<compile_context>
chip_gen: v7x
topology: tpu7x:2x2x1
jax: 0.10.0
libtpu: 0.0.40
codegen_flags: <defaults>
</compile_context>

<pallas_src>
import jax
import jax.numpy as jnp
from jax import lax
from jax.experimental import pallas as pl
from jax.experimental.pallas import tpu as pltpu

# ----- configuration (shrunk from 768/12/12 to stay small; the forward hard-codes a
#       16x16 token grid exactly like the PyTorch transpose(1,2).view(B, C, 16, 16)) ----
IMG, PATCH, IN_C = 128, 8, 3
EMBED_DIM, DEPTH, NUM_HEADS = 128, 2, 4
MLP_RATIO = 4.0
GRID_HW = IMG // PATCH                      # 16
NUM_PATCHES = GRID_HW * GRID_HW             # 256
HEAD_DIM = EMBED_DIM // NUM_HEADS           # 32
MLP_HIDDEN = int(EMBED_DIM * MLP_RATIO)     # 512
LN_EPS = 1e-6
ATTN_SCALE = HEAD_DIM ** -0.5


# --------------------------------------------------------------------------------
# in-kernel math helpers (operate on values already resident in vregs/VMEM)
# --------------------------------------------------------------------------------
def _layer_norm(x, g, b, eps=LN_EPS):
    mean = jnp.mean(x, axis=-1, keepdims=True)
    xc = x - mean
    var = jnp.mean(xc * xc, axis=-1, keepdims=True)      # biased, like torch LayerNorm
    return xc * lax.rsqrt(var + eps) * g + b


def _gelu_tanh(x):
    # TODO(synk): torch.nn.GELU default is the exact erf form; the tanh approximation
    # (EUP tanh, guaranteed Mosaic lowering) differs at ~1e-3 relative.
    c = 0.7978845608028654  # sqrt(2/pi)
    return 0.5 * x * (1.0 + jnp.tanh(c * (x + 0.044715 * x * x * x)))


def _bf16(x):
    return x.astype(jnp.bfloat16)


# --------------------------------------------------------------------------------
# Kernel 1: patch embed  (patch matmul + bias + positional embedding add)
# --------------------------------------------------------------------------------
def _patch_embed_kernel(p_ref, w_ref, b_ref, pos_ref, o_ref):
    acc = jnp.dot(_bf16(p_ref[0]), w_ref[...], preferred_element_type=jnp.float32)
    o_ref[0] = (acc + b_ref[...] + pos_ref[...]).astype(o_ref.dtype)


def patch_embed(patches, w, b, pos):
    B, N, K = patches.shape
    D = w.shape[1]
    return pl.pallas_call(
        _patch_embed_kernel,
        out_shape=jax.ShapeDtypeStruct((B, N, D), jnp.float32),
        grid=(B,),
        in_specs=[
            pl.BlockSpec((1, N, K), lambda b: (b, 0, 0)),
            pl.BlockSpec((K, D), lambda b: (0, 0)),
            pl.BlockSpec((1, D), lambda b: (0, 0)),
            pl.BlockSpec((N, D), lambda b: (0, 0)),
        ],
        out_specs=pl.BlockSpec((1, N, D), lambda b: (b, 0, 0)),
        compiler_params=pltpu.CompilerParams(dimension_semantics=("parallel",)),
    )(patches, w, b, pos)


# --------------------------------------------------------------------------------
# Kernel 2: one fused transformer encoder block per grid step (one batch element)
# --------------------------------------------------------------------------------
def _block_kernel(tok_ref, ln1g_ref, ln1b_ref, wqkv_ref, bqkv_ref,
                  wproj_ref, bproj_ref, ln2g_ref, ln2b_ref,
                  wfc1_ref, bfc1_ref, wfc2_ref, bfc2_ref, out_ref):
    D = EMBED_DIM
    x = tok_ref[0]                                                    # (N, D) f32

    # ---- attention sub-block: x = x + proj(attn(LN1(x))) ----
    h = _layer_norm(x, ln1g_ref[...], ln1b_ref[...])
    qkv = jnp.dot(_bf16(h), wqkv_ref[...],
                  preferred_element_type=jnp.float32) + bqkv_ref[...]  # (N, 3D) f32

    heads = []
    for head in range(NUM_HEADS):                       # all heads in one grid step
        a0, a1 = head * HEAD_DIM, (head + 1) * HEAD_DIM
        q = _bf16(qkv[:, a0:a1] * ATTN_SCALE)           # (N, hd)
        k = _bf16(qkv[:, D + a0:D + a1])
        v = _bf16(qkv[:, 2 * D + a0:2 * D + a1])
        s = lax.dot_general(q, k, (((1,), (1,)), ((), ())),
                            preferred_element_type=jnp.float32)        # (N, N)
        s = s - jnp.max(s, axis=-1, keepdims=True)
        p = jnp.exp(s)
        p = p * pl.reciprocal(jnp.sum(p, axis=-1, keepdims=True), approx=True)
        heads.append(jnp.dot(_bf16(p), v, preferred_element_type=jnp.float32))
    a = jnp.concatenate(heads, axis=-1)                                 # (N, D) f32

    x = x + jnp.dot(_bf16(a), wproj_ref[...],
                    preferred_element_type=jnp.float32) + bproj_ref[...]

    # ---- MLP sub-block: x = x + fc2(gelu(fc1(LN2(x)))) ----
    h2 = _layer_norm(x, ln2g_ref[...], ln2b_ref[...])
    f = jnp.dot(_bf16(h2), wfc1_ref[...],
                preferred_element_type=jnp.float32) + bfc1_ref[...]      # (N, 4D)
    f = _gelu_tanh(f)
    x = x + jnp.dot(_bf16(f), wfc2_ref[...],
                    preferred_element_type=jnp.float32) + bfc2_ref[...]

    out_ref[0] = x.astype(out_ref.dtype)


def encoder_block(tok, blk):
    B, N, D = tok.shape
    Dh = MLP_HIDDEN
    w2 = lambda b: (0, 0)   # weights: whole array every step (no re-DMA on revisit)
    return pl.pallas_call(
        _block_kernel,
        out_shape=jax.ShapeDtypeStruct((B, N, D), jnp.float32),
        grid=(B,),
        in_specs=[
            pl.BlockSpec((1, N, D), lambda b: (b, 0, 0)),                  # tokens
            pl.BlockSpec((1, D), w2), pl.BlockSpec((1, D), w2),            # ln1 g/b
            pl.BlockSpec((D, 3 * D), w2), pl.BlockSpec((1, 3 * D), w2),    # qkv
            pl.BlockSpec((D, D), w2), pl.BlockSpec((1, D), w2),            # proj
            pl.BlockSpec((1, D), w2), pl.BlockSpec((1, D), w2),            # ln2 g/b
            pl.BlockSpec((D, Dh), w2), pl.BlockSpec((1, Dh), w2),          # fc1
            pl.BlockSpec((Dh, D), w2), pl.BlockSpec((1, D), w2),           # fc2
        ],
        out_specs=pl.BlockSpec((1, N, D), lambda b: (b, 0, 0)),
        compiler_params=pltpu.CompilerParams(dimension_semantics=("parallel",)),
    )(tok,
      blk["ln1_g"], blk["ln1_b"],
      blk["w_qkv"], blk["b_qkv"],
      blk["w_proj"], blk["b_proj"],
      blk["ln2_g"], blk["ln2_b"],
      blk["w_fc1"], blk["b_fc1"],
      blk["w_fc2"], blk["b_fc2"])


# --------------------------------------------------------------------------------
# Kernel 3: final LayerNorm + (transpose+view -> 1x1 conv -> relu) head.
# Equivalent to a per-token (D -> 1) reduction; written lane-dense as (B, 1, N).
# --------------------------------------------------------------------------------
def _head_kernel(tok_ref, g_ref, b_ref, wc_ref, bc_ref, o_ref):
    x = tok_ref[0]                                        # (N, D)
    hn = _layer_norm(x, g_ref[...], b_ref[...])
    # lane-dense (1, N) result: contract D of (1, D) against D of (N, D)
    r = lax.dot_general(wc_ref[...], hn, (((1,), (1,)), ((), ())),
                        preferred_element_type=jnp.float32)
    o_ref[0] = jnp.maximum(r + bc_ref[...], 0.0).astype(o_ref.dtype)


def final_head(tok, ln_g, ln_b, w_conv, b_conv):
    B, N, D = tok.shape
    return pl.pallas_call(
        _head_kernel,
        out_shape=jax.ShapeDtypeStruct((B, 1, N), jnp.float32),
        grid=(B,),
        in_specs=[
            pl.BlockSpec((1, N, D), lambda b: (b, 0, 0)),
            pl.BlockSpec((1, D), lambda b: (0, 0)),
            pl.BlockSpec((1, D), lambda b: (0, 0)),
            pl.BlockSpec((1, D), lambda b: (0, 0)),
            pl.BlockSpec((1, 1), lambda b: (0, 0)),
        ],
        out_specs=pl.BlockSpec((1, 1, N), lambda b: (b, 0, 0)),
        compiler_params=pltpu.CompilerParams(dimension_semantics=("parallel",)),
    )(tok, ln_g, ln_b, w_conv, b_conv)


# --------------------------------------------------------------------------------
# Parameters (deterministic, synthetic — mirrors the PyTorch __init__ shapes/init).
# Matmul weights stored in bf16 (MXU-native); LN/bias/pos/conv params stay f32.
# --------------------------------------------------------------------------------
def _normal(key, shape, std):
    return std * jax.random.normal(key, shape, jnp.float32)


def init_params(key):
    D, Dh, N = EMBED_DIM, MLP_HIDDEN, NUM_PATCHES
    ks = iter(jax.random.split(key, 3 + 4 * DEPTH))
    patch_fan_out = D * PATCH * PATCH          # kaiming_normal fan_out for patch conv
    params = {
        # patch-embed conv weight pre-flattened/transposed: (in_c*P*P, D)
        "w_patch": _normal(next(ks), (IN_C * PATCH * PATCH, D),
                           (2.0 / patch_fan_out) ** 0.5).astype(jnp.bfloat16),
        "b_patch": jnp.zeros((1, D), jnp.float32),
        "pos_embed": _normal(next(ks), (N, D), 0.02),
        "ln_g": jnp.ones((1, D), jnp.float32),
        "ln_b": jnp.zeros((1, D), jnp.float32),
        # final 1x1 conv: torch weight (1, D, 1, 1) stored as a (1, D) row; fan_out = 1
        "w_conv": _normal(next(ks), (1, D), (2.0 / 1.0) ** 0.5),
        "b_conv": jnp.zeros((1, 1), jnp.float32),
        "blocks": [],
    }
    for _ in range(DEPTH):
        blk = {
            "ln1_g": jnp.ones((1, D), jnp.float32), "ln1_b": jnp.zeros((1, D), jnp.float32),
            "w_qkv": _normal(next(ks), (D, 3 * D), 0.01).astype(jnp.bfloat16),
            "b_qkv": jnp.zeros((1, 3 * D), jnp.float32),
            "w_proj": _normal(next(ks), (D, D), 0.01).astype(jnp.bfloat16),
            "b_proj": jnp.zeros((1, D), jnp.float32),
            "ln2_g": jnp.ones((1, D), jnp.float32), "ln2_b": jnp.zeros((1, D), jnp.float32),
            "w_fc1": _normal(next(ks), (D, Dh), 0.01).astype(jnp.bfloat16),
            "b_fc1": jnp.zeros((1, Dh), jnp.float32),
            "w_fc2": _normal(next(ks), (Dh, D), 0.01).astype(jnp.bfloat16),
            "b_fc2": jnp.zeros((1, D), jnp.float32),
        }
        params["blocks"].append(blk)
    return params


# --------------------------------------------------------------------------------
# Forward pass (dropout / drop_path are identity since all drop ratios are 0.0)
# --------------------------------------------------------------------------------
def tnet8_forward(params, x):
    B, C, H, W = x.shape
    G, P, N = GRID_HW, PATCH, NUM_PATCHES

    # PatchEmbed: Conv2d(C, D, kernel=P, stride=P) == patch extraction + matmul.
    # TODO(synk): the NCHW->token extraction stays in XLA (one-off strided copy).
    patches = (x.reshape(B, C, G, P, G, P)
                 .transpose(0, 2, 4, 1, 3, 5)
                 .reshape(B, N, C * P * P))
    tok = patch_embed(patches, params["w_patch"], params["b_patch"], params["pos_embed"])

    for blk in params["blocks"]:
        tok = encoder_block(tok, blk)

    # final norm + transpose(1,2).view(B,C,16,16) -> Conv2d(C,1,1,1) -> relu,
    # fused as a lane-dense per-token (D -> 1) reduction writing (B, 1, 256).
    out = final_head(tok, params["ln_g"], params["ln_b"],
                     params["w_conv"], params["b_conv"])
    return out.reshape(B, 1, G, G)                                      # (B, 1, 16, 16)


# --------------------------------------------------------------------------------
if __name__ == "__main__":
    key = jax.random.PRNGKey(0)
    pkey, xkey = jax.random.split(key)
    params = init_params(pkey)
    x = jax.random.normal(xkey, (2, IN_C, IMG, IMG), jnp.float32)   # NCHW, like PyTorch

    fwd = jax.jit(tnet8_forward)
    out = jax.block_until_ready(fwd(params, x))

    assert out.shape == (2, 1, 16, 16), out.shape
    assert out.dtype == jnp.float32
    assert bool(jnp.all(out >= 0.0))          # relu output
    assert bool(jnp.all(jnp.isfinite(out)))
    print("KERNEL_OK")
</pallas_src>

<mosaic_0001>
module attributes {stable_mosaic.version = 11 : i64} {
  func.func @_patch_embed_kernel(%arg0: i32, %arg1: memref<1x256x192xf32, #tpu.memory_space<vmem>>, %arg2: memref<192x128xbf16, #tpu.memory_space<vmem>>, %arg3: memref<1x128xf32, #tpu.memory_space<vmem>>, %arg4: memref<256x128xf32, #tpu.memory_space<vmem>>, %arg5: memref<1x256x128xf32, #tpu.memory_space<vmem>>) attributes {dimension_semantics = [#tpu.dimension_semantics<parallel>], iteration_bounds = array<i64: 2>, scalar_prefetch = 0 : i64, scratch_operands = 0 : i64, tpu.core_type = #tpu.core_type<tc>, window_params = [{transform_indices = @transform_0, window_bounds = array<i64: 1, 256, 192>}, {pipeline_mode = #tpu.pipeline_mode<synchronous>, transform_indices = @transform_1, window_bounds = array<i64: 192, 128>}, {pipeline_mode = #tpu.pipeline_mode<synchronous>, transform_indices = @transform_2, window_bounds = array<i64: 1, 128>}, {pipeline_mode = #tpu.pipeline_mode<synchronous>, transform_indices = @transform_3, window_bounds = array<i64: 256, 128>}, {transform_indices = @transform_4, window_bounds = array<i64: 1, 256, 128>}]} {
    %c0 = arith.constant 0 : index
    %c0_0 = arith.constant 0 : index
    %c0_1 = arith.constant 0 : index
    %0 = vector.load %arg1[%c0, %c0_0, %c0_1] : memref<1x256x192xf32, #tpu.memory_space<vmem>>, vector<1x256x192xf32>
    %1 = vector.shape_cast %0 : vector<1x256x192xf32> to vector<256x192xf32>
    %2 = arith.truncf %1 : vector<256x192xf32> to vector<256x192xbf16>
    %c0_2 = arith.constant 0 : index
    %c0_3 = arith.constant 0 : index
    %3 = vector.load %arg2[%c0_2, %c0_3] : memref<192x128xbf16, #tpu.memory_space<vmem>>, vector<192x128xbf16>
    %cst = arith.constant dense<0.000000e+00> : vector<256x128xf32>
    %4 = tpu.matmul %2, %3, %cst {dimension_numbers = #tpu.dot_dimension_numbers<[1], [0], [0], [1], [0, 0, 1, 1], [], []>} : vector<256x192xbf16>, vector<192x128xbf16>, vector<256x128xf32> -> vector<256x128xf32>
    %c0_4 = arith.constant 0 : index
    %c0_5 = arith.constant 0 : index
    %5 = vector.load %arg3[%c0_4, %c0_5] : memref<1x128xf32, #tpu.memory_space<vmem>>, vector<1x128xf32>
    %6 = vector.broadcast %5 : vector<1x128xf32> to vector<256x128xf32>
    %7 = arith.addf %4, %6 : vector<256x128xf32>
    %c0_6 = arith.constant 0 : index
    %c0_7 = arith.constant 0 : index
    %8 = vector.load %arg4[%c0_6, %c0_7] : memref<256x128xf32, #tpu.memory_space<vmem>>, vector<256x128xf32>
    %9 = arith.addf %7, %8 : vector<256x128xf32>
    %c0_8 = arith.constant 0 : index
    %c0_9 = arith.constant 0 : index
    %c0_10 = arith.constant 0 : index
    %10 = vector.load %arg5[%c0_8, %c0_9, %c0_10] : memref<1x256x128xf32, #tpu.memory_space<vmem>>, vector<1x256x128xf32>
    %11 = vector.shape_cast %10 : vector<1x256x128xf32> to vector<256x128xf32>
    %12 = vector.shape_cast %9 : vector<256x128xf32> to vector<1x256x128xf32>
    tpu.vector_store %arg5[%c0_8, %c0_9, %c0_10], %12 {strides = array<i32>} : memref<1x256x128xf32, #tpu.memory_space<vmem>>, vector<1x256x128xf32>,
    return
  }
  func.func @transform_0(%arg0: i32) -> (i32, i32, i32) {
    %c0_i32 = arith.constant 0 : i32
    %c0_i32_0 = arith.constant 0 : i32
    %c0_i32_1 = arith.constant 0 : i32
    return %arg0, %c0_i32, %c0_i32_0 : i32, i32, i32
  }
  func.func @transform_1(%arg0: i32) -> (i32, i32) {
    %c0_i32 = arith.constant 0 : i32
    %c0_i32_0 = arith.constant 0 : i32
    %c0_i32_1 = arith.constant 0 : i32
    return %c0_i32, %c0_i32_0 : i32, i32
  }
  func.func @transform_2(%arg0: i32) -> (i32, i32) {
    %c0_i32 = arith.constant 0 : i32
    %c0_i32_0 = arith.constant 0 : i32
    %c0_i32_1 = arith.constant 0 : i32
    return %c0_i32, %c0_i32_0 : i32, i32
  }
  func.func @transform_3(%arg0: i32) -> (i32, i32) {
    %c0_i32 = arith.constant 0 : i32
    %c0_i32_0 = arith.constant 0 : i32
    %c0_i32_1 = arith.constant 0 : i32
    return %c0_i32, %c0_i32_0 : i32, i32
  }
  func.func @transform_4(%arg0: i32) -> (i32, i32, i32) {
    %c0_i32 = arith.constant 0 : i32
    %c0_i32_0 = arith.constant 0 : i32
    %c0_i32_1 = arith.constant 0 : i32
    return %arg0, %c0_i32, %c0_i32_0 : i32, i32, i32
  }
}

module attributes {stable_mosaic.version = 11 : i64} {
  func.func @_block_kernel(%arg0: i32, %arg1: memref<1x256x128xf32, #tpu.memory_space<vmem>>, %arg2: memref<1x128xf32, #tpu.memory_space<vmem>>, %arg3: memref<1x128xf32, #tpu.memory_space<vmem>>, %arg4: memref<128x384xbf16, #tpu.memory_space<vmem>>, %arg5: memref<1x384xf32, #tpu.memory_space<vmem>>, %arg6: memref<128x128xbf16, #tpu.memory_space<vmem>>, %arg7: memref<1x128xf32, #tpu.memory_space<vmem>>, %arg8: memref<1x128xf32, #tpu.memory_space<vmem>>, %arg9: memref<1x128xf32, #tpu.memory_space<vmem>>, %arg10: memref<128x512xbf16, #tpu.memory_space<vmem>>, %arg11: memref<1x512xf32, #tpu.memory_space<vmem>>, %arg12: memref<512x128xbf16, #tpu.memory_space<vmem>>, %arg13: memref<1x128xf32, #tpu.memory_space<vmem>>, %arg14: memref<1x256x128xf32, #tpu.memory_space<vmem>>) attributes {dimension_semantics = [#tpu.dimension_semantics<parallel>], iteration_bounds = array<i64: 2>, scalar_prefetch = 0 : i64, scratch_operands = 0 : i64, tpu.core_type = #tpu.core_type<tc>, window_params = [{transform_indices = @transform_0, window_bounds = array<i64: 1, 256, 128>}, {pipeline_mode = #tpu.pipeline_mode<synchronous>, transform_indices = @transform_1, window_bounds = array<i64: 1, 128>}, {pipeline_mode = #tpu.pipeline_mode<synchronous>, transform_indices = @transform_2, window_bounds = array<i64: 1, 128>}, {pipeline_mode = #tpu.pipeline_mode<synchronous>, transform_indices = @transform_3, window_bounds = array<i64: 128, 384>}, {pipeline_mode = #tpu.pipeline_mode<synchronous>, transform_indices = @transform_4, window_bounds = array<i64: 1, 384>}, {pipeline_mode = #tpu.pipeline_mode<synchronous>, transform_indices = @transform_5, window_bounds = array<i64: 128, 128>}, {pipeline_mode = #tpu.pipeline_mode<synchronous>, transform_indices = @transform_6, window_bounds = array<i64: 1, 128>}, {pipeline_mode = #tpu.pipeline_mode<synchronous>, transform_indices = @transform_7, window_bounds = array<i64: 1, 128>}, {pipeline_mode = #tpu.pipeline_mode<synchronous>, transform_indices = @transform_8, window_bounds = array<i64: 1, 128>}, {pipeline_mode = #tpu.pipeline_mode<synchronous>, transform_indices = @transform_9, window_bounds = array<i64: 128, 512>}, {pipeline_mode = #tpu.pipeline_mode<synchronous>, transform_indices = @transform_10, window_bounds = array<i64: 1, 512>}, {pipeline_mode = #tpu.pipeline_mode<synchronous>, transform_indices = @transform_11, window_bounds = array<i64: 512, 128>}, {pipeline_mode = #tpu.pipeline_mode<synchronous>, transform_indices = @transform_12, window_bounds = array<i64: 1, 128>}, {transform_indices = @transform_13, window_bounds = array<i64: 1, 256, 128>}]} {
    %c0 = arith.constant 0 : index
    %c0_0 = arith.constant 0 : index
    %c0_1 = arith.constant 0 : index
    %0 = vector.load %arg1[%c0, %c0_0, %c0_1] : memref<1x256x128xf32, #tpu.memory_space<vmem>>, vector<1x256x128xf32>
    %1 = vector.shape_cast %0 : vector<1x256x128xf32> to vector<256x128xf32>
    %c0_2 = arith.constant 0 : index
    %c0_3 = arith.constant 0 : index
    %2 = vector.load %arg2[%c0_2, %c0_3] : memref<1x128xf32, #tpu.memory_space<vmem>>, vector<1x128xf32>
    %c0_4 = arith.constant 0 : index
    %c0_5 = arith.constant 0 : index
    %3 = vector.load %arg3[%c0_4, %c0_5] : memref<1x128xf32, #tpu.memory_space<vmem>>, vector<1x128xf32>
    %cst = arith.constant dense<0.000000e+00> : vector<256xf32>
    %4 = vector.multi_reduction <add>, %1, %cst [1] : vector<256x128xf32> to vector<256xf32>
    %5 = vector.shape_cast %4 : vector<256xf32> to vector<256x1xf32>
    %cst_6 = arith.constant 1.280000e+02 : f32
    %6 = vector.broadcast %cst_6 : f32 to vector<256x1xf32>
    %7 = arith.divf %5, %6 : vector<256x1xf32>
    %8 = vector.broadcast %7 : vector<256x1xf32> to vector<256x128xf32>
    %9 = arith.subf %1, %8 : vector<256x128xf32>
    %10 = arith.mulf %9, %9 : vector<256x128xf32>
    %cst_7 = arith.constant dense<0.000000e+00> : vector<256xf32>
    %11 = vector.multi_reduction <add>, %10, %cst_7 [1] : vector<256x128xf32> to vector<256xf32>
    %12 = vector.shape_cast %11 : vector<256xf32> to vector<256x1xf32>
    %cst_8 = arith.constant 1.280000e+02 : f32
    %13 = vector.broadcast %cst_8 : f32 to vector<256x1xf32>
    %14 = arith.divf %12, %13 : vector<256x1xf32>
    %cst_9 = arith.constant 9.99999997E-7 : f32
    %15 = vector.broadcast %cst_9 : f32 to vector<256x1xf32>
    %16 = arith.addf %14, %15 : vector<256x1xf32>
    %17 = math.rsqrt %16 : vector<256x1xf32>
    %18 = vector.broadcast %17 : vector<256x1xf32> to vector<256x128xf32>
    %19 = arith.mulf %9, %18 : vector<256x128xf32>
    %20 = vector.broadcast %2 : vector<1x128xf32> to vector<256x128xf32>
    %21 = arith.mulf %19, %20 : vector<256x128xf32>
    %22 = vector.broadcast %3 : vector<1x128xf32> to vector<256x128xf32>
    %23 = arith.addf %21, %22 : vector<256x128xf32>
    %24 = arith.truncf %23 : vector<256x128xf32> to vector<256x128xbf16>
    %c0_10 = arith.constant 0 : index
    %c0_11 = arith.constant 0 : index
    %25 = vector.load %arg4[%c0_10, %c0_11] : memref<128x384xbf16, #tpu.memory_space<vmem>>, vector<128x384xbf16>
    %cst_12 = arith.constant dense<0.000000e+00> : vector<256x384xf32>
    %26 = tpu.matmul %24, %25, %cst_12 {dimension_numbers = #tpu.dot_dimension_numbers<[1], [0], [0], [1], [0, 0, 1, 1], [], []>} : vector<256x128xbf16>, vector<128x384xbf16>, vector<256x384xf32> -> vector<256x384xf32>
    %c0_13 = arith.constant 0 : index
    %c0_14 = arith.constant 0 : index
    %27 = vector.load %arg5[%c0_13, %c0_14] : memref<1x384xf32, #tpu.memory_space<vmem>>, vector<1x384xf32>
    %28 = vector.broadcast %27 : vector<1x384xf32> to vector<256x384xf32>
    %29 = arith.addf %26, %28 : vector<256x384xf32>
    %30 = vector.extract_strided_slice %29 {offsets = [0, 0], sizes = [256, 32], strides = [1, 1]} : vector<256x384xf32> to vector<256x32xf32>
    %cst_15 = arith.constant 0.176776692 : f32
    %31 = vector.broadcast %cst_15 : f32 to vector<256x32xf32>
    %32 = arith.mulf %30, %31 : vector<256x32xf32>
    %33 = arith.truncf %32 : vector<256x32xf32> to vector<256x32xbf16>
    %34 = vector.extract_strided_slice %29 {offsets = [0, 128], sizes = [256, 32], strides = [1, 1]} : vector<256x384xf32> to vector<256x32xf32>
    %35 = arith.truncf %34 : vector<256x32xf32> to vector<256x32xbf16>
    %36 = vector.extract_strided_slice %29 {offsets = [0, 256], sizes = [256, 32], strides = [1, 1]} : vector<256x384xf32> to vector<256x32xf32>
    %37 = arith.truncf %36 : vector<256x32xf32> to vector<256x32xbf16>
    %cst_16 = arith.constant dense<0.000000e+00> : vector<256x256xf32>
    %38 = tpu.matmul %33, %35, %cst_16 {dimension_numbers = #tpu.dot_dimension_numbers<[1], [1], [0], [0], [0, 0, 1, 0], [], []>} : vector<256x32xbf16>, vector<256x32xbf16>, vector<256x256xf32> -> vector<256x256xf32>
    %cst_17 = arith.constant dense<0xFF800000> : vector<256xf32>
    %39 = vector.multi_reduction <maximumf>, %38, %cst_17 [1] : vector<256x256xf32> to vector<256xf32>
    %40 = vector.shape_cast %39 : vector<256xf32> to vector<256x1xf32>
    %41 = vector.broadcast %40 : vector<256x1xf32> to vector<256x256xf32>
    %42 = arith.subf %38, %41 : vector<256x256xf32>
    %43 = math.exp %42 : vector<256x256xf32>
    %cst_18 = arith.constant dense<0.000000e+00> : vector<256xf32>
    %44 = vector.multi_reduction <add>, %43, %cst_18 [1] : vector<256x256xf32> to vector<256xf32>
    %45 = vector.shape_cast %44 : vector<256xf32> to vector<256x1xf32>
    %46 = tpu.reciprocal %45 {approx = true} : vector<256x1xf32> -> vector<256x1xf32>
    %47 = vector.broadcast %46 : vector<256x1xf32> to vector<256x256xf32>
    %48 = arith.mulf %43, %47 : vector<256x256xf32>
    %49 = arith.truncf %48 : vector<256x256xf32> to vector<256x256xbf16>
    %cst_19 = arith.constant dense<0.000000e+00> : vector<256x32xf32>
    %50 = tpu.matmul %49, %37, %cst_19 {dimension_numbers = #tpu.dot_dimension_numbers<[1], [0], [0], [1], [0, 0, 1, 1], [], []>} : vector<256x256xbf16>, vector<256x32xbf16>, vector<256x32xf32> -> vector<256x32xf32>
    %51 = vector.extract_strided_slice %29 {offsets = [0, 32], sizes = [256, 32], strides = [1, 1]} : vector<256x384xf32> to vector<256x32xf32>
    %cst_20 = arith.constant 0.176776692 : f32
    %52 = vector.broadcast %cst_20 : f32 to vector<256x32xf32>
    %53 = arith.mulf %51, %52 : vector<256x32xf32>
    %54 = arith.truncf %53 : vector<256x32xf32> to vector<256x32xbf16>
    %55 = vector.extract_strided_slice %29 {offsets = [0, 160], sizes = [256, 32], strides = [1, 1]} : vector<256x384xf32> to vector<256x32xf32>
    %56 = arith.truncf %55 : vector<256x32xf32> to vector<256x32xbf16>
    %57 = vector.extract_strided_slice %29 {offsets = [0, 288], sizes = [256, 32], strides = [1, 1]} : vector<256x384xf32> to vector<256x32xf32>
    %58 = arith.truncf %57 : vector<256x32xf32> to vector<256x32xbf16>
    %cst_21 = arith.constant dense<0.000000e+00> : vector<256x256xf32>
    %59 = tpu.matmul %54, %56, %cst_21 {dimension_numbers = #tpu.dot_dimension_numbers<[1], [1], [0], [0], [0, 0, 1, 0], [], []>} : vector<256x32xbf16>, vector<256x32xbf16>, vector<256x256xf32> -> vector<256x256xf32>
    %cst_22 = arith.constant dense<0xFF800000> : vector<256xf32>
    %60 = vector.multi_reduction <maximumf>, %59, %cst_22 [1] : vector<256x256xf32> to vector<256xf32>
    %61 = vector.shape_cast %60 : vector<256xf32> to vector<256x1xf32>
    %62 = vector.broadcast %61 : vector<256x1xf32> to vector<256x256xf32>
    %63 = arith.subf %59, %62 : vector<256x256xf32>
    %64 = math.exp %63 : vector<256x256xf32>
    %cst_23 = arith.constant dense<0.000000e+00> : vector<256xf32>
    %65 = vector.multi_reduction <add>, %64, %cst_23 [1] : vector<256x256xf32> to vector<256xf32>
    %66 = vector.shape_cast %65 : vector<256xf32> to vector<256x1xf32>
    %67 = tpu.reciprocal %66 {approx = true} : vector<256x1xf32> -> vector<256x1xf32>
    %68 = vector.broadcast %67 : vector<256x1xf32> to vector<256x256xf32>
    %69 = arith.mulf %64, %68 : vector<256x256xf32>
    %70 = arith.truncf %69 : vector<256x256xf32> to vector<256x256xbf16>
    %cst_24 = arith.constant dense<0.000000e+00> : vector<256x32xf32>
    %71 = tpu.matmul %70, %58, %cst_24 {dimension_numbers = #tpu.dot_dimension_numbers<[1], [0], [0], [1], [0, 0, 1, 1], [], []>} : vector<256x256xbf16>, vector<256x32xbf16>, vector<256x32xf32> -> vector<256x32xf32>
    %72 = vector.extract_strided_slice %29 {offsets = [0, 64], sizes = [256, 32], strides = [1, 1]} : vector<256x384xf32> to vector<256x32xf32>
    %cst_25 = arith.constant 0.176776692 : f32
    %73 = vector.broadcast %cst_25 : f32 to vector<256x32xf32>
    %74 = arith.mulf %72, %73 : vector<256x32xf32>
    %75 = arith.truncf %74 : vector<256x32xf32> to vector<256x32xbf16>
    %76 = vector.extract_strided_slice %29 {offsets = [0, 192], sizes = [256, 32], strides = [1, 1]} : vector<256x384xf32> to vector<256x32xf32>
    %77 = arith.truncf %76 : vector<256x32xf32> to vector<256x32xbf16>
    %78 = vector.extract_strided_slice %29 {offsets = [0, 320], sizes = [256, 32], strides = [1, 1]} : vector<256x384xf32> to vector<256x32xf32>
    %79 = arith.truncf %78 : vector<256x32xf32> to vector<256x32xbf16>
    %cst_26 = arith.constant dense<0.000000e+00> : vector<256x256xf32>
    %80 = tpu.matmul %75, %77, %cst_26 {dimension_numbers = #tpu.dot_dimension_numbers<[1], [1], [0], [0], [0, 0, 1, 0], [], []>} : vector<256x32xbf16>, vector<256x32xbf16>, vector<256x256xf32> -> vector<256x256xf32>
    %cst_27 = arith.constant dense<0xFF800000> : vector<256xf32>
    %81 = vector.multi_reduction <maximumf>, %80, %cst_27 [1] : vector<256x256xf32> to vector<256xf32>
    %82 = vector.shape_cast %81 : vector<256xf32> to vector<256x1xf32>
    %83 = vector.broadcast %82 : vector<256x1xf32> to vector<256x256xf32>
    %84 = arith.subf %80, %83 : vector<256x256xf32>
    %85 = math.exp %84 : vector<256x256xf32>
    %cst_28 = arith.constant dense<0.000000e+00> : vector<256xf32>
    %86 = vector.multi_reduction <add>, %85, %cst_28 [1] : vector<256x256xf32> to vector<256xf32>
    %87 = vector.shape_cast %86 : vector<256xf32> to vector<256x1xf32>
    %88 = tpu.reciprocal %87 {approx = true} : vector<256x1xf32> -> vector<256x1xf32>
    %89 = vector.broadcast %88 : vector<256x1xf32> to vector<256x256xf32>
    %90 = arith.mulf %85, %89 : vector<256x256xf32>
    %91 = arith.truncf %90 : vector<256x256xf32> to vector<256x256xbf16>
    %cst_29 = arith.constant dense<0.000000e+00> : vector<256x32xf32>
    %92 = tpu.matmul %91, %79, %cst_29 {dimension_numbers = #tpu.dot_dimension_numbers<[1], [0], [0], [1], [0, 0, 1, 1], [], []>} : vector<256x256xbf16>, vector<256x32xbf16>, vector<256x32xf32> -> vector<256x32xf32>
    %93 = vector.extract_strided_slice %29 {offsets = [0, 96], sizes = [256, 32], strides = [1, 1]} : vector<256x384xf32> to vector<256x32xf32>
    %cst_30 = arith.constant 0.176776692 : f32
    %94 = vector.broadcast %cst_30 : f32 to vector<256x32xf32>
    %95 = arith.mulf %93, %94 : vector<256x32xf32>
    %96 = arith.truncf %95 : vector<256x32xf32> to vector<256x32xbf16>
    %97 = vector.extract_strided_slice %29 {offsets = [0, 224], sizes = [256, 32], strides = [1, 1]} : vector<256x384xf32> to vector<256x32xf32>
    %98 = arith.truncf %97 : vector<256x32xf32> to vector<256x32xbf16>
    %99 = vector.extract_strided_slice %29 {offsets = [0, 352], sizes = [256, 32], strides = [1, 1]} : vector<256x384xf32> to vector<256x32xf32>
    %100 = arith.truncf %99 : vector<256x32xf32> to vector<256x32xbf16>
    %cst_31 = arith.constant dense<0.000000e+00> : vector<256x256xf32>
    %101 = tpu.matmul %96, %98, %cst_31 {dimension_numbers = #tpu.dot_dimension_numbers<[1], [1], [0], [0], [0, 0, 1, 0], [], []>} : vector<256x32xbf16>, vector<256x32xbf16>, vector<256x256xf32> -> vector<256x256xf32>
    %cst_32 = arith.constant dense<0xFF800000> : vector<256xf32>
    %102 = vector.multi_reduction <maximumf>, %101, %cst_32 [1] : vector<256x256xf32> to vector<256xf32>
    %103 = vector.shape_cast %102 : vector<256xf32> to vector<256x1xf32>
    %104 = vector.broadcast %103 : vector<256x1xf32> to vector<256x256xf32>
    %105 = arith.subf %101, %104 : vector<256x256xf32>
    %106 = math.exp %105 : vector<256x256xf32>
    %cst_33 = arith.constant dense<0.000000e+00> : vector<256xf32>
    %107 = vector.multi_reduction <add>, %106, %cst_33 [1] : vector<256x256xf32> to vector<256xf32>
    %108 = vector.shape_cast %107 : vector<256xf32> to vector<256x1xf32>
    %109 = tpu.reciprocal %108 {approx = true} : vector<256x1xf32> -> vector<256x1xf32>
    %110 = vector.broadcast %109 : vector<256x1xf32> to vector<256x256xf32>
    %111 = arith.mulf %106, %110 : vector<256x256xf32>
    %112 = arith.truncf %111 : vector<256x256xf32> to vector<256x256xbf16>
    %cst_34 = arith.constant dense<0.000000e+00> : vector<256x32xf32>
    %113 = tpu.matmul %112, %100, %cst_34 {dimension_numbers = #tpu.dot_dimension_numbers<[1], [0], [0], [1], [0, 0, 1, 1], [], []>} : vector<256x256xbf16>, vector<256x32xbf16>, vector<256x32xf32> -> vector<256x32xf32>
    %114 = tpu.concatenate %50, %71, %92, %113 in 1 : vector<256x32xf32>, vector<256x32xf32>, vector<256x32xf32>, vector<256x32xf32> -> vector<256x128xf32>
    %115 = arith.truncf %114 : vector<256x128xf32> to vector<256x128xbf16>
    %c0_35 = arith.constant 0 : index
    %c0_36 = arith.constant 0 : index
    %116 = vector.load %arg6[%c0_35, %c0_36] : memref<128x128xbf16, #tpu.memory_space<vmem>>, vector<128x128xbf16>
    %cst_37 = arith.constant dense<0.000000e+00> : vector<256x128xf32>
    %117 = tpu.matmul %115, %116, %cst_37 {dimension_numbers = #tpu.dot_dimension_numbers<[1], [0], [0], [1], [0, 0, 1, 1], [], []>} : vector<256x128xbf16>, vector<128x128xbf16>, vector<256x128xf32> -> vector<256x128xf32>
    %118 = arith.addf %1, %117 : vector<256x128xf32>
    %c0_38 = arith.constant 0 : index
    %c0_39 = arith.constant 0 : index
    %119 = vector.load %arg7[%c0_38, %c0_39] : memref<1x128xf32, #tpu.memory_space<vmem>>, vector<1x128xf32>
    %120 = vector.broadcast %119 : vector<1x128xf32> to vector<256x128xf32>
    %121 = arith.addf %118, %120 : vector<256x128xf32>
    %c0_40 = arith.constant 0 : index
    %c0_41 = arith.constant 0 : index
    %122 = vector.load %arg8[%c0_40, %c0_41] : memref<1x128xf32, #tpu.memory_space<vmem>>, vector<1x128xf32>
    %c0_42 = arith.constant 0 : index
    %c0_43 = arith.constant 0 : index
    %123 = vector.load %arg9[%c0_42, %c0_43] : memref<1x128xf32, #tpu.memory_space<vmem>>, vector<1x128xf32>
    %cst_44 = arith.constant dense<0.000000e+00> : vector<256xf32>
    %124 = vector.multi_reduction <add>, %121, %cst_44 [1] : vector<256x128xf32> to vector<256xf32>
    %125 = vector.shape_cast %124 : vector<256xf32> to vector<256x1xf32>
    %cst_45 = arith.constant 1.280000e+02 : f32
    %126 = vector.broadcast %cst_45 : f32 to vector<256x1xf32>
    %127 = arith.divf %125, %126 : vector<256x1xf32>
    %128 = vector.broadcast %127 : vector<256x1xf32> to vector<256x128xf32>
    %129 = arith.subf %121, %128 : vector<256x128xf32>
    %130 = arith.mulf %129, %129 : vector<256x128xf32>
    %cst_46 = arith.constant dense<0.000000e+00> : vector<256xf32>
    %131 = vector.multi_reduction <add>, %130, %cst_46 [1] : vector<256x128xf32> to vector<256xf32>
    %132 = vector.shape_cast %131 : vector<256xf32> to vector<256x1xf32>
    %cst_47 = arith.constant 1.280000e+02 : f32
    %133 = vector.broadcast %cst_47 : f32 to vector<256x1xf32>
    %134 = arith.divf %132, %133 : vector<256x1xf32>
    %cst_48 = arith.constant 9.99999997E-7 : f32
    %135 = vector.broadcast %cst_48 : f32 to vector<256x1xf32>
    %136 = arith.addf %134, %135 : vector<256x1xf32>
    %137 = math.rsqrt %136 : vector<256x1xf32>
    %138 = vector.broadcast %137 : vector<256x1xf32> to vector<256x128xf32>
    %139 = arith.mulf %129, %138 : vector<256x128xf32>
    %140 = vector.broadcast %122 : vector<1x128xf32> to vector<256x128xf32>
    %141 = arith.mulf %139, %140 : vector<256x128xf32>
    %142 = vector.broadcast %123 : vector<1x128xf32> to vector<256x128xf32>
    %143 = arith.addf %141, %142 : vector<256x128xf32>
    %144 = arith.truncf %143 : vector<256x128xf32> to vector<256x128xbf16>
    %c0_49 = arith.constant 0 : index
    %c0_50 = arith.constant 0 : index
    %145 = vector.load %arg10[%c0_49, %c0_50] : memref<128x512xbf16, #tpu.memory_space<vmem>>, vector<128x512xbf16>
    %cst_51 = arith.constant dense<0.000000e+00> : vector<256x512xf32>
    %146 = tpu.matmul %144, %145, %cst_51 {dimension_numbers = #tpu.dot_dimension_numbers<[1], [0], [0], [1], [0, 0, 1, 1], [], []>} : vector<256x128xbf16>, vector<128x512xbf16>, vector<256x512xf32> -> vector<256x512xf32>
    %c0_52 = arith.constant 0 : index
    %c0_53 = arith.constant 0 : index
    %147 = vector.load %arg11[%c0_52, %c0_53] : memref<1x512xf32, #tpu.memory_space<vmem>>, vector<1x512xf32>
    %148 = vector.broadcast %147 : vector<1x512xf32> to vector<256x512xf32>
    %149 = arith.addf %146, %148 : vector<256x512xf32>
    %cst_54 = arith.constant 5.000000e-01 : f32
    %150 = vector.broadcast %cst_54 : f32 to vector<256x512xf32>
    %151 = arith.mulf %150, %149 : vector<256x512xf32>
    %cst_55 = arith.constant 4.471500e-02 : f32
    %152 = vector.broadcast %cst_55 : f32 to vector<256x512xf32>
    %153 = arith.mulf %152, %149 : vector<256x512xf32>
    %154 = arith.mulf %153, %149 : vector<256x512xf32>
    %155 = arith.mulf %154, %149 : vector<256x512xf32>
    %156 = arith.addf %149, %155 : vector<256x512xf32>
    %cst_56 = arith.constant 0.797884583 : f32
    %157 = vector.broadcast %cst_56 : f32 to vector<256x512xf32>
    %158 = arith.mulf %157, %156 : vector<256x512xf32>
    %159 = math.tanh %158 : vector<256x512xf32>
    %cst_57 = arith.constant 1.000000e+00 : f32
    %160 = vector.broadcast %cst_57 : f32 to vector<256x512xf32>
    %161 = arith.addf %160, %159 : vector<256x512xf32>
    %162 = arith.mulf %151, %161 : vector<256x512xf32>
    %163 = arith.truncf %162 : vector<256x512xf32> to vector<256x512xbf16>
    %c0_58 = arith.constant 0 : index
    %c0_59 = arith.constant 0 : index
    %164 = vector.load %arg12[%c0_58, %c0_59] : memref<512x128xbf16, #tpu.memory_space<vmem>>, vector<512x128xbf16>
    %cst_60 = arith.constant dense<0.000000e+00> : vector<256x128xf32>
    %165 = tpu.matmul %163, %164, %cst_60 {dimension_numbers = #tpu.dot_dimension_numbers<[1], [0], [0], [1], [0, 0, 1, 1], [], []>} : vector<256x512xbf16>, vector<512x128xbf16>, vector<256x128xf32> -> vector<256x128xf32>
    %166 = arith.addf %121, %165 : vector<256x128xf32>
    %c0_61 = arith.constant 0 : index
    %c0_62 = arith.constant 0 : index
    %167 = vector.load %arg13[%c0_61, %c0_62] : memref<1x128xf32, #tpu.memory_space<vmem>>, vector<1x128xf32>
    %168 = vector.broadcast %167 : vector<1x128xf32> to vector<256x128xf32>
    %169 = arith.addf %166, %168 : vector<256x128xf32>
    %c0_63 = arith.constant 0 : index
    %c0_64 = arith.constant 0 : index
    %c0_65 = arith.constant 0 : index
    %170 = vector.load %arg14[%c0_63, %c0_64, %c0_65] : memref<1x256x128xf32, #tpu.memory_space<vmem>>, vector<1x256x128xf32>
    %171 = vector.shape_cast %170 : vector<1x256x128xf32> to vector<256x128xf32>
    %172 = vector.shape_cast %169 : vector<256x128xf32> to vector<1x256x128xf32>
    tpu.vector_store %arg14[%c0_63, %c0_64, %c0_65], %172 {strides = array<i32>} : memref<1x256x128xf32, #tpu.memory_space<vmem>>, vector<1x256x128xf32>,
    return
  }
  func.func @transform_0(%arg0: i32) -> (i32, i32, i32) {
    %c0_i32 = arith.constant 0 : i32
    %c0_i32_0 = arith.constant 0 : i32
    %c0_i32_1 = arith.constant 0 : i32
    return %arg0, %c0_i32, %c0_i32_0 : i32, i32, i32
  }
  func.func @transform_1(%arg0: i32) -> (i32, i32) {
    %c0_i32 = arith.constant 0 : i32
    %c0_i32_0 = arith.constant 0 : i32
    %c0_i32_1 = arith.constant 0 : i32
    return %c0_i32, %c0_i32_0 : i32, i32
  }
  func.func @transform_2(%arg0: i32) -> (i32, i32) {
    %c0_i32 = arith.constant 0 : i32
    %c0_i32_0 = arith.constant 0 : i32
    %c0_i32_1 = arith.constant 0 : i32
    return %c0_i32, %c0_i32_0 : i32, i32
  }
  func.func @transform_3(%arg0: i32) -> (i32, i32) {
    %c0_i32 = arith.constant 0 : i32
    %c0_i32_0 = arith.constant 0 : i32
    %c0_i32_1 = arith.constant 0 : i32
    return %c0_i32, %c0_i32_0 : i32, i32
  }
  func.func @transform_4(%arg0: i32) -> (i32, i32) {
    %c0_i32 = arith.constant 0 : i32
    %c0_i32_0 = arith.constant 0 : i32
    %c0_i32_1 = arith.constant 0 : i32
    return %c0_i32, %c0_i32_0 : i32, i32
  }
  func.func @transform_5(%arg0: i32) -> (i32, i32) {
    %c0_i32 = arith.constant 0 : i32
    %c0_i32_0 = arith.constant 0 : i32
    %c0_i32_1 = arith.constant 0 : i32
    return %c0_i32, %c0_i32_0 : i32, i32
  }
  func.func @transform_6(%arg0: i32) -> (i32, i32) {
    %c0_i32 = arith.constant 0 : i32
    %c0_i32_0 = arith.constant 0 : i32
    %c0_i32_1 = arith.constant 0 : i32
    return %c0_i32, %c0_i32_0 : i32, i32
  }
  func.func @transform_7(%arg0: i32) -> (i32, i32) {
    %c0_i32 = arith.constant 0 : i32
    %c0_i32_0 = arith.constant 0 : i32
    %c0_i32_1 = arith.constant 0 : i32
    return %c0_i32, %c0_i32_0 : i32, i32
  }
  func.func @transform_8(%arg0: i32) -> (i32, i32) {
    %c0_i32 = arith.constant 0 : i32
    %c0_i32_0 = arith.constant 0 : i32
    %c0_i32_1 = arith.constant 0 : i32
    return %c0_i32, %c0_i32_0 : i32, i32
  }
  func.func @transform_9(%arg0: i32) -> (i32, i32) {
    %c0_i32 = arith.constant 0 : i32
    %c0_i32_0 = arith.constant 0 : i32
    %c0_i32_1 = arith.constant 0 : i32
    return %c0_i32, %c0_i32_0 : i32, i32
  }
  func.func @transform_10(%arg0: i32) -> (i32, i32) {
    %c0_i32 = arith.constant 0 : i32
    %c0_i32_0 = arith.constant 0 : i32
    %c0_i32_1 = arith.constant 0 : i32
    return %c0_i32, %c0_i32_0 : i32, i32
  }
  func.func @transform_11(%arg0: i32) -> (i32, i32) {
    %c0_i32 = arith.constant 0 : i32
    %c0_i32_0 = arith.constant 0 : i32
    %c0_i32_1 = arith.constant 0 : i32
    return %c0_i32, %c0_i32_0 : i32, i32
  }
  func.func @transform_12(%arg0: i32) -> (i32, i32) {
    %c0_i32 = arith.constant 0 : i32
    %c0_i32_0 = arith.constant 0 : i32
    %c0_i32_1 = arith.constant 0 : i32
    return %c0_i32, %c0_i32_0 : i32, i32
  }
  func.func @transform_13(%arg0: i32) -> (i32, i32, i32) {
    %c0_i32 = arith.constant 0 : i32
    %c0_i32_0 = arith.constant 0 : i32
    %c0_i32_1 = arith.constant 0 : i32
    return %arg0, %c0_i32, %c0_i32_0 : i32, i32, i32
  }
}

module attributes {stable_mosaic.version = 11 : i64} {
  func.func @_head_kernel(%arg0: i32, %arg1: memref<1x256x128xf32, #tpu.memory_space<vmem>>, %arg2: memref<1x128xf32, #tpu.memory_space<vmem>>, %arg3: memref<1x128xf32, #tpu.memory_space<vmem>>, %arg4: memref<1x128xf32, #tpu.memory_space<vmem>>, %arg5: memref<1x1xf32, #tpu.memory_space<vmem>>, %arg6: memref<1x1x256xf32, #tpu.memory_space<vmem>>) attributes {dimension_semantics = [#tpu.dimension_semantics<parallel>], iteration_bounds = array<i64: 2>, scalar_prefetch = 0 : i64, scratch_operands = 0 : i64, tpu.core_type = #tpu.core_type<tc>, window_params = [{transform_indices = @transform_0, window_bounds = array<i64: 1, 256, 128>}, {pipeline_mode = #tpu.pipeline_mode<synchronous>, transform_indices = @transform_1, window_bounds = array<i64: 1, 128>}, {pipeline_mode = #tpu.pipeline_mode<synchronous>, transform_indices = @transform_2, window_bounds = array<i64: 1, 128>}, {pipeline_mode = #tpu.pipeline_mode<synchronous>, transform_indices = @transform_3, window_bounds = array<i64: 1, 128>}, {pipeline_mode = #tpu.pipeline_mode<synchronous>, transform_indices = @transform_4, window_bounds = array<i64: 1, 1>}, {transform_indices = @transform_5, window_bounds = array<i64: 1, 1, 256>}]} {
    %c0 = arith.constant 0 : index
    %c0_0 = arith.constant 0 : index
    %c0_1 = arith.constant 0 : index
    %0 = vector.load %arg1[%c0, %c0_0, %c0_1] : memref<1x256x128xf32, #tpu.memory_space<vmem>>, vector<1x256x128xf32>
    %1 = vector.shape_cast %0 : vector<1x256x128xf32> to vector<256x128xf32>
    %c0_2 = arith.constant 0 : index
    %c0_3 = arith.constant 0 : index
    %2 = vector.load %arg2[%c0_2, %c0_3] : memref<1x128xf32, #tpu.memory_space<vmem>>, vector<1x128xf32>
    %c0_4 = arith.constant 0 : index
    %c0_5 = arith.constant 0 : index
    %3 = vector.load %arg3[%c0_4, %c0_5] : memref<1x128xf32, #tpu.memory_space<vmem>>, vector<1x128xf32>
    %cst = arith.constant dense<0.000000e+00> : vector<256xf32>
    %4 = vector.multi_reduction <add>, %1, %cst [1] : vector<256x128xf32> to vector<256xf32>
    %5 = vector.shape_cast %4 : vector<256xf32> to vector<256x1xf32>
    %cst_6 = arith.constant 1.280000e+02 : f32
    %6 = vector.broadcast %cst_6 : f32 to vector<256x1xf32>
    %7 = arith.divf %5, %6 : vector<256x1xf32>
    %8 = vector.broadcast %7 : vector<256x1xf32> to vector<256x128xf32>
    %9 = arith.subf %1, %8 : vector<256x128xf32>
    %10 = arith.mulf %9, %9 : vector<256x128xf32>
    %cst_7 = arith.constant dense<0.000000e+00> : vector<256xf32>
    %11 = vector.multi_reduction <add>, %10, %cst_7 [1] : vector<256x128xf32> to vector<256xf32>
    %12 = vector.shape_cast %11 : vector<256xf32> to vector<256x1xf32>
    %cst_8 = arith.constant 1.280000e+02 : f32
    %13 = vector.broadcast %cst_8 : f32 to vector<256x1xf32>
    %14 = arith.divf %12, %13 : vector<256x1xf32>
    %cst_9 = arith.constant 9.99999997E-7 : f32
    %15 = vector.broadcast %cst_9 : f32 to vector<256x1xf32>
    %16 = arith.addf %14, %15 : vector<256x1xf32>
    %17 = math.rsqrt %16 : vector<256x1xf32>
    %18 = vector.broadcast %17 : vector<256x1xf32> to vector<256x128xf32>
    %19 = arith.mulf %9, %18 : vector<256x128xf32>
    %20 = vector.broadcast %2 : vector<1x128xf32> to vector<256x128xf32>
    %21 = arith.mulf %19, %20 : vector<256x128xf32>
    %22 = vector.broadcast %3 : vector<1x128xf32> to vector<256x128xf32>
    %23 = arith.addf %21, %22 : vector<256x128xf32>
    %c0_10 = arith.constant 0 : index
    %c0_11 = arith.constant 0 : index
    %24 = vector.load %arg4[%c0_10, %c0_11] : memref<1x128xf32, #tpu.memory_space<vmem>>, vector<1x128xf32>
    %cst_12 = arith.constant dense<0.000000e+00> : vector<1x256xf32>
    %25 = tpu.matmul %24, %23, %cst_12 {dimension_numbers = #tpu.dot_dimension_numbers<[1], [1], [0], [0], [0, 0, 1, 0], [], []>} : vector<1x128xf32>, vector<256x128xf32>, vector<1x256xf32> -> vector<1x256xf32>
    %c0_13 = arith.constant 0 : index
    %c0_14 = arith.constant 0 : index
    %26 = vector.load %arg5[%c0_13, %c0_14] : memref<1x1xf32, #tpu.memory_space<vmem>>, vector<1x1xf32>
    %27 = vector.broadcast %26 : vector<1x1xf32> to vector<1x256xf32>
    %28 = arith.addf %25, %27 : vector<1x256xf32>
    %cst_15 = arith.constant 0.000000e+00 : f32
    %29 = vector.broadcast %cst_15 : f32 to vector<1x256xf32>
    %30 = arith.maximumf %28, %29 : vector<1x256xf32>
    %c0_16 = arith.constant 0 : index
    %c0_17 = arith.constant 0 : index
    %c0_18 = arith.constant 0 : index
    %31 = vector.load %arg6[%c0_16, %c0_17, %c0_18] : memref<1x1x256xf32, #tpu.memory_space<vmem>>, vector<1x1x256xf32>
    %32 = vector.shape_cast %31 : vector<1x1x256xf32> to vector<1x256xf32>
    %33 = vector.shape_cast %30 : vector<1x256xf32> to vector<1x1x256xf32>
    tpu.vector_store %arg6[%c0_16, %c0_17, %c0_18], %33 {strides = array<i32>} : memref<1x1x256xf32, #tpu.memory_space<vmem>>, vector<1x1x256xf32>,
    return
  }
  func.func @transform_0(%arg0: i32) -> (i32, i32, i32) {
    %c0_i32 = arith.constant 0 : i32
    %c0_i32_0 = arith.constant 0 : i32
    %c0_i32_1 = arith.constant 0 : i32
    return %arg0, %c0_i32, %c0_i32_0 : i32, i32, i32
  }
  func.func @transform_1(%arg0: i32) -> (i32, i32) {
    %c0_i32 = arith.constant 0 : i32
    %c0_i32_0 = arith.constant 0 : i32
    %c0_i32_1 = arith.constant 0 : i32
    return %c0_i32, %c0_i32_0 : i32, i32
  }
  func.func @transform_2(%arg0: i32) -> (i32, i32) {
    %c0_i32 = arith.constant 0 : i32
    %c0_i32_0 = arith.constant 0 : i32
    %c0_i32_1 = arith.constant 0 : i32
    return %c0_i32, %c0_i32_0 : i32, i32
  }
  func.func @transform_3(%arg0: i32) -> (i32, i32) {
    %c0_i32 = arith.constant 0 : i32
    %c0_i32_0 = arith.constant 0 : i32
    %c0_i32_1 = arith.constant 0 : i32
    return %c0_i32, %c0_i32_0 : i32, i32
  }
  func.func @transform_4(%arg0: i32) -> (i32, i32) {
    %c0_i32 = arith.constant 0 : i32
    %c0_i32_0 = arith.constant 0 : i32
    %c0_i32_1 = arith.constant 0 : i32
    return %c0_i32, %c0_i32_0 : i32, i32
  }
  func.func @transform_5(%arg0: i32) -> (i32, i32, i32) {
    %c0_i32 = arith.constant 0 : i32
    %c0_i32_0 = arith.constant 0 : i32
    %c0_i32_1 = arith.constant 0 : i32
    return %arg0, %c0_i32, %c0_i32_0 : i32, i32, i32
  }
}

</mosaic_0001>

<llo_original>
// kernel: tnet8_forward.4
$region0: #{tnet8_forward.4}
  #allocation0 [shape = 'u32[]', space=smem, size = 0x4, offset = 0x4, fixed_abs, tag = 'smem constant byte address 0x4 - core index']
  #allocation1 [shape = 'u32[144,128]{1,0:T(1,128)}', space=vmem, size = 0x12000, scoped, tag = 'internal scratch']
  %s0 = inlined_call_operand.vmem [shape: f32[2,256,192], index: 0, kind: input, shape index: {}]
  %s1 = inlined_call_operand.vmem [shape: bf16[192,128], index: 1, kind: input, shape index: {}]
  %s2 = inlined_call_operand.vmem [shape: f32[1,128], index: 2, kind: input, shape index: {}]
  %s3 = inlined_call_operand.vmem [shape: f32[256,128], index: 3, kind: input, shape index: {}]
  %s4 = inlined_call_operand.vmem [shape: f32[2,256,128], index: 4, kind: output, shape index: {}]
  %s5 = sld [smem:[#allocation0]]
  $region49: #{tnet8_forward.4} parent=0
    _
  %s7 = ssub.s32 1, %s5
  %s8 = scalar_select 0, %s7, %s5
  loop: start=0, step=1, limit=4
  $region2: #{tnet8_forward.4} parent=0 // loop_pre_header
    _
  $region3: #{tnet8_forward.4} parent=0 // loop_header
    %s10 = sphi 0, %s14
    %p11 = scmp.ge.s32.totalorder %s10, 4
    %s20 = sphi 0, %s22
    %s23 = sphi 0, %s20
    %s24 = sphi 0, %s23
    %s40 = sphi 0, %s24
    %s44 = sphi 0, %s44
    %s46 = sphi 0, %s44
    %s47 = sphi 0, %s46
    %s61 = sphi 0, %s47
    %s65 = sphi 0, %s65
    %s67 = sphi 0, %s65
    %s68 = sphi 0, %s67
    %s82 = sphi 0, %s68
    %s86 = sphi 0, %s86
    %s88 = sphi 0, %s86
    %s89 = sphi 0, %s88
    %s103 = sphi 0, %s89
    %s109 = sphi 0, %s111
    %s112 = sphi 0, %s109
    %s113 = sphi 0, %s112
    %s129 = sphi 0, %s113
  $region4: #{tnet8_forward.4} parent=0 // loop_header_branch
    %13 = sbr.rel (%p11) target = $region8
  $region5: #{tnet8_forward.4} parent=0 // loop_body
    %s15 = ssub.s32 %s10, 1
    %s16 = ssub.s32 %s10, 2
    %s17 = sadd.s32 %s10, 1
    %s18 = ssub.s32 %s10, %s17
    %p19 = scmp.eq.s32.totalorder %s18, 0
    %s21 = sadd.s32 %s20, 1
    %s22 = scalar_select %p19, %s20, %s21
    %p25 = pneg %p19
    %p26 = scmp.eq.s32.totalorder %s10, 1
    %p27 = por %p25, %p26
    %p28 = scmp.ne.s32.totalorder %s20, %s23
    %p29 = scmp.eq.s32.totalorder %s10, 0
    %p30 = por %p28, %p29
    %p31 = scmp.ne.s32.totalorder %s20, %s23
    %p32 = scmp.eq.s32.totalorder %s15, 1
    %p33 = por %p31, %p32
    %p34 = scmp.ne.s32.totalorder %s23, %s24
    %p35 = scmp.eq.s32.totalorder %s15, 0
    %p36 = por %p34, %p35
    %p37 = scmp.ne.s32.totalorder %s23, %s24
    %p38 = scmp.eq.s32.totalorder %s16, 1
    %p39 = por %p37, %p38
    %p41 = scmp.ne.s32.totalorder %s24, %s40
    %p42 = scmp.eq.s32.totalorder %s16, 0
    %p43 = por %p41, %p42
    %s45 = sadd.s32 %s44, 1
    %p48 = scmp.eq.s32.totalorder %s10, 1
    %p49 = scmp.ne.s32.totalorder %s44, %s46
    %p50 = scmp.eq.s32.totalorder %s10, 0
    %p51 = por %p49, %p50
    %p52 = scmp.ne.s32.totalorder %s44, %s46
    %p53 = scmp.eq.s32.totalorder %s15, 1
    %p54 = por %p52, %p53
    %p55 = scmp.ne.s32.totalorder %s46, %s47
    %p56 = scmp.eq.s32.totalorder %s15, 0
    %p57 = por %p55, %p56
    %p58 = scmp.ne.s32.totalorder %s46, %s47
    %p59 = scmp.eq.s32.totalorder %s16, 1
    %p60 = por %p58, %p59
    %p62 = scmp.ne.s32.totalorder %s47, %s61
    %p63 = scmp.eq.s32.totalorder %s16, 0
    %p64 = por %p62, %p63
    %s66 = sadd.s32 %s65, 1
    %p69 = scmp.eq.s32.totalorder %s10, 1
    %p70 = scmp.ne.s32.totalorder %s65, %s67
    %p71 = scmp.eq.s32.totalorder %s10, 0
    %p72 = por %p70, %p71
    %p73 = scmp.ne.s32.totalorder %s65, %s67
    %p74 = scmp.eq.s32.totalorder %s15, 1
    %p75 = por %p73, %p74
    %p76 = scmp.ne.s32.totalorder %s67, %s68
    %p77 = scmp.eq.s32.totalorder %s15, 0
    %p78 = por %p76, %p77
    %p79 = scmp.ne.s32.totalorder %s67, %s68
    %p80 = scmp.eq.s32.totalorder %s16, 1
    %p81 = por %p79, %p80
    %p83 = scmp.ne.s32.totalorder %s68, %s82
    %p84 = scmp.eq.s32.totalorder %s16, 0
    %p85 = por %p83, %p84
    %s87 = sadd.s32 %s86, 1
    %p90 = scmp.eq.s32.totalorder %s10, 1
    %p91 = scmp.ne.s32.totalorder %s86, %s88
    %p92 = scmp.eq.s32.totalorder %s10, 0
    %p93 = por %p91, %p92
    %p94 = scmp.ne.s32.totalorder %s86, %s88
    %p95 = scmp.eq.s32.totalorder %s15, 1
    %p96 = por %p94, %p95
    %p97 = scmp.ne.s32.totalorder %s88, %s89
    %p98 = scmp.eq.s32.totalorder %s15, 0
    %p99 = por %p97, %p98
    %p100 = scmp.ne.s32.totalorder %s88, %s89
    %p101 = scmp.eq.s32.totalorder %s16, 1
    %p102 = por %p100, %p101
    %p104 = scmp.ne.s32.totalorder %s89, %s103
    %p105 = scmp.eq.s32.totalorder %s16, 0
    %p106 = por %p104, %p105
    %s107 = ssub.s32 %s10, %s17
    %p108 = scmp.eq.s32.totalorder %s107, 0
    %s110 = sadd.s32 %s109, 1
    %s111 = scalar_select %p108, %s109, %s110
    %p114 = pneg %p108
    %p115 = scmp.eq.s32.totalorder %s10, 1
    %p116 = por %p114, %p115
    %p117 = scmp.ne.s32.totalorder %s109, %s112
    %p118 = scmp.eq.s32.totalorder %s10, 0
    %p119 = por %p117, %p118
    %p120 = scmp.ne.s32.totalorder %s109, %s112
    %p121 = scmp.eq.s32.totalorder %s15, 1
    %p122 = por %p120, %p121
    %p123 = scmp.ne.s32.totalorder %s112, %s113
    %p124 = scmp.eq.s32.totalorder %s15, 0
    %p125 = por %p123, %p124
    %p126 = scmp.ne.s32.totalorder %s112, %s113
    %p127 = scmp.eq.s32.totalorder %s16, 1
    %p128 = por %p126, %p127
    %p130 = scmp.ne.s32.totalorder %s113, %s129
    %p131 = scmp.eq.s32.totalorder %s16, 0
    %p132 = por %p130, %p131
    %p133 = scmp.le.s32.totalorder 1, %s10
    %p134 = scmp.lt.s32.totalorder %s10, 3
    %p135 = pnand %p133, %p134
    %p136 = pneg %p135
    // Predicated region
    $region9: #{tnet8_forward.4} parent=5 // pred_check
      _
    $region10: #{tnet8_forward.4} parent=5 // pred_check_branch
      %138 = sbr.rel (%p135) target = $region12
    $region11: #{tnet8_forward.4} parent=5 // pred_region
      %s139 = ssub.s32 %s10, 1
      // Predicated region
      $region13: #{tnet8_forward.4} parent=11 // pred_check
        %p140 = pneg %p57
      $region14: #{tnet8_forward.4} parent=11 // pred_check_branch
        %142 = sbr.rel (%p140) target = $region16
      $region15: #{tnet8_forward.4} parent=11 // pred_region
        _
      $region16: #{tnet8_forward.4} parent=11 // pred_fallthru
        _
      // Predicated region
      $region17: #{tnet8_forward.4} parent=11 // pred_check
        %p143 = pneg %p78
      $region18: #{tnet8_forward.4} parent=11 // pred_check_branch
        %145 = sbr.rel (%p143) target = $region20
      $region19: #{tnet8_forward.4} parent=11 // pred_region
        _
      $region20: #{tnet8_forward.4} parent=11 // pred_fallthru
        _
      // Predicated region
      $region21: #{tnet8_forward.4} parent=11 // pred_check
        %p146 = pneg %p99
      $region22: #{tnet8_forward.4} parent=11 // pred_check_branch
        %148 = sbr.rel (%p146) target = $region24
      $region23: #{tnet8_forward.4} parent=11 // pred_region
        _
      $region24: #{tnet8_forward.4} parent=11 // pred_fallthru
        _
    $region12: #{tnet8_forward.4} parent=5 // pred_fallthru
      _
    %p149 = scmp.lt.s32.totalorder %s10, 2
    // Predicated region
    $region25: #{tnet8_forward.4} parent=5 // pred_check
      %p150 = pneg %p149
    $region26: #{tnet8_forward.4} parent=5 // pred_check_branch
      %152 = sbr.rel (%p150) target = $region28
    $region27: #{tnet8_forward.4} parent=5 // pred_region
      // Predicated region
      $region29: #{tnet8_forward.4} parent=27 // pred_check
        %p153 = pneg %p30
      $region30: #{tnet8_forward.4} parent=27 // pred_check_branch
        %155 = sbr.rel (%p153) target = $region32
      $region31: #{tnet8_forward.4} parent=27 // pred_region
        %p156 = scmp.lt.s32.totalorder %s10, 1
        %s157 = scalar_select %p156, %s10, 1
        %s158 = smul.addr %s157, 64
        %s159 = smul.addr %s158, 8
        %s160 = scalar_lea.vmem %s0, %s159
      $region32: #{tnet8_forward.4} parent=27 // pred_fallthru
        _
    $region28: #{tnet8_forward.4} parent=5 // pred_fallthru
      _
    %p161 = scmp.le.s32.totalorder 1, %s10
    %p162 = scmp.lt.s32.totalorder %s10, 3
    %p163 = pnand %p161, %p162
    %p164 = pneg %p163
    // Predicated region
    $region33: #{tnet8_forward.4} parent=5 // pred_check
      _
    $region34: #{tnet8_forward.4} parent=5 // pred_check_branch
      %166 = sbr.rel (%p163) target = $region36
    $region35: #{tnet8_forward.4} parent=5 // pred_region
      %s167 = ssub.s32 %s10, 1
      %p168 = scmp.lt.s32.totalorder %s15, 1
      %s169 = scalar_select %p168, %s15, 1
      %s170 = smul.addr %s169, 64
      %s171 = smul.addr %s170, 8
      %s172 = scalar_lea.vmem %s0, %s171
      %p173 = pneg %p36
      %p174 = pneg %p33
      %p175 = pneg %p57
      %p176 = pneg %p54
      %p177 = pneg %p78
      %p178 = pneg %p75
      %p179 = pneg %p99
      %p180 = pneg %p96
      %p181 = pneg %p125
      %p182 = pneg %p122
      %p183 = scmp.lt.s32.totalorder %s15, 1
      %s184 = scalar_select %p183, %s15, 1
      %s185 = smul.addr %s184, 32
      %s186 = smul.addr %s185, 8
      %s187 = scalar_lea.vmem %s4, %s186
      %p188 = scmp.lt.s32.totalorder %s15, 1
      %s189 = scalar_select %p188, %s15, 1
      %s190 = smul.addr %s189, 64
      %s191 = smul.addr %s190, 8
      %s192 = scalar_lea.vmem %s0, %s191
      %p193 = scmp.lt.s32.totalorder %s15, 1
      %s194 = scalar_select %p193, %s15, 1
      %s195 = smul.addr %s194, 32
      %s196 = smul.addr %s195, 8
      %s197 = scalar_lea.vmem %s4, %s196
      %v199 = vld [vmem:[%s192] sm:$0xff]
      %v200 = vld [vmem:[%s192 + $0x8] sm:$0xff]
      %v201 = vld [vmem:[%s192 + $0x10] sm:$0xff]
      %v202 = vld [vmem:[%s192 + $0x18] sm:$0xff]
      %v203 = vld [vmem:[%s192 + $0x20] sm:$0xff]
      %v204 = vld [vmem:[%s192 + $0x28] sm:$0xff]
      %v205 = vld [vmem:[%s192 + $0x30] sm:$0xff]
      %v206 = vld [vmem:[%s192 + $0x38] sm:$0xff]
      %v207 = vld [vmem:[%s192 + $0x40] sm:$0xff]
      %v208 = vld [vmem:[%s192 + $0x48] sm:$0xff]
      %v209 = vld [vmem:[%s192 + $0x50] sm:$0xff]
      %v210 = vld [vmem:[%s192 + $0x58] sm:$0xff]
      %v211 = vld [vmem:[%s192 + $0x60] sm:$0xff]
      %v212 = vld [vmem:[%s192 + $0x68] sm:$0xff]
      %v213 = vld [vmem:[%s192 + $0x70] sm:$0xff]
      %v214 = vld [vmem:[%s192 + $0x78] sm:$0xff]
      %v215 = vld [vmem:[%s192 + $0x80] sm:$0xff]
      %v216 = vld [vmem:[%s192 + $0x88] sm:$0xff]
      %v217 = vld [vmem:[%s192 + $0x90] sm:$0xff]
      %v218 = vld [vmem:[%s192 + $0x98] sm:$0xff]
      %v219 = vld [vmem:[%s192 + $0xa0] sm:$0xff]
      %v220 = vld [vmem:[%s192 + $0xa8] sm:$0xff]
      %v221 = vld [vmem:[%s192 + $0xb0] sm:$0xff]
      %v222 = vld [vmem:[%s192 + $0xb8] sm:$0xff]
      %v223 = vld [vmem:[%s192 + $0xc0] sm:$0xff]
      %v224 = vld [vmem:[%s192 + $0xc8] sm:$0xff]
      %v225 = vld [vmem:[%s192 + $0xd0] sm:$0xff]
      %v226 = vld [vmem:[%s192 + $0xd8] sm:$0xff]
      %v227 = vld [vmem:[%s192 + $0xe0] sm:$0xff]
      %v228 = vld [vmem:[%s192 + $0xe8] sm:$0xff]
      %v229 = vld [vmem:[%s192 + $0xf0] sm:$0xff]
      %v230 = vld [vmem:[%s192 + $0xf8] sm:$0xff]
      %v231 = vld [vmem:[%s192 + $0x100] sm:$0xff]
      %v232 = vld [vmem:[%s192 + $0x108] sm:$0xff]
      %v233 = vld [vmem:[%s192 + $0x110] sm:$0xff]
      %v234 = vld [vmem:[%s192 + $0x118] sm:$0xff]
      %v235 = vld [vmem:[%s192 + $0x120] sm:$0xff]
      %v236 = vld [vmem:[%s192 + $0x128] sm:$0xff]
      %v237 = vld [vmem:[%s192 + $0x130] sm:$0xff]
      %v238 = vld [vmem:[%s192 + $0x138] sm:$0xff]
      %v239 = vld [vmem:[%s192 + $0x140] sm:$0xff]
      %v240 = vld [vmem:[%s192 + $0x148] sm:$0xff]
      %v241 = vld [vmem:[%s192 + $0x150] sm:$0xff]
      %v242 = vld [vmem:[%s192 + $0x158] sm:$0xff]
      %v243 = vld [vmem:[%s192 + $0x160] sm:$0xff]
      %v244 = vld [vmem:[%s192 + $0x168] sm:$0xff]
      %v245 = vld [vmem:[%s192 + $0x170] sm:$0xff]
      %v246 = vld [vmem:[%s192 + $0x178] sm:$0xff]
      %v247 = vld [vmem:[%s192 + $0x180] sm:$0xff]
      %v248 = vld [vmem:[%s192 + $0x188] sm:$0xff]
      %v249 = vld [vmem:[%s192 + $0x190] sm:$0xff]
      %v250 = vld [vmem:[%s192 + $0x198] sm:$0xff]
      %v251 = vld [vmem:[%s192 + $0x1a0] sm:$0xff]
      %v252 = vld [vmem:[%s192 + $0x1a8] sm:$0xff]
      %v253 = vld [vmem:[%s192 + $0x1b0] sm:$0xff]
      %v254 = vld [vmem:[%s192 + $0x1b8] sm:$0xff]
      %v255 = vld [vmem:[%s192 + $0x1c0] sm:$0xff]
      %v256 = vld [vmem:[%s192 + $0x1c8] sm:$0xff]
      %v257 = vld [vmem:[%s192 + $0x1d0] sm:$0xff]
      %v258 = vld [vmem:[%s192 + $0x1d8] sm:$0xff]
      %v259 = vld [vmem:[%s192 + $0x1e0] sm:$0xff]
      %v260 = vld [vmem:[%s192 + $0x1e8] sm:$0xff]
      %v261 = vld [vmem:[%s192 + $0x1f0] sm:$0xff]
      %v262 = vld [vmem:[%s192 + $0x1f8] sm:$0xff]
      %v263 = vpack.c.bf16 %v201, %v199
      %v264 = vpack.c.bf16 %v202, %v200
      %v265 = vpack.c.bf16 %v205, %v203
      %v266 = vpack.c.bf16 %v206, %v204
      %v267 = vpack.c.bf16 %v209, %v207
      %v268 = vpack.c.bf16 %v210, %v208
      %v269 = vpack.c.bf16 %v213, %v211
      %v270 = vpack.c.bf16 %v214, %v212
      %v271 = vpack.c.bf16 %v217, %v215
      %v272 = vpack.c.bf16 %v218, %v216
      %v273 = vpack.c.bf16 %v221, %v219
      %v274 = vpack.c.bf16 %v222, %v220
      %v275 = vpack.c.bf16 %v225, %v223
      %v276 = vpack.c.bf16 %v226, %v224
      %v277 = vpack.c.bf16 %v229, %v227
      %v278 = vpack.c.bf16 %v230, %v228
      %v279 = vpack.c.bf16 %v233, %v231
      %v280 = vpack.c.bf16 %v234, %v232
      %v281 = vpack.c.bf16 %v237, %v235
      %v282 = vpack.c.bf16 %v238, %v236
      %v283 = vpack.c.bf16 %v241, %v239
      %v284 = vpack.c.bf16 %v242, %v240
      %v285 = vpack.c.bf16 %v245, %v243
      %v286 = vpack.c.bf16 %v246, %v244
      %v287 = vpack.c.bf16 %v249, %v247
      %v288 = vpack.c.bf16 %v250, %v248
      %v289 = vpack.c.bf16 %v253, %v251
      %v290 = vpack.c.bf16 %v254, %v252
      %v291 = vpack.c.bf16 %v257, %v255
      %v292 = vpack.c.bf16 %v258, %v256
      %v293 = vpack.c.bf16 %v261, %v259
      %v294 = vpack.c.bf16 %v262, %v260
      %v295 = vld [vmem:[%s1] sm:$0xf]
      %v296 = vld [vmem:[%s1 + $0x4] sm:$0xf]
      %v297 = vld [vmem:[%s1 + $0x8] sm:$0xf]
      %v298 = vld [vmem:[%s1 + $0xc] sm:$0xf]
      %v299 = vld [vmem:[%s1 + $0x10] sm:$0xf]
      %v300 = vld [vmem:[%s1 + $0x14] sm:$0xf]
      %v301 = vld [vmem:[%s1 + $0x18] sm:$0xf]
      %v302 = vld [vmem:[%s1 + $0x1c] sm:$0xf]
      %v303 = vld [vmem:[%s1 + $0x20] sm:$0xf]
      %v304 = vld [vmem:[%s1 + $0x24] sm:$0xf]
      %v305 = vld [vmem:[%s1 + $0x28] sm:$0xf]
      %v306 = vld [vmem:[%s1 + $0x2c] sm:$0xf]
      %v307 = vld [vmem:[%s1 + $0x30] sm:$0xf]
      %v308 = vld [vmem:[%s1 + $0x34] sm:$0xf]
      %v309 = vld [vmem:[%s1 + $0x38] sm:$0xf]
      %v310 = vld [vmem:[%s1 + $0x3c] sm:$0xf]
      %v311 = vld [vmem:[%s1 + $0x40] sm:$0xf]
      %v312 = vld [vmem:[%s1 + $0x44] sm:$0xf]
      %v313 = vld [vmem:[%s1 + $0x48] sm:$0xf]
      %v314 = vld [vmem:[%s1 + $0x4c] sm:$0xf]
      %v315 = vld [vmem:[%s1 + $0x50] sm:$0xf]
      %v316 = vld [vmem:[%s1 + $0x54] sm:$0xf]
      %v317 = vld [vmem:[%s1 + $0x58] sm:$0xf]
      %v318 = vld [vmem:[%s1 + $0x5c] sm:$0xf]
      %v319 = vld [vmem:[%s2] sm:$0x1]
      %v321 = vlaneseq
      %v322 = vshrl.u32 %v321, 7
      %v323 = vsub.s32 0, %v322
      %v324 = vrot.slane %v319, %v323
      %v350 = vunpack.c.l.b16 %v295
      %v351 = vunpack.c.l.b16 %v296
      %v352 = vunpack.c.l.b16 %v297
      %v353 = vunpack.c.l.b16 %v298
      %v354 = vunpack.c.l.b16 %v299
      %v355 = vunpack.c.l.b16 %v300
      %v356 = vunpack.c.l.b16 %v301
      %v357 = vunpack.c.l.b16 %v302
      %v358 = vunpack.c.l.b16 %v303
      %v359 = vunpack.c.l.b16 %v304
      %v360 = vunpack.c.l.b16 %v305
      %v361 = vunpack.c.l.b16 %v306
      %v362 = vunpack.c.l.b16 %v307
      %v363 = vunpack.c.l.b16 %v308
      %v364 = vunpack.c.l.b16 %v309
      %v365 = vunpack.c.l.b16 %v310
      %v366 = vunpack.c.l.b16 %v311
      %v367 = vunpack.c.l.b16 %v312
      %v368 = vunpack.c.l.b16 %v313
      %v369 = vunpack.c.l.b16 %v314
      %v370 = vunpack.c.l.b16 %v315
      %v371 = vunpack.c.l.b16 %v316
      %v372 = vunpack.c.l.b16 %v317
      %v373 = vunpack.c.l.b16 %v318
      %v374 = vpack.c.b16 %v351, %v350
      %v375 = vpack.c.b16 %v353, %v352
      %v376 = vpack.c.b16 %v355, %v354
      %v377 = vpack.c.b16 %v357, %v356
      %v378 = vpack.c.b16 %v359, %v358
      %v379 = vpack.c.b16 %v361, %v360
      %v380 = vpack.c.b16 %v363, %v362
      %v381 = vpack.c.b16 %v365, %v364
      %v382 = vpack.c.b16 %v367, %v366
      %v383 = vpack.c.b16 %v369, %v368
      %v384 = vpack.c.b16 %v371, %v370
      %v385 = vpack.c.b16 %v373, %v372
      %vm398 = vcmask 523264
      %v400 = vsel %vm398, %v264, 0
      %v403 = vsel %vm398, %v266, 0
      %v406 = vsel %vm398, %v268, 0
      %v409 = vsel %vm398, %v270, 0
      %v412 = vsel %vm398, %v272, 0
      %v415 = vsel %vm398, %v274, 0
      %v418 = vsel %vm398, %v276, 0
      %v421 = vsel %vm398, %v278, 0
      %v424 = vsel %vm398, %v280, 0
      %v427 = vsel %vm398, %v282, 0
      %v430 = vsel %vm398, %v284, 0
      %v433 = vsel %vm398, %v286, 0
      %v436 = vsel %vm398, %v288, 0
      %v439 = vsel %vm398, %v290, 0
      %v442 = vsel %vm398, %v292, 0
      %v445 = vsel %vm398, %v294, 0
      %447 = vmatprep.subr.bf16.mxu0 0
      %448 = vmatpush1.bf16.msra.mxu0 %v374
      %449 = vmatprep.subr.bf16.mxu0 0
      %450 = vmatpush1.bf16.msra.mxu0 %v375
      %451 = vmatprep.subr.bf16.mxu0 0
      %452 = vmatpush1.bf16.msra.mxu0 %v376
      %453 = vmatprep.subr.bf16.mxu0 0
      %454 = vmatpush1.bf16.msra.mxu0 %v377
      %455 = vmatprep.subr.bf16.mxu0 0
      %456 = vmatpush1.bf16.msra.mxu0 %v378
      %457 = vmatprep.subr.bf16.mxu0 0
      %458 = vmatpush1.bf16.msra.mxu0 %v379
      %459 = vmatprep.subr.bf16.mxu0 0
      %460 = vmatpush1.bf16.msra.mxu0 %v380
      %461 = vmatprep.subr.bf16.mxu0 0
      %462 = vmatpush1.bf16.msra.mxu0 %v381
      %463 = vmatprep.subr.bf16.mxu0 0
      %464 = vmatpush1.bf16.msra.mxu0 %v382
      %465 = vmatprep.subr.bf16.mxu0 0
      %466 = vmatpush1.bf16.msra.mxu0 %v383
      %467 = vmatprep.subr.bf16.mxu0 0
      %468 = vmatpush1.bf16.msra.mxu0 %v384
      %469 = vmatprep.subr.bf16.mxu0 0
      %470 = vmatpush1.bf16.msra.mxu0 %v385
      %471 = vmatprep.subr.bf16.mxu0 0
      %472 = vmatpush1.bf16.msra.mxu0 0
      %473 = vmatprep.subr.bf16.mxu0 0
      %474 = vmatpush1.bf16.msra.mxu0 0
      %475 = vmatprep.subr.bf16.mxu0 0
      %476 = vmatpush1.bf16.msra.mxu0 0
      %477 = vmatprep.subr.bf16.mxu0 0
      %478 = vmatpush1.bf16.msra.mxu0 0
      %479 = vmatprep.mubr.bf16.mxu0 %v400
      %480 = vmatmul.mubr.bf16.gmra.mrb[0].mxu0 %v263
      %v481 = vpop.f32.mrb[0].mxu0
      %v482 = vadd.f32 %v324, %v481
      %v483 = vpop.f32.mrb[0].mxu0
      %v484 = vpop.f32.mrb[0].mxu0
      %v485 = vadd.f32 %v324, %v484
      %v486 = vpop.f32.mrb[0].mxu0
      %487 = vmatprep.mubr.bf16.mxu0 %v403
      %488 = vmatmul.mubr.bf16.gmra.mrb[0].mxu0 %v265
      %v489 = vpop.f32.mrb[0].mxu0
      %v490 = vadd.f32 %v324, %v489
      %v491 = vpop.f32.mrb[0].mxu0
      %v492 = vpop.f32.mrb[0].mxu0
      %v493 = vadd.f32 %v324, %v492
      %v494 = vpop.f32.mrb[0].mxu0
      %495 = vmatprep.mubr.bf16.mxu0 %v406
      %496 = vmatmul.mubr.bf16.gmra.mrb[0].mxu0 %v267
      %v497 = vpop.f32.mrb[0].mxu0
      %v498 = vadd.f32 %v324, %v497
      %v499 = vpop.f32.mrb[0].mxu0
      %v500 = vpop.f32.mrb[0].mxu0
      %v501 = vadd.f32 %v324, %v500
      %v502 = vpop.f32.mrb[0].mxu0
      %503 = vmatprep.mubr.bf16.mxu0 %v409
      %504 = vmatmul.mubr.bf16.gmra.mrb[0].mxu0 %v269
      %v505 = vpop.f32.mrb[0].mxu0
      %v506 = vadd.f32 %v324, %v505
      %v507 = vpop.f32.mrb[0].mxu0
      %v508 = vpop.f32.mrb[0].mxu0
      %v509 = vadd.f32 %v324, %v508
      %v510 = vpop.f32.mrb[0].mxu0
      %511 = vmatprep.mubr.bf16.mxu0 %v412
      %512 = vmatmul.mubr.bf16.gmra.mrb[0].mxu0 %v271
      %v513 = vpop.f32.mrb[0].mxu0
      %v514 = vadd.f32 %v324, %v513
      %v515 = vpop.f32.mrb[0].mxu0
      %v516 = vpop.f32.mrb[0].mxu0
      %v517 = vadd.f32 %v324, %v516
      %v518 = vpop.f32.mrb[0].mxu0
      %519 = vmatprep.mubr.bf16.mxu0 %v415
      %520 = vmatmul.mubr.bf16.gmra.mrb[0].mxu0 %v273
      %v521 = vpop.f32.mrb[0].mxu0
      %v522 = vadd.f32 %v324, %v521
      %v523 = vpop.f32.mrb[0].mxu0
      %v524 = vpop.f32.mrb[0].mxu0
      %v525 = vadd.f32 %v324, %v524
      %v526 = vpop.f32.mrb[0].mxu0
      %527 = vmatprep.mubr.bf16.mxu0 %v418
      %528 = vmatmul.mubr.bf16.gmra.mrb[0].mxu0 %v275
      %v529 = vpop.f32.mrb[0].mxu0
      %v530 = vadd.f32 %v324, %v529
      %v531 = vpop.f32.mrb[0].mxu0
      %v532 = vpop.f32.mrb[0].mxu0
      %v533 = vadd.f32 %v324, %v532
      %v534 = vpop.f32.mrb[0].mxu0
      %535 = vmatprep.mubr.bf16.mxu0 %v421
      %536 = vmatmul.mubr.bf16.gmra.mrb[0].mxu0 %v277
      %v537 = vpop.f32.mrb[0].mxu0
      %v538 = vadd.f32 %v324, %v537
      %v539 = vpop.f32.mrb[0].mxu0
      %v540 = vpop.f32.mrb[0].mxu0
      %v541 = vadd.f32 %v324, %v540
      %v542 = vpop.f32.mrb[0].mxu0
      %543 = vmatprep.mubr.bf16.mxu0 %v424
      %544 = vmatmul.mubr.bf16.gmra.mrb[0].mxu0 %v279
      %v545 = vpop.f32.mrb[0].mxu0
      %v546 = vadd.f32 %v324, %v545
      %v547 = vpop.f32.mrb[0].mxu0
      %v548 = vpop.f32.mrb[0].mxu0
      %v549 = vadd.f32 %v324, %v548
      %v550 = vpop.f32.mrb[0].mxu0
      %551 = vmatprep.mubr.bf16.mxu0 %v427
      %552 = vmatmul.mubr.bf16.gmra.mrb[0].mxu0 %v281
      %v553 = vpop.f32.mrb[0].mxu0
      %v554 = vadd.f32 %v324, %v553
      %v555 = vpop.f32.mrb[0].mxu0
      %v556 = vpop.f32.mrb[0].mxu0
      %v557 = vadd.f32 %v324, %v556
      %v558 = vpop.f32.mrb[0].mxu0
      %559 = vmatprep.mubr.bf16.mxu0 %v430
      %560 = vmatmul.mubr.bf16.gmra.mrb[0].mxu0 %v283
      %v561 = vpop.f32.mrb[0].mxu0
      %v562 = vadd.f32 %v324, %v561
      %v563 = vpop.f32.mrb[0].mxu0
      %v564 = vpop.f32.mrb[0].mxu0
      %v565 = vadd.f32 %v324, %v564
      %v566 = vpop.f32.mrb[0].mxu0
      %567 = vmatprep.mubr.bf16.mxu0 %v433
      %568 = vmatmul.mubr.bf16.gmra.mrb[0].mxu0 %v285
      %v569 = vpop.f32.mrb[0].mxu0
      %v570 = vadd.f32 %v324, %v569
      %v571 = vpop.f32.mrb[0].mxu0
      %v572 = vpop.f32.mrb[0].mxu0
      %v573 = vadd.f32 %v324, %v572
      %v574 = vpop.f32.mrb[0].mxu0
      %575 = vmatprep.mubr.bf16.mxu0 %v436
      %576 = vmatmul.mubr.bf16.gmra.mrb[0].mxu0 %v287
      %v577 = vpop.f32.mrb[0].mxu0
      %v578 = vadd.f32 %v324, %v577
      %v579 = vpop.f32.mrb[0].mxu0
      %v580 = vpop.f32.mrb[0].mxu0
      %v581 = vadd.f32 %v324, %v580
      %v582 = vpop.f32.mrb[0].mxu0
      %583 = vmatprep.mubr.bf16.mxu0 %v439
      %584 = vmatmul.mubr.bf16.gmra.mrb[0].mxu0 %v289
      %v585 = vpop.f32.mrb[0].mxu0
      %v586 = vadd.f32 %v324, %v585
      %v587 = vpop.f32.mrb[0].mxu0
      %v588 = vpop.f32.mrb[0].mxu0
      %v589 = vadd.f32 %v324, %v588
      %v590 = vpop.f32.mrb[0].mxu0
      %591 = vmatprep.mubr.bf16.mxu0 %v442
      %592 = vmatmul.mubr.bf16.gmra.mrb[0].mxu0 %v291
      %v593 = vpop.f32.mrb[0].mxu0
      %v594 = vadd.f32 %v324, %v593
      %v595 = vpop.f32.mrb[0].mxu0
      %v596 = vpop.f32.mrb[0].mxu0
      %v597 = vadd.f32 %v324, %v596
      %v598 = vpop.f32.mrb[0].mxu0
      %599 = vmatprep.mubr.bf16.mxu0 %v445
      %600 = vmatmul.mubr.bf16.gmra.mrb[0].mxu0 %v293
      %v601 = vpop.f32.mrb[0].mxu0
      %v602 = vadd.f32 %v324, %v601
      %v603 = vpop.f32.mrb[0].mxu0
      %v604 = vpop.f32.mrb[0].mxu0
      %v605 = vadd.f32 %v324, %v604
      %v606 = vpop.f32.mrb[0].mxu0
      %607 = vdwg.mxu0
      %v608 = vld [vmem:[%s3] sm:$0xff]
      %v609 = vld [vmem:[%s3 + $0x8] sm:$0xff]
      %v610 = vld [vmem:[%s3 + $0x10] sm:$0xff]
      %v611 = vld [vmem:[%s3 + $0x18] sm:$0xff]
      %v612 = vld [vmem:[%s3 + $0x20] sm:$0xff]
      %v613 = vld [vmem:[%s3 + $0x28] sm:$0xff]
      %v614 = vld [vmem:[%s3 + $0x30] sm:$0xff]
      %v615 = vld [vmem:[%s3 + $0x38] sm:$0xff]
      %v616 = vld [vmem:[%s3 + $0x40] sm:$0xff]
      %v617 = vld [vmem:[%s3 + $0x48] sm:$0xff]
      %v618 = vld [vmem:[%s3 + $0x50] sm:$0xff]
      %v619 = vld [vmem:[%s3 + $0x58] sm:$0xff]
      %v620 = vld [vmem:[%s3 + $0x60] sm:$0xff]
      %v621 = vld [vmem:[%s3 + $0x68] sm:$0xff]
      %v622 = vld [vmem:[%s3 + $0x70] sm:$0xff]
      %v623 = vld [vmem:[%s3 + $0x78] sm:$0xff]
      %v624 = vld [vmem:[%s3 + $0x80] sm:$0xff]
      %v625 = vld [vmem:[%s3 + $0x88] sm:$0xff]
      %v626 = vld [vmem:[%s3 + $0x90] sm:$0xff]
      %v627 = vld [vmem:[%s3 + $0x98] sm:$0xff]
      %v628 = vld [vmem:[%s3 + $0xa0] sm:$0xff]
      %v629 = vld [vmem:[%s3 + $0xa8] sm:$0xff]
      %v630 = vld [vmem:[%s3 + $0xb0] sm:$0xff]
      %v631 = vld [vmem:[%s3 + $0xb8] sm:$0xff]
      %v632 = vld [vmem:[%s3 + $0xc0] sm:$0xff]
      %v633 = vld [vmem:[%s3 + $0xc8] sm:$0xff]
      %v634 = vld [vmem:[%s3 + $0xd0] sm:$0xff]
      %v635 = vld [vmem:[%s3 + $0xd8] sm:$0xff]
      %v636 = vld [vmem:[%s3 + $0xe0] sm:$0xff]
      %v637 = vld [vmem:[%s3 + $0xe8] sm:$0xff]
      %v638 = vld [vmem:[%s3 + $0xf0] sm:$0xff]
      %v639 = vld [vmem:[%s3 + $0xf8] sm:$0xff]
      %v640 = vadd.f32 %v482, %v608
      %v641 = vadd.f32 %v485, %v609
      %v642 = vadd.f32 %v490, %v610
      %v643 = vadd.f32 %v493, %v611
      %v644 = vadd.f32 %v498, %v612
      %v645 = vadd.f32 %v501, %v613
      %v646 = vadd.f32 %v506, %v614
      %v647 = vadd.f32 %v509, %v615
      %v648 = vadd.f32 %v514, %v616
      %v649 = vadd.f32 %v517, %v617
      %v650 = vadd.f32 %v522, %v618
      %v651 = vadd.f32 %v525, %v619
      %v652 = vadd.f32 %v530, %v620
      %v653 = vadd.f32 %v533, %v621
      %v654 = vadd.f32 %v538, %v622
      %v655 = vadd.f32 %v541, %v623
      %v656 = vadd.f32 %v546, %v624
      %v657 = vadd.f32 %v549, %v625
      %v658 = vadd.f32 %v554, %v626
      %v659 = vadd.f32 %v557, %v627
      %v660 = vadd.f32 %v562, %v628
      %v661 = vadd.f32 %v565, %v629
      %v662 = vadd.f32 %v570, %v630
      %v663 = vadd.f32 %v573, %v631
      %v664 = vadd.f32 %v578, %v632
      %v665 = vadd.f32 %v581, %v633
      %v666 = vadd.f32 %v586, %v634
      %v667 = vadd.f32 %v589, %v635
      %v668 = vadd.f32 %v594, %v636
      %v669 = vadd.f32 %v597, %v637
      %v670 = vadd.f32 %v602, %v638
      %v671 = vadd.f32 %v605, %v639
      %672 = vst [vmem:[%s197] sm:$0xff] %v640
      %673 = vst [vmem:[%s197 + $0x8] sm:$0xff] %v641
      %674 = vst [vmem:[%s197 + $0x10] sm:$0xff] %v642
      %675 = vst [vmem:[%s197 + $0x18] sm:$0xff] %v643
      %676 = vst [vmem:[%s197 + $0x20] sm:$0xff] %v644
      %677 = vst [vmem:[%s197 + $0x28] sm:$0xff] %v645
      %678 = vst [vmem:[%s197 + $0x30] sm:$0xff] %v646
      %679 = vst [vmem:[%s197 + $0x38] sm:$0xff] %v647
      %680 = vst [vmem:[%s197 + $0x40] sm:$0xff] %v648
      %681 = vst [vmem:[%s197 + $0x48] sm:$0xff] %v649
      %682 = vst [vmem:[%s197 + $0x50] sm:$0xff] %v650
      %683 = vst [vmem:[%s197 + $0x58] sm:$0xff] %v651
      %684 = vst [vmem:[%s197 + $0x60] sm:$0xff] %v652
      %685 = vst [vmem:[%s197 + $0x68] sm:$0xff] %v653
      %686 = vst [vmem:[%s197 + $0x70] sm:$0xff] %v654
      %687 = vst [vmem:[%s197 + $0x78] sm:$0xff] %v655
      %688 = vst [vmem:[%s197 + $0x80] sm:$0xff] %v656
      %689 = vst [vmem:[%s197 + $0x88] sm:$0xff] %v657
      %690 = vst [vmem:[%s197 + $0x90] sm:$0xff] %v658
      %691 = vst [vmem:[%s197 + $0x98] sm:$0xff] %v659
      %692 = vst [vmem:[%s197 + $0xa0] sm:$0xff] %v660
      %693 = vst [vmem:[%s197 + $0xa8] sm:$0xff] %v661
      %694 = vst [vmem:[%s197 + $0xb0] sm:$0xff] %v662
      %695 = vst [vmem:[%s197 + $0xb8] sm:$0xff] %v663
      %696 = vst [vmem:[%s197 + $0xc0] sm:$0xff] %v664
      %697 = vst [vmem:[%s197 + $0xc8] sm:$0xff] %v665
      %698 = vst [vmem:[%s197 + $0xd0] sm:$0xff] %v666
      %699 = vst [vmem:[%s197 + $0xd8] sm:$0xff] %v667
      %700 = vst [vmem:[%s197 + $0xe0] sm:$0xff] %v668
      %701 = vst [vmem:[%s197 + $0xe8] sm:$0xff] %v669
      %702 = vst [vmem:[%s197 + $0xf0] sm:$0xff] %v670
      %703 = vst [vmem:[%s197 + $0xf8] sm:$0xff] %v671
      %p704 = scmp.lt.s32.totalorder %s15, 1
      %s705 = scalar_select %p704, %s15, 1
      %s706 = smul.addr %s705, 32
      %s707 = smul.addr %s706, 8
      %s708 = scalar_lea.vmem %s4, %s707
      // Predicated region
      $region37: #{tnet8_forward.4} parent=35 // pred_check
        %p709 = pneg %p122
      $region38: #{tnet8_forward.4} parent=35 // pred_check_branch
        %711 = sbr.rel (%p709) target = $region40
      $region39: #{tnet8_forward.4} parent=35 // pred_region
        _
      $region40: #{tnet8_forward.4} parent=35 // pred_fallthru
        _
    $region36: #{tnet8_forward.4} parent=5 // pred_fallthru
      _
    %p712 = scmp.le.s32.totalorder 2, %s10
    // Predicated region
    $region41: #{tnet8_forward.4} parent=5 // pred_check
      %p713 = pneg %p712
    $region42: #{tnet8_forward.4} parent=5 // pred_check_branch
      %715 = sbr.rel (%p713) target = $region44
    $region43: #{tnet8_forward.4} parent=5 // pred_region
      %s716 = ssub.s32 %s10, 2
      // Predicated region
      $region45: #{tnet8_forward.4} parent=43 // pred_check
        %p717 = pneg %p128
      $region46: #{tnet8_forward.4} parent=43 // pred_check_branch
        %719 = sbr.rel (%p717) target = $region48
      $region47: #{tnet8_forward.4} parent=43 // pred_region
        %p720 = scmp.lt.s32.totalorder %s16, 1
        %s721 = scalar_select %p720, %s16, 1
        %s722 = smul.addr %s721, 32
        %s723 = smul.addr %s722, 8
        %s724 = scalar_lea.vmem %s4, %s723
      $region48: #{tnet8_forward.4} parent=43 // pred_fallthru
        _
    $region44: #{tnet8_forward.4} parent=5 // pred_fallthru
      _
  $region6: #{tnet8_forward.4} parent=0 // loop_footer
    %s14 = sadd.s32 1, %s10
  $region7: #{tnet8_forward.4} parent=0 // loop_footer_branch
    %9 = sbr.rel target = $region3
  $region8: #{tnet8_forward.4} parent=0 // loop_exit
    _

// kernel: tnet8_forward.7
$region0: #{tnet8_forward.7}
  #allocation0 [shape = 'u32[]', space=smem, size = 0x4, offset = 0x4, fixed_abs, tag = 'smem constant byte address 0x4 - core index']
  #allocation1 [shape = 'u32[144,128]{1,0:T(1,128)}', space=vmem, size = 0x12000, scoped, tag = 'internal scratch']
  #allocation2 [shape = 'f32[1,1]{1,0:T(1,128)S(1)}', space=vmem, size = 0x200, scoped, tag = 'scoped memory for tnet8_forward.7']
  %s0 = inlined_call_operand.vmem [shape: f32[2,256,128], index: 0, kind: input, shape index: {}]
  %s1 = inlined_call_operand.vmem [shape: f32[1,128], index: 1, kind: input, shape index: {}]
  %s2 = inlined_call_operand.vmem [shape: f32[1,128], index: 2, kind: input, shape index: {}]
  %s3 = inlined_call_operand.vmem [shape: f32[1,128], index: 3, kind: input, shape index: {}]
  %s4 = inlined_call_operand.<no memory space> [shape: f32[1,1], index: 4, kind: input, shape index: {}]
  %s5 = inlined_call_operand.vmem [shape: f32[2,1,256], index: 5, kind: output, shape index: {}]
  %s6 = sld [smem:[#allocation0]]
  $region53: #{tnet8_forward.7} parent=0
    _
  %s8 = ssub.s32 1, %s6
  %s9 = scalar_select 0, %s8, %s6
  %v10 = vstv %s4
  %11 = vst [vmem:[#allocation2] sm:$0x1] %v10
  loop: start=0, step=1, limit=4
  $region2: #{tnet8_forward.7} parent=0 // loop_pre_header
    _
  $region3: #{tnet8_forward.7} parent=0 // loop_header
    %s13 = sphi 0, %s17
    %p14 = scmp.ge.s32.totalorder %s13, 4
    %s23 = sphi 0, %s25
    %s26 = sphi 0, %s23
    %s27 = sphi 0, %s26
    %s43 = sphi 0, %s27
    %s47 = sphi 0, %s47
    %s49 = sphi 0, %s47
    %s50 = sphi 0, %s49
    %s64 = sphi 0, %s50
    %s68 = sphi 0, %s68
    %s70 = sphi 0, %s68
    %s71 = sphi 0, %s70
    %s85 = sphi 0, %s71
    %s89 = sphi 0, %s89
    %s91 = sphi 0, %s89
    %s92 = sphi 0, %s91
    %s106 = sphi 0, %s92
    %s110 = sphi 0, %s110
    %s112 = sphi 0, %s110
    %s113 = sphi 0, %s112
    %s127 = sphi 0, %s113
    %s133 = sphi 0, %s135
    %s136 = sphi 0, %s133
    %s137 = sphi 0, %s136
    %s153 = sphi 0, %s137
  $region4: #{tnet8_forward.7} parent=0 // loop_header_branch
    %16 = sbr.rel (%p14) target = $region8
  $region5: #{tnet8_forward.7} parent=0 // loop_body
    %s18 = ssub.s32 %s13, 1
    %s19 = ssub.s32 %s13, 2
    %s20 = sadd.s32 %s13, 1
    %s21 = ssub.s32 %s13, %s20
    %p22 = scmp.eq.s32.totalorder %s21, 0
    %s24 = sadd.s32 %s23, 1
    %s25 = scalar_select %p22, %s23, %s24
    %p28 = pneg %p22
    %p29 = scmp.eq.s32.totalorder %s13, 1
    %p30 = por %p28, %p29
    %p31 = scmp.ne.s32.totalorder %s23, %s26
    %p32 = scmp.eq.s32.totalorder %s13, 0
    %p33 = por %p31, %p32
    %p34 = scmp.ne.s32.totalorder %s23, %s26
    %p35 = scmp.eq.s32.totalorder %s18, 1
    %p36 = por %p34, %p35
    %p37 = scmp.ne.s32.totalorder %s26, %s27
    %p38 = scmp.eq.s32.totalorder %s18, 0
    %p39 = por %p37, %p38
    %p40 = scmp.ne.s32.totalorder %s26, %s27
    %p41 = scmp.eq.s32.totalorder %s19, 1
    %p42 = por %p40, %p41
    %p44 = scmp.ne.s32.totalorder %s27, %s43
    %p45 = scmp.eq.s32.totalorder %s19, 0
    %p46 = por %p44, %p45
    %s48 = sadd.s32 %s47, 1
    %p51 = scmp.eq.s32.totalorder %s13, 1
    %p52 = scmp.ne.s32.totalorder %s47, %s49
    %p53 = scmp.eq.s32.totalorder %s13, 0
    %p54 = por %p52, %p53
    %p55 = scmp.ne.s32.totalorder %s47, %s49
    %p56 = scmp.eq.s32.totalorder %s18, 1
    %p57 = por %p55, %p56
    %p58 = scmp.ne.s32.totalorder %s49, %s50
    %p59 = scmp.eq.s32.totalorder %s18, 0
    %p60 = por %p58, %p59
    %p61 = scmp.ne.s32.totalorder %s49, %s50
    %p62 = scmp.eq.s32.totalorder %s19, 1
    %p63 = por %p61, %p62
    %p65 = scmp.ne.s32.totalorder %s50, %s64
    %p66 = scmp.eq.s32.totalorder %s19, 0
    %p67 = por %p65, %p66
    %s69 = sadd.s32 %s68, 1
    %p72 = scmp.eq.s32.totalorder %s13, 1
    %p73 = scmp.ne.s32.totalorder %s68, %s70
    %p74 = scmp.eq.s32.totalorder %s13, 0
    %p75 = por %p73, %p74
    %p76 = scmp.ne.s32.totalorder %s68, %s70
    %p77 = scmp.eq.s32.totalorder %s18, 1
    %p78 = por %p76, %p77
    %p79 = scmp.ne.s32.totalorder %s70, %s71
    %p80 = scmp.eq.s32.totalorder %s18, 0
    %p81 = por %p79, %p80
    %p82 = scmp.ne.s32.totalorder %s70, %s71
    %p83 = scmp.eq.s32.totalorder %s19, 1
    %p84 = por %p82, %p83
    %p86 = scmp.ne.s32.totalorder %s71, %s85
    %p87 = scmp.eq.s32.totalorder %s19, 0
    %p88 = por %p86, %p87
    %s90 = sadd.s32 %s89, 1
    %p93 = scmp.eq.s32.totalorder %s13, 1
    %p94 = scmp.ne.s32.totalorder %s89, %s91
    %p95 = scmp.eq.s32.totalorder %s13, 0
    %p96 = por %p94, %p95
    %p97 = scmp.ne.s32.totalorder %s89, %s91
    %p98 = scmp.eq.s32.totalorder %s18, 1
    %p99 = por %p97, %p98
    %p100 = scmp.ne.s32.totalorder %s91, %s92
    %p101 = scmp.eq.s32.totalorder %s18, 0
    %p102 = por %p100, %p101
    %p103 = scmp.ne.s32.totalorder %s91, %s92
    %p104 = scmp.eq.s32.totalorder %s19, 1
    %p105 = por %p103, %p104
    %p107 = scmp.ne.s32.totalorder %s92, %s106
    %p108 = scmp.eq.s32.totalorder %s19, 0
    %p109 = por %p107, %p108
    %s111 = sadd.s32 %s110, 1
    %p114 = scmp.eq.s32.totalorder %s13, 1
    %p115 = scmp.ne.s32.totalorder %s110, %s112
    %p116 = scmp.eq.s32.totalorder %s13, 0
    %p117 = por %p115, %p116
    %p118 = scmp.ne.s32.totalorder %s110, %s112
    %p119 = scmp.eq.s32.totalorder %s18, 1
    %p120 = por %p118, %p119
    %p121 = scmp.ne.s32.totalorder %s112, %s113
    %p122 = scmp.eq.s32.totalorder %s18, 0
    %p123 = por %p121, %p122
    %p124 = scmp.ne.s32.totalorder %s112, %s113
    %p125 = scmp.eq.s32.totalorder %s19, 1
    %p126 = por %p124, %p125
    %p128 = scmp.ne.s32.totalorder %s113, %s127
    %p129 = scmp.eq.s32.totalorder %s19, 0
    %p130 = por %p128, %p129
    %s131 = ssub.s32 %s13, %s20
    %p132 = scmp.eq.s32.totalorder %s131, 0
    %s134 = sadd.s32 %s133, 1
    %s135 = scalar_select %p132, %s133, %s134
    %p138 = pneg %p132
    %p139 = scmp.eq.s32.totalorder %s13, 1
    %p140 = por %p138, %p139
    %p141 = scmp.ne.s32.totalorder %s133, %s136
    %p142 = scmp.eq.s32.totalorder %s13, 0
    %p143 = por %p141, %p142
    %p144 = scmp.ne.s32.totalorder %s133, %s136
    %p145 = scmp.eq.s32.totalorder %s18, 1
    %p146 = por %p144, %p145
    %p147 = scmp.ne.s32.totalorder %s136, %s137
    %p148 = scmp.eq.s32.totalorder %s18, 0
    %p149 = por %p147, %p148
    %p150 = scmp.ne.s32.totalorder %s136, %s137
    %p151 = scmp.eq.s32.totalorder %s19, 1
    %p152 = por %p150, %p151
    %p154 = scmp.ne.s32.totalorder %s137, %s153
    %p155 = scmp.eq.s32.totalorder %s19, 0
    %p156 = por %p154, %p155
    %p157 = scmp.le.s32.totalorder 1, %s13
    %p158 = scmp.lt.s32.totalorder %s13, 3
    %p159 = pnand %p157, %p158
    %p160 = pneg %p159
    // Predicated region
    $region9: #{tnet8_forward.7} parent=5 // pred_check
      _
    $region10: #{tnet8_forward.7} parent=5 // pred_check_branch
      %162 = sbr.rel (%p159) target = $region12
    $region11: #{tnet8_forward.7} parent=5 // pred_region
      %s163 = ssub.s32 %s13, 1
      // Predicated region
      $region13: #{tnet8_forward.7} parent=11 // pred_check
        %p164 = pneg %p60
      $region14: #{tnet8_forward.7} parent=11 // pred_check_branch
        %166 = sbr.rel (%p164) target = $region16
      $region15: #{tnet8_forward.7} parent=11 // pred_region
        _
      $region16: #{tnet8_forward.7} parent=11 // pred_fallthru
        _
      // Predicated region
      $region17: #{tnet8_forward.7} parent=11 // pred_check
        %p167 = pneg %p81
      $region18: #{tnet8_forward.7} parent=11 // pred_check_branch
        %169 = sbr.rel (%p167) target = $region20
      $region19: #{tnet8_forward.7} parent=11 // pred_region
        _
      $region20: #{tnet8_forward.7} parent=11 // pred_fallthru
        _
      // Predicated region
      $region21: #{tnet8_forward.7} parent=11 // pred_check
        %p170 = pneg %p102
      $region22: #{tnet8_forward.7} parent=11 // pred_check_branch
        %172 = sbr.rel (%p170) target = $region24
      $region23: #{tnet8_forward.7} parent=11 // pred_region
        _
      $region24: #{tnet8_forward.7} parent=11 // pred_fallthru
        _
      // Predicated region
      $region25: #{tnet8_forward.7} parent=11 // pred_check
        %p173 = pneg %p123
      $region26: #{tnet8_forward.7} parent=11 // pred_check_branch
        %175 = sbr.rel (%p173) target = $region28
      $region27: #{tnet8_forward.7} parent=11 // pred_region
        _
      $region28: #{tnet8_forward.7} parent=11 // pred_fallthru
        _
    $region12: #{tnet8_forward.7} parent=5 // pred_fallthru
      _
    %p176 = scmp.lt.s32.totalorder %s13, 2
    // Predicated region
    $region29: #{tnet8_forward.7} parent=5 // pred_check
      %p177 = pneg %p176
    $region30: #{tnet8_forward.7} parent=5 // pred_check_branch
      %179 = sbr.rel (%p177) target = $region32
    $region31: #{tnet8_forward.7} parent=5 // pred_region
      // Predicated region
      $region33: #{tnet8_forward.7} parent=31 // pred_check
        %p180 = pneg %p33
      $region34: #{tnet8_forward.7} parent=31 // pred_check_branch
        %182 = sbr.rel (%p180) target = $region36
      $region35: #{tnet8_forward.7} parent=31 // pred_region
        %p183 = scmp.lt.s32.totalorder %s13, 1
        %s184 = scalar_select %p183, %s13, 1
        %s185 = smul.addr %s184, 32
        %s186 = smul.addr %s185, 8
        %s187 = scalar_lea.vmem %s0, %s186
      $region36: #{tnet8_forward.7} parent=31 // pred_fallthru
        _
    $region32: #{tnet8_forward.7} parent=5 // pred_fallthru
      _
    %p188 = scmp.le.s32.totalorder 1, %s13
    %p189 = scmp.lt.s32.totalorder %s13, 3
    %p190 = pnand %p188, %p189
    %p191 = pneg %p190
    // Predicated region
    $region37: #{tnet8_forward.7} parent=5 // pred_check
      _
    $region38: #{tnet8_forward.7} parent=5 // pred_check_branch
      %193 = sbr.rel (%p190) target = $region40
    $region39: #{tnet8_forward.7} parent=5 // pred_region
      %s194 = ssub.s32 %s13, 1
      %p195 = scmp.lt.s32.totalorder %s18, 1
      %s196 = scalar_select %p195, %s18, 1
      %s197 = smul.addr %s196, 32
      %s198 = smul.addr %s197, 8
      %s199 = scalar_lea.vmem %s0, %s198
      %p200 = pneg %p39
      %p201 = pneg %p36
      %p202 = pneg %p60
      %p203 = pneg %p57
      %p204 = pneg %p81
      %p205 = pneg %p78
      %p206 = pneg %p102
      %p207 = pneg %p99
      %p208 = pneg %p123
      %p209 = pneg %p120
      %p210 = pneg %p149
      %p211 = pneg %p146
      %p212 = scmp.lt.s32.totalorder %s18, 1
      %s213 = scalar_select %p212, %s18, 1
      %s214 = smul.addr %s213, 2
      %s215 = scalar_lea.vmem %s5, %s214
      %p216 = scmp.lt.s32.totalorder %s18, 1
      %s217 = scalar_select %p216, %s18, 1
      %s218 = smul.addr %s217, 32
      %s219 = smul.addr %s218, 8
      %s220 = scalar_lea.vmem %s0, %s219
      %p221 = scmp.lt.s32.totalorder %s18, 1
      %s222 = scalar_select %p221, %s18, 1
      %s223 = smul.addr %s222, 2
      %s224 = scalar_lea.vmem %s5, %s223
      %v225 = vld [vmem:[%s220] sm:$0xff]
      %v226 = vld [vmem:[%s220 + $0x8] sm:$0xff]
      %v227 = vld [vmem:[%s220 + $0x10] sm:$0xff]
      %v228 = vld [vmem:[%s220 + $0x18] sm:$0xff]
      %v229 = vld [vmem:[%s220 + $0x20] sm:$0xff]
      %v230 = vld [vmem:[%s220 + $0x28] sm:$0xff]
      %v231 = vld [vmem:[%s220 + $0x30] sm:$0xff]
      %v232 = vld [vmem:[%s220 + $0x38] sm:$0xff]
      %v233 = vld [vmem:[%s220 + $0x40] sm:$0xff]
      %v234 = vld [vmem:[%s220 + $0x48] sm:$0xff]
      %v235 = vld [vmem:[%s220 + $0x50] sm:$0xff]
      %v236 = vld [vmem:[%s220 + $0x58] sm:$0xff]
      %v237 = vld [vmem:[%s220 + $0x60] sm:$0xff]
      %v238 = vld [vmem:[%s220 + $0x68] sm:$0xff]
      %v239 = vld [vmem:[%s220 + $0x70] sm:$0xff]
      %v240 = vld [vmem:[%s220 + $0x78] sm:$0xff]
      %v241 = vld [vmem:[%s220 + $0x80] sm:$0xff]
      %v242 = vld [vmem:[%s220 + $0x88] sm:$0xff]
      %v243 = vld [vmem:[%s220 + $0x90] sm:$0xff]
      %v244 = vld [vmem:[%s220 + $0x98] sm:$0xff]
      %v245 = vld [vmem:[%s220 + $0xa0] sm:$0xff]
      %v246 = vld [vmem:[%s220 + $0xa8] sm:$0xff]
      %v247 = vld [vmem:[%s220 + $0xb0] sm:$0xff]
      %v248 = vld [vmem:[%s220 + $0xb8] sm:$0xff]
      %v249 = vld [vmem:[%s220 + $0xc0] sm:$0xff]
      %v250 = vld [vmem:[%s220 + $0xc8] sm:$0xff]
      %v251 = vld [vmem:[%s220 + $0xd0] sm:$0xff]
      %v252 = vld [vmem:[%s220 + $0xd8] sm:$0xff]
      %v253 = vld [vmem:[%s220 + $0xe0] sm:$0xff]
      %v254 = vld [vmem:[%s220 + $0xe8] sm:$0xff]
      %v255 = vld [vmem:[%s220 + $0xf0] sm:$0xff]
      %v256 = vld [vmem:[%s220 + $0xf8] sm:$0xff]
      %v257 = vld [vmem:[%s1] sm:$0x1]
      %v258 = vld [vmem:[%s2] sm:$0x1]
      %259 = vadd.xlane.f32.xlu0 %v225
      %v260 = vpop.xlane.xlu0 %259
      %261 = vadd.xlane.f32.xlu0 %v226
      %v262 = vpop.xlane.xlu0 %261
      %263 = vadd.xlane.f32.xlu0 %v227
      %v264 = vpop.xlane.xlu0 %263
      %265 = vadd.xlane.f32.xlu0 %v228
      %v266 = vpop.xlane.xlu0 %265
      %267 = vadd.xlane.f32.xlu0 %v229
      %v268 = vpop.xlane.xlu0 %267
      %269 = vadd.xlane.f32.xlu0 %v230
      %v270 = vpop.xlane.xlu0 %269
      %271 = vadd.xlane.f32.xlu0 %v231
      %v272 = vpop.xlane.xlu0 %271
      %273 = vadd.xlane.f32.xlu0 %v232
      %v274 = vpop.xlane.xlu0 %273
      %275 = vadd.xlane.f32.xlu0 %v233
      %v276 = vpop.xlane.xlu0 %275
      %277 = vadd.xlane.f32.xlu0 %v234
      %v278 = vpop.xlane.xlu0 %277
      %279 = vadd.xlane.f32.xlu0 %v235
      %v280 = vpop.xlane.xlu0 %279
      %281 = vadd.xlane.f32.xlu0 %v236
      %v282 = vpop.xlane.xlu0 %281
      %283 = vadd.xlane.f32.xlu0 %v237
      %v284 = vpop.xlane.xlu0 %283
      %285 = vadd.xlane.f32.xlu0 %v238
      %v286 = vpop.xlane.xlu0 %285
      %287 = vadd.xlane.f32.xlu0 %v239
      %v288 = vpop.xlane.xlu0 %287
      %289 = vadd.xlane.f32.xlu0 %v240
      %v290 = vpop.xlane.xlu0 %289
      %291 = vadd.xlane.f32.xlu0 %v241
      %v292 = vpop.xlane.xlu0 %291
      %293 = vadd.xlane.f32.xlu0 %v242
      %v294 = vpop.xlane.xlu0 %293
      %295 = vadd.xlane.f32.xlu0 %v243
      %v296 = vpop.xlane.xlu0 %295
      %297 = vadd.xlane.f32.xlu0 %v244
      %v298 = vpop.xlane.xlu0 %297
      %299 = vadd.xlane.f32.xlu0 %v245
      %v300 = vpop.xlane.xlu0 %299
      %301 = vadd.xlane.f32.xlu0 %v246
      %v302 = vpop.xlane.xlu0 %301
      %303 = vadd.xlane.f32.xlu0 %v247
      %v304 = vpop.xlane.xlu0 %303
      %305 = vadd.xlane.f32.xlu0 %v248
      %v306 = vpop.xlane.xlu0 %305
      %307 = vadd.xlane.f32.xlu0 %v249
      %v308 = vpop.xlane.xlu0 %307
      %309 = vadd.xlane.f32.xlu0 %v250
      %v310 = vpop.xlane.xlu0 %309
      %311 = vadd.xlane.f32.xlu0 %v251
      %v312 = vpop.xlane.xlu0 %311
      %313 = vadd.xlane.f32.xlu0 %v252
      %v314 = vpop.xlane.xlu0 %313
      %315 = vadd.xlane.f32.xlu0 %v253
      %v316 = vpop.xlane.xlu0 %315
      %317 = vadd.xlane.f32.xlu0 %v254
      %v318 = vpop.xlane.xlu0 %317
      %319 = vadd.xlane.f32.xlu0 %v255
      %v320 = vpop.xlane.xlu0 %319
      %321 = vadd.xlane.f32.xlu0 %v256
      %v322 = vpop.xlane.xlu0 %321
      %v323 = vrcp.pop 128.0
      %v324 = vmul.f32 %v260, %v323
      %v325 = vmul.f32 %v262, %v323
      %v326 = vmul.f32 %v264, %v323
      %v327 = vmul.f32 %v266, %v323
      %v328 = vmul.f32 %v268, %v323
      %v329 = vmul.f32 %v270, %v323
      %v330 = vmul.f32 %v272, %v323
      %v331 = vmul.f32 %v274, %v323
      %v332 = vmul.f32 %v276, %v323
      %v333 = vmul.f32 %v278, %v323
      %v334 = vmul.f32 %v280, %v323
      %v335 = vmul.f32 %v282, %v323
      %v336 = vmul.f32 %v284, %v323
      %v337 = vmul.f32 %v286, %v323
      %v338 = vmul.f32 %v288, %v323
      %v339 = vmul.f32 %v290, %v323
      %v340 = vmul.f32 %v292, %v323
      %v341 = vmul.f32 %v294, %v323
      %v342 = vmul.f32 %v296, %v323
      %v343 = vmul.f32 %v298, %v323
      %v344 = vmul.f32 %v300, %v323
      %v345 = vmul.f32 %v302, %v323
      %v346 = vmul.f32 %v304, %v323
      %v347 = vmul.f32 %v306, %v323
      %v348 = vmul.f32 %v308, %v323
      %v349 = vmul.f32 %v310, %v323
      %v350 = vmul.f32 %v312, %v323
      %v351 = vmul.f32 %v314, %v323
      %v352 = vmul.f32 %v316, %v323
      %v353 = vmul.f32 %v318, %v323
      %v354 = vmul.f32 %v320, %v323
      %v355 = vmul.f32 %v322, %v323
      %v356 = vsub.f32 %v225, %v324
      %v357 = vsub.f32 %v226, %v325
      %v358 = vsub.f32 %v227, %v326
      %v359 = vsub.f32 %v228, %v327
      %v360 = vsub.f32 %v229, %v328
      %v361 = vsub.f32 %v230, %v329
      %v362 = vsub.f32 %v231, %v330
      %v363 = vsub.f32 %v232, %v331
      %v364 = vsub.f32 %v233, %v332
      %v365 = vsub.f32 %v234, %v333
      %v366 = vsub.f32 %v235, %v334
      %v367 = vsub.f32 %v236, %v335
      %v368 = vsub.f32 %v237, %v336
      %v369 = vsub.f32 %v238, %v337
      %v370 = vsub.f32 %v239, %v338
      %v371 = vsub.f32 %v240, %v339
      %v372 = vsub.f32 %v241, %v340
      %v373 = vsub.f32 %v242, %v341
      %v374 = vsub.f32 %v243, %v342
      %v375 = vsub.f32 %v244, %v343
      %v376 = vsub.f32 %v245, %v344
      %v377 = vsub.f32 %v246, %v345
      %v378 = vsub.f32 %v247, %v346
      %v379 = vsub.f32 %v248, %v347
      %v380 = vsub.f32 %v249, %v348
      %v381 = vsub.f32 %v250, %v349
      %v382 = vsub.f32 %v251, %v350
      %v383 = vsub.f32 %v252, %v351
      %v384 = vsub.f32 %v253, %v352
      %v385 = vsub.f32 %v254, %v353
      %v386 = vsub.f32 %v255, %v354
      %v387 = vsub.f32 %v256, %v355
      %v388 = vmul.f32 %v356, %v356
      %v389 = vmul.f32 %v357, %v357
      %v390 = vmul.f32 %v358, %v358
      %v391 = vmul.f32 %v359, %v359
      %v392 = vmul.f32 %v360, %v360
      %v393 = vmul.f32 %v361, %v361
      %v394 = vmul.f32 %v362, %v362
      %v395 = vmul.f32 %v363, %v363
      %v396 = vmul.f32 %v364, %v364
      %v397 = vmul.f32 %v365, %v365
      %v398 = vmul.f32 %v366, %v366
      %v399 = vmul.f32 %v367, %v367
      %v400 = vmul.f32 %v368, %v368
      %v401 = vmul.f32 %v369, %v369
      %v402 = vmul.f32 %v370, %v370
      %v403 = vmul.f32 %v371, %v371
      %v404 = vmul.f32 %v372, %v372
      %v405 = vmul.f32 %v373, %v373
      %v406 = vmul.f32 %v374, %v374
      %v407 = vmul.f32 %v375, %v375
      %v408 = vmul.f32 %v376, %v376
      %v409 = vmul.f32 %v377, %v377
      %v410 = vmul.f32 %v378, %v378
      %v411 = vmul.f32 %v379, %v379
      %v412 = vmul.f32 %v380, %v380
      %v413 = vmul.f32 %v381, %v381
      %v414 = vmul.f32 %v382, %v382
      %v415 = vmul.f32 %v383, %v383
      %v416 = vmul.f32 %v384, %v384
      %v417 = vmul.f32 %v385, %v385
      %v418 = vmul.f32 %v386, %v386
      %v419 = vmul.f32 %v387, %v387
      %420 = vadd.xlane.f32.xlu0 %v388
      %v421 = vpop.xlane.xlu0 %420
      %422 = vadd.xlane.f32.xlu0 %v389
      %v423 = vpop.xlane.xlu0 %422
      %424 = vadd.xlane.f32.xlu0 %v390
      %v425 = vpop.xlane.xlu0 %424
      %426 = vadd.xlane.f32.xlu0 %v391
      %v427 = vpop.xlane.xlu0 %426
      %428 = vadd.xlane.f32.xlu0 %v392
      %v429 = vpop.xlane.xlu0 %428
      %430 = vadd.xlane.f32.xlu0 %v393
      %v431 = vpop.xlane.xlu0 %430
      %432 = vadd.xlane.f32.xlu0 %v394
      %v433 = vpop.xlane.xlu0 %432
      %434 = vadd.xlane.f32.xlu0 %v395
      %v435 = vpop.xlane.xlu0 %434
      %436 = vadd.xlane.f32.xlu0 %v396
      %v437 = vpop.xlane.xlu0 %436
      %438 = vadd.xlane.f32.xlu0 %v397
      %v439 = vpop.xlane.xlu0 %438
      %440 = vadd.xlane.f32.xlu0 %v398
      %v441 = vpop.xlane.xlu0 %440
      %442 = vadd.xlane.f32.xlu0 %v399
      %v443 = vpop.xlane.xlu0 %442
      %444 = vadd.xlane.f32.xlu0 %v400
      %v445 = vpop.xlane.xlu0 %444
      %446 = vadd.xlane.f32.xlu0 %v401
      %v447 = vpop.xlane.xlu0 %446
      %448 = vadd.xlane.f32.xlu0 %v402
      %v449 = vpop.xlane.xlu0 %448
      %450 = vadd.xlane.f32.xlu0 %v403
      %v451 = vpop.xlane.xlu0 %450
      %452 = vadd.xlane.f32.xlu0 %v404
      %v453 = vpop.xlane.xlu0 %452
      %454 = vadd.xlane.f32.xlu0 %v405
      %v455 = vpop.xlane.xlu0 %454
      %456 = vadd.xlane.f32.xlu0 %v406
      %v457 = vpop.xlane.xlu0 %456
      %458 = vadd.xlane.f32.xlu0 %v407
      %v459 = vpop.xlane.xlu0 %458
      %460 = vadd.xlane.f32.xlu0 %v408
      %v461 = vpop.xlane.xlu0 %460
      %462 = vadd.xlane.f32.xlu0 %v409
      %v463 = vpop.xlane.xlu0 %462
      %464 = vadd.xlane.f32.xlu0 %v410
      %v465 = vpop.xlane.xlu0 %464
      %466 = vadd.xlane.f32.xlu0 %v411
      %v467 = vpop.xlane.xlu0 %466
      %468 = vadd.xlane.f32.xlu0 %v412
      %v469 = vpop.xlane.xlu0 %468
      %470 = vadd.xlane.f32.xlu0 %v413
      %v471 = vpop.xlane.xlu0 %470
      %472 = vadd.xlane.f32.xlu0 %v414
      %v473 = vpop.xlane.xlu0 %472
      %474 = vadd.xlane.f32.xlu0 %v415
      %v475 = vpop.xlane.xlu0 %474
      %476 = vadd.xlane.f32.xlu0 %v416
      %v477 = vpop.xlane.xlu0 %476
      %478 = vadd.xlane.f32.xlu0 %v417
      %v479 = vpop.xlane.xlu0 %478
      %480 = vadd.xlane.f32.xlu0 %v418
      %v481 = vpop.xlane.xlu0 %480
      %482 = vadd.xlane.f32.xlu0 %v419
      %v483 = vpop.xlane.xlu0 %482
      %v484 = vmul.f32 %v421, %v323
      %v485 = vmul.f32 %v423, %v323
      %v486 = vmul.f32 %v425, %v323
      %v487 = vmul.f32 %v427, %v323
      %v488 = vmul.f32 %v429, %v323
      %v489 = vmul.f32 %v431, %v323
      %v490 = vmul.f32 %v433, %v323
      %v491 = vmul.f32 %v435, %v323
      %v492 = vmul.f32 %v437, %v323
      %v493 = vmul.f32 %v439, %v323
      %v494 = vmul.f32 %v441, %v323
      %v495 = vmul.f32 %v443, %v323
      %v496 = vmul.f32 %v445, %v323
      %v497 = vmul.f32 %v447, %v323
      %v498 = vmul.f32 %v449, %v323
      %v499 = vmul.f32 %v451, %v323
      %v500 = vmul.f32 %v453, %v323
      %v501 = vmul.f32 %v455, %v323
      %v502 = vmul.f32 %v457, %v323
      %v503 = vmul.f32 %v459, %v323
      %v504 = vmul.f32 %v461, %v323
      %v505 = vmul.f32 %v463, %v323
      %v506 = vmul.f32 %v465, %v323
      %v507 = vmul.f32 %v467, %v323
      %v508 = vmul.f32 %v469, %v323
      %v509 = vmul.f32 %v471, %v323
      %v510 = vmul.f32 %v473, %v323
      %v511 = vmul.f32 %v475, %v323
      %v512 = vmul.f32 %v477, %v323
      %v513 = vmul.f32 %v479, %v323
      %v514 = vmul.f32 %v481, %v323
      %v515 = vmul.f32 %v483, %v323
      %v516 = vadd.f32 %v484, 1e-06
      %v517 = vadd.f32 %v485, 1e-06
      %v518 = vadd.f32 %v486, 1e-06
      %v519 = vadd.f32 %v487, 1e-06
      %v520 = vadd.f32 %v488, 1e-06
      %v521 = vadd.f32 %v489, 1e-06
      %v522 = vadd.f32 %v490, 1e-06
      %v523 = vadd.f32 %v491, 1e-06
      %v524 = vadd.f32 %v492, 1e-06
      %v525 = vadd.f32 %v493, 1e-06
      %v526 = vadd.f32 %v494, 1e-06
      %v527 = vadd.f32 %v495, 1e-06
      %v528 = vadd.f32 %v496, 1e-06
      %v529 = vadd.f32 %v497, 1e-06
      %v530 = vadd.f32 %v498, 1e-06
      %v531 = vadd.f32 %v499, 1e-06
      %v532 = vadd.f32 %v500, 1e-06
      %v533 = vadd.f32 %v501, 1e-06
      %v534 = vadd.f32 %v502, 1e-06
      %v535 = vadd.f32 %v503, 1e-06
      %v536 = vadd.f32 %v504, 1e-06
      %v537 = vadd.f32 %v505, 1e-06
      %v538 = vadd.f32 %v506, 1e-06
      %v539 = vadd.f32 %v507, 1e-06
      %v540 = vadd.f32 %v508, 1e-06
      %v541 = vadd.f32 %v509, 1e-06
      %v542 = vadd.f32 %v510, 1e-06
      %v543 = vadd.f32 %v511, 1e-06
      %v544 = vadd.f32 %v512, 1e-06
      %v545 = vadd.f32 %v513, 1e-06
      %v546 = vadd.f32 %v514, 1e-06
      %v547 = vadd.f32 %v515, 1e-06
      %v548 = vrsqrt.pop %v516
      %v549 = vrsqrt.pop %v517
      %v550 = vrsqrt.pop %v518
      %v551 = vrsqrt.pop %v519
      %v552 = vrsqrt.pop %v520
      %v553 = vrsqrt.pop %v521
      %v554 = vrsqrt.pop %v522
      %v555 = vrsqrt.pop %v523
      %v556 = vrsqrt.pop %v524
      %v557 = vrsqrt.pop %v525
      %v558 = vrsqrt.pop %v526
      %v559 = vrsqrt.pop %v527
      %v560 = vrsqrt.pop %v528
      %v561 = vrsqrt.pop %v529
      %v562 = vrsqrt.pop %v530
      %v563 = vrsqrt.pop %v531
      %v564 = vrsqrt.pop %v532
      %v565 = vrsqrt.pop %v533
      %v566 = vrsqrt.pop %v534
      %v567 = vrsqrt.pop %v535
      %v568 = vrsqrt.pop %v536
      %v569 = vrsqrt.pop %v537
      %v570 = vrsqrt.pop %v538
      %v571 = vrsqrt.pop %v539
      %v572 = vrsqrt.pop %v540
      %v573 = vrsqrt.pop %v541
      %v574 = vrsqrt.pop %v542
      %v575 = vrsqrt.pop %v543
      %v576 = vrsqrt.pop %v544
      %v577 = vrsqrt.pop %v545
      %v578 = vrsqrt.pop %v546
      %v579 = vrsqrt.pop %v547
      %v580 = vmul.f32 %v356, %v548
      %v581 = vmul.f32 %v357, %v549
      %v582 = vmul.f32 %v358, %v550
      %v583 = vmul.f32 %v359, %v551
      %v584 = vmul.f32 %v360, %v552
      %v585 = vmul.f32 %v361, %v553
      %v586 = vmul.f32 %v362, %v554
      %v587 = vmul.f32 %v363, %v555
      %v588 = vmul.f32 %v364, %v556
      %v589 = vmul.f32 %v365, %v557
      %v590 = vmul.f32 %v366, %v558
      %v591 = vmul.f32 %v367, %v559
      %v592 = vmul.f32 %v368, %v560
      %v593 = vmul.f32 %v369, %v561
      %v594 = vmul.f32 %v370, %v562
      %v595 = vmul.f32 %v371, %v563
      %v596 = vmul.f32 %v372, %v564
      %v597 = vmul.f32 %v373, %v565
      %v598 = vmul.f32 %v374, %v566
      %v599 = vmul.f32 %v375, %v567
      %v600 = vmul.f32 %v376, %v568
      %v601 = vmul.f32 %v377, %v569
      %v602 = vmul.f32 %v378, %v570
      %v603 = vmul.f32 %v379, %v571
      %v604 = vmul.f32 %v380, %v572
      %v605 = vmul.f32 %v381, %v573
      %v606 = vmul.f32 %v382, %v574
      %v607 = vmul.f32 %v383, %v575
      %v608 = vmul.f32 %v384, %v576
      %v609 = vmul.f32 %v385, %v577
      %v610 = vmul.f32 %v386, %v578
      %v611 = vmul.f32 %v387, %v579
      %v613 = vlaneseq
      %v614 = vshrl.u32 %v613, 7
      %v615 = vsub.s32 0, %v614
      %v616 = vrot.slane %v257, %v615
      %v618 = vmul.f32 %v580, %v616
      %v619 = vmul.f32 %v581, %v616
      %v620 = vmul.f32 %v582, %v616
      %v621 = vmul.f32 %v583, %v616
      %v622 = vmul.f32 %v584, %v616
      %v623 = vmul.f32 %v585, %v616
      %v624 = vmul.f32 %v586, %v616
      %v625 = vmul.f32 %v587, %v616
      %v626 = vmul.f32 %v588, %v616
      %v627 = vmul.f32 %v589, %v616
      %v628 = vmul.f32 %v590, %v616
      %v629 = vmul.f32 %v591, %v616
      %v630 = vmul.f32 %v592, %v616
      %v631 = vmul.f32 %v593, %v616
      %v632 = vmul.f32 %v594, %v616
      %v633 = vmul.f32 %v595, %v616
      %v634 = vmul.f32 %v596, %v616
      %v635 = vmul.f32 %v597, %v616
      %v636 = vmul.f32 %v598, %v616
      %v637 = vmul.f32 %v599, %v616
      %v638 = vmul.f32 %v600, %v616
      %v639 = vmul.f32 %v601, %v616
      %v640 = vmul.f32 %v602, %v616
      %v641 = vmul.f32 %v603, %v616
      %v642 = vmul.f32 %v604, %v616
      %v643 = vmul.f32 %v605, %v616
      %v644 = vmul.f32 %v606, %v616
      %v645 = vmul.f32 %v607, %v616
      %v646 = vmul.f32 %v608, %v616
      %v647 = vmul.f32 %v609, %v616
      %v648 = vmul.f32 %v610, %v616
      %v649 = vmul.f32 %v611, %v616
      %v651 = vlaneseq
      %v652 = vshrl.u32 %v651, 7
      %v653 = vsub.s32 0, %v652
      %v654 = vrot.slane %v258, %v653
      %v656 = vadd.f32 %v618, %v654
      %v657 = vadd.f32 %v619, %v654
      %v658 = vadd.f32 %v620, %v654
      %v659 = vadd.f32 %v621, %v654
      %v660 = vadd.f32 %v622, %v654
      %v661 = vadd.f32 %v623, %v654
      %v662 = vadd.f32 %v624, %v654
      %v663 = vadd.f32 %v625, %v654
      %v664 = vadd.f32 %v626, %v654
      %v665 = vadd.f32 %v627, %v654
      %v666 = vadd.f32 %v628, %v654
      %v667 = vadd.f32 %v629, %v654
      %v668 = vadd.f32 %v630, %v654
      %v669 = vadd.f32 %v631, %v654
      %v670 = vadd.f32 %v632, %v654
      %v671 = vadd.f32 %v633, %v654
      %v672 = vadd.f32 %v634, %v654
      %v673 = vadd.f32 %v635, %v654
      %v674 = vadd.f32 %v636, %v654
      %v675 = vadd.f32 %v637, %v654
      %v676 = vadd.f32 %v638, %v654
      %v677 = vadd.f32 %v639, %v654
      %v678 = vadd.f32 %v640, %v654
      %v679 = vadd.f32 %v641, %v654
      %v680 = vadd.f32 %v642, %v654
      %v681 = vadd.f32 %v643, %v654
      %v682 = vadd.f32 %v644, %v654
      %v683 = vadd.f32 %v645, %v654
      %v684 = vadd.f32 %v646, %v654
      %v685 = vadd.f32 %v647, %v654
      %v686 = vadd.f32 %v648, %v654
      %v687 = vadd.f32 %v649, %v654
      %v688 = vld [vmem:[%s3] sm:$0x1]
      %v689 = vld [vmem:[#allocation2] sm:$0x1]
      %691 = vset.pattern.permute.xlu0 0
      %692 = vperm.xlu0 %691, %v689
      %v693 = vpop.permute.xlu0 %692
      %v695 = vlaneseq
      %v696 = vshrl.u32 %v695, 7
      %v697 = vsub.s32 0, %v696
      %v698 = vrot.slane %v693, %v697
      %699 = vmatprep.subr.mxu0 0.0
      %700 = vmatpush1.xpose.msra.mxu0 %v656
      %701 = vmatprep.subr.mxu0 0.0
      %702 = vmatpush1.xpose.msra.mxu0 %v657
      %703 = vmatprep.subr.mxu0 0.0
      %704 = vmatpush1.xpose.msra.mxu0 %v658
      %705 = vmatprep.subr.mxu0 0.0
      %706 = vmatpush1.xpose.msra.mxu0 %v659
      %707 = vmatprep.subr.mxu0 0.0
      %708 = vmatpush1.xpose.msra.mxu0 %v660
      %709 = vmatprep.subr.mxu0 0.0
      %710 = vmatpush1.xpose.msra.mxu0 %v661
      %711 = vmatprep.subr.mxu0 0.0
      %712 = vmatpush1.xpose.msra.mxu0 %v662
      %713 = vmatprep.subr.mxu0 0.0
      %714 = vmatpush1.xpose.msra.mxu0 %v663
      %715 = vmatprep.subr.mxu0 0.0
      %716 = vmatpush1.xpose.msra.mxu0 %v664
      %717 = vmatprep.subr.mxu0 0.0
      %718 = vmatpush1.xpose.msra.mxu0 %v665
      %719 = vmatprep.subr.mxu0 0.0
      %720 = vmatpush1.xpose.msra.mxu0 %v666
      %721 = vmatprep.subr.mxu0 0.0
      %722 = vmatpush1.xpose.msra.mxu0 %v667
      %723 = vmatprep.subr.mxu0 0.0
      %724 = vmatpush1.xpose.msra.mxu0 %v668
      %725 = vmatprep.subr.mxu0 0.0
      %726 = vmatpush1.xpose.msra.mxu0 %v669
      %727 = vmatprep.subr.mxu0 0.0
      %728 = vmatpush1.xpose.msra.mxu0 %v670
      %729 = vmatprep.subr.mxu0 0.0
      %730 = vmatpush1.xpose.msra.mxu0 %v671
      %731 = vmatprep.subr.mxu0 0.0
      %732 = vmatpush1.xpose.msra.mxu0 %v672
      %733 = vmatprep.subr.mxu0 0.0
      %734 = vmatpush1.xpose.msra.mxu0 %v673
      %735 = vmatprep.subr.mxu0 0.0
      %736 = vmatpush1.xpose.msra.mxu0 %v674
      %737 = vmatprep.subr.mxu0 0.0
      %738 = vmatpush1.xpose.msra.mxu0 %v675
      %739 = vmatprep.subr.mxu0 0.0
      %740 = vmatpush1.xpose.msra.mxu0 %v676
      %741 = vmatprep.subr.mxu0 0.0
      %742 = vmatpush1.xpose.msra.mxu0 %v677
      %743 = vmatprep.subr.mxu0 0.0
      %744 = vmatpush1.xpose.msra.mxu0 %v678
      %745 = vmatprep.subr.mxu0 0.0
      %746 = vmatpush1.xpose.msra.mxu0 %v679
      %747 = vmatprep.subr.mxu0 0.0
      %748 = vmatpush1.xpose.msra.mxu0 %v680
      %749 = vmatprep.subr.mxu0 0.0
      %750 = vmatpush1.xpose.msra.mxu0 %v681
      %751 = vmatprep.subr.mxu0 0.0
      %752 = vmatpush1.xpose.msra.mxu0 %v682
      %753 = vmatprep.subr.mxu0 0.0
      %754 = vmatpush1.xpose.msra.mxu0 %v683
      %755 = vmatprep.subr.mxu0 0.0
      %756 = vmatpush1.xpose.msra.mxu0 %v684
      %757 = vmatprep.subr.mxu0 0.0
      %758 = vmatpush1.xpose.msra.mxu0 %v685
      %759 = vmatprep.subr.mxu0 0.0
      %760 = vmatpush1.xpose.msra.mxu0 %v686
      %761 = vmatprep.subr.mxu0 0.0
      %762 = vmatpush1.xpose.msra.mxu0 %v687
      %763 = vmatprep.mubr.f32.mxu0 0.0
      %764 = vmatmul.mubr.f32.gmra.mrb[0].mxu0 %v688
      %v765 = vpop.f32.mrb[0].mxu0
      %v766 = vadd.f32 %v698, %v765
      %v767 = vpop.f32.mrb[0].mxu0
      %v768 = vadd.f32 %v698, %v767
      %769 = vdwg.mxu0
      %v770 = vmax.f32 %v766, 0.0
      %v771 = vmax.f32 %v768, 0.0
      %v774 = vcombine.low %v770, %v771
      %v776 = vunpack.c.l.s4 1966171168
      %v777 = vunpack.c.0.s8 %v776
      %v778 = vlaneseq
      %v779 = vshrl.u32 %v778, 7
      %v780 = vsub.s32 %v777, %v779
      %v781 = vrot.slane %v774, %v780
      %v783 = vunpack.c.l.s4 1966171168
      %v784 = vunpack.c.0.s8 %v783
      %v785 = vlaneseq
      %v786 = vshrl.u32 %v785, 7
      %v787 = vsub.s32 %v784, %v786
      %v788 = vrot.slane %v781, %v787
      %v790 = vlaneseq
      %vm791 = vcmp.ge.s32.totalorder %v790, 0
      %vm792 = vcmp.lt.s32.totalorder %v790, 256
      %vm793 = vmand %vm791, %vm792
      %794 = vst.msk [vmem:[%s224] sm:$0x3] %vm793, %v788
      %p795 = scmp.lt.s32.totalorder %s18, 1
      %s796 = scalar_select %p795, %s18, 1
      %s797 = smul.addr %s796, 2
      %s798 = scalar_lea.vmem %s5, %s797
      // Predicated region
      $region41: #{tnet8_forward.7} parent=39 // pred_check
        %p799 = pneg %p146
      $region42: #{tnet8_forward.7} parent=39 // pred_check_branch
        %801 = sbr.rel (%p799) target = $region44
      $region43: #{tnet8_forward.7} parent=39 // pred_region
        _
      $region44: #{tnet8_forward.7} parent=39 // pred_fallthru
        _
    $region40: #{tnet8_forward.7} parent=5 // pred_fallthru
      _
    %p802 = scmp.le.s32.totalorder 2, %s13
    // Predicated region
    $region45: #{tnet8_forward.7} parent=5 // pred_check
      %p803 = pneg %p802
    $region46: #{tnet8_forward.7} parent=5 // pred_check_branch
      %805 = sbr.rel (%p803) target = $region48
    $region47: #{tnet8_forward.7} parent=5 // pred_region
      %s806 = ssub.s32 %s13, 2
      // Predicated region
      $region49: #{tnet8_forward.7} parent=47 // pred_check
        %p807 = pneg %p152
      $region50: #{tnet8_forward.7} parent=47 // pred_check_branch
        %809 = sbr.rel (%p807) target = $region52
      $region51: #{tnet8_forward.7} parent=47 // pred_region
        %p810 = scmp.lt.s32.totalorder %s19, 1
        %s811 = scalar_select %p810, %s19, 1
        %s812 = smul.addr %s811, 2
        %s813 = scalar_lea.vmem %s5, %s812
      $region52: #{tnet8_forward.7} parent=47 // pred_fallthru
        _
    $region48: #{tnet8_forward.7} parent=5 // pred_fallthru
      _
  $region6: #{tnet8_forward.7} parent=0 // loop_footer
    %s17 = sadd.s32 1, %s13
  $region7: #{tnet8_forward.7} parent=0 // loop_footer_branch
    %12 = sbr.rel target = $region3
  $region8: #{tnet8_forward.7} parent=0 // loop_exit
    _

// kernel: tnet8_forward.5
$region0: #{tnet8_forward.5}
  #allocation0 [shape = 'u32[]', space=smem, size = 0x4, offset = 0x4, fixed_abs, tag = 'smem constant byte address 0x4 - core index']
  #allocation1 [shape = 'u32[144,128]{1,0:T(1,128)}', space=vmem, size = 0x12000, scoped, tag = 'internal scratch']
  %s0 = inlined_call_operand.vmem [shape: f32[2,256,128], index: 0, kind: input, shape index: {}]
  %s1 = inlined_call_operand.vmem [shape: f32[1,128], index: 1, kind: input, shape index: {}]
  %s2 = inlined_call_operand.vmem [shape: f32[1,128], index: 2, kind: input, shape index: {}]
  %s3 = inlined_call_operand.vmem [shape: bf16[128,384], index: 3, kind: input, shape index: {}]
  %s4 = inlined_call_operand.vmem [shape: f32[1,384], index: 4, kind: input, shape index: {}]
  %s5 = inlined_call_operand.vmem [shape: bf16[128,128], index: 5, kind: input, shape index: {}]
  %s6 = inlined_call_operand.vmem [shape: f32[1,128], index: 6, kind: input, shape index: {}]
  %s7 = inlined_call_operand.vmem [shape: f32[1,128], index: 7, kind: input, shape index: {}]
  %s8 = inlined_call_operand.vmem [shape: f32[1,128], index: 8, kind: input, shape index: {}]
  %s9 = inlined_call_operand.vmem [shape: bf16[128,512], index: 9, kind: input, shape index: {}]
  %s10 = inlined_call_operand.vmem [shape: f32[1,512], index: 10, kind: input, shape index: {}]
  %s11 = inlined_call_operand.vmem [shape: bf16[512,128], index: 11, kind: input, shape index: {}]
  %s12 = inlined_call_operand.vmem [shape: f32[1,128], index: 12, kind: input, shape index: {}]
  %s13 = inlined_call_operand.vmem [shape: f32[2,256,128], index: 13, kind: output, shape index: {}]
  %s14 = sld [smem:[#allocation0]]
  $region85: #{tnet8_forward.5} parent=0
    _
  %s16 = ssub.s32 1, %s14
  %s17 = scalar_select 0, %s16, %s14
  loop: start=0, step=1, limit=4
  $region2: #{tnet8_forward.5} parent=0 // loop_pre_header
    _
  $region3: #{tnet8_forward.5} parent=0 // loop_header
    %s19 = sphi 0, %s23
    %p20 = scmp.ge.s32.totalorder %s19, 4
    %s29 = sphi 0, %s31
    %s32 = sphi 0, %s29
    %s33 = sphi 0, %s32
    %s49 = sphi 0, %s33
    %s53 = sphi 0, %s53
    %s55 = sphi 0, %s53
    %s56 = sphi 0, %s55
    %s70 = sphi 0, %s56
    %s74 = sphi 0, %s74
    %s76 = sphi 0, %s74
    %s77 = sphi 0, %s76
    %s91 = sphi 0, %s77
    %s95 = sphi 0, %s95
    %s97 = sphi 0, %s95
    %s98 = sphi 0, %s97
    %s112 = sphi 0, %s98
    %s116 = sphi 0, %s116
    %s118 = sphi 0, %s116
    %s119 = sphi 0, %s118
    %s133 = sphi 0, %s119
    %s137 = sphi 0, %s137
    %s139 = sphi 0, %s137
    %s140 = sphi 0, %s139
    %s154 = sphi 0, %s140
    %s158 = sphi 0, %s158
    %s160 = sphi 0, %s158
    %s161 = sphi 0, %s160
    %s175 = sphi 0, %s161
    %s179 = sphi 0, %s179
    %s181 = sphi 0, %s179
    %s182 = sphi 0, %s181
    %s196 = sphi 0, %s182
    %s200 = sphi 0, %s200
    %s202 = sphi 0, %s200
    %s203 = sphi 0, %s202
    %s217 = sphi 0, %s203
    %s221 = sphi 0, %s221
    %s223 = sphi 0, %s221
    %s224 = sphi 0, %s223
    %s238 = sphi 0, %s224
    %s242 = sphi 0, %s242
    %s244 = sphi 0, %s242
    %s245 = sphi 0, %s244
    %s259 = sphi 0, %s245
    %s263 = sphi 0, %s263
    %s265 = sphi 0, %s263
    %s266 = sphi 0, %s265
    %s280 = sphi 0, %s266
    %s284 = sphi 0, %s284
    %s286 = sphi 0, %s284
    %s287 = sphi 0, %s286
    %s301 = sphi 0, %s287
    %s307 = sphi 0, %s309
    %s310 = sphi 0, %s307
    %s311 = sphi 0, %s310
    %s327 = sphi 0, %s311
  $region4: #{tnet8_forward.5} parent=0 // loop_header_branch
    %22 = sbr.rel (%p20) target = $region8
  $region5: #{tnet8_forward.5} parent=0 // loop_body
    %s24 = ssub.s32 %s19, 1
    %s25 = ssub.s32 %s19, 2
    %s26 = sadd.s32 %s19, 1
    %s27 = ssub.s32 %s19, %s26
    %p28 = scmp.eq.s32.totalorder %s27, 0
    %s30 = sadd.s32 %s29, 1
    %s31 = scalar_select %p28, %s29, %s30
    %p34 = pneg %p28
    %p35 = scmp.eq.s32.totalorder %s19, 1
    %p36 = por %p34, %p35
    %p37 = scmp.ne.s32.totalorder %s29, %s32
    %p38 = scmp.eq.s32.totalorder %s19, 0
    %p39 = por %p37, %p38
    %p40 = scmp.ne.s32.totalorder %s29, %s32
    %p41 = scmp.eq.s32.totalorder %s24, 1
    %p42 = por %p40, %p41
    %p43 = scmp.ne.s32.totalorder %s32, %s33
    %p44 = scmp.eq.s32.totalorder %s24, 0
    %p45 = por %p43, %p44
    %p46 = scmp.ne.s32.totalorder %s32, %s33
    %p47 = scmp.eq.s32.totalorder %s25, 1
    %p48 = por %p46, %p47
    %p50 = scmp.ne.s32.totalorder %s33, %s49
    %p51 = scmp.eq.s32.totalorder %s25, 0
    %p52 = por %p50, %p51
    %s54 = sadd.s32 %s53, 1
    %p57 = scmp.eq.s32.totalorder %s19, 1
    %p58 = scmp.ne.s32.totalorder %s53, %s55
    %p59 = scmp.eq.s32.totalorder %s19, 0
    %p60 = por %p58, %p59
    %p61 = scmp.ne.s32.totalorder %s53, %s55
    %p62 = scmp.eq.s32.totalorder %s24, 1
    %p63 = por %p61, %p62
    %p64 = scmp.ne.s32.totalorder %s55, %s56
    %p65 = scmp.eq.s32.totalorder %s24, 0
    %p66 = por %p64, %p65
    %p67 = scmp.ne.s32.totalorder %s55, %s56
    %p68 = scmp.eq.s32.totalorder %s25, 1
    %p69 = por %p67, %p68
    %p71 = scmp.ne.s32.totalorder %s56, %s70
    %p72 = scmp.eq.s32.totalorder %s25, 0
    %p73 = por %p71, %p72
    %s75 = sadd.s32 %s74, 1
    %p78 = scmp.eq.s32.totalorder %s19, 1
    %p79 = scmp.ne.s32.totalorder %s74, %s76
    %p80 = scmp.eq.s32.totalorder %s19, 0
    %p81 = por %p79, %p80
    %p82 = scmp.ne.s32.totalorder %s74, %s76
    %p83 = scmp.eq.s32.totalorder %s24, 1
    %p84 = por %p82, %p83
    %p85 = scmp.ne.s32.totalorder %s76, %s77
    %p86 = scmp.eq.s32.totalorder %s24, 0
    %p87 = por %p85, %p86
    %p88 = scmp.ne.s32.totalorder %s76, %s77
    %p89 = scmp.eq.s32.totalorder %s25, 1
    %p90 = por %p88, %p89
    %p92 = scmp.ne.s32.totalorder %s77, %s91
    %p93 = scmp.eq.s32.totalorder %s25, 0
    %p94 = por %p92, %p93
    %s96 = sadd.s32 %s95, 1
    %p99 = scmp.eq.s32.totalorder %s19, 1
    %p100 = scmp.ne.s32.totalorder %s95, %s97
    %p101 = scmp.eq.s32.totalorder %s19, 0
    %p102 = por %p100, %p101
    %p103 = scmp.ne.s32.totalorder %s95, %s97
    %p104 = scmp.eq.s32.totalorder %s24, 1
    %p105 = por %p103, %p104
    %p106 = scmp.ne.s32.totalorder %s97, %s98
    %p107 = scmp.eq.s32.totalorder %s24, 0
    %p108 = por %p106, %p107
    %p109 = scmp.ne.s32.totalorder %s97, %s98
    %p110 = scmp.eq.s32.totalorder %s25, 1
    %p111 = por %p109, %p110
    %p113 = scmp.ne.s32.totalorder %s98, %s112
    %p114 = scmp.eq.s32.totalorder %s25, 0
    %p115 = por %p113, %p114
    %s117 = sadd.s32 %s116, 1
    %p120 = scmp.eq.s32.totalorder %s19, 1
    %p121 = scmp.ne.s32.totalorder %s116, %s118
    %p122 = scmp.eq.s32.totalorder %s19, 0
    %p123 = por %p121, %p122
    %p124 = scmp.ne.s32.totalorder %s116, %s118
    %p125 = scmp.eq.s32.totalorder %s24, 1
    %p126 = por %p124, %p125
    %p127 = scmp.ne.s32.totalorder %s118, %s119
    %p128 = scmp.eq.s32.totalorder %s24, 0
    %p129 = por %p127, %p128
    %p130 = scmp.ne.s32.totalorder %s118, %s119
    %p131 = scmp.eq.s32.totalorder %s25, 1
    %p132 = por %p130, %p131
    %p134 = scmp.ne.s32.totalorder %s119, %s133
    %p135 = scmp.eq.s32.totalorder %s25, 0
    %p136 = por %p134, %p135
    %s138 = sadd.s32 %s137, 1
    %p141 = scmp.eq.s32.totalorder %s19, 1
    %p142 = scmp.ne.s32.totalorder %s137, %s139
    %p143 = scmp.eq.s32.totalorder %s19, 0
    %p144 = por %p142, %p143
    %p145 = scmp.ne.s32.totalorder %s137, %s139
    %p146 = scmp.eq.s32.totalorder %s24, 1
    %p147 = por %p145, %p146
    %p148 = scmp.ne.s32.totalorder %s139, %s140
    %p149 = scmp.eq.s32.totalorder %s24, 0
    %p150 = por %p148, %p149
    %p151 = scmp.ne.s32.totalorder %s139, %s140
    %p152 = scmp.eq.s32.totalorder %s25, 1
    %p153 = por %p151, %p152
    %p155 = scmp.ne.s32.totalorder %s140, %s154
    %p156 = scmp.eq.s32.totalorder %s25, 0
    %p157 = por %p155, %p156
    %s159 = sadd.s32 %s158, 1
    %p162 = scmp.eq.s32.totalorder %s19, 1
    %p163 = scmp.ne.s32.totalorder %s158, %s160
    %p164 = scmp.eq.s32.totalorder %s19, 0
    %p165 = por %p163, %p164
    %p166 = scmp.ne.s32.totalorder %s158, %s160
    %p167 = scmp.eq.s32.totalorder %s24, 1
    %p168 = por %p166, %p167
    %p169 = scmp.ne.s32.totalorder %s160, %s161
    %p170 = scmp.eq.s32.totalorder %s24, 0
    %p171 = por %p169, %p170
    %p172 = scmp.ne.s32.totalorder %s160, %s161
    %p173 = scmp.eq.s32.totalorder %s25, 1
    %p174 = por %p172, %p173
    %p176 = scmp.ne.s32.totalorder %s161, %s175
    %p177 = scmp.eq.s32.totalorder %s25, 0
    %p178 = por %p176, %p177
    %s180 = sadd.s32 %s179, 1
    %p183 = scmp.eq.s32.totalorder %s19, 1
    %p184 = scmp.ne.s32.totalorder %s179, %s181
    %p185 = scmp.eq.s32.totalorder %s19, 0
    %p186 = por %p184, %p185
    %p187 = scmp.ne.s32.totalorder %s179, %s181
    %p188 = scmp.eq.s32.totalorder %s24, 1
    %p189 = por %p187, %p188
    %p190 = scmp.ne.s32.totalorder %s181, %s182
    %p191 = scmp.eq.s32.totalorder %s24, 0
    %p192 = por %p190, %p191
    %p193 = scmp.ne.s32.totalorder %s181, %s182
    %p194 = scmp.eq.s32.totalorder %s25, 1
    %p195 = por %p193, %p194
    %p197 = scmp.ne.s32.totalorder %s182, %s196
    %p198 = scmp.eq.s32.totalorder %s25, 0
    %p199 = por %p197, %p198
    %s201 = sadd.s32 %s200, 1
    %p204 = scmp.eq.s32.totalorder %s19, 1
    %p205 = scmp.ne.s32.totalorder %s200, %s202
    %p206 = scmp.eq.s32.totalorder %s19, 0
    %p207 = por %p205, %p206
    %p208 = scmp.ne.s32.totalorder %s200, %s202
    %p209 = scmp.eq.s32.totalorder %s24, 1
    %p210 = por %p208, %p209
    %p211 = scmp.ne.s32.totalorder %s202, %s203
    %p212 = scmp.eq.s32.totalorder %s24, 0
    %p213 = por %p211, %p212
    %p214 = scmp.ne.s32.totalorder %s202, %s203
    %p215 = scmp.eq.s32.totalorder %s25, 1
    %p216 = por %p214, %p215
    %p218 = scmp.ne.s32.totalorder %s203, %s217
    %p219 = scmp.eq.s32.totalorder %s25, 0
    %p220 = por %p218, %p219
    %s222 = sadd.s32 %s221, 1
    %p225 = scmp.eq.s32.totalorder %s19, 1
    %p226 = scmp.ne.s32.totalorder %s221, %s223
    %p227 = scmp.eq.s32.totalorder %s19, 0
    %p228 = por %p226, %p227
    %p229 = scmp.ne.s32.totalorder %s221, %s223
    %p230 = scmp.eq.s32.totalorder %s24, 1
    %p231 = por %p229, %p230
    %p232 = scmp.ne.s32.totalorder %s223, %s224
    %p233 = scmp.eq.s32.totalorder %s24, 0
    %p234 = por %p232, %p233
    %p235 = scmp.ne.s32.totalorder %s223, %s224
    %p236 = scmp.eq.s32.totalorder %s25, 1
    %p237 = por %p235, %p236
    %p239 = scmp.ne.s32.totalorder %s224, %s238
    %p240 = scmp.eq.s32.totalorder %s25, 0
    %p241 = por %p239, %p240
    %s243 = sadd.s32 %s242, 1
    %p246 = scmp.eq.s32.totalorder %s19, 1
    %p247 = scmp.ne.s32.totalorder %s242, %s244
    %p248 = scmp.eq.s32.totalorder %s19, 0
    %p249 = por %p247, %p248
    %p250 = scmp.ne.s32.totalorder %s242, %s244
    %p251 = scmp.eq.s32.totalorder %s24, 1
    %p252 = por %p250, %p251
    %p253 = scmp.ne.s32.totalorder %s244, %s245
    %p254 = scmp.eq.s32.totalorder %s24, 0
    %p255 = por %p253, %p254
    %p256 = scmp.ne.s32.totalorder %s244, %s245
    %p257 = scmp.eq.s32.totalorder %s25, 1
    %p258 = por %p256, %p257
    %p260 = scmp.ne.s32.totalorder %s245, %s259
    %p261 = scmp.eq.s32.totalorder %s25, 0
    %p262 = por %p260, %p261
    %s264 = sadd.s32 %s263, 1
    %p267 = scmp.eq.s32.totalorder %s19, 1
    %p268 = scmp.ne.s32.totalorder %s263, %s265
    %p269 = scmp.eq.s32.totalorder %s19, 0
    %p270 = por %p268, %p269
    %p271 = scmp.ne.s32.totalorder %s263, %s265
    %p272 = scmp.eq.s32.totalorder %s24, 1
    %p273 = por %p271, %p272
    %p274 = scmp.ne.s32.totalorder %s265, %s266
    %p275 = scmp.eq.s32.totalorder %s24, 0
    %p276 = por %p274, %p275
    %p277 = scmp.ne.s32.totalorder %s265, %s266
    %p278 = scmp.eq.s32.totalorder %s25, 1
    %p279 = por %p277, %p278
    %p281 = scmp.ne.s32.totalorder %s266, %s280
    %p282 = scmp.eq.s32.totalorder %s25, 0
    %p283 = por %p281, %p282
    %s285 = sadd.s32 %s284, 1
    %p288 = scmp.eq.s32.totalorder %s19, 1
    %p289 = scmp.ne.s32.totalorder %s284, %s286
    %p290 = scmp.eq.s32.totalorder %s19, 0
    %p291 = por %p289, %p290
    %p292 = scmp.ne.s32.totalorder %s284, %s286
    %p293 = scmp.eq.s32.totalorder %s24, 1
    %p294 = por %p292, %p293
    %p295 = scmp.ne.s32.totalorder %s286, %s287
    %p296 = scmp.eq.s32.totalorder %s24, 0
    %p297 = por %p295, %p296
    %p298 = scmp.ne.s32.totalorder %s286, %s287
    %p299 = scmp.eq.s32.totalorder %s25, 1
    %p300 = por %p298, %p299
    %p302 = scmp.ne.s32.totalorder %s287, %s301
    %p303 = scmp.eq.s32.totalorder %s25, 0
    %p304 = por %p302, %p303
    %s305 = ssub.s32 %s19, %s26
    %p306 = scmp.eq.s32.totalorder %s305, 0
    %s308 = sadd.s32 %s307, 1
    %s309 = scalar_select %p306, %s307, %s308
    %p312 = pneg %p306
    %p313 = scmp.eq.s32.totalorder %s19, 1
    %p314 = por %p312, %p313
    %p315 = scmp.ne.s32.totalorder %s307, %s310
    %p316 = scmp.eq.s32.totalorder %s19, 0
    %p317 = por %p315, %p316
    %p318 = scmp.ne.s32.totalorder %s307, %s310
    %p319 = scmp.eq.s32.totalorder %s24, 1
    %p320 = por %p318, %p319
    %p321 = scmp.ne.s32.totalorder %s310, %s311
    %p322 = scmp.eq.s32.totalorder %s24, 0
    %p323 = por %p321, %p322
    %p324 = scmp.ne.s32.totalorder %s310, %s311
    %p325 = scmp.eq.s32.totalorder %s25, 1
    %p326 = por %p324, %p325
    %p328 = scmp.ne.s32.totalorder %s311, %s327
    %p329 = scmp.eq.s32.totalorder %s25, 0
    %p330 = por %p328, %p329
    %p331 = scmp.le.s32.totalorder 1, %s19
    %p332 = scmp.lt.s32.totalorder %s19, 3
    %p333 = pnand %p331, %p332
    %p334 = pneg %p333
    // Predicated region
    $region9: #{tnet8_forward.5} parent=5 // pred_check
      _
    $region10: #{tnet8_forward.5} parent=5 // pred_check_branch
      %336 = sbr.rel (%p333) target = $region12
    $region11: #{tnet8_forward.5} parent=5 // pred_region
      %s337 = ssub.s32 %s19, 1
      // Predicated region
      $region13: #{tnet8_forward.5} parent=11 // pred_check
        %p338 = pneg %p66
      $region14: #{tnet8_forward.5} parent=11 // pred_check_branch
        %340 = sbr.rel (%p338) target = $region16
      $region15: #{tnet8_forward.5} parent=11 // pred_region
        _
      $region16: #{tnet8_forward.5} parent=11 // pred_fallthru
        _
      // Predicated region
      $region17: #{tnet8_forward.5} parent=11 // pred_check
        %p341 = pneg %p87
      $region18: #{tnet8_forward.5} parent=11 // pred_check_branch
        %343 = sbr.rel (%p341) target = $region20
      $region19: #{tnet8_forward.5} parent=11 // pred_region
        _
      $region20: #{tnet8_forward.5} parent=11 // pred_fallthru
        _
      // Predicated region
      $region21: #{tnet8_forward.5} parent=11 // pred_check
        %p344 = pneg %p108
      $region22: #{tnet8_forward.5} parent=11 // pred_check_branch
        %346 = sbr.rel (%p344) target = $region24
      $region23: #{tnet8_forward.5} parent=11 // pred_region
        _
      $region24: #{tnet8_forward.5} parent=11 // pred_fallthru
        _
      // Predicated region
      $region25: #{tnet8_forward.5} parent=11 // pred_check
        %p347 = pneg %p129
      $region26: #{tnet8_forward.5} parent=11 // pred_check_branch
        %349 = sbr.rel (%p347) target = $region28
      $region27: #{tnet8_forward.5} parent=11 // pred_region
        _
      $region28: #{tnet8_forward.5} parent=11 // pred_fallthru
        _
      // Predicated region
      $region29: #{tnet8_forward.5} parent=11 // pred_check
        %p350 = pneg %p150
      $region30: #{tnet8_forward.5} parent=11 // pred_check_branch
        %352 = sbr.rel (%p350) target = $region32
      $region31: #{tnet8_forward.5} parent=11 // pred_region
        _
      $region32: #{tnet8_forward.5} parent=11 // pred_fallthru
        _
      // Predicated region
      $region33: #{tnet8_forward.5} parent=11 // pred_check
        %p353 = pneg %p171
      $region34: #{tnet8_forward.5} parent=11 // pred_check_branch
        %355 = sbr.rel (%p353) target = $region36
      $region35: #{tnet8_forward.5} parent=11 // pred_region
        _
      $region36: #{tnet8_forward.5} parent=11 // pred_fallthru
        _
      // Predicated region
      $region37: #{tnet8_forward.5} parent=11 // pred_check
        %p356 = pneg %p192
      $region38: #{tnet8_forward.5} parent=11 // pred_check_branch
        %358 = sbr.rel (%p356) target = $region40
      $region39: #{tnet8_forward.5} parent=11 // pred_region
        _
      $region40: #{tnet8_forward.5} parent=11 // pred_fallthru
        _
      // Predicated region
      $region41: #{tnet8_forward.5} parent=11 // pred_check
        %p359 = pneg %p213
      $region42: #{tnet8_forward.5} parent=11 // pred_check_branch
        %361 = sbr.rel (%p359) target = $region44
      $region43: #{tnet8_forward.5} parent=11 // pred_region
        _
      $region44: #{tnet8_forward.5} parent=11 // pred_fallthru
        _
      // Predicated region
      $region45: #{tnet8_forward.5} parent=11 // pred_check
        %p362 = pneg %p234
      $region46: #{tnet8_forward.5} parent=11 // pred_check_branch
        %364 = sbr.rel (%p362) target = $region48
      $region47: #{tnet8_forward.5} parent=11 // pred_region
        _
      $region48: #{tnet8_forward.5} parent=11 // pred_fallthru
        _
      // Predicated region
      $region49: #{tnet8_forward.5} parent=11 // pred_check
        %p365 = pneg %p255
      $region50: #{tnet8_forward.5} parent=11 // pred_check_branch
        %367 = sbr.rel (%p365) target = $region52
      $region51: #{tnet8_forward.5} parent=11 // pred_region
        _
      $region52: #{tnet8_forward.5} parent=11 // pred_fallthru
        _
      // Predicated region
      $region53: #{tnet8_forward.5} parent=11 // pred_check
        %p368 = pneg %p276
      $region54: #{tnet8_forward.5} parent=11 // pred_check_branch
        %370 = sbr.rel (%p368) target = $region56
      $region55: #{tnet8_forward.5} parent=11 // pred_region
        _
      $region56: #{tnet8_forward.5} parent=11 // pred_fallthru
        _
      // Predicated region
      $region57: #{tnet8_forward.5} parent=11 // pred_check
        %p371 = pneg %p297
      $region58: #{tnet8_forward.5} parent=11 // pred_check_branch
        %373 = sbr.rel (%p371) target = $region60
      $region59: #{tnet8_forward.5} parent=11 // pred_region
        _
      $region60: #{tnet8_forward.5} parent=11 // pred_fallthru
        _
    $region12: #{tnet8_forward.5} parent=5 // pred_fallthru
      _
    %p374 = scmp.lt.s32.totalorder %s19, 2
    // Predicated region
    $region61: #{tnet8_forward.5} parent=5 // pred_check
      %p375 = pneg %p374
    $region62: #{tnet8_forward.5} parent=5 // pred_check_branch
      %377 = sbr.rel (%p375) target = $region64
    $region63: #{tnet8_forward.5} parent=5 // pred_region
      // Predicated region
      $region65: #{tnet8_forward.5} parent=63 // pred_check
        %p378 = pneg %p39
      $region66: #{tnet8_forward.5} parent=63 // pred_check_branch
        %380 = sbr.rel (%p378) target = $region68
      $region67: #{tnet8_forward.5} parent=63 // pred_region
        %p381 = scmp.lt.s32.totalorder %s19, 1
        %s382 = scalar_select %p381, %s19, 1
        %s383 = smul.addr %s382, 32
        %s384 = smul.addr %s383, 8
        %s385 = scalar_lea.vmem %s0, %s384
      $region68: #{tnet8_forward.5} parent=63 // pred_fallthru
        _
    $region64: #{tnet8_forward.5} parent=5 // pred_fallthru
      _
    %p386 = scmp.le.s32.totalorder 1, %s19
    %p387 = scmp.lt.s32.totalorder %s19, 3
    %p388 = pnand %p386, %p387
    %p389 = pneg %p388
    // Predicated region
    $region69: #{tnet8_forward.5} parent=5 // pred_check
      _
    $region70: #{tnet8_forward.5} parent=5 // pred_check_branch
      %391 = sbr.rel (%p388) target = $region72
    $region71: #{tnet8_forward.5} parent=5 // pred_region
      %s392 = ssub.s32 %s19, 1
      %p393 = scmp.lt.s32.totalorder %s24, 1
      %s394 = scalar_select %p393, %s24, 1
      %s395 = smul.addr %s394, 32
      %s396 = smul.addr %s395, 8
      %s397 = scalar_lea.vmem %s0, %s396
      %p398 = pneg %p45
      %p399 = pneg %p42
      %p400 = pneg %p66
      %p401 = pneg %p63
      %p402 = pneg %p87
      %p403 = pneg %p84
      %p404 = pneg %p108
      %p405 = pneg %p105
      %p406 = pneg %p129
      %p407 = pneg %p126
      %p408 = pneg %p150
      %p409 = pneg %p147
      %p410 = pneg %p171
      %p411 = pneg %p168
      %p412 = pneg %p192
      %p413 = pneg %p189
      %p414 = pneg %p213
      %p415 = pneg %p210
      %p416 = pneg %p234
      %p417 = pneg %p231
      %p418 = pneg %p255
      %p419 = pneg %p252
      %p420 = pneg %p276
      %p421 = pneg %p273
      %p422 = pneg %p297
      %p423 = pneg %p294
      %p424 = pneg %p323
      %p425 = pneg %p320
      %p426 = scmp.lt.s32.totalorder %s24, 1
      %s427 = scalar_select %p426, %s24, 1
      %s428 = smul.addr %s427, 32
      %s429 = smul.addr %s428, 8
      %s430 = scalar_lea.vmem %s13, %s429
      %p431 = scmp.lt.s32.totalorder %s24, 1
      %s432 = scalar_select %p431, %s24, 1
      %s433 = smul.addr %s432, 32
      %s434 = smul.addr %s433, 8
      %s435 = scalar_lea.vmem %s0, %s434
      %p436 = scmp.lt.s32.totalorder %s24, 1
      %s437 = scalar_select %p436, %s24, 1
      %s438 = smul.addr %s437, 32
      %s439 = smul.addr %s438, 8
      %s440 = scalar_lea.vmem %s13, %s439
      %v442 = vld [vmem:[%s435] sm:$0xff]
      %v443 = vld [vmem:[%s435 + $0x8] sm:$0xff]
      %v444 = vld [vmem:[%s435 + $0x10] sm:$0xff]
      %v445 = vld [vmem:[%s435 + $0x18] sm:$0xff]
      %v446 = vld [vmem:[%s435 + $0x20] sm:$0xff]
      %v447 = vld [vmem:[%s435 + $0x28] sm:$0xff]
      %v448 = vld [vmem:[%s435 + $0x30] sm:$0xff]
      %v449 = vld [vmem:[%s435 + $0x38] sm:$0xff]
      %v450 = vld [vmem:[%s435 + $0x40] sm:$0xff]
      %v451 = vld [vmem:[%s435 + $0x48] sm:$0xff]
      %v452 = vld [vmem:[%s435 + $0x50] sm:$0xff]
      %v453 = vld [vmem:[%s435 + $0x58] sm:$0xff]
      %v454 = vld [vmem:[%s435 + $0x60] sm:$0xff]
      %v455 = vld [vmem:[%s435 + $0x68] sm:$0xff]
      %v456 = vld [vmem:[%s435 + $0x70] sm:$0xff]
      %v457 = vld [vmem:[%s435 + $0x78] sm:$0xff]
      %v458 = vld [vmem:[%s435 + $0x80] sm:$0xff]
      %v459 = vld [vmem:[%s435 + $0x88] sm:$0xff]
      %v460 = vld [vmem:[%s435 + $0x90] sm:$0xff]
      %v461 = vld [vmem:[%s435 + $0x98] sm:$0xff]
      %v462 = vld [vmem:[%s435 + $0xa0] sm:$0xff]
      %v463 = vld [vmem:[%s435 + $0xa8] sm:$0xff]
      %v464 = vld [vmem:[%s435 + $0xb0] sm:$0xff]
      %v465 = vld [vmem:[%s435 + $0xb8] sm:$0xff]
      %v466 = vld [vmem:[%s435 + $0xc0] sm:$0xff]
      %v467 = vld [vmem:[%s435 + $0xc8] sm:$0xff]
      %v468 = vld [vmem:[%s435 + $0xd0] sm:$0xff]
      %v469 = vld [vmem:[%s435 + $0xd8] sm:$0xff]
      %v470 = vld [vmem:[%s435 + $0xe0] sm:$0xff]
      %v471 = vld [vmem:[%s435 + $0xe8] sm:$0xff]
      %v472 = vld [vmem:[%s435 + $0xf0] sm:$0xff]
      %v473 = vld [vmem:[%s435 + $0xf8] sm:$0xff]
      %v474 = vld [vmem:[%s1] sm:$0x1]
      %v475 = vld [vmem:[%s2] sm:$0x1]
      %476 = vadd.xlane.f32.xlu0 %v442
      %v477 = vpop.xlane.xlu0 %476
      %478 = vadd.xlane.f32.xlu0 %v443
      %v479 = vpop.xlane.xlu0 %478
      %480 = vadd.xlane.f32.xlu0 %v444
      %v481 = vpop.xlane.xlu0 %480
      %482 = vadd.xlane.f32.xlu0 %v445
      %v483 = vpop.xlane.xlu0 %482
      %484 = vadd.xlane.f32.xlu0 %v446
      %v485 = vpop.xlane.xlu0 %484
      %486 = vadd.xlane.f32.xlu0 %v447
      %v487 = vpop.xlane.xlu0 %486
      %488 = vadd.xlane.f32.xlu0 %v448
      %v489 = vpop.xlane.xlu0 %488
      %490 = vadd.xlane.f32.xlu0 %v449
      %v491 = vpop.xlane.xlu0 %490
      %492 = vadd.xlane.f32.xlu0 %v450
      %v493 = vpop.xlane.xlu0 %492
      %494 = vadd.xlane.f32.xlu0 %v451
      %v495 = vpop.xlane.xlu0 %494
      %496 = vadd.xlane.f32.xlu0 %v452
      %v497 = vpop.xlane.xlu0 %496
      %498 = vadd.xlane.f32.xlu0 %v453
      %v499 = vpop.xlane.xlu0 %498
      %500 = vadd.xlane.f32.xlu0 %v454
      %v501 = vpop.xlane.xlu0 %500
      %502 = vadd.xlane.f32.xlu0 %v455
      %v503 = vpop.xlane.xlu0 %502
      %504 = vadd.xlane.f32.xlu0 %v456
      %v505 = vpop.xlane.xlu0 %504
      %506 = vadd.xlane.f32.xlu0 %v457
      %v507 = vpop.xlane.xlu0 %506
      %508 = vadd.xlane.f32.xlu0 %v458
      %v509 = vpop.xlane.xlu0 %508
      %510 = vadd.xlane.f32.xlu0 %v459
      %v511 = vpop.xlane.xlu0 %510
      %512 = vadd.xlane.f32.xlu0 %v460
      %v513 = vpop.xlane.xlu0 %512
      %514 = vadd.xlane.f32.xlu0 %v461
      %v515 = vpop.xlane.xlu0 %514
      %516 = vadd.xlane.f32.xlu0 %v462
      %v517 = vpop.xlane.xlu0 %516
      %518 = vadd.xlane.f32.xlu0 %v463
      %v519 = vpop.xlane.xlu0 %518
      %520 = vadd.xlane.f32.xlu0 %v464
      %v521 = vpop.xlane.xlu0 %520
      %522 = vadd.xlane.f32.xlu0 %v465
      %v523 = vpop.xlane.xlu0 %522
      %524 = vadd.xlane.f32.xlu0 %v466
      %v525 = vpop.xlane.xlu0 %524
      %526 = vadd.xlane.f32.xlu0 %v467
      %v527 = vpop.xlane.xlu0 %526
      %528 = vadd.xlane.f32.xlu0 %v468
      %v529 = vpop.xlane.xlu0 %528
      %530 = vadd.xlane.f32.xlu0 %v469
      %v531 = vpop.xlane.xlu0 %530
      %532 = vadd.xlane.f32.xlu0 %v470
      %v533 = vpop.xlane.xlu0 %532
      %534 = vadd.xlane.f32.xlu0 %v471
      %v535 = vpop.xlane.xlu0 %534
      %536 = vadd.xlane.f32.xlu0 %v472
      %v537 = vpop.xlane.xlu0 %536
      %538 = vadd.xlane.f32.xlu0 %v473
      %v539 = vpop.xlane.xlu0 %538
      %v540 = vrcp.pop 128.0
      %v541 = vmul.f32 %v477, %v540
      %v542 = vmul.f32 %v479, %v540
      %v543 = vmul.f32 %v481, %v540
      %v544 = vmul.f32 %v483, %v540
      %v545 = vmul.f32 %v485, %v540
      %v546 = vmul.f32 %v487, %v540
      %v547 = vmul.f32 %v489, %v540
      %v548 = vmul.f32 %v491, %v540
      %v549 = vmul.f32 %v493, %v540
      %v550 = vmul.f32 %v495, %v540
      %v551 = vmul.f32 %v497, %v540
      %v552 = vmul.f32 %v499, %v540
      %v553 = vmul.f32 %v501, %v540
      %v554 = vmul.f32 %v503, %v540
      %v555 = vmul.f32 %v505, %v540
      %v556 = vmul.f32 %v507, %v540
      %v557 = vmul.f32 %v509, %v540
      %v558 = vmul.f32 %v511, %v540
      %v559 = vmul.f32 %v513, %v540
      %v560 = vmul.f32 %v515, %v540
      %v561 = vmul.f32 %v517, %v540
      %v562 = vmul.f32 %v519, %v540
      %v563 = vmul.f32 %v521, %v540
      %v564 = vmul.f32 %v523, %v540
      %v565 = vmul.f32 %v525, %v540
      %v566 = vmul.f32 %v527, %v540
      %v567 = vmul.f32 %v529, %v540
      %v568 = vmul.f32 %v531, %v540
      %v569 = vmul.f32 %v533, %v540
      %v570 = vmul.f32 %v535, %v540
      %v571 = vmul.f32 %v537, %v540
      %v572 = vmul.f32 %v539, %v540
      %v573 = vsub.f32 %v442, %v541
      %v574 = vsub.f32 %v443, %v542
      %v575 = vsub.f32 %v444, %v543
      %v576 = vsub.f32 %v445, %v544
      %v577 = vsub.f32 %v446, %v545
      %v578 = vsub.f32 %v447, %v546
      %v579 = vsub.f32 %v448, %v547
      %v580 = vsub.f32 %v449, %v548
      %v581 = vsub.f32 %v450, %v549
      %v582 = vsub.f32 %v451, %v550
      %v583 = vsub.f32 %v452, %v551
      %v584 = vsub.f32 %v453, %v552
      %v585 = vsub.f32 %v454, %v553
      %v586 = vsub.f32 %v455, %v554
      %v587 = vsub.f32 %v456, %v555
      %v588 = vsub.f32 %v457, %v556
      %v589 = vsub.f32 %v458, %v557
      %v590 = vsub.f32 %v459, %v558
      %v591 = vsub.f32 %v460, %v559
      %v592 = vsub.f32 %v461, %v560
      %v593 = vsub.f32 %v462, %v561
      %v594 = vsub.f32 %v463, %v562
      %v595 = vsub.f32 %v464, %v563
      %v596 = vsub.f32 %v465, %v564
      %v597 = vsub.f32 %v466, %v565
      %v598 = vsub.f32 %v467, %v566
      %v599 = vsub.f32 %v468, %v567
      %v600 = vsub.f32 %v469, %v568
      %v601 = vsub.f32 %v470, %v569
      %v602 = vsub.f32 %v471, %v570
      %v603 = vsub.f32 %v472, %v571
      %v604 = vsub.f32 %v473, %v572
      %v605 = vmul.f32 %v573, %v573
      %v606 = vmul.f32 %v574, %v574
      %v607 = vmul.f32 %v575, %v575
      %v608 = vmul.f32 %v576, %v576
      %v609 = vmul.f32 %v577, %v577
      %v610 = vmul.f32 %v578, %v578
      %v611 = vmul.f32 %v579, %v579
      %v612 = vmul.f32 %v580, %v580
      %v613 = vmul.f32 %v581, %v581
      %v614 = vmul.f32 %v582, %v582
      %v615 = vmul.f32 %v583, %v583
      %v616 = vmul.f32 %v584, %v584
      %v617 = vmul.f32 %v585, %v585
      %v618 = vmul.f32 %v586, %v586
      %v619 = vmul.f32 %v587, %v587
      %v620 = vmul.f32 %v588, %v588
      %v621 = vmul.f32 %v589, %v589
      %v622 = vmul.f32 %v590, %v590
      %v623 = vmul.f32 %v591, %v591
      %v624 = vmul.f32 %v592, %v592
      %v625 = vmul.f32 %v593, %v593
      %v626 = vmul.f32 %v594, %v594
      %v627 = vmul.f32 %v595, %v595
      %v628 = vmul.f32 %v596, %v596
      %v629 = vmul.f32 %v597, %v597
      %v630 = vmul.f32 %v598, %v598
      %v631 = vmul.f32 %v599, %v599
      %v632 = vmul.f32 %v600, %v600
      %v633 = vmul.f32 %v601, %v601
      %v634 = vmul.f32 %v602, %v602
      %v635 = vmul.f32 %v603, %v603
      %v636 = vmul.f32 %v604, %v604
      %637 = vadd.xlane.f32.xlu0 %v605
      %v638 = vpop.xlane.xlu0 %637
      %639 = vadd.xlane.f32.xlu0 %v606
      %v640 = vpop.xlane.xlu0 %639
      %641 = vadd.xlane.f32.xlu0 %v607
      %v642 = vpop.xlane.xlu0 %641
      %643 = vadd.xlane.f32.xlu0 %v608
      %v644 = vpop.xlane.xlu0 %643
      %645 = vadd.xlane.f32.xlu0 %v609
      %v646 = vpop.xlane.xlu0 %645
      %647 = vadd.xlane.f32.xlu0 %v610
      %v648 = vpop.xlane.xlu0 %647
      %649 = vadd.xlane.f32.xlu0 %v611
      %v650 = vpop.xlane.xlu0 %649
      %651 = vadd.xlane.f32.xlu0 %v612
      %v652 = vpop.xlane.xlu0 %651
      %653 = vadd.xlane.f32.xlu0 %v613
      %v654 = vpop.xlane.xlu0 %653
      %655 = vadd.xlane.f32.xlu0 %v614
      %v656 = vpop.xlane.xlu0 %655
      %657 = vadd.xlane.f32.xlu0 %v615
      %v658 = vpop.xlane.xlu0 %657
      %659 = vadd.xlane.f32.xlu0 %v616
      %v660 = vpop.xlane.xlu0 %659
      %661 = vadd.xlane.f32.xlu0 %v617
      %v662 = vpop.xlane.xlu0 %661
      %663 = vadd.xlane.f32.xlu0 %v618
      %v664 = vpop.xlane.xlu0 %663
      %665 = vadd.xlane.f32.xlu0 %v619
      %v666 = vpop.xlane.xlu0 %665
      %667 = vadd.xlane.f32.xlu0 %v620
      %v668 = vpop.xlane.xlu0 %667
      %669 = vadd.xlane.f32.xlu0 %v621
      %v670 = vpop.xlane.xlu0 %669
      %671 = vadd.xlane.f32.xlu0 %v622
      %v672 = vpop.xlane.xlu0 %671
      %673 = vadd.xlane.f32.xlu0 %v623
      %v674 = vpop.xlane.xlu0 %673
      %675 = vadd.xlane.f32.xlu0 %v624
      %v676 = vpop.xlane.xlu0 %675
      %677 = vadd.xlane.f32.xlu0 %v625
      %v678 = vpop.xlane.xlu0 %677
      %679 = vadd.xlane.f32.xlu0 %v626
      %v680 = vpop.xlane.xlu0 %679
      %681 = vadd.xlane.f32.xlu0 %v627
      %v682 = vpop.xlane.xlu0 %681
      %683 = vadd.xlane.f32.xlu0 %v628
      %v684 = vpop.xlane.xlu0 %683
      %685 = vadd.xlane.f32.xlu0 %v629
      %v686 = vpop.xlane.xlu0 %685
      %687 = vadd.xlane.f32.xlu0 %v630
      %v688 = vpop.xlane.xlu0 %687
      %689 = vadd.xlane.f32.xlu0 %v631
      %v690 = vpop.xlane.xlu0 %689
      %691 = vadd.xlane.f32.xlu0 %v632
      %v692 = vpop.xlane.xlu0 %691
      %693 = vadd.xlane.f32.xlu0 %v633
      %v694 = vpop.xlane.xlu0 %693
      %695 = vadd.xlane.f32.xlu0 %v634
      %v696 = vpop.xlane.xlu0 %695
      %697 = vadd.xlane.f32.xlu0 %v635
      %v698 = vpop.xlane.xlu0 %697
      %699 = vadd.xlane.f32.xlu0 %v636
      %v700 = vpop.xlane.xlu0 %699
      %v701 = vmul.f32 %v638, %v540
      %v702 = vmul.f32 %v640, %v540
      %v703 = vmul.f32 %v642, %v540
      %v704 = vmul.f32 %v644, %v540
      %v705 = vmul.f32 %v646, %v540
      %v706 = vmul.f32 %v648, %v540
      %v707 = vmul.f32 %v650, %v540
      %v708 = vmul.f32 %v652, %v540
      %v709 = vmul.f32 %v654, %v540
      %v710 = vmul.f32 %v656, %v540
      %v711 = vmul.f32 %v658, %v540
      %v712 = vmul.f32 %v660, %v540
      %v713 = vmul.f32 %v662, %v540
      %v714 = vmul.f32 %v664, %v540
      %v715 = vmul.f32 %v666, %v540
      %v716 = vmul.f32 %v668, %v540
      %v717 = vmul.f32 %v670, %v540
      %v718 = vmul.f32 %v672, %v540
      %v719 = vmul.f32 %v674, %v540
      %v720 = vmul.f32 %v676, %v540
      %v721 = vmul.f32 %v678, %v540
      %v722 = vmul.f32 %v680, %v540
      %v723 = vmul.f32 %v682, %v540
      %v724 = vmul.f32 %v684, %v540
      %v725 = vmul.f32 %v686, %v540
      %v726 = vmul.f32 %v688, %v540
      %v727 = vmul.f32 %v690, %v540
      %v728 = vmul.f32 %v692, %v540
      %v729 = vmul.f32 %v694, %v540
      %v730 = vmul.f32 %v696, %v540
      %v731 = vmul.f32 %v698, %v540
      %v732 = vmul.f32 %v700, %v540
      %v733 = vadd.f32 %v701, 1e-06
      %v734 = vadd.f32 %v702, 1e-06
      %v735 = vadd.f32 %v703, 1e-06
      %v736 = vadd.f32 %v704, 1e-06
      %v737 = vadd.f32 %v705, 1e-06
      %v738 = vadd.f32 %v706, 1e-06
      %v739 = vadd.f32 %v707, 1e-06
      %v740 = vadd.f32 %v708, 1e-06
      %v741 = vadd.f32 %v709, 1e-06
      %v742 = vadd.f32 %v710, 1e-06
      %v743 = vadd.f32 %v711, 1e-06
      %v744 = vadd.f32 %v712, 1e-06
      %v745 = vadd.f32 %v713, 1e-06
      %v746 = vadd.f32 %v714, 1e-06
      %v747 = vadd.f32 %v715, 1e-06
      %v748 = vadd.f32 %v716, 1e-06
      %v749 = vadd.f32 %v717, 1e-06
      %v750 = vadd.f32 %v718, 1e-06
      %v751 = vadd.f32 %v719, 1e-06
      %v752 = vadd.f32 %v720, 1e-06
      %v753 = vadd.f32 %v721, 1e-06
      %v754 = vadd.f32 %v722, 1e-06
      %v755 = vadd.f32 %v723, 1e-06
      %v756 = vadd.f32 %v724, 1e-06
      %v757 = vadd.f32 %v725, 1e-06
      %v758 = vadd.f32 %v726, 1e-06
      %v759 = vadd.f32 %v727, 1e-06
      %v760 = vadd.f32 %v728, 1e-06
      %v761 = vadd.f32 %v729, 1e-06
      %v762 = vadd.f32 %v730, 1e-06
      %v763 = vadd.f32 %v731, 1e-06
      %v764 = vadd.f32 %v732, 1e-06
      %v765 = vrsqrt.pop %v733
      %v766 = vrsqrt.pop %v734
      %v767 = vrsqrt.pop %v735
      %v768 = vrsqrt.pop %v736
      %v769 = vrsqrt.pop %v737
      %v770 = vrsqrt.pop %v738
      %v771 = vrsqrt.pop %v739
      %v772 = vrsqrt.pop %v740
      %v773 = vrsqrt.pop %v741
      %v774 = vrsqrt.pop %v742
      %v775 = vrsqrt.pop %v743
      %v776 = vrsqrt.pop %v744
      %v777 = vrsqrt.pop %v745
      %v778 = vrsqrt.pop %v746
      %v779 = vrsqrt.pop %v747
      %v780 = vrsqrt.pop %v748
      %v781 = vrsqrt.pop %v749
      %v782 = vrsqrt.pop %v750
      %v783 = vrsqrt.pop %v751
      %v784 = vrsqrt.pop %v752
      %v785 = vrsqrt.pop %v753
      %v786 = vrsqrt.pop %v754
      %v787 = vrsqrt.pop %v755
      %v788 = vrsqrt.pop %v756
      %v789 = vrsqrt.pop %v757
      %v790 = vrsqrt.pop %v758
      %v791 = vrsqrt.pop %v759
      %v792 = vrsqrt.pop %v760
      %v793 = vrsqrt.pop %v761
      %v794 = vrsqrt.pop %v762
      %v795 = vrsqrt.pop %v763
      %v796 = vrsqrt.pop %v764
      %v797 = vmul.f32 %v573, %v765
      %v798 = vmul.f32 %v574, %v766
      %v799 = vmul.f32 %v575, %v767
      %v800 = vmul.f32 %v576, %v768
      %v801 = vmul.f32 %v577, %v769
      %v802 = vmul.f32 %v578, %v770
      %v803 = vmul.f32 %v579, %v771
      %v804 = vmul.f32 %v580, %v772
      %v805 = vmul.f32 %v581, %v773
      %v806 = vmul.f32 %v582, %v774
      %v807 = vmul.f32 %v583, %v775
      %v808 = vmul.f32 %v584, %v776
      %v809 = vmul.f32 %v585, %v777
      %v810 = vmul.f32 %v586, %v778
      %v811 = vmul.f32 %v587, %v779
      %v812 = vmul.f32 %v588, %v780
      %v813 = vmul.f32 %v589, %v781
      %v814 = vmul.f32 %v590, %v782
      %v815 = vmul.f32 %v591, %v783
      %v816 = vmul.f32 %v592, %v784
      %v817 = vmul.f32 %v593, %v785
      %v818 = vmul.f32 %v594, %v786
      %v819 = vmul.f32 %v595, %v787
      %v820 = vmul.f32 %v596, %v788
      %v821 = vmul.f32 %v597, %v789
      %v822 = vmul.f32 %v598, %v790
      %v823 = vmul.f32 %v599, %v791
      %v824 = vmul.f32 %v600, %v792
      %v825 = vmul.f32 %v601, %v793
      %v826 = vmul.f32 %v602, %v794
      %v827 = vmul.f32 %v603, %v795
      %v828 = vmul.f32 %v604, %v796
      %v830 = vlaneseq
      %v831 = vshrl.u32 %v830, 7
      %v832 = vsub.s32 0, %v831
      %v833 = vrot.slane %v474, %v832
      %v835 = vmul.f32 %v797, %v833
      %v836 = vmul.f32 %v798, %v833
      %v837 = vmul.f32 %v799, %v833
      %v838 = vmul.f32 %v800, %v833
      %v839 = vmul.f32 %v801, %v833
      %v840 = vmul.f32 %v802, %v833
      %v841 = vmul.f32 %v803, %v833
      %v842 = vmul.f32 %v804, %v833
      %v843 = vmul.f32 %v805, %v833
      %v844 = vmul.f32 %v806, %v833
      %v845 = vmul.f32 %v807, %v833
      %v846 = vmul.f32 %v808, %v833
      %v847 = vmul.f32 %v809, %v833
      %v848 = vmul.f32 %v810, %v833
      %v849 = vmul.f32 %v811, %v833
      %v850 = vmul.f32 %v812, %v833
      %v851 = vmul.f32 %v813, %v833
      %v852 = vmul.f32 %v814, %v833
      %v853 = vmul.f32 %v815, %v833
      %v854 = vmul.f32 %v816, %v833
      %v855 = vmul.f32 %v817, %v833
      %v856 = vmul.f32 %v818, %v833
      %v857 = vmul.f32 %v819, %v833
      %v858 = vmul.f32 %v820, %v833
      %v859 = vmul.f32 %v821, %v833
      %v860 = vmul.f32 %v822, %v833
      %v861 = vmul.f32 %v823, %v833
      %v862 = vmul.f32 %v824, %v833
      %v863 = vmul.f32 %v825, %v833
      %v864 = vmul.f32 %v826, %v833
      %v865 = vmul.f32 %v827, %v833
      %v866 = vmul.f32 %v828, %v833
      %v868 = vlaneseq
      %v869 = vshrl.u32 %v868, 7
      %v870 = vsub.s32 0, %v869
      %v871 = vrot.slane %v475, %v870
      %v873 = vadd.f32 %v835, %v871
      %v874 = vadd.f32 %v836, %v871
      %v875 = vadd.f32 %v837, %v871
      %v876 = vadd.f32 %v838, %v871
      %v877 = vadd.f32 %v839, %v871
      %v878 = vadd.f32 %v840, %v871
      %v879 = vadd.f32 %v841, %v871
      %v880 = vadd.f32 %v842, %v871
      %v881 = vadd.f32 %v843, %v871
      %v882 = vadd.f32 %v844, %v871
      %v883 = vadd.f32 %v845, %v871
      %v884 = vadd.f32 %v846, %v871
      %v885 = vadd.f32 %v847, %v871
      %v886 = vadd.f32 %v848, %v871
      %v887 = vadd.f32 %v849, %v871
      %v888 = vadd.f32 %v850, %v871
      %v889 = vadd.f32 %v851, %v871
      %v890 = vadd.f32 %v852, %v871
      %v891 = vadd.f32 %v853, %v871
      %v892 = vadd.f32 %v854, %v871
      %v893 = vadd.f32 %v855, %v871
      %v894 = vadd.f32 %v856, %v871
      %v895 = vadd.f32 %v857, %v871
      %v896 = vadd.f32 %v858, %v871
      %v897 = vadd.f32 %v859, %v871
      %v898 = vadd.f32 %v860, %v871
      %v899 = vadd.f32 %v861, %v871
      %v900 = vadd.f32 %v862, %v871
      %v901 = vadd.f32 %v863, %v871
      %v902 = vadd.f32 %v864, %v871
      %v903 = vadd.f32 %v865, %v871
      %v904 = vadd.f32 %v866, %v871
      %v905 = vpack.c.bf16 %v874, %v873
      %v906 = vpack.c.bf16 %v876, %v875
      %v907 = vpack.c.bf16 %v878, %v877
      %v908 = vpack.c.bf16 %v880, %v879
      %v909 = vpack.c.bf16 %v882, %v881
      %v910 = vpack.c.bf16 %v884, %v883
      %v911 = vpack.c.bf16 %v886, %v885
      %v912 = vpack.c.bf16 %v888, %v887
      %v913 = vpack.c.bf16 %v890, %v889
      %v914 = vpack.c.bf16 %v892, %v891
      %v915 = vpack.c.bf16 %v894, %v893
      %v916 = vpack.c.bf16 %v896, %v895
      %v917 = vpack.c.bf16 %v898, %v897
      %v918 = vpack.c.bf16 %v900, %v899
      %v919 = vpack.c.bf16 %v902, %v901
      %v920 = vpack.c.bf16 %v904, %v903
      %v921 = vld [vmem:[%s3] sm:$0xff]
      %v922 = vld [vmem:[%s3 + $0x8] sm:$0xf]
      %v923 = vld [vmem:[%s3 + $0xc] sm:$0xff]
      %v924 = vld [vmem:[%s3 + $0x14] sm:$0xf]
      %v925 = vld [vmem:[%s3 + $0x18] sm:$0xff]
      %v926 = vld [vmem:[%s3 + $0x20] sm:$0xf]
      %v927 = vld [vmem:[%s3 + $0x24] sm:$0xff]
      %v928 = vld [vmem:[%s3 + $0x2c] sm:$0xf]
      %v929 = vld [vmem:[%s3 + $0x30] sm:$0xff]
      %v930 = vld [vmem:[%s3 + $0x38] sm:$0xf]
      %v931 = vld [vmem:[%s3 + $0x3c] sm:$0xff]
      %v932 = vld [vmem:[%s3 + $0x44] sm:$0xf]
      %v933 = vld [vmem:[%s3 + $0x48] sm:$0xff]
      %v934 = vld [vmem:[%s3 + $0x50] sm:$0xf]
      %v935 = vld [vmem:[%s3 + $0x54] sm:$0xff]
      %v936 = vld [vmem:[%s3 + $0x5c] sm:$0xf]
      %v937 = vld [vmem:[%s3 + $0x60] sm:$0xff]
      %v938 = vld [vmem:[%s3 + $0x68] sm:$0xf]
      %v939 = vld [vmem:[%s3 + $0x6c] sm:$0xff]
      %v940 = vld [vmem:[%s3 + $0x74] sm:$0xf]
      %v941 = vld [vmem:[%s3 + $0x78] sm:$0xff]
      %v942 = vld [vmem:[%s3 + $0x80] sm:$0xf]
      %v943 = vld [vmem:[%s3 + $0x84] sm:$0xff]
      %v944 = vld [vmem:[%s3 + $0x8c] sm:$0xf]
      %v945 = vld [vmem:[%s3 + $0x90] sm:$0xff]
      %v946 = vld [vmem:[%s3 + $0x98] sm:$0xf]
      %v947 = vld [vmem:[%s3 + $0x9c] sm:$0xff]
      %v948 = vld [vmem:[%s3 + $0xa4] sm:$0xf]
      %v949 = vld [vmem:[%s3 + $0xa8] sm:$0xff]
      %v950 = vld [vmem:[%s3 + $0xb0] sm:$0xf]
      %v951 = vld [vmem:[%s3 + $0xb4] sm:$0xff]
      %v952 = vld [vmem:[%s3 + $0xbc] sm:$0xf]
      %v953 = vld [vmem:[%s4] sm:$0x7]
      %v955 = vlaneseq
      %v956 = vshrl.u32 %v955, 7
      %v957 = vsub.s32 0, %v956
      %v958 = vrot.slane %v953, %v957
      %v959 = vlaneseq
      %v960 = vshrl.u32 %v959, 7
      %v961 = vsub.s32 1, %v960
      %v962 = vrot.slane %v953, %v961
      %v963 = vlaneseq
      %v964 = vshrl.u32 %v963, 7
      %v965 = vsub.s32 2, %v964
      %v966 = vrot.slane %v953, %v965
      %v1002 = vunpack.c.l.b16 %v921
      %v1003 = vunpack.c.h.b16 %v921
      %v1004 = vunpack.c.l.b16 %v922
      %v1005 = vunpack.c.l.b16 %v923
      %v1006 = vunpack.c.h.b16 %v923
      %v1007 = vunpack.c.l.b16 %v924
      %v1008 = vunpack.c.l.b16 %v925
      %v1009 = vunpack.c.h.b16 %v925
      %v1010 = vunpack.c.l.b16 %v926
      %v1011 = vunpack.c.l.b16 %v927
      %v1012 = vunpack.c.h.b16 %v927
      %v1013 = vunpack.c.l.b16 %v928
      %v1014 = vunpack.c.l.b16 %v929
      %v1015 = vunpack.c.h.b16 %v929
      %v1016 = vunpack.c.l.b16 %v930
      %v1017 = vunpack.c.l.b16 %v931
      %v1018 = vunpack.c.h.b16 %v931
      %v1019 = vunpack.c.l.b16 %v932
      %v1020 = vunpack.c.l.b16 %v933
      %v1021 = vunpack.c.h.b16 %v933
      %v1022 = vunpack.c.l.b16 %v934
      %v1023 = vunpack.c.l.b16 %v935
      %v1024 = vunpack.c.h.b16 %v935
      %v1025 = vunpack.c.l.b16 %v936
      %v1026 = vunpack.c.l.b16 %v937
      %v1027 = vunpack.c.h.b16 %v937
      %v1028 = vunpack.c.l.b16 %v938
      %v1029 = vunpack.c.l.b16 %v939
      %v1030 = vunpack.c.h.b16 %v939
      %v1031 = vunpack.c.l.b16 %v940
      %v1032 = vunpack.c.l.b16 %v941
      %v1033 = vunpack.c.h.b16 %v941
      %v1034 = vunpack.c.l.b16 %v942
      %v1035 = vunpack.c.l.b16 %v943
      %v1036 = vunpack.c.h.b16 %v943
      %v1037 = vunpack.c.l.b16 %v944
      %v1038 = vunpack.c.l.b16 %v945
      %v1039 = vunpack.c.h.b16 %v945
      %v1040 = vunpack.c.l.b16 %v946
      %v1041 = vunpack.c.l.b16 %v947
      %v1042 = vunpack.c.h.b16 %v947
      %v1043 = vunpack.c.l.b16 %v948
      %v1044 = vunpack.c.l.b16 %v949
      %v1045 = vunpack.c.h.b16 %v949
      %v1046 = vunpack.c.l.b16 %v950
      %v1047 = vunpack.c.l.b16 %v951
      %v1048 = vunpack.c.h.b16 %v951
      %v1049 = vunpack.c.l.b16 %v952
      %v1050 = vpack.c.b16 %v1005, %v1002
      %v1051 = vpack.c.b16 %v1006, %v1003
      %v1052 = vpack.c.b16 %v1007, %v1004
      %v1053 = vpack.c.b16 %v1011, %v1008
      %v1054 = vpack.c.b16 %v1012, %v1009
      %v1055 = vpack.c.b16 %v1013, %v1010
      %v1056 = vpack.c.b16 %v1017, %v1014
      %v1057 = vpack.c.b16 %v1018, %v1015
      %v1058 = vpack.c.b16 %v1019, %v1016
      %v1059 = vpack.c.b16 %v1023, %v1020
      %v1060 = vpack.c.b16 %v1024, %v1021
      %v1061 = vpack.c.b16 %v1025, %v1022
      %v1062 = vpack.c.b16 %v1029, %v1026
      %v1063 = vpack.c.b16 %v1030, %v1027
      %v1064 = vpack.c.b16 %v1031, %v1028
      %v1065 = vpack.c.b16 %v1035, %v1032
      %v1066 = vpack.c.b16 %v1036, %v1033
      %v1067 = vpack.c.b16 %v1037, %v1034
      %v1068 = vpack.c.b16 %v1041, %v1038
      %v1069 = vpack.c.b16 %v1042, %v1039
      %v1070 = vpack.c.b16 %v1043, %v1040
      %v1071 = vpack.c.b16 %v1047, %v1044
      %v1072 = vpack.c.b16 %v1048, %v1045
      %v1073 = vpack.c.b16 %v1049, %v1046
      %1098 = vmatprep.subr.bf16.mxu0 %v1051
      %1099 = vmatpush1.bf16.msra.mxu0 %v1050
      %1100 = vmatprep.subr.bf16.mxu0 %v1054
      %1101 = vmatpush1.bf16.msra.mxu0 %v1053
      %1102 = vmatprep.subr.bf16.mxu0 %v1057
      %1103 = vmatpush1.bf16.msra.mxu0 %v1056
      %1104 = vmatprep.subr.bf16.mxu0 %v1060
      %1105 = vmatpush1.bf16.msra.mxu0 %v1059
      %1106 = vmatprep.subr.bf16.mxu0 %v1063
      %1107 = vmatpush1.bf16.msra.mxu0 %v1062
      %1108 = vmatprep.subr.bf16.mxu0 %v1066
      %1109 = vmatpush1.bf16.msra.mxu0 %v1065
      %1110 = vmatprep.subr.bf16.mxu0 %v1069
      %1111 = vmatpush1.bf16.msra.mxu0 %v1068
      %1112 = vmatprep.subr.bf16.mxu0 %v1072
      %1113 = vmatpush1.bf16.msra.mxu0 %v1071
      %1114 = vmatprep.subr.bf16.mxu0 0
      %1115 = vmatpush1.bf16.msra.mxu0 0
      %1116 = vmatprep.subr.bf16.mxu0 0
      %1117 = vmatpush1.bf16.msra.mxu0 0
      %1118 = vmatprep.subr.bf16.mxu0 0
      %1119 = vmatpush1.bf16.msra.mxu0 0
      %1120 = vmatprep.subr.bf16.mxu0 0
      %1121 = vmatpush1.bf16.msra.mxu0 0
      %1122 = vmatprep.subr.bf16.mxu0 0
      %1123 = vmatpush1.bf16.msra.mxu0 0
      %1124 = vmatprep.subr.bf16.mxu0 0
      %1125 = vmatpush1.bf16.msra.mxu0 0
      %1126 = vmatprep.subr.bf16.mxu0 0
      %1127 = vmatpush1.bf16.msra.mxu0 0
      %1128 = vmatprep.subr.bf16.mxu0 0
      %1129 = vmatpush1.bf16.msra.mxu0 0
      %1130 = vmatprep.mubr.bf16.mxu0 0
      %1131 = vmatmul.mubr.bf16.gmra.mrb[0].mxu0 %v905
      %v1132 = vpop.f32.mrb[0].mxu0
      %v1133 = vadd.f32 %v958, %v1132
      %v1134 = vpop.f32.mrb[0].mxu0
      %v1135 = vadd.f32 %v962, %v1134
      %v1136 = vpop.f32.mrb[0].mxu0
      %v1137 = vadd.f32 %v958, %v1136
      %v1138 = vpop.f32.mrb[0].mxu0
      %v1139 = vadd.f32 %v962, %v1138
      %1140 = vmatprep.mubr.bf16.mxu0 0
      %1141 = vmatmul.mubr.bf16.gmra.mrb[0].mxu0 %v906
      %v1142 = vpop.f32.mrb[0].mxu0
      %v1143 = vadd.f32 %v958, %v1142
      %v1144 = vpop.f32.mrb[0].mxu0
      %v1145 = vadd.f32 %v962, %v1144
      %v1146 = vpop.f32.mrb[0].mxu0
      %v1147 = vadd.f32 %v958, %v1146
      %v1148 = vpop.f32.mrb[0].mxu0
      %v1149 = vadd.f32 %v962, %v1148
      %1150 = vmatprep.mubr.bf16.mxu0 0
      %1151 = vmatmul.mubr.bf16.gmra.mrb[0].mxu0 %v907
      %v1152 = vpop.f32.mrb[0].mxu0
      %v1153 = vadd.f32 %v958, %v1152
      %v1154 = vpop.f32.mrb[0].mxu0
      %v1155 = vadd.f32 %v962, %v1154
      %v1156 = vpop.f32.mrb[0].mxu0
      %v1157 = vadd.f32 %v958, %v1156
      %v1158 = vpop.f32.mrb[0].mxu0
      %v1159 = vadd.f32 %v962, %v1158
      %1160 = vmatprep.mubr.bf16.mxu0 0
      %1161 = vmatmul.mubr.bf16.gmra.mrb[0].mxu0 %v908
      %v1162 = vpop.f32.mrb[0].mxu0
      %v1163 = vadd.f32 %v958, %v1162
      %v1164 = vpop.f32.mrb[0].mxu0
      %v1165 = vadd.f32 %v962, %v1164
      %v1166 = vpop.f32.mrb[0].mxu0
      %v1167 = vadd.f32 %v958, %v1166
      %v1168 = vpop.f32.mrb[0].mxu0
      %v1169 = vadd.f32 %v962, %v1168
      %1170 = vmatprep.mubr.bf16.mxu0 0
      %1171 = vmatmul.mubr.bf16.gmra.mrb[0].mxu0 %v909
      %v1172 = vpop.f32.mrb[0].mxu0
      %v1173 = vadd.f32 %v958, %v1172
      %v1174 = vpop.f32.mrb[0].mxu0
      %v1175 = vadd.f32 %v962, %v1174
      %v1176 = vpop.f32.mrb[0].mxu0
      %v1177 = vadd.f32 %v958, %v1176
      %v1178 = vpop.f32.mrb[0].mxu0
      %v1179 = vadd.f32 %v962, %v1178
      %1180 = vmatprep.mubr.bf16.mxu0 0
      %1181 = vmatmul.mubr.bf16.gmra.mrb[0].mxu0 %v910
      %v1182 = vpop.f32.mrb[0].mxu0
      %v1183 = vadd.f32 %v958, %v1182
      %v1184 = vpop.f32.mrb[0].mxu0
      %v1185 = vadd.f32 %v962, %v1184
      %v1186 = vpop.f32.mrb[0].mxu0
      %v1187 = vadd.f32 %v958, %v1186
      %v1188 = vpop.f32.mrb[0].mxu0
      %v1189 = vadd.f32 %v962, %v1188
      %1190 = vmatprep.mubr.bf16.mxu0 0
      %1191 = vmatmul.mubr.bf16.gmra.mrb[0].mxu0 %v911
      %v1192 = vpop.f32.mrb[0].mxu0
      %v1193 = vadd.f32 %v958, %v1192
      %v1194 = vpop.f32.mrb[0].mxu0
      %v1195 = vadd.f32 %v962, %v1194
      %v1196 = vpop.f32.mrb[0].mxu0
      %v1197 = vadd.f32 %v958, %v1196
      %v1198 = vpop.f32.mrb[0].mxu0
      %v1199 = vadd.f32 %v962, %v1198
      %1200 = vmatprep.mubr.bf16.mxu0 0
      %1201 = vmatmul.mubr.bf16.gmra.mrb[0].mxu0 %v912
      %v1202 = vpop.f32.mrb[0].mxu0
      %v1203 = vadd.f32 %v958, %v1202
      %v1204 = vpop.f32.mrb[0].mxu0
      %v1205 = vadd.f32 %v962, %v1204
      %v1206 = vpop.f32.mrb[0].mxu0
      %v1207 = vadd.f32 %v958, %v1206
      %v1208 = vpop.f32.mrb[0].mxu0
      %v1209 = vadd.f32 %v962, %v1208
      %1210 = vmatprep.mubr.bf16.mxu0 0
      %1211 = vmatmul.mubr.bf16.gmra.mrb[0].mxu0 %v913
      %v1212 = vpop.f32.mrb[0].mxu0
      %v1213 = vadd.f32 %v958, %v1212
      %v1214 = vpop.f32.mrb[0].mxu0
      %v1215 = vadd.f32 %v962, %v1214
      %v1216 = vpop.f32.mrb[0].mxu0
      %v1217 = vadd.f32 %v958, %v1216
      %v1218 = vpop.f32.mrb[0].mxu0
      %v1219 = vadd.f32 %v962, %v1218
      %1220 = vmatprep.mubr.bf16.mxu0 0
      %1221 = vmatmul.mubr.bf16.gmra.mrb[0].mxu0 %v914
      %v1222 = vpop.f32.mrb[0].mxu0
      %v1223 = vadd.f32 %v958, %v1222
      %v1224 = vpop.f32.mrb[0].mxu0
      %v1225 = vadd.f32 %v962, %v1224
      %v1226 = vpop.f32.mrb[0].mxu0
      %v1227 = vadd.f32 %v958, %v1226
      %v1228 = vpop.f32.mrb[0].mxu0
      %v1229 = vadd.f32 %v962, %v1228
      %1230 = vmatprep.mubr.bf16.mxu0 0
      %1231 = vmatmul.mubr.bf16.gmra.mrb[0].mxu0 %v915
      %v1232 = vpop.f32.mrb[0].mxu0
      %v1233 = vadd.f32 %v958, %v1232
      %v1234 = vpop.f32.mrb[0].mxu0
      %v1235 = vadd.f32 %v962, %v1234
      %v1236 = vpop.f32.mrb[0].mxu0
      %v1237 = vadd.f32 %v958, %v1236
      %v1238 = vpop.f32.mrb[0].mxu0
      %v1239 = vadd.f32 %v962, %v1238
      %1240 = vmatprep.mubr.bf16.mxu0 0
      %1241 = vmatmul.mubr.bf16.gmra.mrb[0].mxu0 %v916
      %v1242 = vpop.f32.mrb[0].mxu0
      %v1243 = vadd.f32 %v958, %v1242
      %v1244 = vpop.f32.mrb[0].mxu0
      %v1245 = vadd.f32 %v962, %v1244
      %v1246 = vpop.f32.mrb[0].mxu0
      %v1247 = vadd.f32 %v958, %v1246
      %v1248 = vpop.f32.mrb[0].mxu0
      %v1249 = vadd.f32 %v962, %v1248
      %1250 = vmatprep.mubr.bf16.mxu0 0
      %1251 = vmatmul.mubr.bf16.gmra.mrb[0].mxu0 %v917
      %v1252 = vpop.f32.mrb[0].mxu0
      %v1253 = vadd.f32 %v958, %v1252
      %v1254 = vpop.f32.mrb[0].mxu0
      %v1255 = vadd.f32 %v962, %v1254
      %v1256 = vpop.f32.mrb[0].mxu0
      %v1257 = vadd.f32 %v958, %v1256
      %v1258 = vpop.f32.mrb[0].mxu0
      %v1259 = vadd.f32 %v962, %v1258
      %1260 = vmatprep.mubr.bf16.mxu0 0
      %1261 = vmatmul.mubr.bf16.gmra.mrb[0].mxu0 %v918
      %v1262 = vpop.f32.mrb[0].mxu0
      %v1263 = vadd.f32 %v958, %v1262
      %v1264 = vpop.f32.mrb[0].mxu0
      %v1265 = vadd.f32 %v962, %v1264
      %v1266 = vpop.f32.mrb[0].mxu0
      %v1267 = vadd.f32 %v958, %v1266
      %v1268 = vpop.f32.mrb[0].mxu0
      %v1269 = vadd.f32 %v962, %v1268
      %1270 = vmatprep.mubr.bf16.mxu0 0
      %1271 = vmatmul.mubr.bf16.gmra.mrb[0].mxu0 %v919
      %v1272 = vpop.f32.mrb[0].mxu0
      %v1273 = vadd.f32 %v958, %v1272
      %v1274 = vpop.f32.mrb[0].mxu0
      %v1275 = vadd.f32 %v962, %v1274
      %v1276 = vpop.f32.mrb[0].mxu0
      %v1277 = vadd.f32 %v958, %v1276
      %v1278 = vpop.f32.mrb[0].mxu0
      %v1279 = vadd.f32 %v962, %v1278
      %1280 = vmatprep.mubr.bf16.mxu0 0
      %1281 = vmatmul.mubr.bf16.gmra.mrb[0].mxu0 %v920
      %v1282 = vpop.f32.mrb[0].mxu0
      %v1283 = vadd.f32 %v958, %v1282
      %v1284 = vpop.f32.mrb[0].mxu0
      %v1285 = vadd.f32 %v962, %v1284
      %v1286 = vpop.f32.mrb[0].mxu0
      %v1287 = vadd.f32 %v958, %v1286
      %v1288 = vpop.f32.mrb[0].mxu0
      %v1289 = vadd.f32 %v962, %v1288
      %1290 = vdwg.mxu0
      %1291 = vmatprep.subr.bf16.mxu0 0
      %1292 = vmatpush1.bf16.msra.mxu0 %v1052
      %1293 = vmatprep.subr.bf16.mxu0 0
      %1294 = vmatpush1.bf16.msra.mxu0 %v1055
      %1295 = vmatprep.subr.bf16.mxu0 0
      %1296 = vmatpush1.bf16.msra.mxu0 %v1058
      %1297 = vmatprep.subr.bf16.mxu0 0
      %1298 = vmatpush1.bf16.msra.mxu0 %v1061
      %1299 = vmatprep.subr.bf16.mxu0 0
      %1300 = vmatpush1.bf16.msra.mxu0 %v1064
      %1301 = vmatprep.subr.bf16.mxu0 0
      %1302 = vmatpush1.bf16.msra.mxu0 %v1067
      %1303 = vmatprep.subr.bf16.mxu0 0
      %1304 = vmatpush1.bf16.msra.mxu0 %v1070
      %1305 = vmatprep.subr.bf16.mxu0 0
      %1306 = vmatpush1.bf16.msra.mxu0 %v1073
      %1307 = vmatprep.subr.bf16.mxu0 0
      %1308 = vmatpush1.bf16.msra.mxu0 0
      %1309 = vmatprep.subr.bf16.mxu0 0
      %1310 = vmatpush1.bf16.msra.mxu0 0
      %1311 = vmatprep.subr.bf16.mxu0 0
      %1312 = vmatpush1.bf16.msra.mxu0 0
      %1313 = vmatprep.subr.bf16.mxu0 0
      %1314 = vmatpush1.bf16.msra.mxu0 0
      %1315 = vmatprep.subr.bf16.mxu0 0
      %1316 = vmatpush1.bf16.msra.mxu0 0
      %1317 = vmatprep.subr.bf16.mxu0 0
      %1318 = vmatpush1.bf16.msra.mxu0 0
      %1319 = vmatprep.subr.bf16.mxu0 0
      %1320 = vmatpush1.bf16.msra.mxu0 0
      %1321 = vmatprep.subr.bf16.mxu0 0
      %1322 = vmatpush1.bf16.msra.mxu0 0
      %1323 = vmatprep.mubr.bf16.mxu0 0
      %1324 = vmatmul.mubr.bf16.gmra.mrb[0].mxu0 %v905
      %v1325 = vpop.f32.mrb[0].mxu0
      %v1326 = vadd.f32 %v966, %v1325
      %v1327 = vpop.f32.mrb[0].mxu0
      %v1328 = vpop.f32.mrb[0].mxu0
      %v1329 = vadd.f32 %v966, %v1328
      %v1330 = vpop.f32.mrb[0].mxu0
      %1331 = vmatprep.mubr.bf16.mxu0 0
      %1332 = vmatmul.mubr.bf16.gmra.mrb[0].mxu0 %v906
      %v1333 = vpop.f32.mrb[0].mxu0
      %v1334 = vadd.f32 %v966, %v1333
      %v1335 = vpop.f32.mrb[0].mxu0
      %v1336 = vpop.f32.mrb[0].mxu0
      %v1337 = vadd.f32 %v966, %v1336
      %v1338 = vpop.f32.mrb[0].mxu0
      %1339 = vmatprep.mubr.bf16.mxu0 0
      %1340 = vmatmul.mubr.bf16.gmra.mrb[0].mxu0 %v907
      %v1341 = vpop.f32.mrb[0].mxu0
      %v1342 = vadd.f32 %v966, %v1341
      %v1343 = vpop.f32.mrb[0].mxu0
      %v1344 = vpop.f32.mrb[0].mxu0
      %v1345 = vadd.f32 %v966, %v1344
      %v1346 = vpop.f32.mrb[0].mxu0
      %1347 = vmatprep.mubr.bf16.mxu0 0
      %1348 = vmatmul.mubr.bf16.gmra.mrb[0].mxu0 %v908
      %v1349 = vpop.f32.mrb[0].mxu0
      %v1350 = vadd.f32 %v966, %v1349
      %v1351 = vpop.f32.mrb[0].mxu0
      %v1352 = vpop.f32.mrb[0].mxu0
      %v1353 = vadd.f32 %v966, %v1352
      %v1354 = vpop.f32.mrb[0].mxu0
      %1355 = vmatprep.mubr.bf16.mxu0 0
      %1356 = vmatmul.mubr.bf16.gmra.mrb[0].mxu0 %v909
      %v1357 = vpop.f32.mrb[0].mxu0
      %v1358 = vadd.f32 %v966, %v1357
      %v1359 = vpop.f32.mrb[0].mxu0
      %v1360 = vpop.f32.mrb[0].mxu0
      %v1361 = vadd.f32 %v966, %v1360
      %v1362 = vpop.f32.mrb[0].mxu0
      %1363 = vmatprep.mubr.bf16.mxu0 0
      %1364 = vmatmul.mubr.bf16.gmra.mrb[0].mxu0 %v910
      %v1365 = vpop.f32.mrb[0].mxu0
      %v1366 = vadd.f32 %v966, %v1365
      %v1367 = vpop.f32.mrb[0].mxu0
      %v1368 = vpop.f32.mrb[0].mxu0
      %v1369 = vadd.f32 %v966, %v1368
      %v1370 = vpop.f32.mrb[0].mxu0
      %1371 = vmatprep.mubr.bf16.mxu0 0
      %1372 = vmatmul.mubr.bf16.gmra.mrb[0].mxu0 %v911
      %v1373 = vpop.f32.mrb[0].mxu0
      %v1374 = vadd.f32 %v966, %v1373
      %v1375 = vpop.f32.mrb[0].mxu0
      %v1376 = vpop.f32.mrb[0].mxu0
      %v1377 = vadd.f32 %v966, %v1376
      %v1378 = vpop.f32.mrb[0].mxu0
      %1379 = vmatprep.mubr.bf16.mxu0 0
      %1380 = vmatmul.mubr.bf16.gmra.mrb[0].mxu0 %v912
      %v1381 = vpop.f32.mrb[0].mxu0
      %v1382 = vadd.f32 %v966, %v1381
      %v1383 = vpop.f32.mrb[0].mxu0
      %v1384 = vpop.f32.mrb[0].mxu0
      %v1385 = vadd.f32 %v966, %v1384
      %v1386 = vpop.f32.mrb[0].mxu0
      %1387 = vmatprep.mubr.bf16.mxu0 0
      %1388 = vmatmul.mubr.bf16.gmra.mrb[0].mxu0 %v913
      %v1389 = vpop.f32.mrb[0].mxu0
      %v1390 = vadd.f32 %v966, %v1389
      %v1391 = vpop.f32.mrb[0].mxu0
      %v1392 = vpop.f32.mrb[0].mxu0
      %v1393 = vadd.f32 %v966, %v1392
      %v1394 = vpop.f32.mrb[0].mxu0
      %1395 = vmatprep.mubr.bf16.mxu0 0
      %1396 = vmatmul.mubr.bf16.gmra.mrb[0].mxu0 %v914
      %v1397 = vpop.f32.mrb[0].mxu0
      %v1398 = vadd.f32 %v966, %v1397
      %v1399 = vpop.f32.mrb[0].mxu0
      %v1400 = vpop.f32.mrb[0].mxu0
      %v1401 = vadd.f32 %v966, %v1400
      %v1402 = vpop.f32.mrb[0].mxu0
      %1403 = vmatprep.mubr.bf16.mxu0 0
      %1404 = vmatmul.mubr.bf16.gmra.mrb[0].mxu0 %v915
      %v1405 = vpop.f32.mrb[0].mxu0
      %v1406 = vadd.f32 %v966, %v1405
      %v1407 = vpop.f32.mrb[0].mxu0
      %v1408 = vpop.f32.mrb[0].mxu0
      %v1409 = vadd.f32 %v966, %v1408
      %v1410 = vpop.f32.mrb[0].mxu0
      %1411 = vmatprep.mubr.bf16.mxu0 0
      %1412 = vmatmul.mubr.bf16.gmra.mrb[0].mxu0 %v916
      %v1413 = vpop.f32.mrb[0].mxu0
      %v1414 = vadd.f32 %v966, %v1413
      %v1415 = vpop.f32.mrb[0].mxu0
      %v1416 = vpop.f32.mrb[0].mxu0
      %v1417 = vadd.f32 %v966, %v1416
      %v1418 = vpop.f32.mrb[0].mxu0
      %1419 = vmatprep.mubr.bf16.mxu0 0
      %1420 = vmatmul.mubr.bf16.gmra.mrb[0].mxu0 %v917
      %v1421 = vpop.f32.mrb[0].mxu0
      %v1422 = vadd.f32 %v966, %v1421
      %v1423 = vpop.f32.mrb[0].mxu0
      %v1424 = vpop.f32.mrb[0].mxu0
      %v1425 = vadd.f32 %v966, %v1424
      %v1426 = vpop.f32.mrb[0].mxu0
      %1427 = vmatprep.mubr.bf16.mxu0 0
      %1428 = vmatmul.mubr.bf16.gmra.mrb[0].mxu0 %v918
      %v1429 = vpop.f32.mrb[0].mxu0
      %v1430 = vadd.f32 %v966, %v1429
      %v1431 = vpop.f32.mrb[0].mxu0
      %v1432 = vpop.f32.mrb[0].mxu0
      %v1433 = vadd.f32 %v966, %v1432
      %v1434 = vpop.f32.mrb[0].mxu0
      %1435 = vmatprep.mubr.bf16.mxu0 0
      %1436 = vmatmul.mubr.bf16.gmra.mrb[0].mxu0 %v919
      %v1437 = vpop.f32.mrb[0].mxu0
      %v1438 = vadd.f32 %v966, %v1437
      %v1439 = vpop.f32.mrb[0].mxu0
      %v1440 = vpop.f32.mrb[0].mxu0
      %v1441 = vadd.f32 %v966, %v1440
      %v1442 = vpop.f32.mrb[0].mxu0
      %1443 = vmatprep.mubr.bf16.mxu0 0
      %1444 = vmatmul.mubr.bf16.gmra.mrb[0].mxu0 %v920
      %v1445 = vpop.f32.mrb[0].mxu0
      %v1446 = vadd.f32 %v966, %v1445
      %v1447 = vpop.f32.mrb[0].mxu0
      %v1448 = vpop.f32.mrb[0].mxu0
      %v1449 = vadd.f32 %v966, %v1448
      %v1450 = vpop.f32.mrb[0].mxu0
      %1451 = vdwg.mxu0
      %v1452 = vmul.f32 %v1133, 0.17677669
      %v1453 = vmul.f32 %v1137, 0.17677669
      %v1454 = vmul.f32 %v1143, 0.17677669
      %v1455 = vmul.f32 %v1147, 0.17677669
      %v1456 = vmul.f32 %v1153, 0.17677669
      %v1457 = vmul.f32 %v1157, 0.17677669
      %v1458 = vmul.f32 %v1163, 0.17677669
      %v1459 = vmul.f32 %v1167, 0.17677669
      %v1460 = vmul.f32 %v1173, 0.17677669
      %v1461 = vmul.f32 %v1177, 0.17677669
      %v1462 = vmul.f32 %v1183, 0.17677669
      %v1463 = vmul.f32 %v1187, 0.17677669
      %v1464 = vmul.f32 %v1193, 0.17677669
      %v1465 = vmul.f32 %v1197, 0.17677669
      %v1466 = vmul.f32 %v1203, 0.17677669
      %v1467 = vmul.f32 %v1207, 0.17677669
      %v1468 = vmul.f32 %v1213, 0.17677669
      %v1469 = vmul.f32 %v1217, 0.17677669
      %v1470 = vmul.f32 %v1223, 0.17677669
      %v1471 = vmul.f32 %v1227, 0.17677669
      %v1472 = vmul.f32 %v1233, 0.17677669
      %v1473 = vmul.f32 %v1237, 0.17677669
      %v1474 = vmul.f32 %v1243, 0.17677669
      %v1475 = vmul.f32 %v1247, 0.17677669
      %v1476 = vmul.f32 %v1253, 0.17677669
      %v1477 = vmul.f32 %v1257, 0.17677669
      %v1478 = vmul.f32 %v1263, 0.17677669
      %v1479 = vmul.f32 %v1267, 0.17677669
      %v1480 = vmul.f32 %v1273, 0.17677669
      %v1481 = vmul.f32 %v1277, 0.17677669
      %v1482 = vmul.f32 %v1283, 0.17677669
      %v1483 = vmul.f32 %v1287, 0.17677669
      %v1484 = vpack.c.bf16 %v1453, %v1452
      %v1485 = vpack.c.bf16 %v1455, %v1454
      %v1486 = vpack.c.bf16 %v1457, %v1456
      %v1487 = vpack.c.bf16 %v1459, %v1458
      %v1488 = vpack.c.bf16 %v1461, %v1460
      %v1489 = vpack.c.bf16 %v1463, %v1462
      %v1490 = vpack.c.bf16 %v1465, %v1464
      %v1491 = vpack.c.bf16 %v1467, %v1466
      %v1492 = vpack.c.bf16 %v1469, %v1468
      %v1493 = vpack.c.bf16 %v1471, %v1470
      %v1494 = vpack.c.bf16 %v1473, %v1472
      %v1495 = vpack.c.bf16 %v1475, %v1474
      %v1496 = vpack.c.bf16 %v1477, %v1476
      %v1497 = vpack.c.bf16 %v1479, %v1478
      %v1498 = vpack.c.bf16 %v1481, %v1480
      %v1499 = vpack.c.bf16 %v1483, %v1482
      %v1500 = vpack.c.bf16 %v1139, %v1135
      %v1501 = vpack.c.bf16 %v1149, %v1145
      %v1502 = vpack.c.bf16 %v1159, %v1155
      %v1503 = vpack.c.bf16 %v1169, %v1165
      %v1504 = vpack.c.bf16 %v1179, %v1175
      %v1505 = vpack.c.bf16 %v1189, %v1185
      %v1506 = vpack.c.bf16 %v1199, %v1195
      %v1507 = vpack.c.bf16 %v1209, %v1205
      %v1508 = vpack.c.bf16 %v1219, %v1215
      %v1509 = vpack.c.bf16 %v1229, %v1225
      %v1510 = vpack.c.bf16 %v1239, %v1235
      %v1511 = vpack.c.bf16 %v1249, %v1245
      %v1512 = vpack.c.bf16 %v1259, %v1255
      %v1513 = vpack.c.bf16 %v1269, %v1265
      %v1514 = vpack.c.bf16 %v1279, %v1275
      %v1515 = vpack.c.bf16 %v1289, %v1285
      %v1516 = vpack.c.bf16 %v1329, %v1326
      %v1517 = vpack.c.bf16 %v1337, %v1334
      %v1518 = vpack.c.bf16 %v1345, %v1342
      %v1519 = vpack.c.bf16 %v1353, %v1350
      %v1520 = vpack.c.bf16 %v1361, %v1358
      %v1521 = vpack.c.bf16 %v1369, %v1366
      %v1522 = vpack.c.bf16 %v1377, %v1374
      %v1523 = vpack.c.bf16 %v1385, %v1382
      %v1524 = vpack.c.bf16 %v1393, %v1390
      %v1525 = vpack.c.bf16 %v1401, %v1398
      %v1526 = vpack.c.bf16 %v1409, %v1406
      %v1527 = vpack.c.bf16 %v1417, %v1414
      %v1528 = vpack.c.bf16 %v1425, %v1422
      %v1529 = vpack.c.bf16 %v1433, %v1430
      %v1530 = vpack.c.bf16 %v1441, %v1438
      %v1531 = vpack.c.bf16 %v1449, %v1446
      %vm1532 = vcmask 261120
      %v1534 = vsel %vm1532, %v1484, 0
      %v1537 = vsel %vm1532, %v1485, 0
      %v1540 = vsel %vm1532, %v1486, 0
      %v1543 = vsel %vm1532, %v1487, 0
      %v1546 = vsel %vm1532, %v1488, 0
      %v1549 = vsel %vm1532, %v1489, 0
      %v1552 = vsel %vm1532, %v1490, 0
      %v1555 = vsel %vm1532, %v1491, 0
      %v1558 = vsel %vm1532, %v1492, 0
      %v1561 = vsel %vm1532, %v1493, 0
      %v1564 = vsel %vm1532, %v1494, 0
      %v1567 = vsel %vm1532, %v1495, 0
      %v1570 = vsel %vm1532, %v1496, 0
      %v1573 = vsel %vm1532, %v1497, 0
      %v1576 = vsel %vm1532, %v1498, 0
      %v1579 = vsel %vm1532, %v1499, 0
      %v1582 = vsel %vm1532, %v1500, 0
      %v1585 = vsel %vm1532, %v1501, 0
      %v1588 = vsel %vm1532, %v1502, 0
      %v1591 = vsel %vm1532, %v1503, 0
      %v1594 = vsel %vm1532, %v1504, 0
      %v1597 = vsel %vm1532, %v1505, 0
      %v1600 = vsel %vm1532, %v1506, 0
      %v1603 = vsel %vm1532, %v1507, 0
      %v1606 = vsel %vm1532, %v1508, 0
      %v1609 = vsel %vm1532, %v1509, 0
      %v1612 = vsel %vm1532, %v1510, 0
      %v1615 = vsel %vm1532, %v1511, 0
      %v1618 = vsel %vm1532, %v1512, 0
      %v1621 = vsel %vm1532, %v1513, 0
      %v1624 = vsel %vm1532, %v1514, 0
      %v1627 = vsel %vm1532, %v1515, 0
      %1629 = vmatprep.subr.bf16.mxu0 0
      %1630 = vmatpush1.bf16.xpose.msra.mxu0 %v1582
      %1631 = vmatprep.subr.bf16.mxu0 0
      %1632 = vmatpush1.bf16.xpose.msra.mxu0 %v1585
      %1633 = vmatprep.subr.bf16.mxu0 0
      %1634 = vmatpush1.bf16.xpose.msra.mxu0 %v1588
      %1635 = vmatprep.subr.bf16.mxu0 0
      %1636 = vmatpush1.bf16.xpose.msra.mxu0 %v1591
      %1637 = vmatprep.subr.bf16.mxu0 0
      %1638 = vmatpush1.bf16.xpose.msra.mxu0 %v1594
      %1639 = vmatprep.subr.bf16.mxu0 0
      %1640 = vmatpush1.bf16.xpose.msra.mxu0 %v1597
      %1641 = vmatprep.subr.bf16.mxu0 0
      %1642 = vmatpush1.bf16.xpose.msra.mxu0 %v1600
      %1643 = vmatprep.subr.bf16.mxu0 0
      %1644 = vmatpush1.bf16.xpose.msra.mxu0 %v1603
      %1645 = vmatprep.subr.bf16.mxu0 0
      %1646 = vmatpush1.bf16.xpose.msra.mxu0 %v1606
      %1647 = vmatprep.subr.bf16.mxu0 0
      %1648 = vmatpush1.bf16.xpose.msra.mxu0 %v1609
      %1649 = vmatprep.subr.bf16.mxu0 0
      %1650 = vmatpush1.bf16.xpose.msra.mxu0 %v1612
      %1651 = vmatprep.subr.bf16.mxu0 0
      %1652 = vmatpush1.bf16.xpose.msra.mxu0 %v1615
      %1653 = vmatprep.subr.bf16.mxu0 0
      %1654 = vmatpush1.bf16.xpose.msra.mxu0 %v1618
      %1655 = vmatprep.subr.bf16.mxu0 0
      %1656 = vmatpush1.bf16.xpose.msra.mxu0 %v1621
      %1657 = vmatprep.subr.bf16.mxu0 0
      %1658 = vmatpush1.bf16.xpose.msra.mxu0 %v1624
      %1659 = vmatprep.subr.bf16.mxu0 0
      %1660 = vmatpush1.bf16.xpose.msra.mxu0 %v1627
      %1661 = vmatprep.mubr.bf16.mxu0 0
      %1662 = vmatmul.mubr.bf16.gmra.mrb[0].mxu0 %v1534
      %v1663 = vpop.f32.mrb[0].mxu0
      %v1664 = vadd.f32 0.0, %v1663
      %v1665 = vpop.f32.mrb[0].mxu0
      %v1666 = vadd.f32 0.0, %v1665
      %v1667 = vpop.f32.mrb[0].mxu0
      %v1668 = vadd.f32 0.0, %v1667
      %v1669 = vpop.f32.mrb[0].mxu0
      %v1670 = vadd.f32 0.0, %v1669
      %1671 = vmatprep.mubr.bf16.mxu0 0
      %1672 = vmatmul.mubr.bf16.gmra.mrb[0].mxu0 %v1537
      %v1673 = vpop.f32.mrb[0].mxu0
      %v1674 = vadd.f32 0.0, %v1673
      %v1675 = vpop.f32.mrb[0].mxu0
      %v1676 = vadd.f32 0.0, %v1675
      %v1677 = vpop.f32.mrb[0].mxu0
      %v1678 = vadd.f32 0.0, %v1677
      %v1679 = vpop.f32.mrb[0].mxu0
      %v1680 = vadd.f32 0.0, %v1679
      %1681 = vmatprep.mubr.bf16.mxu0 0
      %1682 = vmatmul.mubr.bf16.gmra.mrb[0].mxu0 %v1540
      %v1683 = vpop.f32.mrb[0].mxu0
      %v1684 = vadd.f32 0.0, %v1683
      %v1685 = vpop.f32.mrb[0].mxu0
      %v1686 = vadd.f32 0.0, %v1685
      %v1687 = vpop.f32.mrb[0].mxu0
      %v1688 = vadd.f32 0.0, %v1687
      %v1689 = vpop.f32.mrb[0].mxu0
      %v1690 = vadd.f32 0.0, %v1689
      %1691 = vmatprep.mubr.bf16.mxu0 0
      %1692 = vmatmul.mubr.bf16.gmra.mrb[0].mxu0 %v1543
      %v1693 = vpop.f32.mrb[0].mxu0
      %v1694 = vadd.f32 0.0, %v1693
      %v1695 = vpop.f32.mrb[0].mxu0
      %v1696 = vadd.f32 0.0, %v1695
      %v1697 = vpop.f32.mrb[0].mxu0
      %v1698 = vadd.f32 0.0, %v1697
      %v1699 = vpop.f32.mrb[0].mxu0
      %v1700 = vadd.f32 0.0, %v1699
      %1701 = vmatprep.mubr.bf16.mxu0 0
      %1702 = vmatmul.mubr.bf16.gmra.mrb[0].mxu0 %v1546
      %v1703 = vpop.f32.mrb[0].mxu0
      %v1704 = vadd.f32 0.0, %v1703
      %v1705 = vpop.f32.mrb[0].mxu0
      %v1706 = vadd.f32 0.0, %v1705
      %v1707 = vpop.f32.mrb[0].mxu0
      %v1708 = vadd.f32 0.0, %v1707
      %v1709 = vpop.f32.mrb[0].mxu0
      %v1710 = vadd.f32 0.0, %v1709
      %1711 = vmatprep.mubr.bf16.mxu0 0
      %1712 = vmatmul.mubr.bf16.gmra.mrb[0].mxu0 %v1549
      %v1713 = vpop.f32.mrb[0].mxu0
      %v1714 = vadd.f32 0.0, %v1713
      %v1715 = vpop.f32.mrb[0].mxu0
      %v1716 = vadd.f32 0.0, %v1715
      %v1717 = vpop.f32.mrb[0].mxu0
      %v1718 = vadd.f32 0.0, %v1717
      %v1719 = vpop.f32.mrb[0].mxu0
      %v1720 = vadd.f32 0.0, %v1719
      %1721 = vmatprep.mubr.bf16.mxu0 0
      %1722 = vmatmul.mubr.bf16.gmra.mrb[0].mxu0 %v1552
      %v1723 = vpop.f32.mrb[0].mxu0
      %v1724 = vadd.f32 0.0, %v1723
      %v1725 = vpop.f32.mrb[0].mxu0
      %v1726 = vadd.f32 0.0, %v1725
      %v1727 = vpop.f32.mrb[0].mxu0
      %v1728 = vadd.f32 0.0, %v1727
      %v1729 = vpop.f32.mrb[0].mxu0
      %v1730 = vadd.f32 0.0, %v1729
      %1731 = vmatprep.mubr.bf16.mxu0 0
      %1732 = vmatmul.mubr.bf16.gmra.mrb[0].mxu0 %v1555
      %v1733 = vpop.f32.mrb[0].mxu0
      %v1734 = vadd.f32 0.0, %v1733
      %v1735 = vpop.f32.mrb[0].mxu0
      %v1736 = vadd.f32 0.0, %v1735
      %v1737 = vpop.f32.mrb[0].mxu0
      %v1738 = vadd.f32 0.0, %v1737
      %v1739 = vpop.f32.mrb[0].mxu0
      %v1740 = vadd.f32 0.0, %v1739
      %1741 = vmatprep.mubr.bf16.mxu0 0
      %1742 = vmatmul.mubr.bf16.gmra.mrb[0].mxu0 %v1558
      %v1743 = vpop.f32.mrb[0].mxu0
      %v1744 = vadd.f32 0.0, %v1743
      %v1745 = vpop.f32.mrb[0].mxu0
      %v1746 = vadd.f32 0.0, %v1745
      %v1747 = vpop.f32.mrb[0].mxu0
      %v1748 = vadd.f32 0.0, %v1747
      %v1749 = vpop.f32.mrb[0].mxu0
      %v1750 = vadd.f32 0.0, %v1749
      %1751 = vmatprep.mubr.bf16.mxu0 0
      %1752 = vmatmul.mubr.bf16.gmra.mrb[0].mxu0 %v1561
      %v1753 = vpop.f32.mrb[0].mxu0
      %v1754 = vadd.f32 0.0, %v1753
      %v1755 = vpop.f32.mrb[0].mxu0
      %v1756 = vadd.f32 0.0, %v1755
      %v1757 = vpop.f32.mrb[0].mxu0
      %v1758 = vadd.f32 0.0, %v1757
      %v1759 = vpop.f32.mrb[0].mxu0
      %v1760 = vadd.f32 0.0, %v1759
      %1761 = vmatprep.mubr.bf16.mxu0 0
      %1762 = vmatmul.mubr.bf16.gmra.mrb[0].mxu0 %v1564
      %v1763 = vpop.f32.mrb[0].mxu0
      %v1764 = vadd.f32 0.0, %v1763
      %v1765 = vpop.f32.mrb[0].mxu0
      %v1766 = vadd.f32 0.0, %v1765
      %v1767 = vpop.f32.mrb[0].mxu0
      %v1768 = vadd.f32 0.0, %v1767
      %v1769 = vpop.f32.mrb[0].mxu0
      %v1770 = vadd.f32 0.0, %v1769
      %1771 = vmatprep.mubr.bf16.mxu0 0
      %1772 = vmatmul.mubr.bf16.gmra.mrb[0].mxu0 %v1567
      %v1773 = vpop.f32.mrb[0].mxu0
      %v1774 = vadd.f32 0.0, %v1773
      %v1775 = vpop.f32.mrb[0].mxu0
      %v1776 = vadd.f32 0.0, %v1775
      %v1777 = vpop.f32.mrb[0].mxu0
      %v1778 = vadd.f32 0.0, %v1777
      %v1779 = vpop.f32.mrb[0].mxu0
      %v1780 = vadd.f32 0.0, %v1779
      %1781 = vmatprep.mubr.bf16.mxu0 0
      %1782 = vmatmul.mubr.bf16.gmra.mrb[0].mxu0 %v1570
      %v1783 = vpop.f32.mrb[0].mxu0
      %v1784 = vadd.f32 0.0, %v1783
      %v1785 = vpop.f32.mrb[0].mxu0
      %v1786 = vadd.f32 0.0, %v1785
      %v1787 = vpop.f32.mrb[0].mxu0
      %v1788 = vadd.f32 0.0, %v1787
      %v1789 = vpop.f32.mrb[0].mxu0
      %v1790 = vadd.f32 0.0, %v1789
      %1791 = vmatprep.mubr.bf16.mxu0 0
      %1792 = vmatmul.mubr.bf16.gmra.mrb[0].mxu0 %v1573
      %v1793 = vpop.f32.mrb[0].mxu0
      %v1794 = vadd.f32 0.0, %v1793
      %v1795 = vpop.f32.mrb[0].mxu0
      %v1796 = vadd.f32 0.0, %v1795
      %v1797 = vpop.f32.mrb[0].mxu0
      %v1798 = vadd.f32 0.0, %v1797
      %v1799 = vpop.f32.mrb[0].mxu0
      %v1800 = vadd.f32 0.0, %v1799
      %1801 = vmatprep.mubr.bf16.mxu0 0
      %1802 = vmatmul.mubr.bf16.gmra.mrb[0].mxu0 %v1576
      %v1803 = vpop.f32.mrb[0].mxu0
      %v1804 = vadd.f32 0.0, %v1803
      %v1805 = vpop.f32.mrb[0].mxu0
      %v1806 = vadd.f32 0.0, %v1805
      %v1807 = vpop.f32.mrb[0].mxu0
      %v1808 = vadd.f32 0.0, %v1807
      %v1809 = vpop.f32.mrb[0].mxu0
      %v1810 = vadd.f32 0.0, %v1809
      %1811 = vmatprep.mubr.bf16.mxu0 0
      %1812 = vmatmul.mubr.bf16.gmra.mrb[0].mxu0 %v1579
      %v1813 = vpop.f32.mrb[0].mxu0
      %v1814 = vadd.f32 0.0, %v1813
      %v1815 = vpop.f32.mrb[0].mxu0
      %v1816 = vadd.f32 0.0, %v1815
      %v1817 = vpop.f32.mrb[0].mxu0
      %v1818 = vadd.f32 0.0, %v1817
      %v1819 = vpop.f32.mrb[0].mxu0
      %v1820 = vadd.f32 0.0, %v1819
      %1821 = vdwg.mxu0
      %v1822 = vmax.f32 %v1664, %v1666
      %1823 = vmax.xlane.f32.xlu0 %v1822
      %v1824 = vpop.xlane.xlu0 %1823
      %v1825 = vmax.f32 %v1668, %v1670
      %1826 = vmax.xlane.f32.xlu0 %v1825
      %v1827 = vpop.xlane.xlu0 %1826
      %v1828 = vmax.f32 %v1674, %v1676
      %1829 = vmax.xlane.f32.xlu0 %v1828
      %v1830 = vpop.xlane.xlu0 %1829
      %v1831 = vmax.f32 %v1678, %v1680
      %1832 = vmax.xlane.f32.xlu0 %v1831
      %v1833 = vpop.xlane.xlu0 %1832
      %v1834 = vmax.f32 %v1684, %v1686
      %1835 = vmax.xlane.f32.xlu0 %v1834
      %v1836 = vpop.xlane.xlu0 %1835
      %v1837 = vmax.f32 %v1688, %v1690
      %1838 = vmax.xlane.f32.xlu0 %v1837
      %v1839 = vpop.xlane.xlu0 %1838
      %v1840 = vmax.f32 %v1694, %v1696
      %1841 = vmax.xlane.f32.xlu0 %v1840
      %v1842 = vpop.xlane.xlu0 %1841
      %v1843 = vmax.f32 %v1698, %v1700
      %1844 = vmax.xlane.f32.xlu0 %v1843
      %v1845 = vpop.xlane.xlu0 %1844
      %v1846 = vmax.f32 %v1704, %v1706
      %1847 = vmax.xlane.f32.xlu0 %v1846
      %v1848 = vpop.xlane.xlu0 %1847
      %v1849 = vmax.f32 %v1708, %v1710
      %1850 = vmax.xlane.f32.xlu0 %v1849
      %v1851 = vpop.xlane.xlu0 %1850
      %v1852 = vmax.f32 %v1714, %v1716
      %1853 = vmax.xlane.f32.xlu0 %v1852
      %v1854 = vpop.xlane.xlu0 %1853
      %v1855 = vmax.f32 %v1718, %v1720
      %1856 = vmax.xlane.f32.xlu0 %v1855
      %v1857 = vpop.xlane.xlu0 %1856
      %v1858 = vmax.f32 %v1724, %v1726
      %1859 = vmax.xlane.f32.xlu0 %v1858
      %v1860 = vpop.xlane.xlu0 %1859
      %v1861 = vmax.f32 %v1728, %v1730
      %1862 = vmax.xlane.f32.xlu0 %v1861
      %v1863 = vpop.xlane.xlu0 %1862
      %v1864 = vmax.f32 %v1734, %v1736
      %1865 = vmax.xlane.f32.xlu0 %v1864
      %v1866 = vpop.xlane.xlu0 %1865
      %v1867 = vmax.f32 %v1738, %v1740
      %1868 = vmax.xlane.f32.xlu0 %v1867
      %v1869 = vpop.xlane.xlu0 %1868
      %v1870 = vmax.f32 %v1744, %v1746
      %1871 = vmax.xlane.f32.xlu0 %v1870
      %v1872 = vpop.xlane.xlu0 %1871
      %v1873 = vmax.f32 %v1748, %v1750
      %1874 = vmax.xlane.f32.xlu0 %v1873
      %v1875 = vpop.xlane.xlu0 %1874
      %v1876 = vmax.f32 %v1754, %v1756
      %1877 = vmax.xlane.f32.xlu0 %v1876
      %v1878 = vpop.xlane.xlu0 %1877
      %v1879 = vmax.f32 %v1758, %v1760
      %1880 = vmax.xlane.f32.xlu0 %v1879
      %v1881 = vpop.xlane.xlu0 %1880
      %v1882 = vmax.f32 %v1764, %v1766
      %1883 = vmax.xlane.f32.xlu0 %v1882
      %v1884 = vpop.xlane.xlu0 %1883
      %v1885 = vmax.f32 %v1768, %v1770
      %1886 = vmax.xlane.f32.xlu0 %v1885
      %v1887 = vpop.xlane.xlu0 %1886
      %v1888 = vmax.f32 %v1774, %v1776
      %1889 = vmax.xlane.f32.xlu0 %v1888
      %v1890 = vpop.xlane.xlu0 %1889
      %v1891 = vmax.f32 %v1778, %v1780
      %1892 = vmax.xlane.f32.xlu0 %v1891
      %v1893 = vpop.xlane.xlu0 %1892
      %v1894 = vmax.f32 %v1784, %v1786
      %1895 = vmax.xlane.f32.xlu0 %v1894
      %v1896 = vpop.xlane.xlu0 %1895
      %v1897 = vmax.f32 %v1788, %v1790
      %1898 = vmax.xlane.f32.xlu0 %v1897
      %v1899 = vpop.xlane.xlu0 %1898
      %v1900 = vmax.f32 %v1794, %v1796
      %1901 = vmax.xlane.f32.xlu0 %v1900
      %v1902 = vpop.xlane.xlu0 %1901
      %v1903 = vmax.f32 %v1798, %v1800
      %1904 = vmax.xlane.f32.xlu0 %v1903
      %v1905 = vpop.xlane.xlu0 %1904
      %v1906 = vmax.f32 %v1804, %v1806
      %1907 = vmax.xlane.f32.xlu0 %v1906
      %v1908 = vpop.xlane.xlu0 %1907
      %v1909 = vmax.f32 %v1808, %v1810
      %1910 = vmax.xlane.f32.xlu0 %v1909
      %v1911 = vpop.xlane.xlu0 %1910
      %v1912 = vmax.f32 %v1814, %v1816
      %1913 = vmax.xlane.f32.xlu0 %v1912
      %v1914 = vpop.xlane.xlu0 %1913
      %v1915 = vmax.f32 %v1818, %v1820
      %1916 = vmax.xlane.f32.xlu0 %v1915
      %v1917 = vpop.xlane.xlu0 %1916
      %v1918 = vsub.f32 %v1664, %v1824
      %v1919 = vsub.f32 %v1666, %v1824
      %v1920 = vsub.f32 %v1668, %v1827
      %v1921 = vsub.f32 %v1670, %v1827
      %v1922 = vsub.f32 %v1674, %v1830
      %v1923 = vsub.f32 %v1676, %v1830
      %v1924 = vsub.f32 %v1678, %v1833
      %v1925 = vsub.f32 %v1680, %v1833
      %v1926 = vsub.f32 %v1684, %v1836
      %v1927 = vsub.f32 %v1686, %v1836
      %v1928 = vsub.f32 %v1688, %v1839
      %v1929 = vsub.f32 %v1690, %v1839
      %v1930 = vsub.f32 %v1694, %v1842
      %v1931 = vsub.f32 %v1696, %v1842
      %v1932 = vsub.f32 %v1698, %v1845
      %v1933 = vsub.f32 %v1700, %v1845
      %v1934 = vsub.f32 %v1704, %v1848
      %v1935 = vsub.f32 %v1706, %v1848
      %v1936 = vsub.f32 %v1708, %v1851
      %v1937 = vsub.f32 %v1710, %v1851
      %v1938 = vsub.f32 %v1714, %v1854
      %v1939 = vsub.f32 %v1716, %v1854
      %v1940 = vsub.f32 %v1718, %v1857
      %v1941 = vsub.f32 %v1720, %v1857
      %v1942 = vsub.f32 %v1724, %v1860
      %v1943 = vsub.f32 %v1726, %v1860
      %v1944 = vsub.f32 %v1728, %v1863
      %v1945 = vsub.f32 %v1730, %v1863
      %v1946 = vsub.f32 %v1734, %v1866
      %v1947 = vsub.f32 %v1736, %v1866
      %v1948 = vsub.f32 %v1738, %v1869
      %v1949 = vsub.f32 %v1740, %v1869
      %v1950 = vsub.f32 %v1744, %v1872
      %v1951 = vsub.f32 %v1746, %v1872
      %v1952 = vsub.f32 %v1748, %v1875
      %v1953 = vsub.f32 %v1750, %v1875
      %v1954 = vsub.f32 %v1754, %v1878
      %v1955 = vsub.f32 %v1756, %v1878
      %v1956 = vsub.f32 %v1758, %v1881
      %v1957 = vsub.f32 %v1760, %v1881
      %v1958 = vsub.f32 %v1764, %v1884
      %v1959 = vsub.f32 %v1766, %v1884
      %v1960 = vsub.f32 %v1768, %v1887
      %v1961 = vsub.f32 %v1770, %v1887
      %v1962 = vsub.f32 %v1774, %v1890
      %v1963 = vsub.f32 %v1776, %v1890
      %v1964 = vsub.f32 %v1778, %v1893
      %v1965 = vsub.f32 %v1780, %v1893
      %v1966 = vsub.f32 %v1784, %v1896
      %v1967 = vsub.f32 %v1786, %v1896
      %v1968 = vsub.f32 %v1788, %v1899
      %v1969 = vsub.f32 %v1790, %v1899
      %v1970 = vsub.f32 %v1794, %v1902
      %v1971 = vsub.f32 %v1796, %v1902
      %v1972 = vsub.f32 %v1798, %v1905
      %v1973 = vsub.f32 %v1800, %v1905
      %v1974 = vsub.f32 %v1804, %v1908
      %v1975 = vsub.f32 %v1806, %v1908
      %v1976 = vsub.f32 %v1808, %v1911
      %v1977 = vsub.f32 %v1810, %v1911
      %v1978 = vsub.f32 %v1814, %v1914
      %v1979 = vsub.f32 %v1816, %v1914
      %v1980 = vsub.f32 %v1818, %v1917
      %v1981 = vsub.f32 %v1820, %v1917
      %v1982 = vmul.f32 %v1918, 1.442695
      %v1983 = vpow.pop %v1982
      %v1984 = vmul.f32 %v1919, 1.442695
      %v1985 = vpow.pop %v1984
      %v1986 = vmul.f32 %v1920, 1.442695
      %v1987 = vpow.pop %v1986
      %v1988 = vmul.f32 %v1921, 1.442695
      %v1989 = vpow.pop %v1988
      %v1990 = vmul.f32 %v1922, 1.442695
      %v1991 = vpow.pop %v1990
      %v1992 = vmul.f32 %v1923, 1.442695
      %v1993 = vpow.pop %v1992
      %v1994 = vmul.f32 %v1924, 1.442695
      %v1995 = vpow.pop %v1994
      %v1996 = vmul.f32 %v1925, 1.442695
      %v1997 = vpow.pop %v1996
      %v1998 = vmul.f32 %v1926, 1.442695
      %v1999 = vpow.pop %v1998
      %v2000 = vmul.f32 %v1927, 1.442695
      %v2001 = vpow.pop %v2000
      %v2002 = vmul.f32 %v1928, 1.442695
      %v2003 = vpow.pop %v2002
      %v2004 = vmul.f32 %v1929, 1.442695
      %v2005 = vpow.pop %v2004
      %v2006 = vmul.f32 %v1930, 1.442695
      %v2007 = vpow.pop %v2006
      %v2008 = vmul.f32 %v1931, 1.442695
      %v2009 = vpow.pop %v2008
      %v2010 = vmul.f32 %v1932, 1.442695
      %v2011 = vpow.pop %v2010
      %v2012 = vmul.f32 %v1933, 1.442695
      %v2013 = vpow.pop %v2012
      %v2014 = vmul.f32 %v1934, 1.442695
      %v2015 = vpow.pop %v2014
      %v2016 = vmul.f32 %v1935, 1.442695
      %v2017 = vpow.pop %v2016
      %v2018 = vmul.f32 %v1936, 1.442695
      %v2019 = vpow.pop %v2018
      %v2020 = vmul.f32 %v1937, 1.442695
      %v2021 = vpow.pop %v2020
      %v2022 = vmul.f32 %v1938, 1.442695
      %v2023 = vpow.pop %v2022
      %v2024 = vmul.f32 %v1939, 1.442695
      %v2025 = vpow.pop %v2024
      %v2026 = vmul.f32 %v1940, 1.442695
      %v2027 = vpow.pop %v2026
      %v2028 = vmul.f32 %v1941, 1.442695
      %v2029 = vpow.pop %v2028
      %v2030 = vmul.f32 %v1942, 1.442695
      %v2031 = vpow.pop %v2030
      %v2032 = vmul.f32 %v1943, 1.442695
      %v2033 = vpow.pop %v2032
      %v2034 = vmul.f32 %v1944, 1.442695
      %v2035 = vpow.pop %v2034
      %v2036 = vmul.f32 %v1945, 1.442695
      %v2037 = vpow.pop %v2036
      %v2038 = vmul.f32 %v1946, 1.442695
      %v2039 = vpow.pop %v2038
      %v2040 = vmul.f32 %v1947, 1.442695
      %v2041 = vpow.pop %v2040
      %v2042 = vmul.f32 %v1948, 1.442695
      %v2043 = vpow.pop %v2042
      %v2044 = vmul.f32 %v1949, 1.442695
      %v2045 = vpow.pop %v2044
      %v2046 = vmul.f32 %v1950, 1.442695
      %v2047 = vpow.pop %v2046
      %v2048 = vmul.f32 %v1951, 1.442695
      %v2049 = vpow.pop %v2048
      %v2050 = vmul.f32 %v1952, 1.442695
      %v2051 = vpow.pop %v2050
      %v2052 = vmul.f32 %v1953, 1.442695
      %v2053 = vpow.pop %v2052
      %v2054 = vmul.f32 %v1954, 1.442695
      %v2055 = vpow.pop %v2054
      %v2056 = vmul.f32 %v1955, 1.442695
      %v2057 = vpow.pop %v2056
      %v2058 = vmul.f32 %v1956, 1.442695
      %v2059 = vpow.pop %v2058
      %v2060 = vmul.f32 %v1957, 1.442695
      %v2061 = vpow.pop %v2060
      %v2062 = vmul.f32 %v1958, 1.442695
      %v2063 = vpow.pop %v2062
      %v2064 = vmul.f32 %v1959, 1.442695
      %v2065 = vpow.pop %v2064
      %v2066 = vmul.f32 %v1960, 1.442695
      %v2067 = vpow.pop %v2066
      %v2068 = vmul.f32 %v1961, 1.442695
      %v2069 = vpow.pop %v2068
      %v2070 = vmul.f32 %v1962, 1.442695
      %v2071 = vpow.pop %v2070
      %v2072 = vmul.f32 %v1963, 1.442695
      %v2073 = vpow.pop %v2072
      %v2074 = vmul.f32 %v1964, 1.442695
      %v2075 = vpow.pop %v2074
      %v2076 = vmul.f32 %v1965, 1.442695
      %v2077 = vpow.pop %v2076
      %v2078 = vmul.f32 %v1966, 1.442695
      %v2079 = vpow.pop %v2078
      %v2080 = vmul.f32 %v1967, 1.442695
      %v2081 = vpow.pop %v2080
      %v2082 = vmul.f32 %v1968, 1.442695
      %v2083 = vpow.pop %v2082
      %v2084 = vmul.f32 %v1969, 1.442695
      %v2085 = vpow.pop %v2084
      %v2086 = vmul.f32 %v1970, 1.442695
      %v2087 = vpow.pop %v2086
      %v2088 = vmul.f32 %v1971, 1.442695
      %v2089 = vpow.pop %v2088
      %v2090 = vmul.f32 %v1972, 1.442695
      %v2091 = vpow.pop %v2090
      %v2092 = vmul.f32 %v1973, 1.442695
      %v2093 = vpow.pop %v2092
      %v2094 = vmul.f32 %v1974, 1.442695
      %v2095 = vpow.pop %v2094
      %v2096 = vmul.f32 %v1975, 1.442695
      %v2097 = vpow.pop %v2096
      %v2098 = vmul.f32 %v1976, 1.442695
      %v2099 = vpow.pop %v2098
      %v2100 = vmul.f32 %v1977, 1.442695
      %v2101 = vpow.pop %v2100
      %v2102 = vmul.f32 %v1978, 1.442695
      %v2103 = vpow.pop %v2102
      %v2104 = vmul.f32 %v1979, 1.442695
      %v2105 = vpow.pop %v2104
      %v2106 = vmul.f32 %v1980, 1.442695
      %v2107 = vpow.pop %v2106
      %v2108 = vmul.f32 %v1981, 1.442695
      %v2109 = vpow.pop %v2108
      %v2110 = vadd.f32 %v1983, %v1985
      %2111 = vadd.xlane.f32.xlu0 %v2110
      %v2112 = vpop.xlane.xlu0 %2111
      %v2113 = vadd.f32 %v1987, %v1989
      %2114 = vadd.xlane.f32.xlu0 %v2113
      %v2115 = vpop.xlane.xlu0 %2114
      %v2116 = vadd.f32 %v1991, %v1993
      %2117 = vadd.xlane.f32.xlu0 %v2116
      %v2118 = vpop.xlane.xlu0 %2117
      %v2119 = vadd.f32 %v1995, %v1997
      %2120 = vadd.xlane.f32.xlu0 %v2119
      %v2121 = vpop.xlane.xlu0 %2120
      %v2122 = vadd.f32 %v1999, %v2001
      %2123 = vadd.xlane.f32.xlu0 %v2122
      %v2124 = vpop.xlane.xlu0 %2123
      %v2125 = vadd.f32 %v2003, %v2005
      %2126 = vadd.xlane.f32.xlu0 %v2125
      %v2127 = vpop.xlane.xlu0 %2126
      %v2128 = vadd.f32 %v2007, %v2009
      %2129 = vadd.xlane.f32.xlu0 %v2128
      %v2130 = vpop.xlane.xlu0 %2129
      %v2131 = vadd.f32 %v2011, %v2013
      %2132 = vadd.xlane.f32.xlu0 %v2131
      %v2133 = vpop.xlane.xlu0 %2132
      %v2134 = vadd.f32 %v2015, %v2017
      %2135 = vadd.xlane.f32.xlu0 %v2134
      %v2136 = vpop.xlane.xlu0 %2135
      %v2137 = vadd.f32 %v2019, %v2021
      %2138 = vadd.xlane.f32.xlu0 %v2137
      %v2139 = vpop.xlane.xlu0 %2138
      %v2140 = vadd.f32 %v2023, %v2025
      %2141 = vadd.xlane.f32.xlu0 %v2140
      %v2142 = vpop.xlane.xlu0 %2141
      %v2143 = vadd.f32 %v2027, %v2029
      %2144 = vadd.xlane.f32.xlu0 %v2143
      %v2145 = vpop.xlane.xlu0 %2144
      %v2146 = vadd.f32 %v2031, %v2033
      %2147 = vadd.xlane.f32.xlu0 %v2146
      %v2148 = vpop.xlane.xlu0 %2147
      %v2149 = vadd.f32 %v2035, %v2037
      %2150 = vadd.xlane.f32.xlu0 %v2149
      %v2151 = vpop.xlane.xlu0 %2150
      %v2152 = vadd.f32 %v2039, %v2041
      %2153 = vadd.xlane.f32.xlu0 %v2152
      %v2154 = vpop.xlane.xlu0 %2153
      %v2155 = vadd.f32 %v2043, %v2045
      %2156 = vadd.xlane.f32.xlu0 %v2155
      %v2157 = vpop.xlane.xlu0 %2156
      %v2158 = vadd.f32 %v2047, %v2049
      %2159 = vadd.xlane.f32.xlu0 %v2158
      %v2160 = vpop.xlane.xlu0 %2159
      %v2161 = vadd.f32 %v2051, %v2053
      %2162 = vadd.xlane.f32.xlu0 %v2161
      %v2163 = vpop.xlane.xlu0 %2162
      %v2164 = vadd.f32 %v2055, %v2057
      %2165 = vadd.xlane.f32.xlu0 %v2164
      %v2166 = vpop.xlane.xlu0 %2165
      %v2167 = vadd.f32 %v2059, %v2061
      %2168 = vadd.xlane.f32.xlu0 %v2167
      %v2169 = vpop.xlane.xlu0 %2168
      %v2170 = vadd.f32 %v2063, %v2065
      %2171 = vadd.xlane.f32.xlu0 %v2170
      %v2172 = vpop.xlane.xlu0 %2171
      %v2173 = vadd.f32 %v2067, %v2069
      %2174 = vadd.xlane.f32.xlu0 %v2173
      %v2175 = vpop.xlane.xlu0 %2174
      %v2176 = vadd.f32 %v2071, %v2073
      %2177 = vadd.xlane.f32.xlu0 %v2176
      %v2178 = vpop.xlane.xlu0 %2177
      %v2179 = vadd.f32 %v2075, %v2077
      %2180 = vadd.xlane.f32.xlu0 %v2179
      %v2181 = vpop.xlane.xlu0 %2180
      %v2182 = vadd.f32 %v2079, %v2081
      %2183 = vadd.xlane.f32.xlu0 %v2182
      %v2184 = vpop.xlane.xlu0 %2183
      %v2185 = vadd.f32 %v2083, %v2085
      %2186 = vadd.xlane.f32.xlu0 %v2185
      %v2187 = vpop.xlane.xlu0 %2186
      %v2188 = vadd.f32 %v2087, %v2089
      %2189 = vadd.xlane.f32.xlu0 %v2188
      %v2190 = vpop.xlane.xlu0 %2189
      %v2191 = vadd.f32 %v2091, %v2093
      %2192 = vadd.xlane.f32.xlu0 %v2191
      %v2193 = vpop.xlane.xlu0 %2192
      %v2194 = vadd.f32 %v2095, %v2097
      %2195 = vadd.xlane.f32.xlu0 %v2194
      %v2196 = vpop.xlane.xlu0 %2195
      %v2197 = vadd.f32 %v2099, %v2101
      %2198 = vadd.xlane.f32.xlu0 %v2197
      %v2199 = vpop.xlane.xlu0 %2198
      %v2200 = vadd.f32 %v2103, %v2105
      %2201 = vadd.xlane.f32.xlu0 %v2200
      %v2202 = vpop.xlane.xlu0 %2201
      %v2203 = vadd.f32 %v2107, %v2109
      %2204 = vadd.xlane.f32.xlu0 %v2203
      %v2205 = vpop.xlane.xlu0 %2204
      %v2206 = vrcp.pop %v2112
      %v2207 = vrcp.pop %v2115
      %v2208 = vrcp.pop %v2118
      %v2209 = vrcp.pop %v2121
      %v2210 = vrcp.pop %v2124
      %v2211 = vrcp.pop %v2127
      %v2212 = vrcp.pop %v2130
      %v2213 = vrcp.pop %v2133
      %v2214 = vrcp.pop %v2136
      %v2215 = vrcp.pop %v2139
      %v2216 = vrcp.pop %v2142
      %v2217 = vrcp.pop %v2145
      %v2218 = vrcp.pop %v2148
      %v2219 = vrcp.pop %v2151
      %v2220 = vrcp.pop %v2154
      %v2221 = vrcp.pop %v2157
      %v2222 = vrcp.pop %v2160
      %v2223 = vrcp.pop %v2163
      %v2224 = vrcp.pop %v2166
      %v2225 = vrcp.pop %v2169
      %v2226 = vrcp.pop %v2172
      %v2227 = vrcp.pop %v2175
      %v2228 = vrcp.pop %v2178
      %v2229 = vrcp.pop %v2181
      %v2230 = vrcp.pop %v2184
      %v2231 = vrcp.pop %v2187
      %v2232 = vrcp.pop %v2190
      %v2233 = vrcp.pop %v2193
      %v2234 = vrcp.pop %v2196
      %v2235 = vrcp.pop %v2199
      %v2236 = vrcp.pop %v2202
      %v2237 = vrcp.pop %v2205
      %v2238 = vmul.f32 %v1983, %v2206
      %v2239 = vmul.f32 %v1985, %v2206
      %v2240 = vmul.f32 %v1987, %v2207
      %v2241 = vmul.f32 %v1989, %v2207
      %v2242 = vmul.f32 %v1991, %v2208
      %v2243 = vmul.f32 %v1993, %v2208
      %v2244 = vmul.f32 %v1995, %v2209
      %v2245 = vmul.f32 %v1997, %v2209
      %v2246 = vmul.f32 %v1999, %v2210
      %v2247 = vmul.f32 %v2001, %v2210
      %v2248 = vmul.f32 %v2003, %v2211
      %v2249 = vmul.f32 %v2005, %v2211
      %v2250 = vmul.f32 %v2007, %v2212
      %v2251 = vmul.f32 %v2009, %v2212
      %v2252 = vmul.f32 %v2011, %v2213
      %v2253 = vmul.f32 %v2013, %v2213
      %v2254 = vmul.f32 %v2015, %v2214
      %v2255 = vmul.f32 %v2017, %v2214
      %v2256 = vmul.f32 %v2019, %v2215
      %v2257 = vmul.f32 %v2021, %v2215
      %v2258 = vmul.f32 %v2023, %v2216
      %v2259 = vmul.f32 %v2025, %v2216
      %v2260 = vmul.f32 %v2027, %v2217
      %v2261 = vmul.f32 %v2029, %v2217
      %v2262 = vmul.f32 %v2031, %v2218
      %v2263 = vmul.f32 %v2033, %v2218
      %v2264 = vmul.f32 %v2035, %v2219
      %v2265 = vmul.f32 %v2037, %v2219
      %v2266 = vmul.f32 %v2039, %v2220
      %v2267 = vmul.f32 %v2041, %v2220
      %v2268 = vmul.f32 %v2043, %v2221
      %v2269 = vmul.f32 %v2045, %v2221
      %v2270 = vmul.f32 %v2047, %v2222
      %v2271 = vmul.f32 %v2049, %v2222
      %v2272 = vmul.f32 %v2051, %v2223
      %v2273 = vmul.f32 %v2053, %v2223
      %v2274 = vmul.f32 %v2055, %v2224
      %v2275 = vmul.f32 %v2057, %v2224
      %v2276 = vmul.f32 %v2059, %v2225
      %v2277 = vmul.f32 %v2061, %v2225
      %v2278 = vmul.f32 %v2063, %v2226
      %v2279 = vmul.f32 %v2065, %v2226
      %v2280 = vmul.f32 %v2067, %v2227
      %v2281 = vmul.f32 %v2069, %v2227
      %v2282 = vmul.f32 %v2071, %v2228
      %v2283 = vmul.f32 %v2073, %v2228
      %v2284 = vmul.f32 %v2075, %v2229
      %v2285 = vmul.f32 %v2077, %v2229
      %v2286 = vmul.f32 %v2079, %v2230
      %v2287 = vmul.f32 %v2081, %v2230
      %v2288 = vmul.f32 %v2083, %v2231
      %v2289 = vmul.f32 %v2085, %v2231
      %v2290 = vmul.f32 %v2087, %v2232
      %v2291 = vmul.f32 %v2089, %v2232
      %v2292 = vmul.f32 %v2091, %v2233
      %v2293 = vmul.f32 %v2093, %v2233
      %v2294 = vmul.f32 %v2095, %v2234
      %v2295 = vmul.f32 %v2097, %v2234
      %v2296 = vmul.f32 %v2099, %v2235
      %v2297 = vmul.f32 %v2101, %v2235
      %v2298 = vmul.f32 %v2103, %v2236
      %v2299 = vmul.f32 %v2105, %v2236
      %v2300 = vmul.f32 %v2107, %v2237
      %v2301 = vmul.f32 %v2109, %v2237
      %v2302 = vpack.c.bf16 %v2240, %v2238
      %v2303 = vpack.c.bf16 %v2241, %v2239
      %v2304 = vpack.c.bf16 %v2244, %v2242
      %v2305 = vpack.c.bf16 %v2245, %v2243
      %v2306 = vpack.c.bf16 %v2248, %v2246
      %v2307 = vpack.c.bf16 %v2249, %v2247
      %v2308 = vpack.c.bf16 %v2252, %v2250
      %v2309 = vpack.c.bf16 %v2253, %v2251
      %v2310 = vpack.c.bf16 %v2256, %v2254
      %v2311 = vpack.c.bf16 %v2257, %v2255
      %v2312 = vpack.c.bf16 %v2260, %v2258
      %v2313 = vpack.c.bf16 %v2261, %v2259
      %v2314 = vpack.c.bf16 %v2264, %v2262
      %v2315 = vpack.c.bf16 %v2265, %v2263
      %v2316 = vpack.c.bf16 %v2268, %v2266
      %v2317 = vpack.c.bf16 %v2269, %v2267
      %v2318 = vpack.c.bf16 %v2272, %v2270
      %v2319 = vpack.c.bf16 %v2273, %v2271
      %v2320 = vpack.c.bf16 %v2276, %v2274
      %v2321 = vpack.c.bf16 %v2277, %v2275
      %v2322 = vpack.c.bf16 %v2280, %v2278
      %v2323 = vpack.c.bf16 %v2281, %v2279
      %v2324 = vpack.c.bf16 %v2284, %v2282
      %v2325 = vpack.c.bf16 %v2285, %v2283
      %v2326 = vpack.c.bf16 %v2288, %v2286
      %v2327 = vpack.c.bf16 %v2289, %v2287
      %v2328 = vpack.c.bf16 %v2292, %v2290
      %v2329 = vpack.c.bf16 %v2293, %v2291
      %v2330 = vpack.c.bf16 %v2296, %v2294
      %v2331 = vpack.c.bf16 %v2297, %v2295
      %v2332 = vpack.c.bf16 %v2300, %v2298
      %v2333 = vpack.c.bf16 %v2301, %v2299
      %2334 = vmatprep.subr.bf16.mxu0 0
      %2335 = vmatpush1.bf16.msra.mxu0 %v1516
      %2336 = vmatprep.subr.bf16.mxu0 0
      %2337 = vmatpush1.bf16.msra.mxu0 %v1517
      %2338 = vmatprep.subr.bf16.mxu0 0
      %2339 = vmatpush1.bf16.msra.mxu0 %v1518
      %2340 = vmatprep.subr.bf16.mxu0 0
      %2341 = vmatpush1.bf16.msra.mxu0 %v1519
      %2342 = vmatprep.subr.bf16.mxu0 0
      %2343 = vmatpush1.bf16.msra.mxu0 %v1520
      %2344 = vmatprep.subr.bf16.mxu0 0
      %2345 = vmatpush1.bf16.msra.mxu0 %v1521
      %2346 = vmatprep.subr.bf16.mxu0 0
      %2347 = vmatpush1.bf16.msra.mxu0 %v1522
      %2348 = vmatprep.subr.bf16.mxu0 0
      %2349 = vmatpush1.bf16.msra.mxu0 %v1523
      %2350 = vmatprep.subr.bf16.mxu0 0
      %2351 = vmatpush1.bf16.msra.mxu0 %v1524
      %2352 = vmatprep.subr.bf16.mxu0 0
      %2353 = vmatpush1.bf16.msra.mxu0 %v1525
      %2354 = vmatprep.subr.bf16.mxu0 0
      %2355 = vmatpush1.bf16.msra.mxu0 %v1526
      %2356 = vmatprep.subr.bf16.mxu0 0
      %2357 = vmatpush1.bf16.msra.mxu0 %v1527
      %2358 = vmatprep.subr.bf16.mxu0 0
      %2359 = vmatpush1.bf16.msra.mxu0 %v1528
      %2360 = vmatprep.subr.bf16.mxu0 0
      %2361 = vmatpush1.bf16.msra.mxu0 %v1529
      %2362 = vmatprep.subr.bf16.mxu0 0
      %2363 = vmatpush1.bf16.msra.mxu0 %v1530
      %2364 = vmatprep.subr.bf16.mxu0 0
      %2365 = vmatpush1.bf16.msra.mxu0 %v1531
      %2366 = vmatprep.mubr.bf16.mxu0 %v2303
      %2367 = vmatmul.mubr.bf16.gmra.mrb[0].mxu0 %v2302
      %v2368 = vpop.f32.mrb[0].mxu0
      %v2369 = vadd.f32 0.0, %v2368
      %v2370 = vpop.f32.mrb[0].mxu0
      %v2371 = vpop.f32.mrb[0].mxu0
      %v2372 = vadd.f32 0.0, %v2371
      %v2373 = vpop.f32.mrb[0].mxu0
      %2374 = vmatprep.mubr.bf16.mxu0 %v2305
      %2375 = vmatmul.mubr.bf16.gmra.mrb[0].mxu0 %v2304
      %v2376 = vpop.f32.mrb[0].mxu0
      %v2377 = vadd.f32 0.0, %v2376
      %v2378 = vpop.f32.mrb[0].mxu0
      %v2379 = vpop.f32.mrb[0].mxu0
      %v2380 = vadd.f32 0.0, %v2379
      %v2381 = vpop.f32.mrb[0].mxu0
      %2382 = vmatprep.mubr.bf16.mxu0 %v2307
      %2383 = vmatmul.mubr.bf16.gmra.mrb[0].mxu0 %v2306
      %v2384 = vpop.f32.mrb[0].mxu0
      %v2385 = vadd.f32 0.0, %v2384
      %v2386 = vpop.f32.mrb[0].mxu0
      %v2387 = vpop.f32.mrb[0].mxu0
      %v2388 = vadd.f32 0.0, %v2387
      %v2389 = vpop.f32.mrb[0].mxu0
      %2390 = vmatprep.mubr.bf16.mxu0 %v2309
      %2391 = vmatmul.mubr.bf16.gmra.mrb[0].mxu0 %v2308
      %v2392 = vpop.f32.mrb[0].mxu0
      %v2393 = vadd.f32 0.0, %v2392
      %v2394 = vpop.f32.mrb[0].mxu0
      %v2395 = vpop.f32.mrb[0].mxu0
      %v2396 = vadd.f32 0.0, %v2395
      %v2397 = vpop.f32.mrb[0].mxu0
      %2398 = vmatprep.mubr.bf16.mxu0 %v2311
      %2399 = vmatmul.mubr.bf16.gmra.mrb[0].mxu0 %v2310
      %v2400 = vpop.f32.mrb[0].mxu0
      %v2401 = vadd.f32 0.0, %v2400
      %v2402 = vpop.f32.mrb[0].mxu0
      %v2403 = vpop.f32.mrb[0].mxu0
      %v2404 = vadd.f32 0.0, %v2403
      %v2405 = vpop.f32.mrb[0].mxu0
      %2406 = vmatprep.mubr.bf16.mxu0 %v2313
      %2407 = vmatmul.mubr.bf16.gmra.mrb[0].mxu0 %v2312
      %v2408 = vpop.f32.mrb[0].mxu0
      %v2409 = vadd.f32 0.0, %v2408
      %v2410 = vpop.f32.mrb[0].mxu0
      %v2411 = vpop.f32.mrb[0].mxu0
      %v2412 = vadd.f32 0.0, %v2411
      %v2413 = vpop.f32.mrb[0].mxu0
      %2414 = vmatprep.mubr.bf16.mxu0 %v2315
      %2415 = vmatmul.mubr.bf16.gmra.mrb[0].mxu0 %v2314
      %v2416 = vpop.f32.mrb[0].mxu0
      %v2417 = vadd.f32 0.0, %v2416
      %v2418 = vpop.f32.mrb[0].mxu0
      %v2419 = vpop.f32.mrb[0].mxu0
      %v2420 = vadd.f32 0.0, %v2419
      %v2421 = vpop.f32.mrb[0].mxu0
      %2422 = vmatprep.mubr.bf16.mxu0 %v2317
      %2423 = vmatmul.mubr.bf16.gmra.mrb[0].mxu0 %v2316
      %v2424 = vpop.f32.mrb[0].mxu0
      %v2425 = vadd.f32 0.0, %v2424
      %v2426 = vpop.f32.mrb[0].mxu0
      %v2427 = vpop.f32.mrb[0].mxu0
      %v2428 = vadd.f32 0.0, %v2427
      %v2429 = vpop.f32.mrb[0].mxu0
      %2430 = vmatprep.mubr.bf16.mxu0 %v2319
      %2431 = vmatmul.mubr.bf16.gmra.mrb[0].mxu0 %v2318
      %v2432 = vpop.f32.mrb[0].mxu0
      %v2433 = vadd.f32 0.0, %v2432
      %v2434 = vpop.f32.mrb[0].mxu0
      %v2435 = vpop.f32.mrb[0].mxu0
      %v2436 = vadd.f32 0.0, %v2435
      %v2437 = vpop.f32.mrb[0].mxu0
      %2438 = vmatprep.mubr.bf16.mxu0 %v2321
      %2439 = vmatmul.mubr.bf16.gmra.mrb[0].mxu0 %v2320
      %v2440 = vpop.f32.mrb[0].mxu0
      %v2441 = vadd.f32 0.0, %v2440
      %v2442 = vpop.f32.mrb[0].mxu0
      %v2443 = vpop.f32.mrb[0].mxu0
      %v2444 = vadd.f32 0.0, %v2443
      %v2445 = vpop.f32.mrb[0].mxu0
      %2446 = vmatprep.mubr.bf16.mxu0 %v2323
      %2447 = vmatmul.mubr.bf16.gmra.mrb[0].mxu0 %v2322
      %v2448 = vpop.f32.mrb[0].mxu0
      %v2449 = vadd.f32 0.0, %v2448
      %v2450 = vpop.f32.mrb[0].mxu0
      %v2451 = vpop.f32.mrb[0].mxu0
      %v2452 = vadd.f32 0.0, %v2451
      %v2453 = vpop.f32.mrb[0].mxu0
      %2454 = vmatprep.mubr.bf16.mxu0 %v2325
      %2455 = vmatmul.mubr.bf16.gmra.mrb[0].mxu0 %v2324
      %v2456 = vpop.f32.mrb[0].mxu0
      %v2457 = vadd.f32 0.0, %v2456
      %v2458 = vpop.f32.mrb[0].mxu0
      %v2459 = vpop.f32.mrb[0].mxu0
      %v2460 = vadd.f32 0.0, %v2459
      %v2461 = vpop.f32.mrb[0].mxu0
      %2462 = vmatprep.mubr.bf16.mxu0 %v2327
      %2463 = vmatmul.mubr.bf16.gmra.mrb[0].mxu0 %v2326
      %v2464 = vpop.f32.mrb[0].mxu0
      %v2465 = vadd.f32 0.0, %v2464
      %v2466 = vpop.f32.mrb[0].mxu0
      %v2467 = vpop.f32.mrb[0].mxu0
      %v2468 = vadd.f32 0.0, %v2467
      %v2469 = vpop.f32.mrb[0].mxu0
      %2470 = vmatprep.mubr.bf16.mxu0 %v2329
      %2471 = vmatmul.mubr.bf16.gmra.mrb[0].mxu0 %v2328
      %v2472 = vpop.f32.mrb[0].mxu0
      %v2473 = vadd.f32 0.0, %v2472
      %v2474 = vpop.f32.mrb[0].mxu0
      %v2475 = vpop.f32.mrb[0].mxu0
      %v2476 = vadd.f32 0.0, %v2475
      %v2477 = vpop.f32.mrb[0].mxu0
      %2478 = vmatprep.mubr.bf16.mxu0 %v2331
      %2479 = vmatmul.mubr.bf16.gmra.mrb[0].mxu0 %v2330
      %v2480 = vpop.f32.mrb[0].mxu0
      %v2481 = vadd.f32 0.0, %v2480
      %v2482 = vpop.f32.mrb[0].mxu0
      %v2483 = vpop.f32.mrb[0].mxu0
      %v2484 = vadd.f32 0.0, %v2483
      %v2485 = vpop.f32.mrb[0].mxu0
      %2486 = vmatprep.mubr.bf16.mxu0 %v2333
      %2487 = vmatmul.mubr.bf16.gmra.mrb[0].mxu0 %v2332
      %v2488 = vpop.f32.mrb[0].mxu0
      %v2489 = vadd.f32 0.0, %v2488
      %v2490 = vpop.f32.mrb[0].mxu0
      %v2491 = vpop.f32.mrb[0].mxu0
      %v2492 = vadd.f32 0.0, %v2491
      %v2493 = vpop.f32.mrb[0].mxu0
      %2494 = vdwg.mxu0
      %2511 = vrot.lane.b32.xlu0 %v1484, 96
      %v2512 = vpop.permute.xlu0 %2511
      %2513 = vrot.lane.b32.xlu0 %v1485, 96
      %v2514 = vpop.permute.xlu0 %2513
      %2515 = vrot.lane.b32.xlu0 %v1486, 96
      %v2516 = vpop.permute.xlu0 %2515
      %2517 = vrot.lane.b32.xlu0 %v1487, 96
      %v2518 = vpop.permute.xlu0 %2517
      %2519 = vrot.lane.b32.xlu0 %v1488, 96
      %v2520 = vpop.permute.xlu0 %2519
      %2521 = vrot.lane.b32.xlu0 %v1489, 96
      %v2522 = vpop.permute.xlu0 %2521
      %2523 = vrot.lane.b32.xlu0 %v1490, 96
      %v2524 = vpop.permute.xlu0 %2523
      %2525 = vrot.lane.b32.xlu0 %v1491, 96
      %v2526 = vpop.permute.xlu0 %2525
      %2527 = vrot.lane.b32.xlu0 %v1492, 96
      %v2528 = vpop.permute.xlu0 %2527
      %2529 = vrot.lane.b32.xlu0 %v1493, 96
      %v2530 = vpop.permute.xlu0 %2529
      %2531 = vrot.lane.b32.xlu0 %v1494, 96
      %v2532 = vpop.permute.xlu0 %2531
      %2533 = vrot.lane.b32.xlu0 %v1495, 96
      %v2534 = vpop.permute.xlu0 %2533
      %2535 = vrot.lane.b32.xlu0 %v1496, 96
      %v2536 = vpop.permute.xlu0 %2535
      %2537 = vrot.lane.b32.xlu0 %v1497, 96
      %v2538 = vpop.permute.xlu0 %2537
      %2539 = vrot.lane.b32.xlu0 %v1498, 96
      %v2540 = vpop.permute.xlu0 %2539
      %2541 = vrot.lane.b32.xlu0 %v1499, 96
      %v2542 = vpop.permute.xlu0 %2541
      %2559 = vrot.lane.b32.xlu0 %v1500, 96
      %v2560 = vpop.permute.xlu0 %2559
      %2561 = vrot.lane.b32.xlu0 %v1501, 96
      %v2562 = vpop.permute.xlu0 %2561
      %2563 = vrot.lane.b32.xlu0 %v1502, 96
      %v2564 = vpop.permute.xlu0 %2563
      %2565 = vrot.lane.b32.xlu0 %v1503, 96
      %v2566 = vpop.permute.xlu0 %2565
      %2567 = vrot.lane.b32.xlu0 %v1504, 96
      %v2568 = vpop.permute.xlu0 %2567
      %2569 = vrot.lane.b32.xlu0 %v1505, 96
      %v2570 = vpop.permute.xlu0 %2569
      %2571 = vrot.lane.b32.xlu0 %v1506, 96
      %v2572 = vpop.permute.xlu0 %2571
      %2573 = vrot.lane.b32.xlu0 %v1507, 96
      %v2574 = vpop.permute.xlu0 %2573
      %2575 = vrot.lane.b32.xlu0 %v1508, 96
      %v2576 = vpop.permute.xlu0 %2575
      %2577 = vrot.lane.b32.xlu0 %v1509, 96
      %v2578 = vpop.permute.xlu0 %2577
      %2579 = vrot.lane.b32.xlu0 %v1510, 96
      %v2580 = vpop.permute.xlu0 %2579
      %2581 = vrot.lane.b32.xlu0 %v1511, 96
      %v2582 = vpop.permute.xlu0 %2581
      %2583 = vrot.lane.b32.xlu0 %v1512, 96
      %v2584 = vpop.permute.xlu0 %2583
      %2585 = vrot.lane.b32.xlu0 %v1513, 96
      %v2586 = vpop.permute.xlu0 %2585
      %2587 = vrot.lane.b32.xlu0 %v1514, 96
      %v2588 = vpop.permute.xlu0 %2587
      %2589 = vrot.lane.b32.xlu0 %v1515, 96
      %v2590 = vpop.permute.xlu0 %2589
      %v2592 = vsel %vm1532, %v2512, 0
      %v2595 = vsel %vm1532, %v2514, 0
      %v2598 = vsel %vm1532, %v2516, 0
      %v2601 = vsel %vm1532, %v2518, 0
      %v2604 = vsel %vm1532, %v2520, 0
      %v2607 = vsel %vm1532, %v2522, 0
      %v2610 = vsel %vm1532, %v2524, 0
      %v2613 = vsel %vm1532, %v2526, 0
      %v2616 = vsel %vm1532, %v2528, 0
      %v2619 = vsel %vm1532, %v2530, 0
      %v2622 = vsel %vm1532, %v2532, 0
      %v2625 = vsel %vm1532, %v2534, 0
      %v2628 = vsel %vm1532, %v2536, 0
      %v2631 = vsel %vm1532, %v2538, 0
      %v2634 = vsel %vm1532, %v2540, 0
      %v2637 = vsel %vm1532, %v2542, 0
      %v2640 = vsel %vm1532, %v2560, 0
      %v2643 = vsel %vm1532, %v2562, 0
      %v2646 = vsel %vm1532, %v2564, 0
      %v2649 = vsel %vm1532, %v2566, 0
      %v2652 = vsel %vm1532, %v2568, 0
      %v2655 = vsel %vm1532, %v2570, 0
      %v2658 = vsel %vm1532, %v2572, 0
      %v2661 = vsel %vm1532, %v2574, 0
      %v2664 = vsel %vm1532, %v2576, 0
      %v2667 = vsel %vm1532, %v2578, 0
      %v2670 = vsel %vm1532, %v2580, 0
      %v2673 = vsel %vm1532, %v2582, 0
      %v2676 = vsel %vm1532, %v2584, 0
      %v2679 = vsel %vm1532, %v2586, 0
      %v2682 = vsel %vm1532, %v2588, 0
      %v2685 = vsel %vm1532, %v2590, 0
      %2687 = vmatprep.subr.bf16.mxu0 0
      %2688 = vmatpush1.bf16.xpose.msra.mxu0 %v2640
      %2689 = vmatprep.subr.bf16.mxu0 0
      %2690 = vmatpush1.bf16.xpose.msra.mxu0 %v2643
      %2691 = vmatprep.subr.bf16.mxu0 0
      %2692 = vmatpush1.bf16.xpose.msra.mxu0 %v2646
      %2693 = vmatprep.subr.bf16.mxu0 0
      %2694 = vmatpush1.bf16.xpose.msra.mxu0 %v2649
      %2695 = vmatprep.subr.bf16.mxu0 0
      %2696 = vmatpush1.bf16.xpose.msra.mxu0 %v2652
      %2697 = vmatprep.subr.bf16.mxu0 0
      %2698 = vmatpush1.bf16.xpose.msra.mxu0 %v2655
      %2699 = vmatprep.subr.bf16.mxu0 0
      %2700 = vmatpush1.bf16.xpose.msra.mxu0 %v2658
      %2701 = vmatprep.subr.bf16.mxu0 0
      %2702 = vmatpush1.bf16.xpose.msra.mxu0 %v2661
      %2703 = vmatprep.subr.bf16.mxu0 0
      %2704 = vmatpush1.bf16.xpose.msra.mxu0 %v2664
      %2705 = vmatprep.subr.bf16.mxu0 0
      %2706 = vmatpush1.bf16.xpose.msra.mxu0 %v2667
      %2707 = vmatprep.subr.bf16.mxu0 0
      %2708 = vmatpush1.bf16.xpose.msra.mxu0 %v2670
      %2709 = vmatprep.subr.bf16.mxu0 0
      %2710 = vmatpush1.bf16.xpose.msra.mxu0 %v2673
      %2711 = vmatprep.subr.bf16.mxu0 0
      %2712 = vmatpush1.bf16.xpose.msra.mxu0 %v2676
      %2713 = vmatprep.subr.bf16.mxu0 0
      %2714 = vmatpush1.bf16.xpose.msra.mxu0 %v2679
      %2715 = vmatprep.subr.bf16.mxu0 0
      %2716 = vmatpush1.bf16.xpose.msra.mxu0 %v2682
      %2717 = vmatprep.subr.bf16.mxu0 0
      %2718 = vmatpush1.bf16.xpose.msra.mxu0 %v2685
      %2719 = vmatprep.mubr.bf16.mxu0 0
      %2720 = vmatmul.mubr.bf16.gmra.mrb[0].mxu0 %v2592
      %v2721 = vpop.f32.mrb[0].mxu0
      %v2722 = vadd.f32 0.0, %v2721
      %v2723 = vpop.f32.mrb[0].mxu0
      %v2724 = vadd.f32 0.0, %v2723
      %v2725 = vpop.f32.mrb[0].mxu0
      %v2726 = vadd.f32 0.0, %v2725
      %v2727 = vpop.f32.mrb[0].mxu0
      %v2728 = vadd.f32 0.0, %v2727
      %2729 = vmatprep.mubr.bf16.mxu0 0
      %2730 = vmatmul.mubr.bf16.gmra.mrb[0].mxu0 %v2595
      %v2731 = vpop.f32.mrb[0].mxu0
      %v2732 = vadd.f32 0.0, %v2731
      %v2733 = vpop.f32.mrb[0].mxu0
      %v2734 = vadd.f32 0.0, %v2733
      %v2735 = vpop.f32.mrb[0].mxu0
      %v2736 = vadd.f32 0.0, %v2735
      %v2737 = vpop.f32.mrb[0].mxu0
      %v2738 = vadd.f32 0.0, %v2737
      %2739 = vmatprep.mubr.bf16.mxu0 0
      %2740 = vmatmul.mubr.bf16.gmra.mrb[0].mxu0 %v2598
      %v2741 = vpop.f32.mrb[0].mxu0
      %v2742 = vadd.f32 0.0, %v2741
      %v2743 = vpop.f32.mrb[0].mxu0
      %v2744 = vadd.f32 0.0, %v2743
      %v2745 = vpop.f32.mrb[0].mxu0
      %v2746 = vadd.f32 0.0, %v2745
      %v2747 = vpop.f32.mrb[0].mxu0
      %v2748 = vadd.f32 0.0, %v2747
      %2749 = vmatprep.mubr.bf16.mxu0 0
      %2750 = vmatmul.mubr.bf16.gmra.mrb[0].mxu0 %v2601
      %v2751 = vpop.f32.mrb[0].mxu0
      %v2752 = vadd.f32 0.0, %v2751
      %v2753 = vpop.f32.mrb[0].mxu0
      %v2754 = vadd.f32 0.0, %v2753
      %v2755 = vpop.f32.mrb[0].mxu0
      %v2756 = vadd.f32 0.0, %v2755
      %v2757 = vpop.f32.mrb[0].mxu0
      %v2758 = vadd.f32 0.0, %v2757
      %2759 = vmatprep.mubr.bf16.mxu0 0
      %2760 = vmatmul.mubr.bf16.gmra.mrb[0].mxu0 %v2604
      %v2761 = vpop.f32.mrb[0].mxu0
      %v2762 = vadd.f32 0.0, %v2761
      %v2763 = vpop.f32.mrb[0].mxu0
      %v2764 = vadd.f32 0.0, %v2763
      %v2765 = vpop.f32.mrb[0].mxu0
      %v2766 = vadd.f32 0.0, %v2765
      %v2767 = vpop.f32.mrb[0].mxu0
      %v2768 = vadd.f32 0.0, %v2767
      %2769 = vmatprep.mubr.bf16.mxu0 0
      %2770 = vmatmul.mubr.bf16.gmra.mrb[0].mxu0 %v2607
      %v2771 = vpop.f32.mrb[0].mxu0
      %v2772 = vadd.f32 0.0, %v2771
      %v2773 = vpop.f32.mrb[0].mxu0
      %v2774 = vadd.f32 0.0, %v2773
      %v2775 = vpop.f32.mrb[0].mxu0
      %v2776 = vadd.f32 0.0, %v2775
      %v2777 = vpop.f32.mrb[0].mxu0
      %v2778 = vadd.f32 0.0, %v2777
      %2779 = vmatprep.mubr.bf16.mxu0 0
      %2780 = vmatmul.mubr.bf16.gmra.mrb[0].mxu0 %v2610
      %v2781 = vpop.f32.mrb[0].mxu0
      %v2782 = vadd.f32 0.0, %v2781
      %v2783 = vpop.f32.mrb[0].mxu0
      %v2784 = vadd.f32 0.0, %v2783
      %v2785 = vpop.f32.mrb[0].mxu0
      %v2786 = vadd.f32 0.0, %v2785
      %v2787 = vpop.f32.mrb[0].mxu0
      %v2788 = vadd.f32 0.0, %v2787
      %2789 = vmatprep.mubr.bf16.mxu0 0
      %2790 = vmatmul.mubr.bf16.gmra.mrb[0].mxu0 %v2613
      %v2791 = vpop.f32.mrb[0].mxu0
      %v2792 = vadd.f32 0.0, %v2791
      %v2793 = vpop.f32.mrb[0].mxu0
      %v2794 = vadd.f32 0.0, %v2793
      %v2795 = vpop.f32.mrb[0].mxu0
      %v2796 = vadd.f32 0.0, %v2795
      %v2797 = vpop.f32.mrb[0].mxu0
      %v2798 = vadd.f32 0.0, %v2797
      %2799 = vmatprep.mubr.bf16.mxu0 0
      %2800 = vmatmul.mubr.bf16.gmra.mrb[0].mxu0 %v2616
      %v2801 = vpop.f32.mrb[0].mxu0
      %v2802 = vadd.f32 0.0, %v2801
      %v2803 = vpop.f32.mrb[0].mxu0
      %v2804 = vadd.f32 0.0, %v2803
      %v2805 = vpop.f32.mrb[0].mxu0
      %v2806 = vadd.f32 0.0, %v2805
      %v2807 = vpop.f32.mrb[0].mxu0
      %v2808 = vadd.f32 0.0, %v2807
      %2809 = vmatprep.mubr.bf16.mxu0 0
      %2810 = vmatmul.mubr.bf16.gmra.mrb[0].mxu0 %v2619
      %v2811 = vpop.f32.mrb[0].mxu0
      %v2812 = vadd.f32 0.0, %v2811
      %v2813 = vpop.f32.mrb[0].mxu0
      %v2814 = vadd.f32 0.0, %v2813
      %v2815 = vpop.f32.mrb[0].mxu0
      %v2816 = vadd.f32 0.0, %v2815
      %v2817 = vpop.f32.mrb[0].mxu0
      %v2818 = vadd.f32 0.0, %v2817
      %2819 = vmatprep.mubr.bf16.mxu0 0
      %2820 = vmatmul.mubr.bf16.gmra.mrb[0].mxu0 %v2622
      %v2821 = vpop.f32.mrb[0].mxu0
      %v2822 = vadd.f32 0.0, %v2821
      %v2823 = vpop.f32.mrb[0].mxu0
      %v2824 = vadd.f32 0.0, %v2823
      %v2825 = vpop.f32.mrb[0].mxu0
      %v2826 = vadd.f32 0.0, %v2825
      %v2827 = vpop.f32.mrb[0].mxu0
      %v2828 = vadd.f32 0.0, %v2827
      %2829 = vmatprep.mubr.bf16.mxu0 0
      %2830 = vmatmul.mubr.bf16.gmra.mrb[0].mxu0 %v2625
      %v2831 = vpop.f32.mrb[0].mxu0
      %v2832 = vadd.f32 0.0, %v2831
      %v2833 = vpop.f32.mrb[0].mxu0
      %v2834 = vadd.f32 0.0, %v2833
      %v2835 = vpop.f32.mrb[0].mxu0
      %v2836 = vadd.f32 0.0, %v2835
      %v2837 = vpop.f32.mrb[0].mxu0
      %v2838 = vadd.f32 0.0, %v2837
      %2839 = vmatprep.mubr.bf16.mxu0 0
      %2840 = vmatmul.mubr.bf16.gmra.mrb[0].mxu0 %v2628
      %v2841 = vpop.f32.mrb[0].mxu0
      %v2842 = vadd.f32 0.0, %v2841
      %v2843 = vpop.f32.mrb[0].mxu0
      %v2844 = vadd.f32 0.0, %v2843
      %v2845 = vpop.f32.mrb[0].mxu0
      %v2846 = vadd.f32 0.0, %v2845
      %v2847 = vpop.f32.mrb[0].mxu0
      %v2848 = vadd.f32 0.0, %v2847
      %2849 = vmatprep.mubr.bf16.mxu0 0
      %2850 = vmatmul.mubr.bf16.gmra.mrb[0].mxu0 %v2631
      %v2851 = vpop.f32.mrb[0].mxu0
      %v2852 = vadd.f32 0.0, %v2851
      %v2853 = vpop.f32.mrb[0].mxu0
      %v2854 = vadd.f32 0.0, %v2853
      %v2855 = vpop.f32.mrb[0].mxu0
      %v2856 = vadd.f32 0.0, %v2855
      %v2857 = vpop.f32.mrb[0].mxu0
      %v2858 = vadd.f32 0.0, %v2857
      %2859 = vmatprep.mubr.bf16.mxu0 0
      %2860 = vmatmul.mubr.bf16.gmra.mrb[0].mxu0 %v2634
      %v2861 = vpop.f32.mrb[0].mxu0
      %v2862 = vadd.f32 0.0, %v2861
      %v2863 = vpop.f32.mrb[0].mxu0
      %v2864 = vadd.f32 0.0, %v2863
      %v2865 = vpop.f32.mrb[0].mxu0
      %v2866 = vadd.f32 0.0, %v2865
      %v2867 = vpop.f32.mrb[0].mxu0
      %v2868 = vadd.f32 0.0, %v2867
      %2869 = vmatprep.mubr.bf16.mxu0 0
      %2870 = vmatmul.mubr.bf16.gmra.mrb[0].mxu0 %v2637
      %v2871 = vpop.f32.mrb[0].mxu0
      %v2872 = vadd.f32 0.0, %v2871
      %v2873 = vpop.f32.mrb[0].mxu0
      %v2874 = vadd.f32 0.0, %v2873
      %v2875 = vpop.f32.mrb[0].mxu0
      %v2876 = vadd.f32 0.0, %v2875
      %v2877 = vpop.f32.mrb[0].mxu0
      %v2878 = vadd.f32 0.0, %v2877
      %2879 = vdwg.mxu0
      %v2880 = vmax.f32 %v2722, %v2724
      %2881 = vmax.xlane.f32.xlu0 %v2880
      %v2882 = vpop.xlane.xlu0 %2881
      %v2883 = vmax.f32 %v2726, %v2728
      %2884 = vmax.xlane.f32.xlu0 %v2883
      %v2885 = vpop.xlane.xlu0 %2884
      %v2886 = vmax.f32 %v2732, %v2734
      %2887 = vmax.xlane.f32.xlu0 %v2886
      %v2888 = vpop.xlane.xlu0 %2887
      %v2889 = vmax.f32 %v2736, %v2738
      %2890 = vmax.xlane.f32.xlu0 %v2889
      %v2891 = vpop.xlane.xlu0 %2890
      %v2892 = vmax.f32 %v2742, %v2744
      %2893 = vmax.xlane.f32.xlu0 %v2892
      %v2894 = vpop.xlane.xlu0 %2893
      %v2895 = vmax.f32 %v2746, %v2748
      %2896 = vmax.xlane.f32.xlu0 %v2895
      %v2897 = vpop.xlane.xlu0 %2896
      %v2898 = vmax.f32 %v2752, %v2754
      %2899 = vmax.xlane.f32.xlu0 %v2898
      %v2900 = vpop.xlane.xlu0 %2899
      %v2901 = vmax.f32 %v2756, %v2758
      %2902 = vmax.xlane.f32.xlu0 %v2901
      %v2903 = vpop.xlane.xlu0 %2902
      %v2904 = vmax.f32 %v2762, %v2764
      %2905 = vmax.xlane.f32.xlu0 %v2904
      %v2906 = vpop.xlane.xlu0 %2905
      %v2907 = vmax.f32 %v2766, %v2768
      %2908 = vmax.xlane.f32.xlu0 %v2907
      %v2909 = vpop.xlane.xlu0 %2908
      %v2910 = vmax.f32 %v2772, %v2774
      %2911 = vmax.xlane.f32.xlu0 %v2910
      %v2912 = vpop.xlane.xlu0 %2911
      %v2913 = vmax.f32 %v2776, %v2778
      %2914 = vmax.xlane.f32.xlu0 %v2913
      %v2915 = vpop.xlane.xlu0 %2914
      %v2916 = vmax.f32 %v2782, %v2784
      %2917 = vmax.xlane.f32.xlu0 %v2916
      %v2918 = vpop.xlane.xlu0 %2917
      %v2919 = vmax.f32 %v2786, %v2788
      %2920 = vmax.xlane.f32.xlu0 %v2919
      %v2921 = vpop.xlane.xlu0 %2920
      %v2922 = vmax.f32 %v2792, %v2794
      %2923 = vmax.xlane.f32.xlu0 %v2922
      %v2924 = vpop.xlane.xlu0 %2923
      %v2925 = vmax.f32 %v2796, %v2798
      %2926 = vmax.xlane.f32.xlu0 %v2925
      %v2927 = vpop.xlane.xlu0 %2926
      %v2928 = vmax.f32 %v2802, %v2804
      %2929 = vmax.xlane.f32.xlu0 %v2928
      %v2930 = vpop.xlane.xlu0 %2929
      %v2931 = vmax.f32 %v2806, %v2808
      %2932 = vmax.xlane.f32.xlu0 %v2931
      %v2933 = vpop.xlane.xlu0 %2932
      %v2934 = vmax.f32 %v2812, %v2814
      %2935 = vmax.xlane.f32.xlu0 %v2934
      %v2936 = vpop.xlane.xlu0 %2935
      %v2937 = vmax.f32 %v2816, %v2818
      %2938 = vmax.xlane.f32.xlu0 %v2937
      %v2939 = vpop.xlane.xlu0 %2938
      %v2940 = vmax.f32 %v2822, %v2824
      %2941 = vmax.xlane.f32.xlu0 %v2940
      %v2942 = vpop.xlane.xlu0 %2941
      %v2943 = vmax.f32 %v2826, %v2828
      %2944 = vmax.xlane.f32.xlu0 %v2943
      %v2945 = vpop.xlane.xlu0 %2944
      %v2946 = vmax.f32 %v2832, %v2834
      %2947 = vmax.xlane.f32.xlu0 %v2946
      %v2948 = vpop.xlane.xlu0 %2947
      %v2949 = vmax.f32 %v2836, %v2838
      %2950 = vmax.xlane.f32.xlu0 %v2949
      %v2951 = vpop.xlane.xlu0 %2950
      %v2952 = vmax.f32 %v2842, %v2844
      %2953 = vmax.xlane.f32.xlu0 %v2952
      %v2954 = vpop.xlane.xlu0 %2953
      %v2955 = vmax.f32 %v2846, %v2848
      %2956 = vmax.xlane.f32.xlu0 %v2955
      %v2957 = vpop.xlane.xlu0 %2956
      %v2958 = vmax.f32 %v2852, %v2854
      %2959 = vmax.xlane.f32.xlu0 %v2958
      %v2960 = vpop.xlane.xlu0 %2959
      %v2961 = vmax.f32 %v2856, %v2858
      %2962 = vmax.xlane.f32.xlu0 %v2961
      %v2963 = vpop.xlane.xlu0 %2962
      %v2964 = vmax.f32 %v2862, %v2864
      %2965 = vmax.xlane.f32.xlu0 %v2964
      %v2966 = vpop.xlane.xlu0 %2965
      %v2967 = vmax.f32 %v2866, %v2868
      %2968 = vmax.xlane.f32.xlu0 %v2967
      %v2969 = vpop.xlane.xlu0 %2968
      %v2970 = vmax.f32 %v2872, %v2874
      %2971 = vmax.xlane.f32.xlu0 %v2970
      %v2972 = vpop.xlane.xlu0 %2971
      %v2973 = vmax.f32 %v2876, %v2878
      %2974 = vmax.xlane.f32.xlu0 %v2973
      %v2975 = vpop.xlane.xlu0 %2974
      %v2976 = vsub.f32 %v2722, %v2882
      %v2977 = vsub.f32 %v2724, %v2882
      %v2978 = vsub.f32 %v2726, %v2885
      %v2979 = vsub.f32 %v2728, %v2885
      %v2980 = vsub.f32 %v2732, %v2888
      %v2981 = vsub.f32 %v2734, %v2888
      %v2982 = vsub.f32 %v2736, %v2891
      %v2983 = vsub.f32 %v2738, %v2891
      %v2984 = vsub.f32 %v2742, %v2894
      %v2985 = vsub.f32 %v2744, %v2894
      %v2986 = vsub.f32 %v2746, %v2897
      %v2987 = vsub.f32 %v2748, %v2897
      %v2988 = vsub.f32 %v2752, %v2900
      %v2989 = vsub.f32 %v2754, %v2900
      %v2990 = vsub.f32 %v2756, %v2903
      %v2991 = vsub.f32 %v2758, %v2903
      %v2992 = vsub.f32 %v2762, %v2906
      %v2993 = vsub.f32 %v2764, %v2906
      %v2994 = vsub.f32 %v2766, %v2909
      %v2995 = vsub.f32 %v2768, %v2909
      %v2996 = vsub.f32 %v2772, %v2912
      %v2997 = vsub.f32 %v2774, %v2912
      %v2998 = vsub.f32 %v2776, %v2915
      %v2999 = vsub.f32 %v2778, %v2915
      %v3000 = vsub.f32 %v2782, %v2918
      %v3001 = vsub.f32 %v2784, %v2918
      %v3002 = vsub.f32 %v2786, %v2921
      %v3003 = vsub.f32 %v2788, %v2921
      %v3004 = vsub.f32 %v2792, %v2924
      %v3005 = vsub.f32 %v2794, %v2924
      %v3006 = vsub.f32 %v2796, %v2927
      %v3007 = vsub.f32 %v2798, %v2927
      %v3008 = vsub.f32 %v2802, %v2930
      %v3009 = vsub.f32 %v2804, %v2930
      %v3010 = vsub.f32 %v2806, %v2933
      %v3011 = vsub.f32 %v2808, %v2933
      %v3012 = vsub.f32 %v2812, %v2936
      %v3013 = vsub.f32 %v2814, %v2936
      %v3014 = vsub.f32 %v2816, %v2939
      %v3015 = vsub.f32 %v2818, %v2939
      %v3016 = vsub.f32 %v2822, %v2942
      %v3017 = vsub.f32 %v2824, %v2942
      %v3018 = vsub.f32 %v2826, %v2945
      %v3019 = vsub.f32 %v2828, %v2945
      %v3020 = vsub.f32 %v2832, %v2948
      %v3021 = vsub.f32 %v2834, %v2948
      %v3022 = vsub.f32 %v2836, %v2951
      %v3023 = vsub.f32 %v2838, %v2951
      %v3024 = vsub.f32 %v2842, %v2954
      %v3025 = vsub.f32 %v2844, %v2954
      %v3026 = vsub.f32 %v2846, %v2957
      %v3027 = vsub.f32 %v2848, %v2957
      %v3028 = vsub.f32 %v2852, %v2960
      %v3029 = vsub.f32 %v2854, %v2960
      %v3030 = vsub.f32 %v2856, %v2963
      %v3031 = vsub.f32 %v2858, %v2963
      %v3032 = vsub.f32 %v2862, %v2966
      %v3033 = vsub.f32 %v2864, %v2966
      %v3034 = vsub.f32 %v2866, %v2969
      %v3035 = vsub.f32 %v2868, %v2969
      %v3036 = vsub.f32 %v2872, %v2972
      %v3037 = vsub.f32 %v2874, %v2972
      %v3038 = vsub.f32 %v2876, %v2975
      %v3039 = vsub.f32 %v2878, %v2975
      %v3040 = vmul.f32 %v2976, 1.442695
      %v3041 = vpow.pop %v3040
      %v3042 = vmul.f32 %v2977, 1.442695
      %v3043 = vpow.pop %v3042
      %v3044 = vmul.f32 %v2978, 1.442695
      %v3045 = vpow.pop %v3044
      %v3046 = vmul.f32 %v2979, 1.442695
      %v3047 = vpow.pop %v3046
      %v3048 = vmul.f32 %v2980, 1.442695
      %v3049 = vpow.pop %v3048
      %v3050 = vmul.f32 %v2981, 1.442695
      %v3051 = vpow.pop %v3050
      %v3052 = vmul.f32 %v2982, 1.442695
      %v3053 = vpow.pop %v3052
      %v3054 = vmul.f32 %v2983, 1.442695
      %v3055 = vpow.pop %v3054
      %v3056 = vmul.f32 %v2984, 1.442695
      %v3057 = vpow.pop %v3056
      %v3058 = vmul.f32 %v2985, 1.442695
      %v3059 = vpow.pop %v3058
      %v3060 = vmul.f32 %v2986, 1.442695
      %v3061 = vpow.pop %v3060
      %v3062 = vmul.f32 %v2987, 1.442695
      %v3063 = vpow.pop %v3062
      %v3064 = vmul.f32 %v2988, 1.442695
      %v3065 = vpow.pop %v3064
      %v3066 = vmul.f32 %v2989, 1.442695
      %v3067 = vpow.pop %v3066
      %v3068 = vmul.f32 %v2990, 1.442695
      %v3069 = vpow.pop %v3068
      %v3070 = vmul.f32 %v2991, 1.442695
      %v3071 = vpow.pop %v3070
      %v3072 = vmul.f32 %v2992, 1.442695
      %v3073 = vpow.pop %v3072
      %v3074 = vmul.f32 %v2993, 1.442695
      %v3075 = vpow.pop %v3074
      %v3076 = vmul.f32 %v2994, 1.442695
      %v3077 = vpow.pop %v3076
      %v3078 = vmul.f32 %v2995, 1.442695
      %v3079 = vpow.pop %v3078
      %v3080 = vmul.f32 %v2996, 1.442695
      %v3081 = vpow.pop %v3080
      %v3082 = vmul.f32 %v2997, 1.442695
      %v3083 = vpow.pop %v3082
      %v3084 = vmul.f32 %v2998, 1.442695
      %v3085 = vpow.pop %v3084
      %v3086 = vmul.f32 %v2999, 1.442695
      %v3087 = vpow.pop %v3086
      %v3088 = vmul.f32 %v3000, 1.442695
      %v3089 = vpow.pop %v3088
      %v3090 = vmul.f32 %v3001, 1.442695
      %v3091 = vpow.pop %v3090
      %v3092 = vmul.f32 %v3002, 1.442695
      %v3093 = vpow.pop %v3092
      %v3094 = vmul.f32 %v3003, 1.442695
      %v3095 = vpow.pop %v3094
      %v3096 = vmul.f32 %v3004, 1.442695
      %v3097 = vpow.pop %v3096
      %v3098 = vmul.f32 %v3005, 1.442695
      %v3099 = vpow.pop %v3098
      %v3100 = vmul.f32 %v3006, 1.442695
      %v3101 = vpow.pop %v3100
      %v3102 = vmul.f32 %v3007, 1.442695
      %v3103 = vpow.pop %v3102
      %v3104 = vmul.f32 %v3008, 1.442695
      %v3105 = vpow.pop %v3104
      %v3106 = vmul.f32 %v3009, 1.442695
      %v3107 = vpow.pop %v3106
      %v3108 = vmul.f32 %v3010, 1.442695
      %v3109 = vpow.pop %v3108
      %v3110 = vmul.f32 %v3011, 1.442695
      %v3111 = vpow.pop %v3110
      %v3112 = vmul.f32 %v3012, 1.442695
      %v3113 = vpow.pop %v3112
      %v3114 = vmul.f32 %v3013, 1.442695
      %v3115 = vpow.pop %v3114
      %v3116 = vmul.f32 %v3014, 1.442695
      %v3117 = vpow.pop %v3116
      %v3118 = vmul.f32 %v3015, 1.442695
      %v3119 = vpow.pop %v3118
      %v3120 = vmul.f32 %v3016, 1.442695
      %v3121 = vpow.pop %v3120
      %v3122 = vmul.f32 %v3017, 1.442695
      %v3123 = vpow.pop %v3122
      %v3124 = vmul.f32 %v3018, 1.442695
      %v3125 = vpow.pop %v3124
      %v3126 = vmul.f32 %v3019, 1.442695
      %v3127 = vpow.pop %v3126
      %v3128 = vmul.f32 %v3020, 1.442695
      %v3129 = vpow.pop %v3128
      %v3130 = vmul.f32 %v3021, 1.442695
      %v3131 = vpow.pop %v3130
      %v3132 = vmul.f32 %v3022, 1.442695
      %v3133 = vpow.pop %v3132
      %v3134 = vmul.f32 %v3023, 1.442695
      %v3135 = vpow.pop %v3134
      %v3136 = vmul.f32 %v3024, 1.442695
      %v3137 = vpow.pop %v3136
      %v3138 = vmul.f32 %v3025, 1.442695
      %v3139 = vpow.pop %v3138
      %v3140 = vmul.f32 %v3026, 1.442695
      %v3141 = vpow.pop %v3140
      %v3142 = vmul.f32 %v3027, 1.442695
      %v3143 = vpow.pop %v3142
      %v3144 = vmul.f32 %v3028, 1.442695
      %v3145 = vpow.pop %v3144
      %v3146 = vmul.f32 %v3029, 1.442695
      %v3147 = vpow.pop %v3146
      %v3148 = vmul.f32 %v3030, 1.442695
      %v3149 = vpow.pop %v3148
      %v3150 = vmul.f32 %v3031, 1.442695
      %v3151 = vpow.pop %v3150
      %v3152 = vmul.f32 %v3032, 1.442695
      %v3153 = vpow.pop %v3152
      %v3154 = vmul.f32 %v3033, 1.442695
      %v3155 = vpow.pop %v3154
      %v3156 = vmul.f32 %v3034, 1.442695
      %v3157 = vpow.pop %v3156
      %v3158 = vmul.f32 %v3035, 1.442695
      %v3159 = vpow.pop %v3158
      %v3160 = vmul.f32 %v3036, 1.442695
      %v3161 = vpow.pop %v3160
      %v3162 = vmul.f32 %v3037, 1.442695
      %v3163 = vpow.pop %v3162
      %v3164 = vmul.f32 %v3038, 1.442695
      %v3165 = vpow.pop %v3164
      %v3166 = vmul.f32 %v3039, 1.442695
      %v3167 = vpow.pop %v3166
      %v3168 = vadd.f32 %v3041, %v3043
      %3169 = vadd.xlane.f32.xlu0 %v3168
      %v3170 = vpop.xlane.xlu0 %3169
      %v3171 = vadd.f32 %v3045, %v3047
      %3172 = vadd.xlane.f32.xlu0 %v3171
      %v3173 = vpop.xlane.xlu0 %3172
      %v3174 = vadd.f32 %v3049, %v3051
      %3175 = vadd.xlane.f32.xlu0 %v3174
      %v3176 = vpop.xlane.xlu0 %3175
      %v3177 = vadd.f32 %v3053, %v3055
      %3178 = vadd.xlane.f32.xlu0 %v3177
      %v3179 = vpop.xlane.xlu0 %3178
      %v3180 = vadd.f32 %v3057, %v3059
      %3181 = vadd.xlane.f32.xlu0 %v3180
      %v3182 = vpop.xlane.xlu0 %3181
      %v3183 = vadd.f32 %v3061, %v3063
      %3184 = vadd.xlane.f32.xlu0 %v3183
      %v3185 = vpop.xlane.xlu0 %3184
      %v3186 = vadd.f32 %v3065, %v3067
      %3187 = vadd.xlane.f32.xlu0 %v3186
      %v3188 = vpop.xlane.xlu0 %3187
      %v3189 = vadd.f32 %v3069, %v3071
      %3190 = vadd.xlane.f32.xlu0 %v3189
      %v3191 = vpop.xlane.xlu0 %3190
      %v3192 = vadd.f32 %v3073, %v3075
      %3193 = vadd.xlane.f32.xlu0 %v3192
      %v3194 = vpop.xlane.xlu0 %3193
      %v3195 = vadd.f32 %v3077, %v3079
      %3196 = vadd.xlane.f32.xlu0 %v3195
      %v3197 = vpop.xlane.xlu0 %3196
      %v3198 = vadd.f32 %v3081, %v3083
      %3199 = vadd.xlane.f32.xlu0 %v3198
      %v3200 = vpop.xlane.xlu0 %3199
      %v3201 = vadd.f32 %v3085, %v3087
      %3202 = vadd.xlane.f32.xlu0 %v3201
      %v3203 = vpop.xlane.xlu0 %3202
      %v3204 = vadd.f32 %v3089, %v3091
      %3205 = vadd.xlane.f32.xlu0 %v3204
      %v3206 = vpop.xlane.xlu0 %3205
      %v3207 = vadd.f32 %v3093, %v3095
      %3208 = vadd.xlane.f32.xlu0 %v3207
      %v3209 = vpop.xlane.xlu0 %3208
      %v3210 = vadd.f32 %v3097, %v3099
      %3211 = vadd.xlane.f32.xlu0 %v3210
      %v3212 = vpop.xlane.xlu0 %3211
      %v3213 = vadd.f32 %v3101, %v3103
      %3214 = vadd.xlane.f32.xlu0 %v3213
      %v3215 = vpop.xlane.xlu0 %3214
      %v3216 = vadd.f32 %v3105, %v3107
      %3217 = vadd.xlane.f32.xlu0 %v3216
      %v3218 = vpop.xlane.xlu0 %3217
      %v3219 = vadd.f32 %v3109, %v3111
      %3220 = vadd.xlane.f32.xlu0 %v3219
      %v3221 = vpop.xlane.xlu0 %3220
      %v3222 = vadd.f32 %v3113, %v3115
      %3223 = vadd.xlane.f32.xlu0 %v3222
      %v3224 = vpop.xlane.xlu0 %3223
      %v3225 = vadd.f32 %v3117, %v3119
      %3226 = vadd.xlane.f32.xlu0 %v3225
      %v3227 = vpop.xlane.xlu0 %3226
      %v3228 = vadd.f32 %v3121, %v3123
      %3229 = vadd.xlane.f32.xlu0 %v3228
      %v3230 = vpop.xlane.xlu0 %3229
      %v3231 = vadd.f32 %v3125, %v3127
      %3232 = vadd.xlane.f32.xlu0 %v3231
      %v3233 = vpop.xlane.xlu0 %3232
      %v3234 = vadd.f32 %v3129, %v3131
      %3235 = vadd.xlane.f32.xlu0 %v3234
      %v3236 = vpop.xlane.xlu0 %3235
      %v3237 = vadd.f32 %v3133, %v3135
      %3238 = vadd.xlane.f32.xlu0 %v3237
      %v3239 = vpop.xlane.xlu0 %3238
      %v3240 = vadd.f32 %v3137, %v3139
      %3241 = vadd.xlane.f32.xlu0 %v3240
      %v3242 = vpop.xlane.xlu0 %3241
      %v3243 = vadd.f32 %v3141, %v3143
      %3244 = vadd.xlane.f32.xlu0 %v3243
      %v3245 = vpop.xlane.xlu0 %3244
      %v3246 = vadd.f32 %v3145, %v3147
      %3247 = vadd.xlane.f32.xlu0 %v3246
      %v3248 = vpop.xlane.xlu0 %3247
      %v3249 = vadd.f32 %v3149, %v3151
      %3250 = vadd.xlane.f32.xlu0 %v3249
      %v3251 = vpop.xlane.xlu0 %3250
      %v3252 = vadd.f32 %v3153, %v3155
      %3253 = vadd.xlane.f32.xlu0 %v3252
      %v3254 = vpop.xlane.xlu0 %3253
      %v3255 = vadd.f32 %v3157, %v3159
      %3256 = vadd.xlane.f32.xlu0 %v3255
      %v3257 = vpop.xlane.xlu0 %3256
      %v3258 = vadd.f32 %v3161, %v3163
      %3259 = vadd.xlane.f32.xlu0 %v3258
      %v3260 = vpop.xlane.xlu0 %3259
      %v3261 = vadd.f32 %v3165, %v3167
      %3262 = vadd.xlane.f32.xlu0 %v3261
      %v3263 = vpop.xlane.xlu0 %3262
      %v3264 = vrcp.pop %v3170
      %v3265 = vrcp.pop %v3173
      %v3266 = vrcp.pop %v3176
      %v3267 = vrcp.pop %v3179
      %v3268 = vrcp.pop %v3182
      %v3269 = vrcp.pop %v3185
      %v3270 = vrcp.pop %v3188
      %v3271 = vrcp.pop %v3191
      %v3272 = vrcp.pop %v3194
      %v3273 = vrcp.pop %v3197
      %v3274 = vrcp.pop %v3200
      %v3275 = vrcp.pop %v3203
      %v3276 = vrcp.pop %v3206
      %v3277 = vrcp.pop %v3209
      %v3278 = vrcp.pop %v3212
      %v3279 = vrcp.pop %v3215
      %v3280 = vrcp.pop %v3218
      %v3281 = vrcp.pop %v3221
      %v3282 = vrcp.pop %v3224
      %v3283 = vrcp.pop %v3227
      %v3284 = vrcp.pop %v3230
      %v3285 = vrcp.pop %v3233
      %v3286 = vrcp.pop %v3236
      %v3287 = vrcp.pop %v3239
      %v3288 = vrcp.pop %v3242
      %v3289 = vrcp.pop %v3245
      %v3290 = vrcp.pop %v3248
      %v3291 = vrcp.pop %v3251
      %v3292 = vrcp.pop %v3254
      %v3293 = vrcp.pop %v3257
      %v3294 = vrcp.pop %v3260
      %v3295 = vrcp.pop %v3263
      %v3296 = vmul.f32 %v3041, %v3264
      %v3297 = vmul.f32 %v3043, %v3264
      %v3298 = vmul.f32 %v3045, %v3265
      %v3299 = vmul.f32 %v3047, %v3265
      %v3300 = vmul.f32 %v3049, %v3266
      %v3301 = vmul.f32 %v3051, %v3266
      %v3302 = vmul.f32 %v3053, %v3267
      %v3303 = vmul.f32 %v3055, %v3267
      %v3304 = vmul.f32 %v3057, %v3268
      %v3305 = vmul.f32 %v3059, %v3268
      %v3306 = vmul.f32 %v3061, %v3269
      %v3307 = vmul.f32 %v3063, %v3269
      %v3308 = vmul.f32 %v3065, %v3270
      %v3309 = vmul.f32 %v3067, %v3270
      %v3310 = vmul.f32 %v3069, %v3271
      %v3311 = vmul.f32 %v3071, %v3271
      %v3312 = vmul.f32 %v3073, %v3272
      %v3313 = vmul.f32 %v3075, %v3272
      %v3314 = vmul.f32 %v3077, %v3273
      %v3315 = vmul.f32 %v3079, %v3273
      %v3316 = vmul.f32 %v3081, %v3274
      %v3317 = vmul.f32 %v3083, %v3274
      %v3318 = vmul.f32 %v3085, %v3275
      %v3319 = vmul.f32 %v3087, %v3275
      %v3320 = vmul.f32 %v3089, %v3276
      %v3321 = vmul.f32 %v3091, %v3276
      %v3322 = vmul.f32 %v3093, %v3277
      %v3323 = vmul.f32 %v3095, %v3277
      %v3324 = vmul.f32 %v3097, %v3278
      %v3325 = vmul.f32 %v3099, %v3278
      %v3326 = vmul.f32 %v3101, %v3279
      %v3327 = vmul.f32 %v3103, %v3279
      %v3328 = vmul.f32 %v3105, %v3280
      %v3329 = vmul.f32 %v3107, %v3280
      %v3330 = vmul.f32 %v3109, %v3281
      %v3331 = vmul.f32 %v3111, %v3281
      %v3332 = vmul.f32 %v3113, %v3282
      %v3333 = vmul.f32 %v3115, %v3282
      %v3334 = vmul.f32 %v3117, %v3283
      %v3335 = vmul.f32 %v3119, %v3283
      %v3336 = vmul.f32 %v3121, %v3284
      %v3337 = vmul.f32 %v3123, %v3284
      %v3338 = vmul.f32 %v3125, %v3285
      %v3339 = vmul.f32 %v3127, %v3285
      %v3340 = vmul.f32 %v3129, %v3286
      %v3341 = vmul.f32 %v3131, %v3286
      %v3342 = vmul.f32 %v3133, %v3287
      %v3343 = vmul.f32 %v3135, %v3287
      %v3344 = vmul.f32 %v3137, %v3288
      %v3345 = vmul.f32 %v3139, %v3288
      %v3346 = vmul.f32 %v3141, %v3289
      %v3347 = vmul.f32 %v3143, %v3289
      %v3348 = vmul.f32 %v3145, %v3290
      %v3349 = vmul.f32 %v3147, %v3290
      %v3350 = vmul.f32 %v3149, %v3291
      %v3351 = vmul.f32 %v3151, %v3291
      %v3352 = vmul.f32 %v3153, %v3292
      %v3353 = vmul.f32 %v3155, %v3292
      %v3354 = vmul.f32 %v3157, %v3293
      %v3355 = vmul.f32 %v3159, %v3293
      %v3356 = vmul.f32 %v3161, %v3294
      %v3357 = vmul.f32 %v3163, %v3294
      %v3358 = vmul.f32 %v3165, %v3295
      %v3359 = vmul.f32 %v3167, %v3295
      %v3360 = vpack.c.bf16 %v3298, %v3296
      %v3361 = vpack.c.bf16 %v3299, %v3297
      %v3362 = vpack.c.bf16 %v3302, %v3300
      %v3363 = vpack.c.bf16 %v3303, %v3301
      %v3364 = vpack.c.bf16 %v3306, %v3304
      %v3365 = vpack.c.bf16 %v3307, %v3305
      %v3366 = vpack.c.bf16 %v3310, %v3308
      %v3367 = vpack.c.bf16 %v3311, %v3309
      %v3368 = vpack.c.bf16 %v3314, %v3312
      %v3369 = vpack.c.bf16 %v3315, %v3313
      %v3370 = vpack.c.bf16 %v3318, %v3316
      %v3371 = vpack.c.bf16 %v3319, %v3317
      %v3372 = vpack.c.bf16 %v3322, %v3320
      %v3373 = vpack.c.bf16 %v3323, %v3321
      %v3374 = vpack.c.bf16 %v3326, %v3324
      %v3375 = vpack.c.bf16 %v3327, %v3325
      %v3376 = vpack.c.bf16 %v3330, %v3328
      %v3377 = vpack.c.bf16 %v3331, %v3329
      %v3378 = vpack.c.bf16 %v3334, %v3332
      %v3379 = vpack.c.bf16 %v3335, %v3333
      %v3380 = vpack.c.bf16 %v3338, %v3336
      %v3381 = vpack.c.bf16 %v3339, %v3337
      %v3382 = vpack.c.bf16 %v3342, %v3340
      %v3383 = vpack.c.bf16 %v3343, %v3341
      %v3384 = vpack.c.bf16 %v3346, %v3344
      %v3385 = vpack.c.bf16 %v3347, %v3345
      %v3386 = vpack.c.bf16 %v3350, %v3348
      %v3387 = vpack.c.bf16 %v3351, %v3349
      %v3388 = vpack.c.bf16 %v3354, %v3352
      %v3389 = vpack.c.bf16 %v3355, %v3353
      %v3390 = vpack.c.bf16 %v3358, %v3356
      %v3391 = vpack.c.bf16 %v3359, %v3357
      %3408 = vrot.lane.b32.xlu0 %v1516, 96
      %v3409 = vpop.permute.xlu0 %3408
      %3410 = vrot.lane.b32.xlu0 %v1517, 96
      %v3411 = vpop.permute.xlu0 %3410
      %3412 = vrot.lane.b32.xlu0 %v1518, 96
      %v3413 = vpop.permute.xlu0 %3412
      %3414 = vrot.lane.b32.xlu0 %v1519, 96
      %v3415 = vpop.permute.xlu0 %3414
      %3416 = vrot.lane.b32.xlu0 %v1520, 96
      %v3417 = vpop.permute.xlu0 %3416
      %3418 = vrot.lane.b32.xlu0 %v1521, 96
      %v3419 = vpop.permute.xlu0 %3418
      %3420 = vrot.lane.b32.xlu0 %v1522, 96
      %v3421 = vpop.permute.xlu0 %3420
      %3422 = vrot.lane.b32.xlu0 %v1523, 96
      %v3423 = vpop.permute.xlu0 %3422
      %3424 = vrot.lane.b32.xlu0 %v1524, 96
      %v3425 = vpop.permute.xlu0 %3424
      %3426 = vrot.lane.b32.xlu0 %v1525, 96
      %v3427 = vpop.permute.xlu0 %3426
      %3428 = vrot.lane.b32.xlu0 %v1526, 96
      %v3429 = vpop.permute.xlu0 %3428
      %3430 = vrot.lane.b32.xlu0 %v1527, 96
      %v3431 = vpop.permute.xlu0 %3430
      %3432 = vrot.lane.b32.xlu0 %v1528, 96
      %v3433 = vpop.permute.xlu0 %3432
      %3434 = vrot.lane.b32.xlu0 %v1529, 96
      %v3435 = vpop.permute.xlu0 %3434
      %3436 = vrot.lane.b32.xlu0 %v1530, 96
      %v3437 = vpop.permute.xlu0 %3436
      %3438 = vrot.lane.b32.xlu0 %v1531, 96
      %v3439 = vpop.permute.xlu0 %3438
      %3456 = vmatprep.subr.bf16.mxu0 0
      %3457 = vmatpush1.bf16.msra.mxu0 %v3409
      %3458 = vmatprep.subr.bf16.mxu0 0
      %3459 = vmatpush1.bf16.msra.mxu0 %v3411
      %3460 = vmatprep.subr.bf16.mxu0 0
      %3461 = vmatpush1.bf16.msra.mxu0 %v3413
      %3462 = vmatprep.subr.bf16.mxu0 0
      %3463 = vmatpush1.bf16.msra.mxu0 %v3415
      %3464 = vmatprep.subr.bf16.mxu0 0
      %3465 = vmatpush1.bf16.msra.mxu0 %v3417
      %3466 = vmatprep.subr.bf16.mxu0 0
      %3467 = vmatpush1.bf16.msra.mxu0 %v3419
      %3468 = vmatprep.subr.bf16.mxu0 0
      %3469 = vmatpush1.bf16.msra.mxu0 %v3421
      %3470 = vmatprep.subr.bf16.mxu0 0
      %3471 = vmatpush1.bf16.msra.mxu0 %v3423
      %3472 = vmatprep.subr.bf16.mxu0 0
      %3473 = vmatpush1.bf16.msra.mxu0 %v3425
      %3474 = vmatprep.subr.bf16.mxu0 0
      %3475 = vmatpush1.bf16.msra.mxu0 %v3427
      %3476 = vmatprep.subr.bf16.mxu0 0
      %3477 = vmatpush1.bf16.msra.mxu0 %v3429
      %3478 = vmatprep.subr.bf16.mxu0 0
      %3479 = vmatpush1.bf16.msra.mxu0 %v3431
      %3480 = vmatprep.subr.bf16.mxu0 0
      %3481 = vmatpush1.bf16.msra.mxu0 %v3433
      %3482 = vmatprep.subr.bf16.mxu0 0
      %3483 = vmatpush1.bf16.msra.mxu0 %v3435
      %3484 = vmatprep.subr.bf16.mxu0 0
      %3485 = vmatpush1.bf16.msra.mxu0 %v3437
      %3486 = vmatprep.subr.bf16.mxu0 0
      %3487 = vmatpush1.bf16.msra.mxu0 %v3439
      %3488 = vmatprep.mubr.bf16.mxu0 %v3361
      %3489 = vmatmul.mubr.bf16.gmra.mrb[0].mxu0 %v3360
      %v3490 = vpop.f32.mrb[0].mxu0
      %v3491 = vadd.f32 0.0, %v3490
      %v3492 = vpop.f32.mrb[0].mxu0
      %v3493 = vpop.f32.mrb[0].mxu0
      %v3494 = vadd.f32 0.0, %v3493
      %v3495 = vpop.f32.mrb[0].mxu0
      %3496 = vmatprep.mubr.bf16.mxu0 %v3363
      %3497 = vmatmul.mubr.bf16.gmra.mrb[0].mxu0 %v3362
      %v3498 = vpop.f32.mrb[0].mxu0
      %v3499 = vadd.f32 0.0, %v3498
      %v3500 = vpop.f32.mrb[0].mxu0
      %v3501 = vpop.f32.mrb[0].mxu0
      %v3502 = vadd.f32 0.0, %v3501
      %v3503 = vpop.f32.mrb[0].mxu0
      %3504 = vmatprep.mubr.bf16.mxu0 %v3365
      %3505 = vmatmul.mubr.bf16.gmra.mrb[0].mxu0 %v3364
      %v3506 = vpop.f32.mrb[0].mxu0
      %v3507 = vadd.f32 0.0, %v3506
      %v3508 = vpop.f32.mrb[0].mxu0
      %v3509 = vpop.f32.mrb[0].mxu0
      %v3510 = vadd.f32 0.0, %v3509
      %v3511 = vpop.f32.mrb[0].mxu0
      %3512 = vmatprep.mubr.bf16.mxu0 %v3367
      %3513 = vmatmul.mubr.bf16.gmra.mrb[0].mxu0 %v3366
      %v3514 = vpop.f32.mrb[0].mxu0
      %v3515 = vadd.f32 0.0, %v3514
      %v3516 = vpop.f32.mrb[0].mxu0
      %v3517 = vpop.f32.mrb[0].mxu0
      %v3518 = vadd.f32 0.0, %v3517
      %v3519 = vpop.f32.mrb[0].mxu0
      %3520 = vmatprep.mubr.bf16.mxu0 %v3369
      %3521 = vmatmul.mubr.bf16.gmra.mrb[0].mxu0 %v3368
      %v3522 = vpop.f32.mrb[0].mxu0
      %v3523 = vadd.f32 0.0, %v3522
      %v3524 = vpop.f32.mrb[0].mxu0
      %v3525 = vpop.f32.mrb[0].mxu0
      %v3526 = vadd.f32 0.0, %v3525
      %v3527 = vpop.f32.mrb[0].mxu0
      %3528 = vmatprep.mubr.bf16.mxu0 %v3371
      %3529 = vmatmul.mubr.bf16.gmra.mrb[0].mxu0 %v3370
      %v3530 = vpop.f32.mrb[0].mxu0
      %v3531 = vadd.f32 0.0, %v3530
      %v3532 = vpop.f32.mrb[0].mxu0
      %v3533 = vpop.f32.mrb[0].mxu0
      %v3534 = vadd.f32 0.0, %v3533
      %v3535 = vpop.f32.mrb[0].mxu0
      %3536 = vmatprep.mubr.bf16.mxu0 %v3373
      %3537 = vmatmul.mubr.bf16.gmra.mrb[0].mxu0 %v3372
      %v3538 = vpop.f32.mrb[0].mxu0
      %v3539 = vadd.f32 0.0, %v3538
      %v3540 = vpop.f32.mrb[0].mxu0
      %v3541 = vpop.f32.mrb[0].mxu0
      %v3542 = vadd.f32 0.0, %v3541
      %v3543 = vpop.f32.mrb[0].mxu0
      %3544 = vmatprep.mubr.bf16.mxu0 %v3375
      %3545 = vmatmul.mubr.bf16.gmra.mrb[0].mxu0 %v3374
      %v3546 = vpop.f32.mrb[0].mxu0
      %v3547 = vadd.f32 0.0, %v3546
      %v3548 = vpop.f32.mrb[0].mxu0
      %v3549 = vpop.f32.mrb[0].mxu0
      %v3550 = vadd.f32 0.0, %v3549
      %v3551 = vpop.f32.mrb[0].mxu0
      %3552 = vmatprep.mubr.bf16.mxu0 %v3377
      %3553 = vmatmul.mubr.bf16.gmra.mrb[0].mxu0 %v3376
      %v3554 = vpop.f32.mrb[0].mxu0
      %v3555 = vadd.f32 0.0, %v3554
      %v3556 = vpop.f32.mrb[0].mxu0
      %v3557 = vpop.f32.mrb[0].mxu0
      %v3558 = vadd.f32 0.0, %v3557
      %v3559 = vpop.f32.mrb[0].mxu0
      %3560 = vmatprep.mubr.bf16.mxu0 %v3379
      %3561 = vmatmul.mubr.bf16.gmra.mrb[0].mxu0 %v3378
      %v3562 = vpop.f32.mrb[0].mxu0
      %v3563 = vadd.f32 0.0, %v3562
      %v3564 = vpop.f32.mrb[0].mxu0
      %v3565 = vpop.f32.mrb[0].mxu0
      %v3566 = vadd.f32 0.0, %v3565
      %v3567 = vpop.f32.mrb[0].mxu0
      %3568 = vmatprep.mubr.bf16.mxu0 %v3381
      %3569 = vmatmul.mubr.bf16.gmra.mrb[0].mxu0 %v3380
      %v3570 = vpop.f32.mrb[0].mxu0
      %v3571 = vadd.f32 0.0, %v3570
      %v3572 = vpop.f32.mrb[0].mxu0
      %v3573 = vpop.f32.mrb[0].mxu0
      %v3574 = vadd.f32 0.0, %v3573
      %v3575 = vpop.f32.mrb[0].mxu0
      %3576 = vmatprep.mubr.bf16.mxu0 %v3383
      %3577 = vmatmul.mubr.bf16.gmra.mrb[0].mxu0 %v3382
      %v3578 = vpop.f32.mrb[0].mxu0
      %v3579 = vadd.f32 0.0, %v3578
      %v3580 = vpop.f32.mrb[0].mxu0
      %v3581 = vpop.f32.mrb[0].mxu0
      %v3582 = vadd.f32 0.0, %v3581
      %v3583 = vpop.f32.mrb[0].mxu0
      %3584 = vmatprep.mubr.bf16.mxu0 %v3385
      %3585 = vmatmul.mubr.bf16.gmra.mrb[0].mxu0 %v3384
      %v3586 = vpop.f32.mrb[0].mxu0
      %v3587 = vadd.f32 0.0, %v3586
      %v3588 = vpop.f32.mrb[0].mxu0
      %v3589 = vpop.f32.mrb[0].mxu0
      %v3590 = vadd.f32 0.0, %v3589
      %v3591 = vpop.f32.mrb[0].mxu0
      %3592 = vmatprep.mubr.bf16.mxu0 %v3387
      %3593 = vmatmul.mubr.bf16.gmra.mrb[0].mxu0 %v3386
      %v3594 = vpop.f32.mrb[0].mxu0
      %v3595 = vadd.f32 0.0, %v3594
      %v3596 = vpop.f32.mrb[0].mxu0
      %v3597 = vpop.f32.mrb[0].mxu0
      %v3598 = vadd.f32 0.0, %v3597
      %v3599 = vpop.f32.mrb[0].mxu0
      %3600 = vmatprep.mubr.bf16.mxu0 %v3389
      %3601 = vmatmul.mubr.bf16.gmra.mrb[0].mxu0 %v3388
      %v3602 = vpop.f32.mrb[0].mxu0
      %v3603 = vadd.f32 0.0, %v3602
      %v3604 = vpop.f32.mrb[0].mxu0
      %v3605 = vpop.f32.mrb[0].mxu0
      %v3606 = vadd.f32 0.0, %v3605
      %v3607 = vpop.f32.mrb[0].mxu0
      %3608 = vmatprep.mubr.bf16.mxu0 %v3391
      %3609 = vmatmul.mubr.bf16.gmra.mrb[0].mxu0 %v3390
      %v3610 = vpop.f32.mrb[0].mxu0
      %v3611 = vadd.f32 0.0, %v3610
      %v3612 = vpop.f32.mrb[0].mxu0
      %v3613 = vpop.f32.mrb[0].mxu0
      %v3614 = vadd.f32 0.0, %v3613
      %v3615 = vpop.f32.mrb[0].mxu0
      %3616 = vdwg.mxu0
      %3617 = vrot.lane.b32.xlu0 %v1484, 64
      %v3618 = vpop.permute.xlu0 %3617
      %3619 = vrot.lane.b32.xlu0 %v1485, 64
      %v3620 = vpop.permute.xlu0 %3619
      %3621 = vrot.lane.b32.xlu0 %v1486, 64
      %v3622 = vpop.permute.xlu0 %3621
      %3623 = vrot.lane.b32.xlu0 %v1487, 64
      %v3624 = vpop.permute.xlu0 %3623
      %3625 = vrot.lane.b32.xlu0 %v1488, 64
      %v3626 = vpop.permute.xlu0 %3625
      %3627 = vrot.lane.b32.xlu0 %v1489, 64
      %v3628 = vpop.permute.xlu0 %3627
      %3629 = vrot.lane.b32.xlu0 %v1490, 64
      %v3630 = vpop.permute.xlu0 %3629
      %3631 = vrot.lane.b32.xlu0 %v1491, 64
      %v3632 = vpop.permute.xlu0 %3631
      %3633 = vrot.lane.b32.xlu0 %v1492, 64
      %v3634 = vpop.permute.xlu0 %3633
      %3635 = vrot.lane.b32.xlu0 %v1493, 64
      %v3636 = vpop.permute.xlu0 %3635
      %3637 = vrot.lane.b32.xlu0 %v1494, 64
      %v3638 = vpop.permute.xlu0 %3637
      %3639 = vrot.lane.b32.xlu0 %v1495, 64
      %v3640 = vpop.permute.xlu0 %3639
      %3641 = vrot.lane.b32.xlu0 %v1496, 64
      %v3642 = vpop.permute.xlu0 %3641
      %3643 = vrot.lane.b32.xlu0 %v1497, 64
      %v3644 = vpop.permute.xlu0 %3643
      %3645 = vrot.lane.b32.xlu0 %v1498, 64
      %v3646 = vpop.permute.xlu0 %3645
      %3647 = vrot.lane.b32.xlu0 %v1499, 64
      %v3648 = vpop.permute.xlu0 %3647
      %3649 = vrot.lane.b32.xlu0 %v1500, 64
      %v3650 = vpop.permute.xlu0 %3649
      %3651 = vrot.lane.b32.xlu0 %v1501, 64
      %v3652 = vpop.permute.xlu0 %3651
      %3653 = vrot.lane.b32.xlu0 %v1502, 64
      %v3654 = vpop.permute.xlu0 %3653
      %3655 = vrot.lane.b32.xlu0 %v1503, 64
      %v3656 = vpop.permute.xlu0 %3655
      %3657 = vrot.lane.b32.xlu0 %v1504, 64
      %v3658 = vpop.permute.xlu0 %3657
      %3659 = vrot.lane.b32.xlu0 %v1505, 64
      %v3660 = vpop.permute.xlu0 %3659
      %3661 = vrot.lane.b32.xlu0 %v1506, 64
      %v3662 = vpop.permute.xlu0 %3661
      %3663 = vrot.lane.b32.xlu0 %v1507, 64
      %v3664 = vpop.permute.xlu0 %3663
      %3665 = vrot.lane.b32.xlu0 %v1508, 64
      %v3666 = vpop.permute.xlu0 %3665
      %3667 = vrot.lane.b32.xlu0 %v1509, 64
      %v3668 = vpop.permute.xlu0 %3667
      %3669 = vrot.lane.b32.xlu0 %v1510, 64
      %v3670 = vpop.permute.xlu0 %3669
      %3671 = vrot.lane.b32.xlu0 %v1511, 64
      %v3672 = vpop.permute.xlu0 %3671
      %3673 = vrot.lane.b32.xlu0 %v1512, 64
      %v3674 = vpop.permute.xlu0 %3673
      %3675 = vrot.lane.b32.xlu0 %v1513, 64
      %v3676 = vpop.permute.xlu0 %3675
      %3677 = vrot.lane.b32.xlu0 %v1514, 64
      %v3678 = vpop.permute.xlu0 %3677
      %3679 = vrot.lane.b32.xlu0 %v1515, 64
      %v3680 = vpop.permute.xlu0 %3679
      %v3682 = vsel %vm1532, %v3618, 0
      %v3685 = vsel %vm1532, %v3620, 0
      %v3688 = vsel %vm1532, %v3622, 0
      %v3691 = vsel %vm1532, %v3624, 0
      %v3694 = vsel %vm1532, %v3626, 0
      %v3697 = vsel %vm1532, %v3628, 0
      %v3700 = vsel %vm1532, %v3630, 0
      %v3703 = vsel %vm1532, %v3632, 0
      %v3706 = vsel %vm1532, %v3634, 0
      %v3709 = vsel %vm1532, %v3636, 0
      %v3712 = vsel %vm1532, %v3638, 0
      %v3715 = vsel %vm1532, %v3640, 0
      %v3718 = vsel %vm1532, %v3642, 0
      %v3721 = vsel %vm1532, %v3644, 0
      %v3724 = vsel %vm1532, %v3646, 0
      %v3727 = vsel %vm1532, %v3648, 0
      %v3730 = vsel %vm1532, %v3650, 0
      %v3733 = vsel %vm1532, %v3652, 0
      %v3736 = vsel %vm1532, %v3654, 0
      %v3739 = vsel %vm1532, %v3656, 0
      %v3742 = vsel %vm1532, %v3658, 0
      %v3745 = vsel %vm1532, %v3660, 0
      %v3748 = vsel %vm1532, %v3662, 0
      %v3751 = vsel %vm1532, %v3664, 0
      %v3754 = vsel %vm1532, %v3666, 0
      %v3757 = vsel %vm1532, %v3668, 0
      %v3760 = vsel %vm1532, %v3670, 0
      %v3763 = vsel %vm1532, %v3672, 0
      %v3766 = vsel %vm1532, %v3674, 0
      %v3769 = vsel %vm1532, %v3676, 0
      %v3772 = vsel %vm1532, %v3678, 0
      %v3775 = vsel %vm1532, %v3680, 0
      %3777 = vmatprep.subr.bf16.mxu0 0
      %3778 = vmatpush1.bf16.xpose.msra.mxu0 %v3730
      %3779 = vmatprep.subr.bf16.mxu0 0
      %3780 = vmatpush1.bf16.xpose.msra.mxu0 %v3733
      %3781 = vmatprep.subr.bf16.mxu0 0
      %3782 = vmatpush1.bf16.xpose.msra.mxu0 %v3736
      %3783 = vmatprep.subr.bf16.mxu0 0
      %3784 = vmatpush1.bf16.xpose.msra.mxu0 %v3739
      %3785 = vmatprep.subr.bf16.mxu0 0
      %3786 = vmatpush1.bf16.xpose.msra.mxu0 %v3742
      %3787 = vmatprep.subr.bf16.mxu0 0
      %3788 = vmatpush1.bf16.xpose.msra.mxu0 %v3745
      %3789 = vmatprep.subr.bf16.mxu0 0
      %3790 = vmatpush1.bf16.xpose.msra.mxu0 %v3748
      %3791 = vmatprep.subr.bf16.mxu0 0
      %3792 = vmatpush1.bf16.xpose.msra.mxu0 %v3751
      %3793 = vmatprep.subr.bf16.mxu0 0
      %3794 = vmatpush1.bf16.xpose.msra.mxu0 %v3754
      %3795 = vmatprep.subr.bf16.mxu0 0
      %3796 = vmatpush1.bf16.xpose.msra.mxu0 %v3757
      %3797 = vmatprep.subr.bf16.mxu0 0
      %3798 = vmatpush1.bf16.xpose.msra.mxu0 %v3760
      %3799 = vmatprep.subr.bf16.mxu0 0
      %3800 = vmatpush1.bf16.xpose.msra.mxu0 %v3763
      %3801 = vmatprep.subr.bf16.mxu0 0
      %3802 = vmatpush1.bf16.xpose.msra.mxu0 %v3766
      %3803 = vmatprep.subr.bf16.mxu0 0
      %3804 = vmatpush1.bf16.xpose.msra.mxu0 %v3769
      %3805 = vmatprep.subr.bf16.mxu0 0
      %3806 = vmatpush1.bf16.xpose.msra.mxu0 %v3772
      %3807 = vmatprep.subr.bf16.mxu0 0
      %3808 = vmatpush1.bf16.xpose.msra.mxu0 %v3775
      %3809 = vmatprep.mubr.bf16.mxu0 0
      %3810 = vmatmul.mubr.bf16.gmra.mrb[0].mxu0 %v3682
      %v3811 = vpop.f32.mrb[0].mxu0
      %v3812 = vadd.f32 0.0, %v3811
      %v3813 = vpop.f32.mrb[0].mxu0
      %v3814 = vadd.f32 0.0, %v3813
      %v3815 = vpop.f32.mrb[0].mxu0
      %v3816 = vadd.f32 0.0, %v3815
      %v3817 = vpop.f32.mrb[0].mxu0
      %v3818 = vadd.f32 0.0, %v3817
      %3819 = vmatprep.mubr.bf16.mxu0 0
      %3820 = vmatmul.mubr.bf16.gmra.mrb[0].mxu0 %v3685
      %v3821 = vpop.f32.mrb[0].mxu0
      %v3822 = vadd.f32 0.0, %v3821
      %v3823 = vpop.f32.mrb[0].mxu0
      %v3824 = vadd.f32 0.0, %v3823
      %v3825 = vpop.f32.mrb[0].mxu0
      %v3826 = vadd.f32 0.0, %v3825
      %v3827 = vpop.f32.mrb[0].mxu0
      %v3828 = vadd.f32 0.0, %v3827
      %3829 = vmatprep.mubr.bf16.mxu0 0
      %3830 = vmatmul.mubr.bf16.gmra.mrb[0].mxu0 %v3688
      %v3831 = vpop.f32.mrb[0].mxu0
      %v3832 = vadd.f32 0.0, %v3831
      %v3833 = vpop.f32.mrb[0].mxu0
      %v3834 = vadd.f32 0.0, %v3833
      %v3835 = vpop.f32.mrb[0].mxu0
      %v3836 = vadd.f32 0.0, %v3835
      %v3837 = vpop.f32.mrb[0].mxu0
      %v3838 = vadd.f32 0.0, %v3837
      %3839 = vmatprep.mubr.bf16.mxu0 0
      %3840 = vmatmul.mubr.bf16.gmra.mrb[0].mxu0 %v3691
      %v3841 = vpop.f32.mrb[0].mxu0
      %v3842 = vadd.f32 0.0, %v3841
      %v3843 = vpop.f32.mrb[0].mxu0
      %v3844 = vadd.f32 0.0, %v3843
      %v3845 = vpop.f32.mrb[0].mxu0
      %v3846 = vadd.f32 0.0, %v3845
      %v3847 = vpop.f32.mrb[0].mxu0
      %v3848 = vadd.f32 0.0, %v3847
      %3849 = vmatprep.mubr.bf16.mxu0 0
      %3850 = vmatmul.mubr.bf16.gmra.mrb[0].mxu0 %v3694
      %v3851 = vpop.f32.mrb[0].mxu0
      %v3852 = vadd.f32 0.0, %v3851
      %v3853 = vpop.f32.mrb[0].mxu0
      %v3854 = vadd.f32 0.0, %v3853
      %v3855 = vpop.f32.mrb[0].mxu0
      %v3856 = vadd.f32 0.0, %v3855
      %v3857 = vpop.f32.mrb[0].mxu0
      %v3858 = vadd.f32 0.0, %v3857
      %3859 = vmatprep.mubr.bf16.mxu0 0
      %3860 = vmatmul.mubr.bf16.gmra.mrb[0].mxu0 %v3697
      %v3861 = vpop.f32.mrb[0].mxu0
      %v3862 = vadd.f32 0.0, %v3861
      %v3863 = vpop.f32.mrb[0].mxu0
      %v3864 = vadd.f32 0.0, %v3863
      %v3865 = vpop.f32.mrb[0].mxu0
      %v3866 = vadd.f32 0.0, %v3865
      %v3867 = vpop.f32.mrb[0].mxu0
      %v3868 = vadd.f32 0.0, %v3867
      %3869 = vmatprep.mubr.bf16.mxu0 0
      %3870 = vmatmul.mubr.bf16.gmra.mrb[0].mxu0 %v3700
      %v3871 = vpop.f32.mrb[0].mxu0
      %v3872 = vadd.f32 0.0, %v3871
      %v3873 = vpop.f32.mrb[0].mxu0
      %v3874 = vadd.f32 0.0, %v3873
      %v3875 = vpop.f32.mrb[0].mxu0
      %v3876 = vadd.f32 0.0, %v3875
      %v3877 = vpop.f32.mrb[0].mxu0
      %v3878 = vadd.f32 0.0, %v3877
      %3879 = vmatprep.mubr.bf16.mxu0 0
      %3880 = vmatmul.mubr.bf16.gmra.mrb[0].mxu0 %v3703
      %v3881 = vpop.f32.mrb[0].mxu0
      %v3882 = vadd.f32 0.0, %v3881
      %v3883 = vpop.f32.mrb[0].mxu0
      %v3884 = vadd.f32 0.0, %v3883
      %v3885 = vpop.f32.mrb[0].mxu0
      %v3886 = vadd.f32 0.0, %v3885
      %v3887 = vpop.f32.mrb[0].mxu0
      %v3888 = vadd.f32 0.0, %v3887
      %3889 = vmatprep.mubr.bf16.mxu0 0
      %3890 = vmatmul.mubr.bf16.gmra.mrb[0].mxu0 %v3706
      %v3891 = vpop.f32.mrb[0].mxu0
      %v3892 = vadd.f32 0.0, %v3891
      %v3893 = vpop.f32.mrb[0].mxu0
      %v3894 = vadd.f32 0.0, %v3893
      %v3895 = vpop.f32.mrb[0].mxu0
      %v3896 = vadd.f32 0.0, %v3895
      %v3897 = vpop.f32.mrb[0].mxu0
      %v3898 = vadd.f32 0.0, %v3897
      %3899 = vmatprep.mubr.bf16.mxu0 0
      %3900 = vmatmul.mubr.bf16.gmra.mrb[0].mxu0 %v3709
      %v3901 = vpop.f32.mrb[0].mxu0
      %v3902 = vadd.f32 0.0, %v3901
      %v3903 = vpop.f32.mrb[0].mxu0
      %v3904 = vadd.f32 0.0, %v3903
      %v3905 = vpop.f32.mrb[0].mxu0
      %v3906 = vadd.f32 0.0, %v3905
      %v3907 = vpop.f32.mrb[0].mxu0
      %v3908 = vadd.f32 0.0, %v3907
      %3909 = vmatprep.mubr.bf16.mxu0 0
      %3910 = vmatmul.mubr.bf16.gmra.mrb[0].mxu0 %v3712
      %v3911 = vpop.f32.mrb[0].mxu0
      %v3912 = vadd.f32 0.0, %v3911
      %v3913 = vpop.f32.mrb[0].mxu0
      %v3914 = vadd.f32 0.0, %v3913
      %v3915 = vpop.f32.mrb[0].mxu0
      %v3916 = vadd.f32 0.0, %v3915
      %v3917 = vpop.f32.mrb[0].mxu0
      %v3918 = vadd.f32 0.0, %v3917
      %3919 = vmatprep.mubr.bf16.mxu0 0
      %3920 = vmatmul.mubr.bf16.gmra.mrb[0].mxu0 %v3715
      %v3921 = vpop.f32.mrb[0].mxu0
      %v3922 = vadd.f32 0.0, %v3921
      %v3923 = vpop.f32.mrb[0].mxu0
      %v3924 = vadd.f32 0.0, %v3923
      %v3925 = vpop.f32.mrb[0].mxu0
      %v3926 = vadd.f32 0.0, %v3925
      %v3927 = vpop.f32.mrb[0].mxu0
      %v3928 = vadd.f32 0.0, %v3927
      %3929 = vmatprep.mubr.bf16.mxu0 0
      %3930 = vmatmul.mubr.bf16.gmra.mrb[0].mxu0 %v3718
      %v3931 = vpop.f32.mrb[0].mxu0
      %v3932 = vadd.f32 0.0, %v3931
      %v3933 = vpop.f32.mrb[0].mxu0
      %v3934 = vadd.f32 0.0, %v3933
      %v3935 = vpop.f32.mrb[0].mxu0
      %v3936 = vadd.f32 0.0, %v3935
      %v3937 = vpop.f32.mrb[0].mxu0
      %v3938 = vadd.f32 0.0, %v3937
      %3939 = vmatprep.mubr.bf16.mxu0 0
      %3940 = vmatmul.mubr.bf16.gmra.mrb[0].mxu0 %v3721
      %v3941 = vpop.f32.mrb[0].mxu0
      %v3942 = vadd.f32 0.0, %v3941
      %v3943 = vpop.f32.mrb[0].mxu0
      %v3944 = vadd.f32 0.0, %v3943
      %v3945 = vpop.f32.mrb[0].mxu0
      %v3946 = vadd.f32 0.0, %v3945
      %v3947 = vpop.f32.mrb[0].mxu0
      %v3948 = vadd.f32 0.0, %v3947
      %3949 = vmatprep.mubr.bf16.mxu0 0
      %3950 = vmatmul.mubr.bf16.gmra.mrb[0].mxu0 %v3724
      %v3951 = vpop.f32.mrb[0].mxu0
      %v3952 = vadd.f32 0.0, %v3951
      %v3953 = vpop.f32.mrb[0].mxu0
      %v3954 = vadd.f32 0.0, %v3953
      %v3955 = vpop.f32.mrb[0].mxu0
      %v3956 = vadd.f32 0.0, %v3955
      %v3957 = vpop.f32.mrb[0].mxu0
      %v3958 = vadd.f32 0.0, %v3957
      %3959 = vmatprep.mubr.bf16.mxu0 0
      %3960 = vmatmul.mubr.bf16.gmra.mrb[0].mxu0 %v3727
      %v3961 = vpop.f32.mrb[0].mxu0
      %v3962 = vadd.f32 0.0, %v3961
      %v3963 = vpop.f32.mrb[0].mxu0
      %v3964 = vadd.f32 0.0, %v3963
      %v3965 = vpop.f32.mrb[0].mxu0
      %v3966 = vadd.f32 0.0, %v3965
      %v3967 = vpop.f32.mrb[0].mxu0
      %v3968 = vadd.f32 0.0, %v3967
      %3969 = vdwg.mxu0
      %v3970 = vmax.f32 %v3812, %v3814
      %3971 = vmax.xlane.f32.xlu0 %v3970
      %v3972 = vpop.xlane.xlu0 %3971
      %v3973 = vmax.f32 %v3816, %v3818
      %3974 = vmax.xlane.f32.xlu0 %v3973
      %v3975 = vpop.xlane.xlu0 %3974
      %v3976 = vmax.f32 %v3822, %v3824
      %3977 = vmax.xlane.f32.xlu0 %v3976
      %v3978 = vpop.xlane.xlu0 %3977
      %v3979 = vmax.f32 %v3826, %v3828
      %3980 = vmax.xlane.f32.xlu0 %v3979
      %v3981 = vpop.xlane.xlu0 %3980
      %v3982 = vmax.f32 %v3832, %v3834
      %3983 = vmax.xlane.f32.xlu0 %v3982
      %v3984 = vpop.xlane.xlu0 %3983
      %v3985 = vmax.f32 %v3836, %v3838
      %3986 = vmax.xlane.f32.xlu0 %v3985
      %v3987 = vpop.xlane.xlu0 %3986
      %v3988 = vmax.f32 %v3842, %v3844
      %3989 = vmax.xlane.f32.xlu0 %v3988
      %v3990 = vpop.xlane.xlu0 %3989
      %v3991 = vmax.f32 %v3846, %v3848
      %3992 = vmax.xlane.f32.xlu0 %v3991
      %v3993 = vpop.xlane.xlu0 %3992
      %v3994 = vmax.f32 %v3852, %v3854
      %3995 = vmax.xlane.f32.xlu0 %v3994
      %v3996 = vpop.xlane.xlu0 %3995
      %v3997 = vmax.f32 %v3856, %v3858
      %3998 = vmax.xlane.f32.xlu0 %v3997
      %v3999 = vpop.xlane.xlu0 %3998
      %v4000 = vmax.f32 %v3862, %v3864
      %4001 = vmax.xlane.f32.xlu0 %v4000
      %v4002 = vpop.xlane.xlu0 %4001
      %v4003 = vmax.f32 %v3866, %v3868
      %4004 = vmax.xlane.f32.xlu0 %v4003
      %v4005 = vpop.xlane.xlu0 %4004
      %v4006 = vmax.f32 %v3872, %v3874
      %4007 = vmax.xlane.f32.xlu0 %v4006
      %v4008 = vpop.xlane.xlu0 %4007
      %v4009 = vmax.f32 %v3876, %v3878
      %4010 = vmax.xlane.f32.xlu0 %v4009
      %v4011 = vpop.xlane.xlu0 %4010
      %v4012 = vmax.f32 %v3882, %v3884
      %4013 = vmax.xlane.f32.xlu0 %v4012
      %v4014 = vpop.xlane.xlu0 %4013
      %v4015 = vmax.f32 %v3886, %v3888
      %4016 = vmax.xlane.f32.xlu0 %v4015
      %v4017 = vpop.xlane.xlu0 %4016
      %v4018 = vmax.f32 %v3892, %v3894
      %4019 = vmax.xlane.f32.xlu0 %v4018
      %v4020 = vpop.xlane.xlu0 %4019
      %v4021 = vmax.f32 %v3896, %v3898
      %4022 = vmax.xlane.f32.xlu0 %v4021
      %v4023 = vpop.xlane.xlu0 %4022
      %v4024 = vmax.f32 %v3902, %v3904
      %4025 = vmax.xlane.f32.xlu0 %v4024
      %v4026 = vpop.xlane.xlu0 %4025
      %v4027 = vmax.f32 %v3906, %v3908
      %4028 = vmax.xlane.f32.xlu0 %v4027
      %v4029 = vpop.xlane.xlu0 %4028
      %v4030 = vmax.f32 %v3912, %v3914
      %4031 = vmax.xlane.f32.xlu0 %v4030
      %v4032 = vpop.xlane.xlu0 %4031
      %v4033 = vmax.f32 %v3916, %v3918
      %4034 = vmax.xlane.f32.xlu0 %v4033
      %v4035 = vpop.xlane.xlu0 %4034
      %v4036 = vmax.f32 %v3922, %v3924
      %4037 = vmax.xlane.f32.xlu0 %v4036
      %v4038 = vpop.xlane.xlu0 %4037
      %v4039 = vmax.f32 %v3926, %v3928
      %4040 = vmax.xlane.f32.xlu0 %v4039
      %v4041 = vpop.xlane.xlu0 %4040
      %v4042 = vmax.f32 %v3932, %v3934
      %4043 = vmax.xlane.f32.xlu0 %v4042
      %v4044 = vpop.xlane.xlu0 %4043
      %v4045 = vmax.f32 %v3936, %v3938
      %4046 = vmax.xlane.f32.xlu0 %v4045
      %v4047 = vpop.xlane.xlu0 %4046
      %v4048 = vmax.f32 %v3942, %v3944
      %4049 = vmax.xlane.f32.xlu0 %v4048
      %v4050 = vpop.xlane.xlu0 %4049
      %v4051 = vmax.f32 %v3946, %v3948
      %4052 = vmax.xlane.f32.xlu0 %v4051
      %v4053 = vpop.xlane.xlu0 %4052
      %v4054 = vmax.f32 %v3952, %v3954
      %4055 = vmax.xlane.f32.xlu0 %v4054
      %v4056 = vpop.xlane.xlu0 %4055
      %v4057 = vmax.f32 %v3956, %v3958
      %4058 = vmax.xlane.f32.xlu0 %v4057
      %v4059 = vpop.xlane.xlu0 %4058
      %v4060 = vmax.f32 %v3962, %v3964
      %4061 = vmax.xlane.f32.xlu0 %v4060
      %v4062 = vpop.xlane.xlu0 %4061
      %v4063 = vmax.f32 %v3966, %v3968
      %4064 = vmax.xlane.f32.xlu0 %v4063
      %v4065 = vpop.xlane.xlu0 %4064
      %v4066 = vsub.f32 %v3812, %v3972
      %v4067 = vsub.f32 %v3814, %v3972
      %v4068 = vsub.f32 %v3816, %v3975
      %v4069 = vsub.f32 %v3818, %v3975
      %v4070 = vsub.f32 %v3822, %v3978
      %v4071 = vsub.f32 %v3824, %v3978
      %v4072 = vsub.f32 %v3826, %v3981
      %v4073 = vsub.f32 %v3828, %v3981
      %v4074 = vsub.f32 %v3832, %v3984
      %v4075 = vsub.f32 %v3834, %v3984
      %v4076 = vsub.f32 %v3836, %v3987
      %v4077 = vsub.f32 %v3838, %v3987
      %v4078 = vsub.f32 %v3842, %v3990
      %v4079 = vsub.f32 %v3844, %v3990
      %v4080 = vsub.f32 %v3846, %v3993
      %v4081 = vsub.f32 %v3848, %v3993
      %v4082 = vsub.f32 %v3852, %v3996
      %v4083 = vsub.f32 %v3854, %v3996
      %v4084 = vsub.f32 %v3856, %v3999
      %v4085 = vsub.f32 %v3858, %v3999
      %v4086 = vsub.f32 %v3862, %v4002
      %v4087 = vsub.f32 %v3864, %v4002
      %v4088 = vsub.f32 %v3866, %v4005
      %v4089 = vsub.f32 %v3868, %v4005
      %v4090 = vsub.f32 %v3872, %v4008
      %v4091 = vsub.f32 %v3874, %v4008
      %v4092 = vsub.f32 %v3876, %v4011
      %v4093 = vsub.f32 %v3878, %v4011
      %v4094 = vsub.f32 %v3882, %v4014
      %v4095 = vsub.f32 %v3884, %v4014
      %v4096 = vsub.f32 %v3886, %v4017
      %v4097 = vsub.f32 %v3888, %v4017
      %v4098 = vsub.f32 %v3892, %v4020
      %v4099 = vsub.f32 %v3894, %v4020
      %v4100 = vsub.f32 %v3896, %v4023
      %v4101 = vsub.f32 %v3898, %v4023
      %v4102 = vsub.f32 %v3902, %v4026
      %v4103 = vsub.f32 %v3904, %v4026
      %v4104 = vsub.f32 %v3906, %v4029
      %v4105 = vsub.f32 %v3908, %v4029
      %v4106 = vsub.f32 %v3912, %v4032
      %v4107 = vsub.f32 %v3914, %v4032
      %v4108 = vsub.f32 %v3916, %v4035
      %v4109 = vsub.f32 %v3918, %v4035
      %v4110 = vsub.f32 %v3922, %v4038
      %v4111 = vsub.f32 %v3924, %v4038
      %v4112 = vsub.f32 %v3926, %v4041
      %v4113 = vsub.f32 %v3928, %v4041
      %v4114 = vsub.f32 %v3932, %v4044
      %v4115 = vsub.f32 %v3934, %v4044
      %v4116 = vsub.f32 %v3936, %v4047
      %v4117 = vsub.f32 %v3938, %v4047
      %v4118 = vsub.f32 %v3942, %v4050
      %v4119 = vsub.f32 %v3944, %v4050
      %v4120 = vsub.f32 %v3946, %v4053
      %v4121 = vsub.f32 %v3948, %v4053
      %v4122 = vsub.f32 %v3952, %v4056
      %v4123 = vsub.f32 %v3954, %v4056
      %v4124 = vsub.f32 %v3956, %v4059
      %v4125 = vsub.f32 %v3958, %v4059
      %v4126 = vsub.f32 %v3962, %v4062
      %v4127 = vsub.f32 %v3964, %v4062
      %v4128 = vsub.f32 %v3966, %v4065
      %v4129 = vsub.f32 %v3968, %v4065
      %v4130 = vmul.f32 %v4066, 1.442695
      %v4131 = vpow.pop %v4130
      %v4132 = vmul.f32 %v4067, 1.442695
      %v4133 = vpow.pop %v4132
      %v4134 = vmul.f32 %v4068, 1.442695
      %v4135 = vpow.pop %v4134
      %v4136 = vmul.f32 %v4069, 1.442695
      %v4137 = vpow.pop %v4136
      %v4138 = vmul.f32 %v4070, 1.442695
      %v4139 = vpow.pop %v4138
      %v4140 = vmul.f32 %v4071, 1.442695
      %v4141 = vpow.pop %v4140
      %v4142 = vmul.f32 %v4072, 1.442695
      %v4143 = vpow.pop %v4142
      %v4144 = vmul.f32 %v4073, 1.442695
      %v4145 = vpow.pop %v4144
      %v4146 = vmul.f32 %v4074, 1.442695
      %v4147 = vpow.pop %v4146
      %v4148 = vmul.f32 %v4075, 1.442695
      %v4149 = vpow.pop %v4148
      %v4150 = vmul.f32 %v4076, 1.442695
      %v4151 = vpow.pop %v4150
      %v4152 = vmul.f32 %v4077, 1.442695
      %v4153 = vpow.pop %v4152
      %v4154 = vmul.f32 %v4078, 1.442695
      %v4155 = vpow.pop %v4154
      %v4156 = vmul.f32 %v4079, 1.442695
      %v4157 = vpow.pop %v4156
      %v4158 = vmul.f32 %v4080, 1.442695
      %v4159 = vpow.pop %v4158
      %v4160 = vmul.f32 %v4081, 1.442695
      %v4161 = vpow.pop %v4160
      %v4162 = vmul.f32 %v4082, 1.442695
      %v4163 = vpow.pop %v4162
      %v4164 = vmul.f32 %v4083, 1.442695
      %v4165 = vpow.pop %v4164
      %v4166 = vmul.f32 %v4084, 1.442695
      %v4167 = vpow.pop %v4166
      %v4168 = vmul.f32 %v4085, 1.442695
      %v4169 = vpow.pop %v4168
      %v4170 = vmul.f32 %v4086, 1.442695
      %v4171 = vpow.pop %v4170
      %v4172 = vmul.f32 %v4087, 1.442695
      %v4173 = vpow.pop %v4172
      %v4174 = vmul.f32 %v4088, 1.442695
      %v4175 = vpow.pop %v4174
      %v4176 = vmul.f32 %v4089, 1.442695
      %v4177 = vpow.pop %v4176
      %v4178 = vmul.f32 %v4090, 1.442695
      %v4179 = vpow.pop %v4178
      %v4180 = vmul.f32 %v4091, 1.442695
      %v4181 = vpow.pop %v4180
      %v4182 = vmul.f32 %v4092, 1.442695
      %v4183 = vpow.pop %v4182
      %v4184 = vmul.f32 %v4093, 1.442695
      %v4185 = vpow.pop %v4184
      %v4186 = vmul.f32 %v4094, 1.442695
      %v4187 = vpow.pop %v4186
      %v4188 = vmul.f32 %v4095, 1.442695
      %v4189 = vpow.pop %v4188
      %v4190 = vmul.f32 %v4096, 1.442695
      %v4191 = vpow.pop %v4190
      %v4192 = vmul.f32 %v4097, 1.442695
      %v4193 = vpow.pop %v4192
      %v4194 = vmul.f32 %v4098, 1.442695
      %v4195 = vpow.pop %v4194
      %v4196 = vmul.f32 %v4099, 1.442695
      %v4197 = vpow.pop %v4196
      %v4198 = vmul.f32 %v4100, 1.442695
      %v4199 = vpow.pop %v4198
      %v4200 = vmul.f32 %v4101, 1.442695
      %v4201 = vpow.pop %v4200
      %v4202 = vmul.f32 %v4102, 1.442695
      %v4203 = vpow.pop %v4202
      %v4204 = vmul.f32 %v4103, 1.442695
      %v4205 = vpow.pop %v4204
      %v4206 = vmul.f32 %v4104, 1.442695
      %v4207 = vpow.pop %v4206
      %v4208 = vmul.f32 %v4105, 1.442695
      %v4209 = vpow.pop %v4208
      %v4210 = vmul.f32 %v4106, 1.442695
      %v4211 = vpow.pop %v4210
      %v4212 = vmul.f32 %v4107, 1.442695
      %v4213 = vpow.pop %v4212
      %v4214 = vmul.f32 %v4108, 1.442695
      %v4215 = vpow.pop %v4214
      %v4216 = vmul.f32 %v4109, 1.442695
      %v4217 = vpow.pop %v4216
      %v4218 = vmul.f32 %v4110, 1.442695
      %v4219 = vpow.pop %v4218
      %v4220 = vmul.f32 %v4111, 1.442695
      %v4221 = vpow.pop %v4220
      %v4222 = vmul.f32 %v4112, 1.442695
      %v4223 = vpow.pop %v4222
      %v4224 = vmul.f32 %v4113, 1.442695
      %v4225 = vpow.pop %v4224
      %v4226 = vmul.f32 %v4114, 1.442695
      %v4227 = vpow.pop %v4226
      %v4228 = vmul.f32 %v4115, 1.442695
      %v4229 = vpow.pop %v4228
      %v4230 = vmul.f32 %v4116, 1.442695
      %v4231 = vpow.pop %v4230
      %v4232 = vmul.f32 %v4117, 1.442695
      %v4233 = vpow.pop %v4232
      %v4234 = vmul.f32 %v4118, 1.442695
      %v4235 = vpow.pop %v4234
      %v4236 = vmul.f32 %v4119, 1.442695
      %v4237 = vpow.pop %v4236
      %v4238 = vmul.f32 %v4120, 1.442695
      %v4239 = vpow.pop %v4238
      %v4240 = vmul.f32 %v4121, 1.442695
      %v4241 = vpow.pop %v4240
      %v4242 = vmul.f32 %v4122, 1.442695
      %v4243 = vpow.pop %v4242
      %v4244 = vmul.f32 %v4123, 1.442695
      %v4245 = vpow.pop %v4244
      %v4246 = vmul.f32 %v4124, 1.442695
      %v4247 = vpow.pop %v4246
      %v4248 = vmul.f32 %v4125, 1.442695
      %v4249 = vpow.pop %v4248
      %v4250 = vmul.f32 %v4126, 1.442695
      %v4251 = vpow.pop %v4250
      %v4252 = vmul.f32 %v4127, 1.442695
      %v4253 = vpow.pop %v4252
      %v4254 = vmul.f32 %v4128, 1.442695
      %v4255 = vpow.pop %v4254
      %v4256 = vmul.f32 %v4129, 1.442695
      %v4257 = vpow.pop %v4256
      %v4258 = vadd.f32 %v4131, %v4133
      %4259 = vadd.xlane.f32.xlu0 %v4258
      %v4260 = vpop.xlane.xlu0 %4259
      %v4261 = vadd.f32 %v4135, %v4137
      %4262 = vadd.xlane.f32.xlu0 %v4261
      %v4263 = vpop.xlane.xlu0 %4262
      %v4264 = vadd.f32 %v4139, %v4141
      %4265 = vadd.xlane.f32.xlu0 %v4264
      %v4266 = vpop.xlane.xlu0 %4265
      %v4267 = vadd.f32 %v4143, %v4145
      %4268 = vadd.xlane.f32.xlu0 %v4267
      %v4269 = vpop.xlane.xlu0 %4268
      %v4270 = vadd.f32 %v4147, %v4149
      %4271 = vadd.xlane.f32.xlu0 %v4270
      %v4272 = vpop.xlane.xlu0 %4271
      %v4273 = vadd.f32 %v4151, %v4153
      %4274 = vadd.xlane.f32.xlu0 %v4273
      %v4275 = vpop.xlane.xlu0 %4274
      %v4276 = vadd.f32 %v4155, %v4157
      %4277 = vadd.xlane.f32.xlu0 %v4276
      %v4278 = vpop.xlane.xlu0 %4277
      %v4279 = vadd.f32 %v4159, %v4161
      %4280 = vadd.xlane.f32.xlu0 %v4279
      %v4281 = vpop.xlane.xlu0 %4280
      %v4282 = vadd.f32 %v4163, %v4165
      %4283 = vadd.xlane.f32.xlu0 %v4282
      %v4284 = vpop.xlane.xlu0 %4283
      %v4285 = vadd.f32 %v4167, %v4169
      %4286 = vadd.xlane.f32.xlu0 %v4285
      %v4287 = vpop.xlane.xlu0 %4286
      %v4288 = vadd.f32 %v4171, %v4173
      %4289 = vadd.xlane.f32.xlu0 %v4288
      %v4290 = vpop.xlane.xlu0 %4289
      %v4291 = vadd.f32 %v4175, %v4177
      %4292 = vadd.xlane.f32.xlu0 %v4291
      %v4293 = vpop.xlane.xlu0 %4292
      %v4294 = vadd.f32 %v4179, %v4181
      %4295 = vadd.xlane.f32.xlu0 %v4294
      %v4296 = vpop.xlane.xlu0 %4295
      %v4297 = vadd.f32 %v4183, %v4185
      %4298 = vadd.xlane.f32.xlu0 %v4297
      %v4299 = vpop.xlane.xlu0 %4298
      %v4300 = vadd.f32 %v4187, %v4189
      %4301 = vadd.xlane.f32.xlu0 %v4300
      %v4302 = vpop.xlane.xlu0 %4301
      %v4303 = vadd.f32 %v4191, %v4193
      %4304 = vadd.xlane.f32.xlu0 %v4303
      %v4305 = vpop.xlane.xlu0 %4304
      %v4306 = vadd.f32 %v4195, %v4197
      %4307 = vadd.xlane.f32.xlu0 %v4306
      %v4308 = vpop.xlane.xlu0 %4307
      %v4309 = vadd.f32 %v4199, %v4201
      %4310 = vadd.xlane.f32.xlu0 %v4309
      %v4311 = vpop.xlane.xlu0 %4310
      %v4312 = vadd.f32 %v4203, %v4205
      %4313 = vadd.xlane.f32.xlu0 %v4312
      %v4314 = vpop.xlane.xlu0 %4313
      %v4315 = vadd.f32 %v4207, %v4209
      %4316 = vadd.xlane.f32.xlu0 %v4315
      %v4317 = vpop.xlane.xlu0 %4316
      %v4318 = vadd.f32 %v4211, %v4213
      %4319 = vadd.xlane.f32.xlu0 %v4318
      %v4320 = vpop.xlane.xlu0 %4319
      %v4321 = vadd.f32 %v4215, %v4217
      %4322 = vadd.xlane.f32.xlu0 %v4321
      %v4323 = vpop.xlane.xlu0 %4322
      %v4324 = vadd.f32 %v4219, %v4221
      %4325 = vadd.xlane.f32.xlu0 %v4324
      %v4326 = vpop.xlane.xlu0 %4325
      %v4327 = vadd.f32 %v4223, %v4225
      %4328 = vadd.xlane.f32.xlu0 %v4327
      %v4329 = vpop.xlane.xlu0 %4328
      %v4330 = vadd.f32 %v4227, %v4229
      %4331 = vadd.xlane.f32.xlu0 %v4330
      %v4332 = vpop.xlane.xlu0 %4331
      %v4333 = vadd.f32 %v4231, %v4233
      %4334 = vadd.xlane.f32.xlu0 %v4333
      %v4335 = vpop.xlane.xlu0 %4334
      %v4336 = vadd.f32 %v4235, %v4237
      %4337 = vadd.xlane.f32.xlu0 %v4336
      %v4338 = vpop.xlane.xlu0 %4337
      %v4339 = vadd.f32 %v4239, %v4241
      %4340 = vadd.xlane.f32.xlu0 %v4339
      %v4341 = vpop.xlane.xlu0 %4340
      %v4342 = vadd.f32 %v4243, %v4245
      %4343 = vadd.xlane.f32.xlu0 %v4342
      %v4344 = vpop.xlane.xlu0 %4343
      %v4345 = vadd.f32 %v4247, %v4249
      %4346 = vadd.xlane.f32.xlu0 %v4345
      %v4347 = vpop.xlane.xlu0 %4346
      %v4348 = vadd.f32 %v4251, %v4253
      %4349 = vadd.xlane.f32.xlu0 %v4348
      %v4350 = vpop.xlane.xlu0 %4349
      %v4351 = vadd.f32 %v4255, %v4257
      %4352 = vadd.xlane.f32.xlu0 %v4351
      %v4353 = vpop.xlane.xlu0 %4352
      %v4354 = vrcp.pop %v4260
      %v4355 = vrcp.pop %v4263
      %v4356 = vrcp.pop %v4266
      %v4357 = vrcp.pop %v4269
      %v4358 = vrcp.pop %v4272
      %v4359 = vrcp.pop %v4275
      %v4360 = vrcp.pop %v4278
      %v4361 = vrcp.pop %v4281
      %v4362 = vrcp.pop %v4284
      %v4363 = vrcp.pop %v4287
      %v4364 = vrcp.pop %v4290
      %v4365 = vrcp.pop %v4293
      %v4366 = vrcp.pop %v4296
      %v4367 = vrcp.pop %v4299
      %v4368 = vrcp.pop %v4302
      %v4369 = vrcp.pop %v4305
      %v4370 = vrcp.pop %v4308
      %v4371 = vrcp.pop %v4311
      %v4372 = vrcp.pop %v4314
      %v4373 = vrcp.pop %v4317
      %v4374 = vrcp.pop %v4320
      %v4375 = vrcp.pop %v4323
      %v4376 = vrcp.pop %v4326
      %v4377 = vrcp.pop %v4329
      %v4378 = vrcp.pop %v4332
      %v4379 = vrcp.pop %v4335
      %v4380 = vrcp.pop %v4338
      %v4381 = vrcp.pop %v4341
      %v4382 = vrcp.pop %v4344
      %v4383 = vrcp.pop %v4347
      %v4384 = vrcp.pop %v4350
      %v4385 = vrcp.pop %v4353
      %v4386 = vmul.f32 %v4131, %v4354
      %v4387 = vmul.f32 %v4133, %v4354
      %v4388 = vmul.f32 %v4135, %v4355
      %v4389 = vmul.f32 %v4137, %v4355
      %v4390 = vmul.f32 %v4139, %v4356
      %v4391 = vmul.f32 %v4141, %v4356
      %v4392 = vmul.f32 %v4143, %v4357
      %v4393 = vmul.f32 %v4145, %v4357
      %v4394 = vmul.f32 %v4147, %v4358
      %v4395 = vmul.f32 %v4149, %v4358
      %v4396 = vmul.f32 %v4151, %v4359
      %v4397 = vmul.f32 %v4153, %v4359
      %v4398 = vmul.f32 %v4155, %v4360
      %v4399 = vmul.f32 %v4157, %v4360
      %v4400 = vmul.f32 %v4159, %v4361
      %v4401 = vmul.f32 %v4161, %v4361
      %v4402 = vmul.f32 %v4163, %v4362
      %v4403 = vmul.f32 %v4165, %v4362
      %v4404 = vmul.f32 %v4167, %v4363
      %v4405 = vmul.f32 %v4169, %v4363
      %v4406 = vmul.f32 %v4171, %v4364
      %v4407 = vmul.f32 %v4173, %v4364
      %v4408 = vmul.f32 %v4175, %v4365
      %v4409 = vmul.f32 %v4177, %v4365
      %v4410 = vmul.f32 %v4179, %v4366
      %v4411 = vmul.f32 %v4181, %v4366
      %v4412 = vmul.f32 %v4183, %v4367
      %v4413 = vmul.f32 %v4185, %v4367
      %v4414 = vmul.f32 %v4187, %v4368
      %v4415 = vmul.f32 %v4189, %v4368
      %v4416 = vmul.f32 %v4191, %v4369
      %v4417 = vmul.f32 %v4193, %v4369
      %v4418 = vmul.f32 %v4195, %v4370
      %v4419 = vmul.f32 %v4197, %v4370
      %v4420 = vmul.f32 %v4199, %v4371
      %v4421 = vmul.f32 %v4201, %v4371
      %v4422 = vmul.f32 %v4203, %v4372
      %v4423 = vmul.f32 %v4205, %v4372
      %v4424 = vmul.f32 %v4207, %v4373
      %v4425 = vmul.f32 %v4209, %v4373
      %v4426 = vmul.f32 %v4211, %v4374
      %v4427 = vmul.f32 %v4213, %v4374
      %v4428 = vmul.f32 %v4215, %v4375
      %v4429 = vmul.f32 %v4217, %v4375
      %v4430 = vmul.f32 %v4219, %v4376
      %v4431 = vmul.f32 %v4221, %v4376
      %v4432 = vmul.f32 %v4223, %v4377
      %v4433 = vmul.f32 %v4225, %v4377
      %v4434 = vmul.f32 %v4227, %v4378
      %v4435 = vmul.f32 %v4229, %v4378
      %v4436 = vmul.f32 %v4231, %v4379
      %v4437 = vmul.f32 %v4233, %v4379
      %v4438 = vmul.f32 %v4235, %v4380
      %v4439 = vmul.f32 %v4237, %v4380
      %v4440 = vmul.f32 %v4239, %v4381
      %v4441 = vmul.f32 %v4241, %v4381
      %v4442 = vmul.f32 %v4243, %v4382
      %v4443 = vmul.f32 %v4245, %v4382
      %v4444 = vmul.f32 %v4247, %v4383
      %v4445 = vmul.f32 %v4249, %v4383
      %v4446 = vmul.f32 %v4251, %v4384
      %v4447 = vmul.f32 %v4253, %v4384
      %v4448 = vmul.f32 %v4255, %v4385
      %v4449 = vmul.f32 %v4257, %v4385
      %v4450 = vpack.c.bf16 %v4388, %v4386
      %v4451 = vpack.c.bf16 %v4389, %v4387
      %v4452 = vpack.c.bf16 %v4392, %v4390
      %v4453 = vpack.c.bf16 %v4393, %v4391
      %v4454 = vpack.c.bf16 %v4396, %v4394
      %v4455 = vpack.c.bf16 %v4397, %v4395
      %v4456 = vpack.c.bf16 %v4400, %v4398
      %v4457 = vpack.c.bf16 %v4401, %v4399
      %v4458 = vpack.c.bf16 %v4404, %v4402
      %v4459 = vpack.c.bf16 %v4405, %v4403
      %v4460 = vpack.c.bf16 %v4408, %v4406
      %v4461 = vpack.c.bf16 %v4409, %v4407
      %v4462 = vpack.c.bf16 %v4412, %v4410
      %v4463 = vpack.c.bf16 %v4413, %v4411
      %v4464 = vpack.c.bf16 %v4416, %v4414
      %v4465 = vpack.c.bf16 %v4417, %v4415
      %v4466 = vpack.c.bf16 %v4420, %v4418
      %v4467 = vpack.c.bf16 %v4421, %v4419
      %v4468 = vpack.c.bf16 %v4424, %v4422
      %v4469 = vpack.c.bf16 %v4425, %v4423
      %v4470 = vpack.c.bf16 %v4428, %v4426
      %v4471 = vpack.c.bf16 %v4429, %v4427
      %v4472 = vpack.c.bf16 %v4432, %v4430
      %v4473 = vpack.c.bf16 %v4433, %v4431
      %v4474 = vpack.c.bf16 %v4436, %v4434
      %v4475 = vpack.c.bf16 %v4437, %v4435
      %v4476 = vpack.c.bf16 %v4440, %v4438
      %v4477 = vpack.c.bf16 %v4441, %v4439
      %v4478 = vpack.c.bf16 %v4444, %v4442
      %v4479 = vpack.c.bf16 %v4445, %v4443
      %v4480 = vpack.c.bf16 %v4448, %v4446
      %v4481 = vpack.c.bf16 %v4449, %v4447
      %4482 = vrot.lane.b32.xlu0 %v1516, 64
      %v4483 = vpop.permute.xlu0 %4482
      %4484 = vrot.lane.b32.xlu0 %v1517, 64
      %v4485 = vpop.permute.xlu0 %4484
      %4486 = vrot.lane.b32.xlu0 %v1518, 64
      %v4487 = vpop.permute.xlu0 %4486
      %4488 = vrot.lane.b32.xlu0 %v1519, 64
      %v4489 = vpop.permute.xlu0 %4488
      %4490 = vrot.lane.b32.xlu0 %v1520, 64
      %v4491 = vpop.permute.xlu0 %4490
      %4492 = vrot.lane.b32.xlu0 %v1521, 64
      %v4493 = vpop.permute.xlu0 %4492
      %4494 = vrot.lane.b32.xlu0 %v1522, 64
      %v4495 = vpop.permute.xlu0 %4494
      %4496 = vrot.lane.b32.xlu0 %v1523, 64
      %v4497 = vpop.permute.xlu0 %4496
      %4498 = vrot.lane.b32.xlu0 %v1524, 64
      %v4499 = vpop.permute.xlu0 %4498
      %4500 = vrot.lane.b32.xlu0 %v1525, 64
      %v4501 = vpop.permute.xlu0 %4500
      %4502 = vrot.lane.b32.xlu0 %v1526, 64
      %v4503 = vpop.permute.xlu0 %4502
      %4504 = vrot.lane.b32.xlu0 %v1527, 64
      %v4505 = vpop.permute.xlu0 %4504
      %4506 = vrot.lane.b32.xlu0 %v1528, 64
      %v4507 = vpop.permute.xlu0 %4506
      %4508 = vrot.lane.b32.xlu0 %v1529, 64
      %v4509 = vpop.permute.xlu0 %4508
      %4510 = vrot.lane.b32.xlu0 %v1530, 64
      %v4511 = vpop.permute.xlu0 %4510
      %4512 = vrot.lane.b32.xlu0 %v1531, 64
      %v4513 = vpop.permute.xlu0 %4512
      %4530 = vmatprep.subr.bf16.mxu0 0
      %4531 = vmatpush1.bf16.msra.mxu0 %v4483
      %4532 = vmatprep.subr.bf16.mxu0 0
      %4533 = vmatpush1.bf16.msra.mxu0 %v4485
      %4534 = vmatprep.subr.bf16.mxu0 0
      %4535 = vmatpush1.bf16.msra.mxu0 %v4487
      %4536 = vmatprep.subr.bf16.mxu0 0
      %4537 = vmatpush1.bf16.msra.mxu0 %v4489
      %4538 = vmatprep.subr.bf16.mxu0 0
      %4539 = vmatpush1.bf16.msra.mxu0 %v4491
      %4540 = vmatprep.subr.bf16.mxu0 0
      %4541 = vmatpush1.bf16.msra.mxu0 %v4493
      %4542 = vmatprep.subr.bf16.mxu0 0
      %4543 = vmatpush1.bf16.msra.mxu0 %v4495
      %4544 = vmatprep.subr.bf16.mxu0 0
      %4545 = vmatpush1.bf16.msra.mxu0 %v4497
      %4546 = vmatprep.subr.bf16.mxu0 0
      %4547 = vmatpush1.bf16.msra.mxu0 %v4499
      %4548 = vmatprep.subr.bf16.mxu0 0
      %4549 = vmatpush1.bf16.msra.mxu0 %v4501
      %4550 = vmatprep.subr.bf16.mxu0 0
      %4551 = vmatpush1.bf16.msra.mxu0 %v4503
      %4552 = vmatprep.subr.bf16.mxu0 0
      %4553 = vmatpush1.bf16.msra.mxu0 %v4505
      %4554 = vmatprep.subr.bf16.mxu0 0
      %4555 = vmatpush1.bf16.msra.mxu0 %v4507
      %4556 = vmatprep.subr.bf16.mxu0 0
      %4557 = vmatpush1.bf16.msra.mxu0 %v4509
      %4558 = vmatprep.subr.bf16.mxu0 0
      %4559 = vmatpush1.bf16.msra.mxu0 %v4511
      %4560 = vmatprep.subr.bf16.mxu0 0
      %4561 = vmatpush1.bf16.msra.mxu0 %v4513
      %4562 = vmatprep.mubr.bf16.mxu0 %v4451
      %4563 = vmatmul.mubr.bf16.gmra.mrb[0].mxu0 %v4450
      %v4564 = vpop.f32.mrb[0].mxu0
      %v4565 = vadd.f32 0.0, %v4564
      %v4566 = vpop.f32.mrb[0].mxu0
      %v4567 = vpop.f32.mrb[0].mxu0
      %v4568 = vadd.f32 0.0, %v4567
      %v4569 = vpop.f32.mrb[0].mxu0
      %4570 = vmatprep.mubr.bf16.mxu0 %v4453
      %4571 = vmatmul.mubr.bf16.gmra.mrb[0].mxu0 %v4452
      %v4572 = vpop.f32.mrb[0].mxu0
      %v4573 = vadd.f32 0.0, %v4572
      %v4574 = vpop.f32.mrb[0].mxu0
      %v4575 = vpop.f32.mrb[0].mxu0
      %v4576 = vadd.f32 0.0, %v4575
      %v4577 = vpop.f32.mrb[0].mxu0
      %4578 = vmatprep.mubr.bf16.mxu0 %v4455
      %4579 = vmatmul.mubr.bf16.gmra.mrb[0].mxu0 %v4454
      %v4580 = vpop.f32.mrb[0].mxu0
      %v4581 = vadd.f32 0.0, %v4580
      %v4582 = vpop.f32.mrb[0].mxu0
      %v4583 = vpop.f32.mrb[0].mxu0
      %v4584 = vadd.f32 0.0, %v4583
      %v4585 = vpop.f32.mrb[0].mxu0
      %4586 = vmatprep.mubr.bf16.mxu0 %v4457
      %4587 = vmatmul.mubr.bf16.gmra.mrb[0].mxu0 %v4456
      %v4588 = vpop.f32.mrb[0].mxu0
      %v4589 = vadd.f32 0.0, %v4588
      %v4590 = vpop.f32.mrb[0].mxu0
      %v4591 = vpop.f32.mrb[0].mxu0
      %v4592 = vadd.f32 0.0, %v4591
      %v4593 = vpop.f32.mrb[0].mxu0
      %4594 = vmatprep.mubr.bf16.mxu0 %v4459
      %4595 = vmatmul.mubr.bf16.gmra.mrb[0].mxu0 %v4458
      %v4596 = vpop.f32.mrb[0].mxu0
      %v4597 = vadd.f32 0.0, %v4596
      %v4598 = vpop.f32.mrb[0].mxu0
      %v4599 = vpop.f32.mrb[0].mxu0
      %v4600 = vadd.f32 0.0, %v4599
      %v4601 = vpop.f32.mrb[0].mxu0
      %4602 = vmatprep.mubr.bf16.mxu0 %v4461
      %4603 = vmatmul.mubr.bf16.gmra.mrb[0].mxu0 %v4460
      %v4604 = vpop.f32.mrb[0].mxu0
      %v4605 = vadd.f32 0.0, %v4604
      %v4606 = vpop.f32.mrb[0].mxu0
      %v4607 = vpop.f32.mrb[0].mxu0
      %v4608 = vadd.f32 0.0, %v4607
      %v4609 = vpop.f32.mrb[0].mxu0
      %4610 = vmatprep.mubr.bf16.mxu0 %v4463
      %4611 = vmatmul.mubr.bf16.gmra.mrb[0].mxu0 %v4462
      %v4612 = vpop.f32.mrb[0].mxu0
      %v4613 = vadd.f32 0.0, %v4612
      %v4614 = vpop.f32.mrb[0].mxu0
      %v4615 = vpop.f32.mrb[0].mxu0
      %v4616 = vadd.f32 0.0, %v4615
      %v4617 = vpop.f32.mrb[0].mxu0
      %4618 = vmatprep.mubr.bf16.mxu0 %v4465
      %4619 = vmatmul.mubr.bf16.gmra.mrb[0].mxu0 %v4464
      %v4620 = vpop.f32.mrb[0].mxu0
      %v4621 = vadd.f32 0.0, %v4620
      %v4622 = vpop.f32.mrb[0].mxu0
      %v4623 = vpop.f32.mrb[0].mxu0
      %v4624 = vadd.f32 0.0, %v4623
      %v4625 = vpop.f32.mrb[0].mxu0
      %4626 = vmatprep.mubr.bf16.mxu0 %v4467
      %4627 = vmatmul.mubr.bf16.gmra.mrb[0].mxu0 %v4466
      %v4628 = vpop.f32.mrb[0].mxu0
      %v4629 = vadd.f32 0.0, %v4628
      %v4630 = vpop.f32.mrb[0].mxu0
      %v4631 = vpop.f32.mrb[0].mxu0
      %v4632 = vadd.f32 0.0, %v4631
      %v4633 = vpop.f32.mrb[0].mxu0
      %4634 = vmatprep.mubr.bf16.mxu0 %v4469
      %4635 = vmatmul.mubr.bf16.gmra.mrb[0].mxu0 %v4468
      %v4636 = vpop.f32.mrb[0].mxu0
      %v4637 = vadd.f32 0.0, %v4636
      %v4638 = vpop.f32.mrb[0].mxu0
      %v4639 = vpop.f32.mrb[0].mxu0
      %v4640 = vadd.f32 0.0, %v4639
      %v4641 = vpop.f32.mrb[0].mxu0
      %4642 = vmatprep.mubr.bf16.mxu0 %v4471
      %4643 = vmatmul.mubr.bf16.gmra.mrb[0].mxu0 %v4470
      %v4644 = vpop.f32.mrb[0].mxu0
      %v4645 = vadd.f32 0.0, %v4644
      %v4646 = vpop.f32.mrb[0].mxu0
      %v4647 = vpop.f32.mrb[0].mxu0
      %v4648 = vadd.f32 0.0, %v4647
      %v4649 = vpop.f32.mrb[0].mxu0
      %4650 = vmatprep.mubr.bf16.mxu0 %v4473
      %4651 = vmatmul.mubr.bf16.gmra.mrb[0].mxu0 %v4472
      %v4652 = vpop.f32.mrb[0].mxu0
      %v4653 = vadd.f32 0.0, %v4652
      %v4654 = vpop.f32.mrb[0].mxu0
      %v4655 = vpop.f32.mrb[0].mxu0
      %v4656 = vadd.f32 0.0, %v4655
      %v4657 = vpop.f32.mrb[0].mxu0
      %4658 = vmatprep.mubr.bf16.mxu0 %v4475
      %4659 = vmatmul.mubr.bf16.gmra.mrb[0].mxu0 %v4474
      %v4660 = vpop.f32.mrb[0].mxu0
      %v4661 = vadd.f32 0.0, %v4660
      %v4662 = vpop.f32.mrb[0].mxu0
      %v4663 = vpop.f32.mrb[0].mxu0
      %v4664 = vadd.f32 0.0, %v4663
      %v4665 = vpop.f32.mrb[0].mxu0
      %4666 = vmatprep.mubr.bf16.mxu0 %v4477
      %4667 = vmatmul.mubr.bf16.gmra.mrb[0].mxu0 %v4476
      %v4668 = vpop.f32.mrb[0].mxu0
      %v4669 = vadd.f32 0.0, %v4668
      %v4670 = vpop.f32.mrb[0].mxu0
      %v4671 = vpop.f32.mrb[0].mxu0
      %v4672 = vadd.f32 0.0, %v4671
      %v4673 = vpop.f32.mrb[0].mxu0
      %4674 = vmatprep.mubr.bf16.mxu0 %v4479
      %4675 = vmatmul.mubr.bf16.gmra.mrb[0].mxu0 %v4478
      %v4676 = vpop.f32.mrb[0].mxu0
      %v4677 = vadd.f32 0.0, %v4676
      %v4678 = vpop.f32.mrb[0].mxu0
      %v4679 = vpop.f32.mrb[0].mxu0
      %v4680 = vadd.f32 0.0, %v4679
      %v4681 = vpop.f32.mrb[0].mxu0
      %4682 = vmatprep.mubr.bf16.mxu0 %v4481
      %4683 = vmatmul.mubr.bf16.gmra.mrb[0].mxu0 %v4480
      %v4684 = vpop.f32.mrb[0].mxu0
      %v4685 = vadd.f32 0.0, %v4684
      %v4686 = vpop.f32.mrb[0].mxu0
      %v4687 = vpop.f32.mrb[0].mxu0
      %v4688 = vadd.f32 0.0, %v4687
      %v4689 = vpop.f32.mrb[0].mxu0
      %4690 = vdwg.mxu0
      %4691 = vrot.lane.b32.xlu0 %v1484, 32
      %v4692 = vpop.permute.xlu0 %4691
      %4693 = vrot.lane.b32.xlu0 %v1485, 32
      %v4694 = vpop.permute.xlu0 %4693
      %4695 = vrot.lane.b32.xlu0 %v1486, 32
      %v4696 = vpop.permute.xlu0 %4695
      %4697 = vrot.lane.b32.xlu0 %v1487, 32
      %v4698 = vpop.permute.xlu0 %4697
      %4699 = vrot.lane.b32.xlu0 %v1488, 32
      %v4700 = vpop.permute.xlu0 %4699
      %4701 = vrot.lane.b32.xlu0 %v1489, 32
      %v4702 = vpop.permute.xlu0 %4701
      %4703 = vrot.lane.b32.xlu0 %v1490, 32
      %v4704 = vpop.permute.xlu0 %4703
      %4705 = vrot.lane.b32.xlu0 %v1491, 32
      %v4706 = vpop.permute.xlu0 %4705
      %4707 = vrot.lane.b32.xlu0 %v1492, 32
      %v4708 = vpop.permute.xlu0 %4707
      %4709 = vrot.lane.b32.xlu0 %v1493, 32
      %v4710 = vpop.permute.xlu0 %4709
      %4711 = vrot.lane.b32.xlu0 %v1494, 32
      %v4712 = vpop.permute.xlu0 %4711
      %4713 = vrot.lane.b32.xlu0 %v1495, 32
      %v4714 = vpop.permute.xlu0 %4713
      %4715 = vrot.lane.b32.xlu0 %v1496, 32
      %v4716 = vpop.permute.xlu0 %4715
      %4717 = vrot.lane.b32.xlu0 %v1497, 32
      %v4718 = vpop.permute.xlu0 %4717
      %4719 = vrot.lane.b32.xlu0 %v1498, 32
      %v4720 = vpop.permute.xlu0 %4719
      %4721 = vrot.lane.b32.xlu0 %v1499, 32
      %v4722 = vpop.permute.xlu0 %4721
      %4723 = vrot.lane.b32.xlu0 %v1500, 32
      %v4724 = vpop.permute.xlu0 %4723
      %4725 = vrot.lane.b32.xlu0 %v1501, 32
      %v4726 = vpop.permute.xlu0 %4725
      %4727 = vrot.lane.b32.xlu0 %v1502, 32
      %v4728 = vpop.permute.xlu0 %4727
      %4729 = vrot.lane.b32.xlu0 %v1503, 32
      %v4730 = vpop.permute.xlu0 %4729
      %4731 = vrot.lane.b32.xlu0 %v1504, 32
      %v4732 = vpop.permute.xlu0 %4731
      %4733 = vrot.lane.b32.xlu0 %v1505, 32
      %v4734 = vpop.permute.xlu0 %4733
      %4735 = vrot.lane.b32.xlu0 %v1506, 32
      %v4736 = vpop.permute.xlu0 %4735
      %4737 = vrot.lane.b32.xlu0 %v1507, 32
      %v4738 = vpop.permute.xlu0 %4737
      %4739 = vrot.lane.b32.xlu0 %v1508, 32
      %v4740 = vpop.permute.xlu0 %4739
      %4741 = vrot.lane.b32.xlu0 %v1509, 32
      %v4742 = vpop.permute.xlu0 %4741
      %4743 = vrot.lane.b32.xlu0 %v1510, 32
      %v4744 = vpop.permute.xlu0 %4743
      %4745 = vrot.lane.b32.xlu0 %v1511, 32
      %v4746 = vpop.permute.xlu0 %4745
      %4747 = vrot.lane.b32.xlu0 %v1512, 32
      %v4748 = vpop.permute.xlu0 %4747
      %4749 = vrot.lane.b32.xlu0 %v1513, 32
      %v4750 = vpop.permute.xlu0 %4749
      %4751 = vrot.lane.b32.xlu0 %v1514, 32
      %v4752 = vpop.permute.xlu0 %4751
      %4753 = vrot.lane.b32.xlu0 %v1515, 32
      %v4754 = vpop.permute.xlu0 %4753
      %v4756 = vsel %vm1532, %v4692, 0
      %v4759 = vsel %vm1532, %v4694, 0
      %v4762 = vsel %vm1532, %v4696, 0
      %v4765 = vsel %vm1532, %v4698, 0
      %v4768 = vsel %vm1532, %v4700, 0
      %v4771 = vsel %vm1532, %v4702, 0
      %v4774 = vsel %vm1532, %v4704, 0
      %v4777 = vsel %vm1532, %v4706, 0
      %v4780 = vsel %vm1532, %v4708, 0
      %v4783 = vsel %vm1532, %v4710, 0
      %v4786 = vsel %vm1532, %v4712, 0
      %v4789 = vsel %vm1532, %v4714, 0
      %v4792 = vsel %vm1532, %v4716, 0
      %v4795 = vsel %vm1532, %v4718, 0
      %v4798 = vsel %vm1532, %v4720, 0
      %v4801 = vsel %vm1532, %v4722, 0
      %v4804 = vsel %vm1532, %v4724, 0
      %v4807 = vsel %vm1532, %v4726, 0
      %v4810 = vsel %vm1532, %v4728, 0
      %v4813 = vsel %vm1532, %v4730, 0
      %v4816 = vsel %vm1532, %v4732, 0
      %v4819 = vsel %vm1532, %v4734, 0
      %v4822 = vsel %vm1532, %v4736, 0
      %v4825 = vsel %vm1532, %v4738, 0
      %v4828 = vsel %vm1532, %v4740, 0
      %v4831 = vsel %vm1532, %v4742, 0
      %v4834 = vsel %vm1532, %v4744, 0
      %v4837 = vsel %vm1532, %v4746, 0
      %v4840 = vsel %vm1532, %v4748, 0
      %v4843 = vsel %vm1532, %v4750, 0
      %v4846 = vsel %vm1532, %v4752, 0
      %v4849 = vsel %vm1532, %v4754, 0
      %4851 = vmatprep.subr.bf16.mxu0 0
      %4852 = vmatpush1.bf16.xpose.msra.mxu0 %v4804
      %4853 = vmatprep.subr.bf16.mxu0 0
      %4854 = vmatpush1.bf16.xpose.msra.mxu0 %v4807
      %4855 = vmatprep.subr.bf16.mxu0 0
      %4856 = vmatpush1.bf16.xpose.msra.mxu0 %v4810
      %4857 = vmatprep.subr.bf16.mxu0 0
      %4858 = vmatpush1.bf16.xpose.msra.mxu0 %v4813
      %4859 = vmatprep.subr.bf16.mxu0 0
      %4860 = vmatpush1.bf16.xpose.msra.mxu0 %v4816
      %4861 = vmatprep.subr.bf16.mxu0 0
      %4862 = vmatpush1.bf16.xpose.msra.mxu0 %v4819
      %4863 = vmatprep.subr.bf16.mxu0 0
      %4864 = vmatpush1.bf16.xpose.msra.mxu0 %v4822
      %4865 = vmatprep.subr.bf16.mxu0 0
      %4866 = vmatpush1.bf16.xpose.msra.mxu0 %v4825
      %4867 = vmatprep.subr.bf16.mxu0 0
      %4868 = vmatpush1.bf16.xpose.msra.mxu0 %v4828
      %4869 = vmatprep.subr.bf16.mxu0 0
      %4870 = vmatpush1.bf16.xpose.msra.mxu0 %v4831
      %4871 = vmatprep.subr.bf16.mxu0 0
      %4872 = vmatpush1.bf16.xpose.msra.mxu0 %v4834
      %4873 = vmatprep.subr.bf16.mxu0 0
      %4874 = vmatpush1.bf16.xpose.msra.mxu0 %v4837
      %4875 = vmatprep.subr.bf16.mxu0 0
      %4876 = vmatpush1.bf16.xpose.msra.mxu0 %v4840
      %4877 = vmatprep.subr.bf16.mxu0 0
      %4878 = vmatpush1.bf16.xpose.msra.mxu0 %v4843
      %4879 = vmatprep.subr.bf16.mxu0 0
      %4880 = vmatpush1.bf16.xpose.msra.mxu0 %v4846
      %4881 = vmatprep.subr.bf16.mxu0 0
      %4882 = vmatpush1.bf16.xpose.msra.mxu0 %v4849
      %4883 = vmatprep.mubr.bf16.mxu0 0
      %4884 = vmatmul.mubr.bf16.gmra.mrb[0].mxu0 %v4756
      %v4885 = vpop.f32.mrb[0].mxu0
      %v4886 = vadd.f32 0.0, %v4885
      %v4887 = vpop.f32.mrb[0].mxu0
      %v4888 = vadd.f32 0.0, %v4887
      %v4889 = vpop.f32.mrb[0].mxu0
      %v4890 = vadd.f32 0.0, %v4889
      %v4891 = vpop.f32.mrb[0].mxu0
      %v4892 = vadd.f32 0.0, %v4891
      %4893 = vmatprep.mubr.bf16.mxu0 0
      %4894 = vmatmul.mubr.bf16.gmra.mrb[0].mxu0 %v4759
      %v4895 = vpop.f32.mrb[0].mxu0
      %v4896 = vadd.f32 0.0, %v4895
      %v4897 = vpop.f32.mrb[0].mxu0
      %v4898 = vadd.f32 0.0, %v4897
      %v4899 = vpop.f32.mrb[0].mxu0
      %v4900 = vadd.f32 0.0, %v4899
      %v4901 = vpop.f32.mrb[0].mxu0
      %v4902 = vadd.f32 0.0, %v4901
      %4903 = vmatprep.mubr.bf16.mxu0 0
      %4904 = vmatmul.mubr.bf16.gmra.mrb[0].mxu0 %v4762
      %v4905 = vpop.f32.mrb[0].mxu0
      %v4906 = vadd.f32 0.0, %v4905
      %v4907 = vpop.f32.mrb[0].mxu0
      %v4908 = vadd.f32 0.0, %v4907
      %v4909 = vpop.f32.mrb[0].mxu0
      %v4910 = vadd.f32 0.0, %v4909
      %v4911 = vpop.f32.mrb[0].mxu0
      %v4912 = vadd.f32 0.0, %v4911
      %4913 = vmatprep.mubr.bf16.mxu0 0
      %4914 = vmatmul.mubr.bf16.gmra.mrb[0].mxu0 %v4765
      %v4915 = vpop.f32.mrb[0].mxu0
      %v4916 = vadd.f32 0.0, %v4915
      %v4917 = vpop.f32.mrb[0].mxu0
      %v4918 = vadd.f32 0.0, %v4917
      %v4919 = vpop.f32.mrb[0].mxu0
      %v4920 = vadd.f32 0.0, %v4919
      %v4921 = vpop.f32.mrb[0].mxu0
      %v4922 = vadd.f32 0.0, %v4921
      %4923 = vmatprep.mubr.bf16.mxu0 0
      %4924 = vmatmul.mubr.bf16.gmra.mrb[0].mxu0 %v4768
      %v4925 = vpop.f32.mrb[0].mxu0
      %v4926 = vadd.f32 0.0, %v4925
      %v4927 = vpop.f32.mrb[0].mxu0
      %v4928 = vadd.f32 0.0, %v4927
      %v4929 = vpop.f32.mrb[0].mxu0
      %v4930 = vadd.f32 0.0, %v4929
      %v4931 = vpop.f32.mrb[0].mxu0
      %v4932 = vadd.f32 0.0, %v4931
      %4933 = vmatprep.mubr.bf16.mxu0 0
      %4934 = vmatmul.mubr.bf16.gmra.mrb[0].mxu0 %v4771
      %v4935 = vpop.f32.mrb[0].mxu0
      %v4936 = vadd.f32 0.0, %v4935
      %v4937 = vpop.f32.mrb[0].mxu0
      %v4938 = vadd.f32 0.0, %v4937
      %v4939 = vpop.f32.mrb[0].mxu0
      %v4940 = vadd.f32 0.0, %v4939
      %v4941 = vpop.f32.mrb[0].mxu0
      %v4942 = vadd.f32 0.0, %v4941
      %4943 = vmatprep.mubr.bf16.mxu0 0
      %4944 = vmatmul.mubr.bf16.gmra.mrb[0].mxu0 %v4774
      %v4945 = vpop.f32.mrb[0].mxu0
      %v4946 = vadd.f32 0.0, %v4945
      %v4947 = vpop.f32.mrb[0].mxu0
      %v4948 = vadd.f32 0.0, %v4947
      %v4949 = vpop.f32.mrb[0].mxu0
      %v4950 = vadd.f32 0.0, %v4949
      %v4951 = vpop.f32.mrb[0].mxu0
      %v4952 = vadd.f32 0.0, %v4951
      %4953 = vmatprep.mubr.bf16.mxu0 0
      %4954 = vmatmul.mubr.bf16.gmra.mrb[0].mxu0 %v4777
      %v4955 = vpop.f32.mrb[0].mxu0
      %v4956 = vadd.f32 0.0, %v4955
      %v4957 = vpop.f32.mrb[0].mxu0
      %v4958 = vadd.f32 0.0, %v4957
      %v4959 = vpop.f32.mrb[0].mxu0
      %v4960 = vadd.f32 0.0, %v4959
      %v4961 = vpop.f32.mrb[0].mxu0
      %v4962 = vadd.f32 0.0, %v4961
      %4963 = vmatprep.mubr.bf16.mxu0 0
      %4964 = vmatmul.mubr.bf16.gmra.mrb[0].mxu0 %v4780
      %v4965 = vpop.f32.mrb[0].mxu0
      %v4966 = vadd.f32 0.0, %v4965
      %v4967 = vpop.f32.mrb[0].mxu0
      %v4968 = vadd.f32 0.0, %v4967
      %v4969 = vpop.f32.mrb[0].mxu0
      %v4970 = vadd.f32 0.0, %v4969
      %v4971 = vpop.f32.mrb[0].mxu0
      %v4972 = vadd.f32 0.0, %v4971
      %4973 = vmatprep.mubr.bf16.mxu0 0
      %4974 = vmatmul.mubr.bf16.gmra.mrb[0].mxu0 %v4783
      %v4975 = vpop.f32.mrb[0].mxu0
      %v4976 = vadd.f32 0.0, %v4975
      %v4977 = vpop.f32.mrb[0].mxu0
      %v4978 = vadd.f32 0.0, %v4977
      %v4979 = vpop.f32.mrb[0].mxu0
      %v4980 = vadd.f32 0.0, %v4979
      %v4981 = vpop.f32.mrb[0].mxu0
      %v4982 = vadd.f32 0.0, %v4981
      %4983 = vmatprep.mubr.bf16.mxu0 0
      %4984 = vmatmul.mubr.bf16.gmra.mrb[0].mxu0 %v4786
      %v4985 = vpop.f32.mrb[0].mxu0
      %v4986 = vadd.f32 0.0, %v4985
      %v4987 = vpop.f32.mrb[0].mxu0
      %v4988 = vadd.f32 0.0, %v4987
      %v4989 = vpop.f32.mrb[0].mxu0
      %v4990 = vadd.f32 0.0, %v4989
      %v4991 = vpop.f32.mrb[0].mxu0
      %v4992 = vadd.f32 0.0, %v4991
      %4993 = vmatprep.mubr.bf16.mxu0 0
      %4994 = vmatmul.mubr.bf16.gmra.mrb[0].mxu0 %v4789
      %v4995 = vpop.f32.mrb[0].mxu0
      %v4996 = vadd.f32 0.0, %v4995
      %v4997 = vpop.f32.mrb[0].mxu0
      %v4998 = vadd.f32 0.0, %v4997
      %v4999 = vpop.f32.mrb[0].mxu0
      %v5000 = vadd.f32 0.0, %v4999
      %v5001 = vpop.f32.mrb[0].mxu0
      %v5002 = vadd.f32 0.0, %v5001
      %5003 = vmatprep.mubr.bf16.mxu0 0
      %5004 = vmatmul.mubr.bf16.gmra.mrb[0].mxu0 %v4792
      %v5005 = vpop.f32.mrb[0].mxu0
      %v5006 = vadd.f32 0.0, %v5005
      %v5007 = vpop.f32.mrb[0].mxu0
      %v5008 = vadd.f32 0.0, %v5007
      %v5009 = vpop.f32.mrb[0].mxu0
      %v5010 = vadd.f32 0.0, %v5009
      %v5011 = vpop.f32.mrb[0].mxu0
      %v5012 = vadd.f32 0.0, %v5011
      %5013 = vmatprep.mubr.bf16.mxu0 0
      %5014 = vmatmul.mubr.bf16.gmra.mrb[0].mxu0 %v4795
      %v5015 = vpop.f32.mrb[0].mxu0
      %v5016 = vadd.f32 0.0, %v5015
      %v5017 = vpop.f32.mrb[0].mxu0
      %v5018 = vadd.f32 0.0, %v5017
      %v5019 = vpop.f32.mrb[0].mxu0
      %v5020 = vadd.f32 0.0, %v5019
      %v5021 = vpop.f32.mrb[0].mxu0
      %v5022 = vadd.f32 0.0, %v5021
      %5023 = vmatprep.mubr.bf16.mxu0 0
      %5024 = vmatmul.mubr.bf16.gmra.mrb[0].mxu0 %v4798
      %v5025 = vpop.f32.mrb[0].mxu0
      %v5026 = vadd.f32 0.0, %v5025
      %v5027 = vpop.f32.mrb[0].mxu0
      %v5028 = vadd.f32 0.0, %v5027
      %v5029 = vpop.f32.mrb[0].mxu0
      %v5030 = vadd.f32 0.0, %v5029
      %v5031 = vpop.f32.mrb[0].mxu0
      %v5032 = vadd.f32 0.0, %v5031
      %5033 = vmatprep.mubr.bf16.mxu0 0
      %5034 = vmatmul.mubr.bf16.gmra.mrb[0].mxu0 %v4801
      %v5035 = vpop.f32.mrb[0].mxu0
      %v5036 = vadd.f32 0.0, %v5035
      %v5037 = vpop.f32.mrb[0].mxu0
      %v5038 = vadd.f32 0.0, %v5037
      %v5039 = vpop.f32.mrb[0].mxu0
      %v5040 = vadd.f32 0.0, %v5039
      %v5041 = vpop.f32.mrb[0].mxu0
      %v5042 = vadd.f32 0.0, %v5041
      %5043 = vdwg.mxu0
      %v5044 = vmax.f32 %v4886, %v4888
      %5045 = vmax.xlane.f32.xlu0 %v5044
      %v5046 = vpop.xlane.xlu0 %5045
      %v5047 = vmax.f32 %v4890, %v4892
      %5048 = vmax.xlane.f32.xlu0 %v5047
      %v5049 = vpop.xlane.xlu0 %5048
      %v5050 = vmax.f32 %v4896, %v4898
      %5051 = vmax.xlane.f32.xlu0 %v5050
      %v5052 = vpop.xlane.xlu0 %5051
      %v5053 = vmax.f32 %v4900, %v4902
      %5054 = vmax.xlane.f32.xlu0 %v5053
      %v5055 = vpop.xlane.xlu0 %5054
      %v5056 = vmax.f32 %v4906, %v4908
      %5057 = vmax.xlane.f32.xlu0 %v5056
      %v5058 = vpop.xlane.xlu0 %5057
      %v5059 = vmax.f32 %v4910, %v4912
      %5060 = vmax.xlane.f32.xlu0 %v5059
      %v5061 = vpop.xlane.xlu0 %5060
      %v5062 = vmax.f32 %v4916, %v4918
      %5063 = vmax.xlane.f32.xlu0 %v5062
      %v5064 = vpop.xlane.xlu0 %5063
      %v5065 = vmax.f32 %v4920, %v4922
      %5066 = vmax.xlane.f32.xlu0 %v5065
      %v5067 = vpop.xlane.xlu0 %5066
      %v5068 = vmax.f32 %v4926, %v4928
      %5069 = vmax.xlane.f32.xlu0 %v5068
      %v5070 = vpop.xlane.xlu0 %5069
      %v5071 = vmax.f32 %v4930, %v4932
      %5072 = vmax.xlane.f32.xlu0 %v5071
      %v5073 = vpop.xlane.xlu0 %5072
      %v5074 = vmax.f32 %v4936, %v4938
      %5075 = vmax.xlane.f32.xlu0 %v5074
      %v5076 = vpop.xlane.xlu0 %5075
      %v5077 = vmax.f32 %v4940, %v4942
      %5078 = vmax.xlane.f32.xlu0 %v5077
      %v5079 = vpop.xlane.xlu0 %5078
      %v5080 = vmax.f32 %v4946, %v4948
      %5081 = vmax.xlane.f32.xlu0 %v5080
      %v5082 = vpop.xlane.xlu0 %5081
      %v5083 = vmax.f32 %v4950, %v4952
      %5084 = vmax.xlane.f32.xlu0 %v5083
      %v5085 = vpop.xlane.xlu0 %5084
      %v5086 = vmax.f32 %v4956, %v4958
      %5087 = vmax.xlane.f32.xlu0 %v5086
      %v5088 = vpop.xlane.xlu0 %5087
      %v5089 = vmax.f32 %v4960, %v4962
      %5090 = vmax.xlane.f32.xlu0 %v5089
      %v5091 = vpop.xlane.xlu0 %5090
      %v5092 = vmax.f32 %v4966, %v4968
      %5093 = vmax.xlane.f32.xlu0 %v5092
      %v5094 = vpop.xlane.xlu0 %5093
      %v5095 = vmax.f32 %v4970, %v4972
      %5096 = vmax.xlane.f32.xlu0 %v5095
      %v5097 = vpop.xlane.xlu0 %5096
      %v5098 = vmax.f32 %v4976, %v4978
      %5099 = vmax.xlane.f32.xlu0 %v5098
      %v5100 = vpop.xlane.xlu0 %5099
      %v5101 = vmax.f32 %v4980, %v4982
      %5102 = vmax.xlane.f32.xlu0 %v5101
      %v5103 = vpop.xlane.xlu0 %5102
      %v5104 = vmax.f32 %v4986, %v4988
      %5105 = vmax.xlane.f32.xlu0 %v5104
      %v5106 = vpop.xlane.xlu0 %5105
      %v5107 = vmax.f32 %v4990, %v4992
      %5108 = vmax.xlane.f32.xlu0 %v5107
      %v5109 = vpop.xlane.xlu0 %5108
      %v5110 = vmax.f32 %v4996, %v4998
      %5111 = vmax.xlane.f32.xlu0 %v5110
      %v5112 = vpop.xlane.xlu0 %5111
      %v5113 = vmax.f32 %v5000, %v5002
      %5114 = vmax.xlane.f32.xlu0 %v5113
      %v5115 = vpop.xlane.xlu0 %5114
      %v5116 = vmax.f32 %v5006, %v5008
      %5117 = vmax.xlane.f32.xlu0 %v5116
      %v5118 = vpop.xlane.xlu0 %5117
      %v5119 = vmax.f32 %v5010, %v5012
      %5120 = vmax.xlane.f32.xlu0 %v5119
      %v5121 = vpop.xlane.xlu0 %5120
      %v5122 = vmax.f32 %v5016, %v5018
      %5123 = vmax.xlane.f32.xlu0 %v5122
      %v5124 = vpop.xlane.xlu0 %5123
      %v5125 = vmax.f32 %v5020, %v5022
      %5126 = vmax.xlane.f32.xlu0 %v5125
      %v5127 = vpop.xlane.xlu0 %5126
      %v5128 = vmax.f32 %v5026, %v5028
      %5129 = vmax.xlane.f32.xlu0 %v5128
      %v5130 = vpop.xlane.xlu0 %5129
      %v5131 = vmax.f32 %v5030, %v5032
      %5132 = vmax.xlane.f32.xlu0 %v5131
      %v5133 = vpop.xlane.xlu0 %5132
      %v5134 = vmax.f32 %v5036, %v5038
      %5135 = vmax.xlane.f32.xlu0 %v5134
      %v5136 = vpop.xlane.xlu0 %5135
      %v5137 = vmax.f32 %v5040, %v5042
      %5138 = vmax.xlane.f32.xlu0 %v5137
      %v5139 = vpop.xlane.xlu0 %5138
      %v5140 = vsub.f32 %v4886, %v5046
      %v5141 = vsub.f32 %v4888, %v5046
      %v5142 = vsub.f32 %v4890, %v5049
      %v5143 = vsub.f32 %v4892, %v5049
      %v5144 = vsub.f32 %v4896, %v5052
      %v5145 = vsub.f32 %v4898, %v5052
      %v5146 = vsub.f32 %v4900, %v5055
      %v5147 = vsub.f32 %v4902, %v5055
      %v5148 = vsub.f32 %v4906, %v5058
      %v5149 = vsub.f32 %v4908, %v5058
      %v5150 = vsub.f32 %v4910, %v5061
      %v5151 = vsub.f32 %v4912, %v5061
      %v5152 = vsub.f32 %v4916, %v5064
      %v5153 = vsub.f32 %v4918, %v5064
      %v5154 = vsub.f32 %v4920, %v5067
      %v5155 = vsub.f32 %v4922, %v5067
      %v5156 = vsub.f32 %v4926, %v5070
      %v5157 = vsub.f32 %v4928, %v5070
      %v5158 = vsub.f32 %v4930, %v5073
      %v5159 = vsub.f32 %v4932, %v5073
      %v5160 = vsub.f32 %v4936, %v5076
      %v5161 = vsub.f32 %v4938, %v5076
      %v5162 = vsub.f32 %v4940, %v5079
      %v5163 = vsub.f32 %v4942, %v5079
      %v5164 = vsub.f32 %v4946, %v5082
      %v5165 = vsub.f32 %v4948, %v5082
      %v5166 = vsub.f32 %v4950, %v5085
      %v5167 = vsub.f32 %v4952, %v5085
      %v5168 = vsub.f32 %v4956, %v5088
      %v5169 = vsub.f32 %v4958, %v5088
      %v5170 = vsub.f32 %v4960, %v5091
      %v5171 = vsub.f32 %v4962, %v5091
      %v5172 = vsub.f32 %v4966, %v5094
      %v5173 = vsub.f32 %v4968, %v5094
      %v5174 = vsub.f32 %v4970, %v5097
      %v5175 = vsub.f32 %v4972, %v5097
      %v5176 = vsub.f32 %v4976, %v5100
      %v5177 = vsub.f32 %v4978, %v5100
      %v5178 = vsub.f32 %v4980, %v5103
      %v5179 = vsub.f32 %v4982, %v5103
      %v5180 = vsub.f32 %v4986, %v5106
      %v5181 = vsub.f32 %v4988, %v5106
      %v5182 = vsub.f32 %v4990, %v5109
      %v5183 = vsub.f32 %v4992, %v5109
      %v5184 = vsub.f32 %v4996, %v5112
      %v5185 = vsub.f32 %v4998, %v5112
      %v5186 = vsub.f32 %v5000, %v5115
      %v5187 = vsub.f32 %v5002, %v5115
      %v5188 = vsub.f32 %v5006, %v5118
      %v5189 = vsub.f32 %v5008, %v5118
      %v5190 = vsub.f32 %v5010, %v5121
      %v5191 = vsub.f32 %v5012, %v5121
      %v5192 = vsub.f32 %v5016, %v5124
      %v5193 = vsub.f32 %v5018, %v5124
      %v5194 = vsub.f32 %v5020, %v5127
      %v5195 = vsub.f32 %v5022, %v5127
      %v5196 = vsub.f32 %v5026, %v5130
      %v5197 = vsub.f32 %v5028, %v5130
      %v5198 = vsub.f32 %v5030, %v5133
      %v5199 = vsub.f32 %v5032, %v5133
      %v5200 = vsub.f32 %v5036, %v5136
      %v5201 = vsub.f32 %v5038, %v5136
      %v5202 = vsub.f32 %v5040, %v5139
      %v5203 = vsub.f32 %v5042, %v5139
      %v5204 = vmul.f32 %v5140, 1.442695
      %v5205 = vpow.pop %v5204
      %v5206 = vmul.f32 %v5141, 1.442695
      %v5207 = vpow.pop %v5206
      %v5208 = vmul.f32 %v5142, 1.442695
      %v5209 = vpow.pop %v5208
      %v5210 = vmul.f32 %v5143, 1.442695
      %v5211 = vpow.pop %v5210
      %v5212 = vmul.f32 %v5144, 1.442695
      %v5213 = vpow.pop %v5212
      %v5214 = vmul.f32 %v5145, 1.442695
      %v5215 = vpow.pop %v5214
      %v5216 = vmul.f32 %v5146, 1.442695
      %v5217 = vpow.pop %v5216
      %v5218 = vmul.f32 %v5147, 1.442695
      %v5219 = vpow.pop %v5218
      %v5220 = vmul.f32 %v5148, 1.442695
      %v5221 = vpow.pop %v5220
      %v5222 = vmul.f32 %v5149, 1.442695
      %v5223 = vpow.pop %v5222
      %v5224 = vmul.f32 %v5150, 1.442695
      %v5225 = vpow.pop %v5224
      %v5226 = vmul.f32 %v5151, 1.442695
      %v5227 = vpow.pop %v5226
      %v5228 = vmul.f32 %v5152, 1.442695
      %v5229 = vpow.pop %v5228
      %v5230 = vmul.f32 %v5153, 1.442695
      %v5231 = vpow.pop %v5230
      %v5232 = vmul.f32 %v5154, 1.442695
      %v5233 = vpow.pop %v5232
      %v5234 = vmul.f32 %v5155, 1.442695
      %v5235 = vpow.pop %v5234
      %v5236 = vmul.f32 %v5156, 1.442695
      %v5237 = vpow.pop %v5236
      %v5238 = vmul.f32 %v5157, 1.442695
      %v5239 = vpow.pop %v5238
      %v5240 = vmul.f32 %v5158, 1.442695
      %v5241 = vpow.pop %v5240
      %v5242 = vmul.f32 %v5159, 1.442695
      %v5243 = vpow.pop %v5242
      %v5244 = vmul.f32 %v5160, 1.442695
      %v5245 = vpow.pop %v5244
      %v5246 = vmul.f32 %v5161, 1.442695
      %v5247 = vpow.pop %v5246
      %v5248 = vmul.f32 %v5162, 1.442695
      %v5249 = vpow.pop %v5248
      %v5250 = vmul.f32 %v5163, 1.442695
      %v5251 = vpow.pop %v5250
      %v5252 = vmul.f32 %v5164, 1.442695
      %v5253 = vpow.pop %v5252
      %v5254 = vmul.f32 %v5165, 1.442695
      %v5255 = vpow.pop %v5254
      %v5256 = vmul.f32 %v5166, 1.442695
      %v5257 = vpow.pop %v5256
      %v5258 = vmul.f32 %v5167, 1.442695
      %v5259 = vpow.pop %v5258
      %v5260 = vmul.f32 %v5168, 1.442695
      %v5261 = vpow.pop %v5260
      %v5262 = vmul.f32 %v5169, 1.442695
      %v5263 = vpow.pop %v5262
      %v5264 = vmul.f32 %v5170, 1.442695
      %v5265 = vpow.pop %v5264
      %v5266 = vmul.f32 %v5171, 1.442695
      %v5267 = vpow.pop %v5266
      %v5268 = vmul.f32 %v5172, 1.442695
      %v5269 = vpow.pop %v5268
      %v5270 = vmul.f32 %v5173, 1.442695
      %v5271 = vpow.pop %v5270
      %v5272 = vmul.f32 %v5174, 1.442695
      %v5273 = vpow.pop %v5272
      %v5274 = vmul.f32 %v5175, 1.442695
      %v5275 = vpow.pop %v5274
      %v5276 = vmul.f32 %v5176, 1.442695
      %v5277 = vpow.pop %v5276
      %v5278 = vmul.f32 %v5177, 1.442695
      %v5279 = vpow.pop %v5278
      %v5280 = vmul.f32 %v5178, 1.442695
      %v5281 = vpow.pop %v5280
      %v5282 = vmul.f32 %v5179, 1.442695
      %v5283 = vpow.pop %v5282
      %v5284 = vmul.f32 %v5180, 1.442695
      %v5285 = vpow.pop %v5284
      %v5286 = vmul.f32 %v5181, 1.442695
      %v5287 = vpow.pop %v5286
      %v5288 = vmul.f32 %v5182, 1.442695
      %v5289 = vpow.pop %v5288
      %v5290 = vmul.f32 %v5183, 1.442695
      %v5291 = vpow.pop %v5290
      %v5292 = vmul.f32 %v5184, 1.442695
      %v5293 = vpow.pop %v5292
      %v5294 = vmul.f32 %v5185, 1.442695
      %v5295 = vpow.pop %v5294
      %v5296 = vmul.f32 %v5186, 1.442695
      %v5297 = vpow.pop %v5296
      %v5298 = vmul.f32 %v5187, 1.442695
      %v5299 = vpow.pop %v5298
      %v5300 = vmul.f32 %v5188, 1.442695
      %v5301 = vpow.pop %v5300
      %v5302 = vmul.f32 %v5189, 1.442695
      %v5303 = vpow.pop %v5302
      %v5304 = vmul.f32 %v5190, 1.442695
      %v5305 = vpow.pop %v5304
      %v5306 = vmul.f32 %v5191, 1.442695
      %v5307 = vpow.pop %v5306
      %v5308 = vmul.f32 %v5192, 1.442695
      %v5309 = vpow.pop %v5308
      %v5310 = vmul.f32 %v5193, 1.442695
      %v5311 = vpow.pop %v5310
      %v5312 = vmul.f32 %v5194, 1.442695
      %v5313 = vpow.pop %v5312
      %v5314 = vmul.f32 %v5195, 1.442695
      %v5315 = vpow.pop %v5314
      %v5316 = vmul.f32 %v5196, 1.442695
      %v5317 = vpow.pop %v5316
      %v5318 = vmul.f32 %v5197, 1.442695
      %v5319 = vpow.pop %v5318
      %v5320 = vmul.f32 %v5198, 1.442695
      %v5321 = vpow.pop %v5320
      %v5322 = vmul.f32 %v5199, 1.442695
      %v5323 = vpow.pop %v5322
      %v5324 = vmul.f32 %v5200, 1.442695
      %v5325 = vpow.pop %v5324
      %v5326 = vmul.f32 %v5201, 1.442695
      %v5327 = vpow.pop %v5326
      %v5328 = vmul.f32 %v5202, 1.442695
      %v5329 = vpow.pop %v5328
      %v5330 = vmul.f32 %v5203, 1.442695
      %v5331 = vpow.pop %v5330
      %v5332 = vadd.f32 %v5205, %v5207
      %5333 = vadd.xlane.f32.xlu0 %v5332
      %v5334 = vpop.xlane.xlu0 %5333
      %v5335 = vadd.f32 %v5209, %v5211
      %5336 = vadd.xlane.f32.xlu0 %v5335
      %v5337 = vpop.xlane.xlu0 %5336
      %v5338 = vadd.f32 %v5213, %v5215
      %5339 = vadd.xlane.f32.xlu0 %v5338
      %v5340 = vpop.xlane.xlu0 %5339
      %v5341 = vadd.f32 %v5217, %v5219
      %5342 = vadd.xlane.f32.xlu0 %v5341
      %v5343 = vpop.xlane.xlu0 %5342
      %v5344 = vadd.f32 %v5221, %v5223
      %5345 = vadd.xlane.f32.xlu0 %v5344
      %v5346 = vpop.xlane.xlu0 %5345
      %v5347 = vadd.f32 %v5225, %v5227
      %5348 = vadd.xlane.f32.xlu0 %v5347
      %v5349 = vpop.xlane.xlu0 %5348
      %v5350 = vadd.f32 %v5229, %v5231
      %5351 = vadd.xlane.f32.xlu0 %v5350
      %v5352 = vpop.xlane.xlu0 %5351
      %v5353 = vadd.f32 %v5233, %v5235
      %5354 = vadd.xlane.f32.xlu0 %v5353
      %v5355 = vpop.xlane.xlu0 %5354
      %v5356 = vadd.f32 %v5237, %v5239
      %5357 = vadd.xlane.f32.xlu0 %v5356
      %v5358 = vpop.xlane.xlu0 %5357
      %v5359 = vadd.f32 %v5241, %v5243
      %5360 = vadd.xlane.f32.xlu0 %v5359
      %v5361 = vpop.xlane.xlu0 %5360
      %v5362 = vadd.f32 %v5245, %v5247
      %5363 = vadd.xlane.f32.xlu0 %v5362
      %v5364 = vpop.xlane.xlu0 %5363
      %v5365 = vadd.f32 %v5249, %v5251
      %5366 = vadd.xlane.f32.xlu0 %v5365
      %v5367 = vpop.xlane.xlu0 %5366
      %v5368 = vadd.f32 %v5253, %v5255
      %5369 = vadd.xlane.f32.xlu0 %v5368
      %v5370 = vpop.xlane.xlu0 %5369
      %v5371 = vadd.f32 %v5257, %v5259
      %5372 = vadd.xlane.f32.xlu0 %v5371
      %v5373 = vpop.xlane.xlu0 %5372
      %v5374 = vadd.f32 %v5261, %v5263
      %5375 = vadd.xlane.f32.xlu0 %v5374
      %v5376 = vpop.xlane.xlu0 %5375
      %v5377 = vadd.f32 %v5265, %v5267
      %5378 = vadd.xlane.f32.xlu0 %v5377
      %v5379 = vpop.xlane.xlu0 %5378
      %v5380 = vadd.f32 %v5269, %v5271
      %5381 = vadd.xlane.f32.xlu0 %v5380
      %v5382 = vpop.xlane.xlu0 %5381
      %v5383 = vadd.f32 %v5273, %v5275
      %5384 = vadd.xlane.f32.xlu0 %v5383
      %v5385 = vpop.xlane.xlu0 %5384
      %v5386 = vadd.f32 %v5277, %v5279
      %5387 = vadd.xlane.f32.xlu0 %v5386
      %v5388 = vpop.xlane.xlu0 %5387
      %v5389 = vadd.f32 %v5281, %v5283
      %5390 = vadd.xlane.f32.xlu0 %v5389
      %v5391 = vpop.xlane.xlu0 %5390
      %v5392 = vadd.f32 %v5285, %v5287
      %5393 = vadd.xlane.f32.xlu0 %v5392
      %v5394 = vpop.xlane.xlu0 %5393
      %v5395 = vadd.f32 %v5289, %v5291
      %5396 = vadd.xlane.f32.xlu0 %v5395
      %v5397 = vpop.xlane.xlu0 %5396
      %v5398 = vadd.f32 %v5293, %v5295
      %5399 = vadd.xlane.f32.xlu0 %v5398
      %v5400 = vpop.xlane.xlu0 %5399
      %v5401 = vadd.f32 %v5297, %v5299
      %5402 = vadd.xlane.f32.xlu0 %v5401
      %v5403 = vpop.xlane.xlu0 %5402
      %v5404 = vadd.f32 %v5301, %v5303
      %5405 = vadd.xlane.f32.xlu0 %v5404
      %v5406 = vpop.xlane.xlu0 %5405
      %v5407 = vadd.f32 %v5305, %v5307
      %5408 = vadd.xlane.f32.xlu0 %v5407
      %v5409 = vpop.xlane.xlu0 %5408
      %v5410 = vadd.f32 %v5309, %v5311
      %5411 = vadd.xlane.f32.xlu0 %v5410
      %v5412 = vpop.xlane.xlu0 %5411
      %v5413 = vadd.f32 %v5313, %v5315
      %5414 = vadd.xlane.f32.xlu0 %v5413
      %v5415 = vpop.xlane.xlu0 %5414
      %v5416 = vadd.f32 %v5317, %v5319
      %5417 = vadd.xlane.f32.xlu0 %v5416
      %v5418 = vpop.xlane.xlu0 %5417
      %v5419 = vadd.f32 %v5321, %v5323
      %5420 = vadd.xlane.f32.xlu0 %v5419
      %v5421 = vpop.xlane.xlu0 %5420
      %v5422 = vadd.f32 %v5325, %v5327
      %5423 = vadd.xlane.f32.xlu0 %v5422
      %v5424 = vpop.xlane.xlu0 %5423
      %v5425 = vadd.f32 %v5329, %v5331
      %5426 = vadd.xlane.f32.xlu0 %v5425
      %v5427 = vpop.xlane.xlu0 %5426
      %v5428 = vrcp.pop %v5334
      %v5429 = vrcp.pop %v5337
      %v5430 = vrcp.pop %v5340
      %v5431 = vrcp.pop %v5343
      %v5432 = vrcp.pop %v5346
      %v5433 = vrcp.pop %v5349
      %v5434 = vrcp.pop %v5352
      %v5435 = vrcp.pop %v5355
      %v5436 = vrcp.pop %v5358
      %v5437 = vrcp.pop %v5361
      %v5438 = vrcp.pop %v5364
      %v5439 = vrcp.pop %v5367
      %v5440 = vrcp.pop %v5370
      %v5441 = vrcp.pop %v5373
      %v5442 = vrcp.pop %v5376
      %v5443 = vrcp.pop %v5379
      %v5444 = vrcp.pop %v5382
      %v5445 = vrcp.pop %v5385
      %v5446 = vrcp.pop %v5388
      %v5447 = vrcp.pop %v5391
      %v5448 = vrcp.pop %v5394
      %v5449 = vrcp.pop %v5397
      %v5450 = vrcp.pop %v5400
      %v5451 = vrcp.pop %v5403
      %v5452 = vrcp.pop %v5406
      %v5453 = vrcp.pop %v5409
      %v5454 = vrcp.pop %v5412
      %v5455 = vrcp.pop %v5415
      %v5456 = vrcp.pop %v5418
      %v5457 = vrcp.pop %v5421
      %v5458 = vrcp.pop %v5424
      %v5459 = vrcp.pop %v5427
      %v5460 = vmul.f32 %v5205, %v5428
      %v5461 = vmul.f32 %v5207, %v5428
      %v5462 = vmul.f32 %v5209, %v5429
      %v5463 = vmul.f32 %v5211, %v5429
      %v5464 = vmul.f32 %v5213, %v5430
      %v5465 = vmul.f32 %v5215, %v5430
      %v5466 = vmul.f32 %v5217, %v5431
      %v5467 = vmul.f32 %v5219, %v5431
      %v5468 = vmul.f32 %v5221, %v5432
      %v5469 = vmul.f32 %v5223, %v5432
      %v5470 = vmul.f32 %v5225, %v5433
      %v5471 = vmul.f32 %v5227, %v5433
      %v5472 = vmul.f32 %v5229, %v5434
      %v5473 = vmul.f32 %v5231, %v5434
      %v5474 = vmul.f32 %v5233, %v5435
      %v5475 = vmul.f32 %v5235, %v5435
      %v5476 = vmul.f32 %v5237, %v5436
      %v5477 = vmul.f32 %v5239, %v5436
      %v5478 = vmul.f32 %v5241, %v5437
      %v5479 = vmul.f32 %v5243, %v5437
      %v5480 = vmul.f32 %v5245, %v5438
      %v5481 = vmul.f32 %v5247, %v5438
      %v5482 = vmul.f32 %v5249, %v5439
      %v5483 = vmul.f32 %v5251, %v5439
      %v5484 = vmul.f32 %v5253, %v5440
      %v5485 = vmul.f32 %v5255, %v5440
      %v5486 = vmul.f32 %v5257, %v5441
      %v5487 = vmul.f32 %v5259, %v5441
      %v5488 = vmul.f32 %v5261, %v5442
      %v5489 = vmul.f32 %v5263, %v5442
      %v5490 = vmul.f32 %v5265, %v5443
      %v5491 = vmul.f32 %v5267, %v5443
      %v5492 = vmul.f32 %v5269, %v5444
      %v5493 = vmul.f32 %v5271, %v5444
      %v5494 = vmul.f32 %v5273, %v5445
      %v5495 = vmul.f32 %v5275, %v5445
      %v5496 = vmul.f32 %v5277, %v5446
      %v5497 = vmul.f32 %v5279, %v5446
      %v5498 = vmul.f32 %v5281, %v5447
      %v5499 = vmul.f32 %v5283, %v5447
      %v5500 = vmul.f32 %v5285, %v5448
      %v5501 = vmul.f32 %v5287, %v5448
      %v5502 = vmul.f32 %v5289, %v5449
      %v5503 = vmul.f32 %v5291, %v5449
      %v5504 = vmul.f32 %v5293, %v5450
      %v5505 = vmul.f32 %v5295, %v5450
      %v5506 = vmul.f32 %v5297, %v5451
      %v5507 = vmul.f32 %v5299, %v5451
      %v5508 = vmul.f32 %v5301, %v5452
      %v5509 = vmul.f32 %v5303, %v5452
      %v5510 = vmul.f32 %v5305, %v5453
      %v5511 = vmul.f32 %v5307, %v5453
      %v5512 = vmul.f32 %v5309, %v5454
      %v5513 = vmul.f32 %v5311, %v5454
      %v5514 = vmul.f32 %v5313, %v5455
      %v5515 = vmul.f32 %v5315, %v5455
      %v5516 = vmul.f32 %v5317, %v5456
      %v5517 = vmul.f32 %v5319, %v5456
      %v5518 = vmul.f32 %v5321, %v5457
      %v5519 = vmul.f32 %v5323, %v5457
      %v5520 = vmul.f32 %v5325, %v5458
      %v5521 = vmul.f32 %v5327, %v5458
      %v5522 = vmul.f32 %v5329, %v5459
      %v5523 = vmul.f32 %v5331, %v5459
      %v5524 = vpack.c.bf16 %v5462, %v5460
      %v5525 = vpack.c.bf16 %v5463, %v5461
      %v5526 = vpack.c.bf16 %v5466, %v5464
      %v5527 = vpack.c.bf16 %v5467, %v5465
      %v5528 = vpack.c.bf16 %v5470, %v5468
      %v5529 = vpack.c.bf16 %v5471, %v5469
      %v5530 = vpack.c.bf16 %v5474, %v5472
      %v5531 = vpack.c.bf16 %v5475, %v5473
      %v5532 = vpack.c.bf16 %v5478, %v5476
      %v5533 = vpack.c.bf16 %v5479, %v5477
      %v5534 = vpack.c.bf16 %v5482, %v5480
      %v5535 = vpack.c.bf16 %v5483, %v5481
      %v5536 = vpack.c.bf16 %v5486, %v5484
      %v5537 = vpack.c.bf16 %v5487, %v5485
      %v5538 = vpack.c.bf16 %v5490, %v5488
      %v5539 = vpack.c.bf16 %v5491, %v5489
      %v5540 = vpack.c.bf16 %v5494, %v5492
      %v5541 = vpack.c.bf16 %v5495, %v5493
      %v5542 = vpack.c.bf16 %v5498, %v5496
      %v5543 = vpack.c.bf16 %v5499, %v5497
      %v5544 = vpack.c.bf16 %v5502, %v5500
      %v5545 = vpack.c.bf16 %v5503, %v5501
      %v5546 = vpack.c.bf16 %v5506, %v5504
      %v5547 = vpack.c.bf16 %v5507, %v5505
      %v5548 = vpack.c.bf16 %v5510, %v5508
      %v5549 = vpack.c.bf16 %v5511, %v5509
      %v5550 = vpack.c.bf16 %v5514, %v5512
      %v5551 = vpack.c.bf16 %v5515, %v5513
      %v5552 = vpack.c.bf16 %v5518, %v5516
      %v5553 = vpack.c.bf16 %v5519, %v5517
      %v5554 = vpack.c.bf16 %v5522, %v5520
      %v5555 = vpack.c.bf16 %v5523, %v5521
      %5556 = vrot.lane.b32.xlu0 %v1516, 32
      %v5557 = vpop.permute.xlu0 %5556
      %5558 = vrot.lane.b32.xlu0 %v1517, 32
      %v5559 = vpop.permute.xlu0 %5558
      %5560 = vrot.lane.b32.xlu0 %v1518, 32
      %v5561 = vpop.permute.xlu0 %5560
      %5562 = vrot.lane.b32.xlu0 %v1519, 32
      %v5563 = vpop.permute.xlu0 %5562
      %5564 = vrot.lane.b32.xlu0 %v1520, 32
      %v5565 = vpop.permute.xlu0 %5564
      %5566 = vrot.lane.b32.xlu0 %v1521, 32
      %v5567 = vpop.permute.xlu0 %5566
      %5568 = vrot.lane.b32.xlu0 %v1522, 32
      %v5569 = vpop.permute.xlu0 %5568
      %5570 = vrot.lane.b32.xlu0 %v1523, 32
      %v5571 = vpop.permute.xlu0 %5570
      %5572 = vrot.lane.b32.xlu0 %v1524, 32
      %v5573 = vpop.permute.xlu0 %5572
      %5574 = vrot.lane.b32.xlu0 %v1525, 32
      %v5575 = vpop.permute.xlu0 %5574
      %5576 = vrot.lane.b32.xlu0 %v1526, 32
      %v5577 = vpop.permute.xlu0 %5576
      %5578 = vrot.lane.b32.xlu0 %v1527, 32
      %v5579 = vpop.permute.xlu0 %5578
      %5580 = vrot.lane.b32.xlu0 %v1528, 32
      %v5581 = vpop.permute.xlu0 %5580
      %5582 = vrot.lane.b32.xlu0 %v1529, 32
      %v5583 = vpop.permute.xlu0 %5582
      %5584 = vrot.lane.b32.xlu0 %v1530, 32
      %v5585 = vpop.permute.xlu0 %5584
      %5586 = vrot.lane.b32.xlu0 %v1531, 32
      %v5587 = vpop.permute.xlu0 %5586
      %5604 = vmatprep.subr.bf16.mxu0 0
      %5605 = vmatpush1.bf16.msra.mxu0 %v5557
      %5606 = vmatprep.subr.bf16.mxu0 0
      %5607 = vmatpush1.bf16.msra.mxu0 %v5559
      %5608 = vmatprep.subr.bf16.mxu0 0
      %5609 = vmatpush1.bf16.msra.mxu0 %v5561
      %5610 = vmatprep.subr.bf16.mxu0 0
      %5611 = vmatpush1.bf16.msra.mxu0 %v5563
      %5612 = vmatprep.subr.bf16.mxu0 0
      %5613 = vmatpush1.bf16.msra.mxu0 %v5565
      %5614 = vmatprep.subr.bf16.mxu0 0
      %5615 = vmatpush1.bf16.msra.mxu0 %v5567
      %5616 = vmatprep.subr.bf16.mxu0 0
      %5617 = vmatpush1.bf16.msra.mxu0 %v5569
      %5618 = vmatprep.subr.bf16.mxu0 0
      %5619 = vmatpush1.bf16.msra.mxu0 %v5571
      %5620 = vmatprep.subr.bf16.mxu0 0
      %5621 = vmatpush1.bf16.msra.mxu0 %v5573
      %5622 = vmatprep.subr.bf16.mxu0 0
      %5623 = vmatpush1.bf16.msra.mxu0 %v5575
      %5624 = vmatprep.subr.bf16.mxu0 0
      %5625 = vmatpush1.bf16.msra.mxu0 %v5577
      %5626 = vmatprep.subr.bf16.mxu0 0
      %5627 = vmatpush1.bf16.msra.mxu0 %v5579
      %5628 = vmatprep.subr.bf16.mxu0 0
      %5629 = vmatpush1.bf16.msra.mxu0 %v5581
      %5630 = vmatprep.subr.bf16.mxu0 0
      %5631 = vmatpush1.bf16.msra.mxu0 %v5583
      %5632 = vmatprep.subr.bf16.mxu0 0
      %5633 = vmatpush1.bf16.msra.mxu0 %v5585
      %5634 = vmatprep.subr.bf16.mxu0 0
      %5635 = vmatpush1.bf16.msra.mxu0 %v5587
      %5636 = vmatprep.mubr.bf16.mxu0 %v5525
      %5637 = vmatmul.mubr.bf16.gmra.mrb[0].mxu0 %v5524
      %v5638 = vpop.f32.mrb[0].mxu0
      %v5639 = vadd.f32 0.0, %v5638
      %v5640 = vpop.f32.mrb[0].mxu0
      %v5641 = vpop.f32.mrb[0].mxu0
      %v5642 = vadd.f32 0.0, %v5641
      %v5643 = vpop.f32.mrb[0].mxu0
      %5644 = vmatprep.mubr.bf16.mxu0 %v5527
      %5645 = vmatmul.mubr.bf16.gmra.mrb[0].mxu0 %v5526
      %v5646 = vpop.f32.mrb[0].mxu0
      %v5647 = vadd.f32 0.0, %v5646
      %v5648 = vpop.f32.mrb[0].mxu0
      %v5649 = vpop.f32.mrb[0].mxu0
      %v5650 = vadd.f32 0.0, %v5649
      %v5651 = vpop.f32.mrb[0].mxu0
      %5652 = vmatprep.mubr.bf16.mxu0 %v5529
      %5653 = vmatmul.mubr.bf16.gmra.mrb[0].mxu0 %v5528
      %v5654 = vpop.f32.mrb[0].mxu0
      %v5655 = vadd.f32 0.0, %v5654
      %v5656 = vpop.f32.mrb[0].mxu0
      %v5657 = vpop.f32.mrb[0].mxu0
      %v5658 = vadd.f32 0.0, %v5657
      %v5659 = vpop.f32.mrb[0].mxu0
      %5660 = vmatprep.mubr.bf16.mxu0 %v5531
      %5661 = vmatmul.mubr.bf16.gmra.mrb[0].mxu0 %v5530
      %v5662 = vpop.f32.mrb[0].mxu0
      %v5663 = vadd.f32 0.0, %v5662
      %v5664 = vpop.f32.mrb[0].mxu0
      %v5665 = vpop.f32.mrb[0].mxu0
      %v5666 = vadd.f32 0.0, %v5665
      %v5667 = vpop.f32.mrb[0].mxu0
      %5668 = vmatprep.mubr.bf16.mxu0 %v5533
      %5669 = vmatmul.mubr.bf16.gmra.mrb[0].mxu0 %v5532
      %v5670 = vpop.f32.mrb[0].mxu0
      %v5671 = vadd.f32 0.0, %v5670
      %v5672 = vpop.f32.mrb[0].mxu0
      %v5673 = vpop.f32.mrb[0].mxu0
      %v5674 = vadd.f32 0.0, %v5673
      %v5675 = vpop.f32.mrb[0].mxu0
      %5676 = vmatprep.mubr.bf16.mxu0 %v5535
      %5677 = vmatmul.mubr.bf16.gmra.mrb[0].mxu0 %v5534
      %v5678 = vpop.f32.mrb[0].mxu0
      %v5679 = vadd.f32 0.0, %v5678
      %v5680 = vpop.f32.mrb[0].mxu0
      %v5681 = vpop.f32.mrb[0].mxu0
      %v5682 = vadd.f32 0.0, %v5681
      %v5683 = vpop.f32.mrb[0].mxu0
      %5684 = vmatprep.mubr.bf16.mxu0 %v5537
      %5685 = vmatmul.mubr.bf16.gmra.mrb[0].mxu0 %v5536
      %v5686 = vpop.f32.mrb[0].mxu0
      %v5687 = vadd.f32 0.0, %v5686
      %v5688 = vpop.f32.mrb[0].mxu0
      %v5689 = vpop.f32.mrb[0].mxu0
      %v5690 = vadd.f32 0.0, %v5689
      %v5691 = vpop.f32.mrb[0].mxu0
      %5692 = vmatprep.mubr.bf16.mxu0 %v5539
      %5693 = vmatmul.mubr.bf16.gmra.mrb[0].mxu0 %v5538
      %v5694 = vpop.f32.mrb[0].mxu0
      %v5695 = vadd.f32 0.0, %v5694
      %v5696 = vpop.f32.mrb[0].mxu0
      %v5697 = vpop.f32.mrb[0].mxu0
      %v5698 = vadd.f32 0.0, %v5697
      %v5699 = vpop.f32.mrb[0].mxu0
      %5700 = vmatprep.mubr.bf16.mxu0 %v5541
      %5701 = vmatmul.mubr.bf16.gmra.mrb[0].mxu0 %v5540
      %v5702 = vpop.f32.mrb[0].mxu0
      %v5703 = vadd.f32 0.0, %v5702
      %v5704 = vpop.f32.mrb[0].mxu0
      %v5705 = vpop.f32.mrb[0].mxu0
      %v5706 = vadd.f32 0.0, %v5705
      %v5707 = vpop.f32.mrb[0].mxu0
      %5708 = vmatprep.mubr.bf16.mxu0 %v5543
      %5709 = vmatmul.mubr.bf16.gmra.mrb[0].mxu0 %v5542
      %v5710 = vpop.f32.mrb[0].mxu0
      %v5711 = vadd.f32 0.0, %v5710
      %v5712 = vpop.f32.mrb[0].mxu0
      %v5713 = vpop.f32.mrb[0].mxu0
      %v5714 = vadd.f32 0.0, %v5713
      %v5715 = vpop.f32.mrb[0].mxu0
      %5716 = vmatprep.mubr.bf16.mxu0 %v5545
      %5717 = vmatmul.mubr.bf16.gmra.mrb[0].mxu0 %v5544
      %v5718 = vpop.f32.mrb[0].mxu0
      %v5719 = vadd.f32 0.0, %v5718
      %v5720 = vpop.f32.mrb[0].mxu0
      %v5721 = vpop.f32.mrb[0].mxu0
      %v5722 = vadd.f32 0.0, %v5721
      %v5723 = vpop.f32.mrb[0].mxu0
      %5724 = vmatprep.mubr.bf16.mxu0 %v5547
      %5725 = vmatmul.mubr.bf16.gmra.mrb[0].mxu0 %v5546
      %v5726 = vpop.f32.mrb[0].mxu0
      %v5727 = vadd.f32 0.0, %v5726
      %v5728 = vpop.f32.mrb[0].mxu0
      %v5729 = vpop.f32.mrb[0].mxu0
      %v5730 = vadd.f32 0.0, %v5729
      %v5731 = vpop.f32.mrb[0].mxu0
      %5732 = vmatprep.mubr.bf16.mxu0 %v5549
      %5733 = vmatmul.mubr.bf16.gmra.mrb[0].mxu0 %v5548
      %v5734 = vpop.f32.mrb[0].mxu0
      %v5735 = vadd.f32 0.0, %v5734
      %v5736 = vpop.f32.mrb[0].mxu0
      %v5737 = vpop.f32.mrb[0].mxu0
      %v5738 = vadd.f32 0.0, %v5737
      %v5739 = vpop.f32.mrb[0].mxu0
      %5740 = vmatprep.mubr.bf16.mxu0 %v5551
      %5741 = vmatmul.mubr.bf16.gmra.mrb[0].mxu0 %v5550
      %v5742 = vpop.f32.mrb[0].mxu0
      %v5743 = vadd.f32 0.0, %v5742
      %v5744 = vpop.f32.mrb[0].mxu0
      %v5745 = vpop.f32.mrb[0].mxu0
      %v5746 = vadd.f32 0.0, %v5745
      %v5747 = vpop.f32.mrb[0].mxu0
      %5748 = vmatprep.mubr.bf16.mxu0 %v5553
      %5749 = vmatmul.mubr.bf16.gmra.mrb[0].mxu0 %v5552
      %v5750 = vpop.f32.mrb[0].mxu0
      %v5751 = vadd.f32 0.0, %v5750
      %v5752 = vpop.f32.mrb[0].mxu0
      %v5753 = vpop.f32.mrb[0].mxu0
      %v5754 = vadd.f32 0.0, %v5753
      %v5755 = vpop.f32.mrb[0].mxu0
      %5756 = vmatprep.mubr.bf16.mxu0 %v5555
      %5757 = vmatmul.mubr.bf16.gmra.mrb[0].mxu0 %v5554
      %v5758 = vpop.f32.mrb[0].mxu0
      %v5759 = vadd.f32 0.0, %v5758
      %v5760 = vpop.f32.mrb[0].mxu0
      %v5761 = vpop.f32.mrb[0].mxu0
      %v5762 = vadd.f32 0.0, %v5761
      %v5763 = vpop.f32.mrb[0].mxu0
      %5764 = vdwg.mxu0
      %5797 = vrot.lane.b32.xlu0 %v3491, 32
      %v5798 = vpop.permute.xlu0 %5797
      %5799 = vrot.lane.b32.xlu0 %v3494, 32
      %v5800 = vpop.permute.xlu0 %5799
      %5801 = vrot.lane.b32.xlu0 %v3499, 32
      %v5802 = vpop.permute.xlu0 %5801
      %5803 = vrot.lane.b32.xlu0 %v3502, 32
      %v5804 = vpop.permute.xlu0 %5803
      %5805 = vrot.lane.b32.xlu0 %v3507, 32
      %v5806 = vpop.permute.xlu0 %5805
      %5807 = vrot.lane.b32.xlu0 %v3510, 32
      %v5808 = vpop.permute.xlu0 %5807
      %5809 = vrot.lane.b32.xlu0 %v3515, 32
      %v5810 = vpop.permute.xlu0 %5809
      %5811 = vrot.lane.b32.xlu0 %v3518, 32
      %v5812 = vpop.permute.xlu0 %5811
      %5813 = vrot.lane.b32.xlu0 %v3523, 32
      %v5814 = vpop.permute.xlu0 %5813
      %5815 = vrot.lane.b32.xlu0 %v3526, 32
      %v5816 = vpop.permute.xlu0 %5815
      %5817 = vrot.lane.b32.xlu0 %v3531, 32
      %v5818 = vpop.permute.xlu0 %5817
      %5819 = vrot.lane.b32.xlu0 %v3534, 32
      %v5820 = vpop.permute.xlu0 %5819
      %5821 = vrot.lane.b32.xlu0 %v3539, 32
      %v5822 = vpop.permute.xlu0 %5821
      %5823 = vrot.lane.b32.xlu0 %v3542, 32
      %v5824 = vpop.permute.xlu0 %5823
      %5825 = vrot.lane.b32.xlu0 %v3547, 32
      %v5826 = vpop.permute.xlu0 %5825
      %5827 = vrot.lane.b32.xlu0 %v3550, 32
      %v5828 = vpop.permute.xlu0 %5827
      %5829 = vrot.lane.b32.xlu0 %v3555, 32
      %v5830 = vpop.permute.xlu0 %5829
      %5831 = vrot.lane.b32.xlu0 %v3558, 32
      %v5832 = vpop.permute.xlu0 %5831
      %5833 = vrot.lane.b32.xlu0 %v3563, 32
      %v5834 = vpop.permute.xlu0 %5833
      %5835 = vrot.lane.b32.xlu0 %v3566, 32
      %v5836 = vpop.permute.xlu0 %5835
      %5837 = vrot.lane.b32.xlu0 %v3571, 32
      %v5838 = vpop.permute.xlu0 %5837
      %5839 = vrot.lane.b32.xlu0 %v3574, 32
      %v5840 = vpop.permute.xlu0 %5839
      %5841 = vrot.lane.b32.xlu0 %v3579, 32
      %v5842 = vpop.permute.xlu0 %5841
      %5843 = vrot.lane.b32.xlu0 %v3582, 32
      %v5844 = vpop.permute.xlu0 %5843
      %5845 = vrot.lane.b32.xlu0 %v3587, 32
      %v5846 = vpop.permute.xlu0 %5845
      %5847 = vrot.lane.b32.xlu0 %v3590, 32
      %v5848 = vpop.permute.xlu0 %5847
      %5849 = vrot.lane.b32.xlu0 %v3595, 32
      %v5850 = vpop.permute.xlu0 %5849
      %5851 = vrot.lane.b32.xlu0 %v3598, 32
      %v5852 = vpop.permute.xlu0 %5851
      %5853 = vrot.lane.b32.xlu0 %v3603, 32
      %v5854 = vpop.permute.xlu0 %5853
      %5855 = vrot.lane.b32.xlu0 %v3606, 32
      %v5856 = vpop.permute.xlu0 %5855
      %5857 = vrot.lane.b32.xlu0 %v3611, 32
      %v5858 = vpop.permute.xlu0 %5857
      %5859 = vrot.lane.b32.xlu0 %v3614, 32
      %v5860 = vpop.permute.xlu0 %5859
      %5925 = vrot.lane.b32.xlu0 %v4565, 64
      %v5926 = vpop.permute.xlu0 %5925
      %5927 = vrot.lane.b32.xlu0 %v4568, 64
      %v5928 = vpop.permute.xlu0 %5927
      %5929 = vrot.lane.b32.xlu0 %v4573, 64
      %v5930 = vpop.permute.xlu0 %5929
      %5931 = vrot.lane.b32.xlu0 %v4576, 64
      %v5932 = vpop.permute.xlu0 %5931
      %5933 = vrot.lane.b32.xlu0 %v4581, 64
      %v5934 = vpop.permute.xlu0 %5933
      %5935 = vrot.lane.b32.xlu0 %v4584, 64
      %v5936 = vpop.permute.xlu0 %5935
      %5937 = vrot.lane.b32.xlu0 %v4589, 64
      %v5938 = vpop.permute.xlu0 %5937
      %5939 = vrot.lane.b32.xlu0 %v4592, 64
      %v5940 = vpop.permute.xlu0 %5939
      %5941 = vrot.lane.b32.xlu0 %v4597, 64
      %v5942 = vpop.permute.xlu0 %5941
      %5943 = vrot.lane.b32.xlu0 %v4600, 64
      %v5944 = vpop.permute.xlu0 %5943
      %5945 = vrot.lane.b32.xlu0 %v4605, 64
      %v5946 = vpop.permute.xlu0 %5945
      %5947 = vrot.lane.b32.xlu0 %v4608, 64
      %v5948 = vpop.permute.xlu0 %5947
      %5949 = vrot.lane.b32.xlu0 %v4613, 64
      %v5950 = vpop.permute.xlu0 %5949
      %5951 = vrot.lane.b32.xlu0 %v4616, 64
      %v5952 = vpop.permute.xlu0 %5951
      %5953 = vrot.lane.b32.xlu0 %v4621, 64
      %v5954 = vpop.permute.xlu0 %5953
      %5955 = vrot.lane.b32.xlu0 %v4624, 64
      %v5956 = vpop.permute.xlu0 %5955
      %5957 = vrot.lane.b32.xlu0 %v4629, 64
      %v5958 = vpop.permute.xlu0 %5957
      %5959 = vrot.lane.b32.xlu0 %v4632, 64
      %v5960 = vpop.permute.xlu0 %5959
      %5961 = vrot.lane.b32.xlu0 %v4637, 64
      %v5962 = vpop.permute.xlu0 %5961
      %5963 = vrot.lane.b32.xlu0 %v4640, 64
      %v5964 = vpop.permute.xlu0 %5963
      %5965 = vrot.lane.b32.xlu0 %v4645, 64
      %v5966 = vpop.permute.xlu0 %5965
      %5967 = vrot.lane.b32.xlu0 %v4648, 64
      %v5968 = vpop.permute.xlu0 %5967
      %5969 = vrot.lane.b32.xlu0 %v4653, 64
      %v5970 = vpop.permute.xlu0 %5969
      %5971 = vrot.lane.b32.xlu0 %v4656, 64
      %v5972 = vpop.permute.xlu0 %5971
      %5973 = vrot.lane.b32.xlu0 %v4661, 64
      %v5974 = vpop.permute.xlu0 %5973
      %5975 = vrot.lane.b32.xlu0 %v4664, 64
      %v5976 = vpop.permute.xlu0 %5975
      %5977 = vrot.lane.b32.xlu0 %v4669, 64
      %v5978 = vpop.permute.xlu0 %5977
      %5979 = vrot.lane.b32.xlu0 %v4672, 64
      %v5980 = vpop.permute.xlu0 %5979
      %5981 = vrot.lane.b32.xlu0 %v4677, 64
      %v5982 = vpop.permute.xlu0 %5981
      %5983 = vrot.lane.b32.xlu0 %v4680, 64
      %v5984 = vpop.permute.xlu0 %5983
      %5985 = vrot.lane.b32.xlu0 %v4685, 64
      %v5986 = vpop.permute.xlu0 %5985
      %5987 = vrot.lane.b32.xlu0 %v4688, 64
      %v5988 = vpop.permute.xlu0 %5987
      %6053 = vrot.lane.b32.xlu0 %v5639, 96
      %v6054 = vpop.permute.xlu0 %6053
      %6055 = vrot.lane.b32.xlu0 %v5642, 96
      %v6056 = vpop.permute.xlu0 %6055
      %6057 = vrot.lane.b32.xlu0 %v5647, 96
      %v6058 = vpop.permute.xlu0 %6057
      %6059 = vrot.lane.b32.xlu0 %v5650, 96
      %v6060 = vpop.permute.xlu0 %6059
      %6061 = vrot.lane.b32.xlu0 %v5655, 96
      %v6062 = vpop.permute.xlu0 %6061
      %6063 = vrot.lane.b32.xlu0 %v5658, 96
      %v6064 = vpop.permute.xlu0 %6063
      %6065 = vrot.lane.b32.xlu0 %v5663, 96
      %v6066 = vpop.permute.xlu0 %6065
      %6067 = vrot.lane.b32.xlu0 %v5666, 96
      %v6068 = vpop.permute.xlu0 %6067
      %6069 = vrot.lane.b32.xlu0 %v5671, 96
      %v6070 = vpop.permute.xlu0 %6069
      %6071 = vrot.lane.b32.xlu0 %v5674, 96
      %v6072 = vpop.permute.xlu0 %6071
      %6073 = vrot.lane.b32.xlu0 %v5679, 96
      %v6074 = vpop.permute.xlu0 %6073
      %6075 = vrot.lane.b32.xlu0 %v5682, 96
      %v6076 = vpop.permute.xlu0 %6075
      %6077 = vrot.lane.b32.xlu0 %v5687, 96
      %v6078 = vpop.permute.xlu0 %6077
      %6079 = vrot.lane.b32.xlu0 %v5690, 96
      %v6080 = vpop.permute.xlu0 %6079
      %6081 = vrot.lane.b32.xlu0 %v5695, 96
      %v6082 = vpop.permute.xlu0 %6081
      %6083 = vrot.lane.b32.xlu0 %v5698, 96
      %v6084 = vpop.permute.xlu0 %6083
      %6085 = vrot.lane.b32.xlu0 %v5703, 96
      %v6086 = vpop.permute.xlu0 %6085
      %6087 = vrot.lane.b32.xlu0 %v5706, 96
      %v6088 = vpop.permute.xlu0 %6087
      %6089 = vrot.lane.b32.xlu0 %v5711, 96
      %v6090 = vpop.permute.xlu0 %6089
      %6091 = vrot.lane.b32.xlu0 %v5714, 96
      %v6092 = vpop.permute.xlu0 %6091
      %6093 = vrot.lane.b32.xlu0 %v5719, 96
      %v6094 = vpop.permute.xlu0 %6093
      %6095 = vrot.lane.b32.xlu0 %v5722, 96
      %v6096 = vpop.permute.xlu0 %6095
      %6097 = vrot.lane.b32.xlu0 %v5727, 96
      %v6098 = vpop.permute.xlu0 %6097
      %6099 = vrot.lane.b32.xlu0 %v5730, 96
      %v6100 = vpop.permute.xlu0 %6099
      %6101 = vrot.lane.b32.xlu0 %v5735, 96
      %v6102 = vpop.permute.xlu0 %6101
      %6103 = vrot.lane.b32.xlu0 %v5738, 96
      %v6104 = vpop.permute.xlu0 %6103
      %6105 = vrot.lane.b32.xlu0 %v5743, 96
      %v6106 = vpop.permute.xlu0 %6105
      %6107 = vrot.lane.b32.xlu0 %v5746, 96
      %v6108 = vpop.permute.xlu0 %6107
      %6109 = vrot.lane.b32.xlu0 %v5751, 96
      %v6110 = vpop.permute.xlu0 %6109
      %6111 = vrot.lane.b32.xlu0 %v5754, 96
      %v6112 = vpop.permute.xlu0 %6111
      %6113 = vrot.lane.b32.xlu0 %v5759, 96
      %v6114 = vpop.permute.xlu0 %6113
      %6115 = vrot.lane.b32.xlu0 %v5762, 96
      %v6116 = vpop.permute.xlu0 %6115
      %v6149 = vsel %vm1532, %v2369, %v5798
      %v6150 = vsel %vm1532, %v2372, %v5800
      %v6151 = vsel %vm1532, %v2377, %v5802
      %v6152 = vsel %vm1532, %v2380, %v5804
      %v6153 = vsel %vm1532, %v2385, %v5806
      %v6154 = vsel %vm1532, %v2388, %v5808
      %v6155 = vsel %vm1532, %v2393, %v5810
      %v6156 = vsel %vm1532, %v2396, %v5812
      %v6157 = vsel %vm1532, %v2401, %v5814
      %v6158 = vsel %vm1532, %v2404, %v5816
      %v6159 = vsel %vm1532, %v2409, %v5818
      %v6160 = vsel %vm1532, %v2412, %v5820
      %v6161 = vsel %vm1532, %v2417, %v5822
      %v6162 = vsel %vm1532, %v2420, %v5824
      %v6163 = vsel %vm1532, %v2425, %v5826
      %v6164 = vsel %vm1532, %v2428, %v5828
      %v6165 = vsel %vm1532, %v2433, %v5830
      %v6166 = vsel %vm1532, %v2436, %v5832
      %v6167 = vsel %vm1532, %v2441, %v5834
      %v6168 = vsel %vm1532, %v2444, %v5836
      %v6169 = vsel %vm1532, %v2449, %v5838
      %v6170 = vsel %vm1532, %v2452, %v5840
      %v6171 = vsel %vm1532, %v2457, %v5842
      %v6172 = vsel %vm1532, %v2460, %v5844
      %v6173 = vsel %vm1532, %v2465, %v5846
      %v6174 = vsel %vm1532, %v2468, %v5848
      %v6175 = vsel %vm1532, %v2473, %v5850
      %v6176 = vsel %vm1532, %v2476, %v5852
      %v6177 = vsel %vm1532, %v2481, %v5854
      %v6178 = vsel %vm1532, %v2484, %v5856
      %v6179 = vsel %vm1532, %v2489, %v5858
      %v6180 = vsel %vm1532, %v2492, %v5860
      %vm6181 = vcmask 523264
      %v6182 = vsel %vm6181, %v6149, %v5926
      %v6183 = vsel %vm6181, %v6150, %v5928
      %v6184 = vsel %vm6181, %v6151, %v5930
      %v6185 = vsel %vm6181, %v6152, %v5932
      %v6186 = vsel %vm6181, %v6153, %v5934
      %v6187 = vsel %vm6181, %v6154, %v5936
      %v6188 = vsel %vm6181, %v6155, %v5938
      %v6189 = vsel %vm6181, %v6156, %v5940
      %v6190 = vsel %vm6181, %v6157, %v5942
      %v6191 = vsel %vm6181, %v6158, %v5944
      %v6192 = vsel %vm6181, %v6159, %v5946
      %v6193 = vsel %vm6181, %v6160, %v5948
      %v6194 = vsel %vm6181, %v6161, %v5950
      %v6195 = vsel %vm6181, %v6162, %v5952
      %v6196 = vsel %vm6181, %v6163, %v5954
      %v6197 = vsel %vm6181, %v6164, %v5956
      %v6198 = vsel %vm6181, %v6165, %v5958
      %v6199 = vsel %vm6181, %v6166, %v5960
      %v6200 = vsel %vm6181, %v6167, %v5962
      %v6201 = vsel %vm6181, %v6168, %v5964
      %v6202 = vsel %vm6181, %v6169, %v5966
      %v6203 = vsel %vm6181, %v6170, %v5968
      %v6204 = vsel %vm6181, %v6171, %v5970
      %v6205 = vsel %vm6181, %v6172, %v5972
      %v6206 = vsel %vm6181, %v6173, %v5974
      %v6207 = vsel %vm6181, %v6174, %v5976
      %v6208 = vsel %vm6181, %v6175, %v5978
      %v6209 = vsel %vm6181, %v6176, %v5980
      %v6210 = vsel %vm6181, %v6177, %v5982
      %v6211 = vsel %vm6181, %v6178, %v5984
      %v6212 = vsel %vm6181, %v6179, %v5986
      %v6213 = vsel %vm6181, %v6180, %v5988
      %vm6214 = vcmask 785408
      %v6215 = vsel %vm6214, %v6182, %v6054
      %v6216 = vsel %vm6214, %v6183, %v6056
      %v6217 = vsel %vm6214, %v6184, %v6058
      %v6218 = vsel %vm6214, %v6185, %v6060
      %v6219 = vsel %vm6214, %v6186, %v6062
      %v6220 = vsel %vm6214, %v6187, %v6064
      %v6221 = vsel %vm6214, %v6188, %v6066
      %v6222 = vsel %vm6214, %v6189, %v6068
      %v6223 = vsel %vm6214, %v6190, %v6070
      %v6224 = vsel %vm6214, %v6191, %v6072
      %v6225 = vsel %vm6214, %v6192, %v6074
      %v6226 = vsel %vm6214, %v6193, %v6076
      %v6227 = vsel %vm6214, %v6194, %v6078
      %v6228 = vsel %vm6214, %v6195, %v6080
      %v6229 = vsel %vm6214, %v6196, %v6082
      %v6230 = vsel %vm6214, %v6197, %v6084
      %v6231 = vsel %vm6214, %v6198, %v6086
      %v6232 = vsel %vm6214, %v6199, %v6088
      %v6233 = vsel %vm6214, %v6200, %v6090
      %v6234 = vsel %vm6214, %v6201, %v6092
      %v6235 = vsel %vm6214, %v6202, %v6094
      %v6236 = vsel %vm6214, %v6203, %v6096
      %v6237 = vsel %vm6214, %v6204, %v6098
      %v6238 = vsel %vm6214, %v6205, %v6100
      %v6239 = vsel %vm6214, %v6206, %v6102
      %v6240 = vsel %vm6214, %v6207, %v6104
      %v6241 = vsel %vm6214, %v6208, %v6106
      %v6242 = vsel %vm6214, %v6209, %v6108
      %v6243 = vsel %vm6214, %v6210, %v6110
      %v6244 = vsel %vm6214, %v6211, %v6112
      %v6245 = vsel %vm6214, %v6212, %v6114
      %v6246 = vsel %vm6214, %v6213, %v6116
      %v6247 = vpack.c.bf16 %v6216, %v6215
      %v6248 = vpack.c.bf16 %v6218, %v6217
      %v6249 = vpack.c.bf16 %v6220, %v6219
      %v6250 = vpack.c.bf16 %v6222, %v6221
      %v6251 = vpack.c.bf16 %v6224, %v6223
      %v6252 = vpack.c.bf16 %v6226, %v6225
      %v6253 = vpack.c.bf16 %v6228, %v6227
      %v6254 = vpack.c.bf16 %v6230, %v6229
      %v6255 = vpack.c.bf16 %v6232, %v6231
      %v6256 = vpack.c.bf16 %v6234, %v6233
      %v6257 = vpack.c.bf16 %v6236, %v6235
      %v6258 = vpack.c.bf16 %v6238, %v6237
      %v6259 = vpack.c.bf16 %v6240, %v6239
      %v6260 = vpack.c.bf16 %v6242, %v6241
      %v6261 = vpack.c.bf16 %v6244, %v6243
      %v6262 = vpack.c.bf16 %v6246, %v6245
      %v6263 = vld [vmem:[%s5] sm:$0xf]
      %v6264 = vld [vmem:[%s5 + $0x4] sm:$0xf]
      %v6265 = vld [vmem:[%s5 + $0x8] sm:$0xf]
      %v6266 = vld [vmem:[%s5 + $0xc] sm:$0xf]
      %v6267 = vld [vmem:[%s5 + $0x10] sm:$0xf]
      %v6268 = vld [vmem:[%s5 + $0x14] sm:$0xf]
      %v6269 = vld [vmem:[%s5 + $0x18] sm:$0xf]
      %v6270 = vld [vmem:[%s5 + $0x1c] sm:$0xf]
      %v6271 = vld [vmem:[%s5 + $0x20] sm:$0xf]
      %v6272 = vld [vmem:[%s5 + $0x24] sm:$0xf]
      %v6273 = vld [vmem:[%s5 + $0x28] sm:$0xf]
      %v6274 = vld [vmem:[%s5 + $0x2c] sm:$0xf]
      %v6275 = vld [vmem:[%s5 + $0x30] sm:$0xf]
      %v6276 = vld [vmem:[%s5 + $0x34] sm:$0xf]
      %v6277 = vld [vmem:[%s5 + $0x38] sm:$0xf]
      %v6278 = vld [vmem:[%s5 + $0x3c] sm:$0xf]
      %v6295 = vunpack.c.l.b16 %v6263
      %v6296 = vunpack.c.l.b16 %v6264
      %v6297 = vunpack.c.l.b16 %v6265
      %v6298 = vunpack.c.l.b16 %v6266
      %v6299 = vunpack.c.l.b16 %v6267
      %v6300 = vunpack.c.l.b16 %v6268
      %v6301 = vunpack.c.l.b16 %v6269
      %v6302 = vunpack.c.l.b16 %v6270
      %v6303 = vunpack.c.l.b16 %v6271
      %v6304 = vunpack.c.l.b16 %v6272
      %v6305 = vunpack.c.l.b16 %v6273
      %v6306 = vunpack.c.l.b16 %v6274
      %v6307 = vunpack.c.l.b16 %v6275
      %v6308 = vunpack.c.l.b16 %v6276
      %v6309 = vunpack.c.l.b16 %v6277
      %v6310 = vunpack.c.l.b16 %v6278
      %v6311 = vpack.c.b16 %v6296, %v6295
      %v6312 = vpack.c.b16 %v6298, %v6297
      %v6313 = vpack.c.b16 %v6300, %v6299
      %v6314 = vpack.c.b16 %v6302, %v6301
      %v6315 = vpack.c.b16 %v6304, %v6303
      %v6316 = vpack.c.b16 %v6306, %v6305
      %v6317 = vpack.c.b16 %v6308, %v6307
      %v6318 = vpack.c.b16 %v6310, %v6309
      %6327 = vmatprep.subr.bf16.mxu0 0
      %6328 = vmatpush1.bf16.msra.mxu0 %v6311
      %6329 = vmatprep.subr.bf16.mxu0 0
      %6330 = vmatpush1.bf16.msra.mxu0 %v6312
      %6331 = vmatprep.subr.bf16.mxu0 0
      %6332 = vmatpush1.bf16.msra.mxu0 %v6313
      %6333 = vmatprep.subr.bf16.mxu0 0
      %6334 = vmatpush1.bf16.msra.mxu0 %v6314
      %6335 = vmatprep.subr.bf16.mxu0 0
      %6336 = vmatpush1.bf16.msra.mxu0 %v6315
      %6337 = vmatprep.subr.bf16.mxu0 0
      %6338 = vmatpush1.bf16.msra.mxu0 %v6316
      %6339 = vmatprep.subr.bf16.mxu0 0
      %6340 = vmatpush1.bf16.msra.mxu0 %v6317
      %6341 = vmatprep.subr.bf16.mxu0 0
      %6342 = vmatpush1.bf16.msra.mxu0 %v6318
      %6343 = vmatprep.subr.bf16.mxu0 0
      %6344 = vmatpush1.bf16.msra.mxu0 0
      %6345 = vmatprep.subr.bf16.mxu0 0
      %6346 = vmatpush1.bf16.msra.mxu0 0
      %6347 = vmatprep.subr.bf16.mxu0 0
      %6348 = vmatpush1.bf16.msra.mxu0 0
      %6349 = vmatprep.subr.bf16.mxu0 0
      %6350 = vmatpush1.bf16.msra.mxu0 0
      %6351 = vmatprep.subr.bf16.mxu0 0
      %6352 = vmatpush1.bf16.msra.mxu0 0
      %6353 = vmatprep.subr.bf16.mxu0 0
      %6354 = vmatpush1.bf16.msra.mxu0 0
      %6355 = vmatprep.subr.bf16.mxu0 0
      %6356 = vmatpush1.bf16.msra.mxu0 0
      %6357 = vmatprep.subr.bf16.mxu0 0
      %6358 = vmatpush1.bf16.msra.mxu0 0
      %6359 = vmatprep.mubr.bf16.mxu0 0
      %6360 = vmatmul.mubr.bf16.gmra.mrb[0].mxu0 %v6247
      %v6361 = vpop.f32.mrb[0].mxu0
      %v6362 = vadd.f32 0.0, %v6361
      %v6363 = vpop.f32.mrb[0].mxu0
      %v6364 = vpop.f32.mrb[0].mxu0
      %v6365 = vadd.f32 0.0, %v6364
      %v6366 = vpop.f32.mrb[0].mxu0
      %6367 = vmatprep.mubr.bf16.mxu0 0
      %6368 = vmatmul.mubr.bf16.gmra.mrb[0].mxu0 %v6248
      %v6369 = vpop.f32.mrb[0].mxu0
      %v6370 = vadd.f32 0.0, %v6369
      %v6371 = vpop.f32.mrb[0].mxu0
      %v6372 = vpop.f32.mrb[0].mxu0
      %v6373 = vadd.f32 0.0, %v6372
      %v6374 = vpop.f32.mrb[0].mxu0
      %6375 = vmatprep.mubr.bf16.mxu0 0
      %6376 = vmatmul.mubr.bf16.gmra.mrb[0].mxu0 %v6249
      %v6377 = vpop.f32.mrb[0].mxu0
      %v6378 = vadd.f32 0.0, %v6377
      %v6379 = vpop.f32.mrb[0].mxu0
      %v6380 = vpop.f32.mrb[0].mxu0
      %v6381 = vadd.f32 0.0, %v6380
      %v6382 = vpop.f32.mrb[0].mxu0
      %6383 = vmatprep.mubr.bf16.mxu0 0
      %6384 = vmatmul.mubr.bf16.gmra.mrb[0].mxu0 %v6250
      %v6385 = vpop.f32.mrb[0].mxu0
      %v6386 = vadd.f32 0.0, %v6385
      %v6387 = vpop.f32.mrb[0].mxu0
      %v6388 = vpop.f32.mrb[0].mxu0
      %v6389 = vadd.f32 0.0, %v6388
      %v6390 = vpop.f32.mrb[0].mxu0
      %6391 = vmatprep.mubr.bf16.mxu0 0
      %6392 = vmatmul.mubr.bf16.gmra.mrb[0].mxu0 %v6251
      %v6393 = vpop.f32.mrb[0].mxu0
      %v6394 = vadd.f32 0.0, %v6393
      %v6395 = vpop.f32.mrb[0].mxu0
      %v6396 = vpop.f32.mrb[0].mxu0
      %v6397 = vadd.f32 0.0, %v6396
      %v6398 = vpop.f32.mrb[0].mxu0
      %6399 = vmatprep.mubr.bf16.mxu0 0
      %6400 = vmatmul.mubr.bf16.gmra.mrb[0].mxu0 %v6252
      %v6401 = vpop.f32.mrb[0].mxu0
      %v6402 = vadd.f32 0.0, %v6401
      %v6403 = vpop.f32.mrb[0].mxu0
      %v6404 = vpop.f32.mrb[0].mxu0
      %v6405 = vadd.f32 0.0, %v6404
      %v6406 = vpop.f32.mrb[0].mxu0
      %6407 = vmatprep.mubr.bf16.mxu0 0
      %6408 = vmatmul.mubr.bf16.gmra.mrb[0].mxu0 %v6253
      %v6409 = vpop.f32.mrb[0].mxu0
      %v6410 = vadd.f32 0.0, %v6409
      %v6411 = vpop.f32.mrb[0].mxu0
      %v6412 = vpop.f32.mrb[0].mxu0
      %v6413 = vadd.f32 0.0, %v6412
      %v6414 = vpop.f32.mrb[0].mxu0
      %6415 = vmatprep.mubr.bf16.mxu0 0
      %6416 = vmatmul.mubr.bf16.gmra.mrb[0].mxu0 %v6254
      %v6417 = vpop.f32.mrb[0].mxu0
      %v6418 = vadd.f32 0.0, %v6417
      %v6419 = vpop.f32.mrb[0].mxu0
      %v6420 = vpop.f32.mrb[0].mxu0
      %v6421 = vadd.f32 0.0, %v6420
      %v6422 = vpop.f32.mrb[0].mxu0
      %6423 = vmatprep.mubr.bf16.mxu0 0
      %6424 = vmatmul.mubr.bf16.gmra.mrb[0].mxu0 %v6255
      %v6425 = vpop.f32.mrb[0].mxu0
      %v6426 = vadd.f32 0.0, %v6425
      %v6427 = vpop.f32.mrb[0].mxu0
      %v6428 = vpop.f32.mrb[0].mxu0
      %v6429 = vadd.f32 0.0, %v6428
      %v6430 = vpop.f32.mrb[0].mxu0
      %6431 = vmatprep.mubr.bf16.mxu0 0
      %6432 = vmatmul.mubr.bf16.gmra.mrb[0].mxu0 %v6256
      %v6433 = vpop.f32.mrb[0].mxu0
      %v6434 = vadd.f32 0.0, %v6433
      %v6435 = vpop.f32.mrb[0].mxu0
      %v6436 = vpop.f32.mrb[0].mxu0
      %v6437 = vadd.f32 0.0, %v6436
      %v6438 = vpop.f32.mrb[0].mxu0
      %6439 = vmatprep.mubr.bf16.mxu0 0
      %6440 = vmatmul.mubr.bf16.gmra.mrb[0].mxu0 %v6257
      %v6441 = vpop.f32.mrb[0].mxu0
      %v6442 = vadd.f32 0.0, %v6441
      %v6443 = vpop.f32.mrb[0].mxu0
      %v6444 = vpop.f32.mrb[0].mxu0
      %v6445 = vadd.f32 0.0, %v6444
      %v6446 = vpop.f32.mrb[0].mxu0
      %6447 = vmatprep.mubr.bf16.mxu0 0
      %6448 = vmatmul.mubr.bf16.gmra.mrb[0].mxu0 %v6258
      %v6449 = vpop.f32.mrb[0].mxu0
      %v6450 = vadd.f32 0.0, %v6449
      %v6451 = vpop.f32.mrb[0].mxu0
      %v6452 = vpop.f32.mrb[0].mxu0
      %v6453 = vadd.f32 0.0, %v6452
      %v6454 = vpop.f32.mrb[0].mxu0
      %6455 = vmatprep.mubr.bf16.mxu0 0
      %6456 = vmatmul.mubr.bf16.gmra.mrb[0].mxu0 %v6259
      %v6457 = vpop.f32.mrb[0].mxu0
      %v6458 = vadd.f32 0.0, %v6457
      %v6459 = vpop.f32.mrb[0].mxu0
      %v6460 = vpop.f32.mrb[0].mxu0
      %v6461 = vadd.f32 0.0, %v6460
      %v6462 = vpop.f32.mrb[0].mxu0
      %6463 = vmatprep.mubr.bf16.mxu0 0
      %6464 = vmatmul.mubr.bf16.gmra.mrb[0].mxu0 %v6260
      %v6465 = vpop.f32.mrb[0].mxu0
      %v6466 = vadd.f32 0.0, %v6465
      %v6467 = vpop.f32.mrb[0].mxu0
      %v6468 = vpop.f32.mrb[0].mxu0
      %v6469 = vadd.f32 0.0, %v6468
      %v6470 = vpop.f32.mrb[0].mxu0
      %6471 = vmatprep.mubr.bf16.mxu0 0
      %6472 = vmatmul.mubr.bf16.gmra.mrb[0].mxu0 %v6261
      %v6473 = vpop.f32.mrb[0].mxu0
      %v6474 = vadd.f32 0.0, %v6473
      %v6475 = vpop.f32.mrb[0].mxu0
      %v6476 = vpop.f32.mrb[0].mxu0
      %v6477 = vadd.f32 0.0, %v6476
      %v6478 = vpop.f32.mrb[0].mxu0
      %6479 = vmatprep.mubr.bf16.mxu0 0
      %6480 = vmatmul.mubr.bf16.gmra.mrb[0].mxu0 %v6262
      %v6481 = vpop.f32.mrb[0].mxu0
      %v6482 = vadd.f32 0.0, %v6481
      %v6483 = vpop.f32.mrb[0].mxu0
      %v6484 = vpop.f32.mrb[0].mxu0
      %v6485 = vadd.f32 0.0, %v6484
      %v6486 = vpop.f32.mrb[0].mxu0
      %6487 = vdwg.mxu0
      %v6488 = vadd.f32 %v442, %v6362
      %v6489 = vadd.f32 %v443, %v6365
      %v6490 = vadd.f32 %v444, %v6370
      %v6491 = vadd.f32 %v445, %v6373
      %v6492 = vadd.f32 %v446, %v6378
      %v6493 = vadd.f32 %v447, %v6381
      %v6494 = vadd.f32 %v448, %v6386
      %v6495 = vadd.f32 %v449, %v6389
      %v6496 = vadd.f32 %v450, %v6394
      %v6497 = vadd.f32 %v451, %v6397
      %v6498 = vadd.f32 %v452, %v6402
      %v6499 = vadd.f32 %v453, %v6405
      %v6500 = vadd.f32 %v454, %v6410
      %v6501 = vadd.f32 %v455, %v6413
      %v6502 = vadd.f32 %v456, %v6418
      %v6503 = vadd.f32 %v457, %v6421
      %v6504 = vadd.f32 %v458, %v6426
      %v6505 = vadd.f32 %v459, %v6429
      %v6506 = vadd.f32 %v460, %v6434
      %v6507 = vadd.f32 %v461, %v6437
      %v6508 = vadd.f32 %v462, %v6442
      %v6509 = vadd.f32 %v463, %v6445
      %v6510 = vadd.f32 %v464, %v6450
      %v6511 = vadd.f32 %v465, %v6453
      %v6512 = vadd.f32 %v466, %v6458
      %v6513 = vadd.f32 %v467, %v6461
      %v6514 = vadd.f32 %v468, %v6466
      %v6515 = vadd.f32 %v469, %v6469
      %v6516 = vadd.f32 %v470, %v6474
      %v6517 = vadd.f32 %v471, %v6477
      %v6518 = vadd.f32 %v472, %v6482
      %v6519 = vadd.f32 %v473, %v6485
      %v6520 = vld [vmem:[%s6] sm:$0x1]
      %v6522 = vlaneseq
      %v6523 = vshrl.u32 %v6522, 7
      %v6524 = vsub.s32 0, %v6523
      %v6525 = vrot.slane %v6520, %v6524
      %v6527 = vadd.f32 %v6488, %v6525
      %v6528 = vadd.f32 %v6489, %v6525
      %v6529 = vadd.f32 %v6490, %v6525
      %v6530 = vadd.f32 %v6491, %v6525
      %v6531 = vadd.f32 %v6492, %v6525
      %v6532 = vadd.f32 %v6493, %v6525
      %v6533 = vadd.f32 %v6494, %v6525
      %v6534 = vadd.f32 %v6495, %v6525
      %v6535 = vadd.f32 %v6496, %v6525
      %v6536 = vadd.f32 %v6497, %v6525
      %v6537 = vadd.f32 %v6498, %v6525
      %v6538 = vadd.f32 %v6499, %v6525
      %v6539 = vadd.f32 %v6500, %v6525
      %v6540 = vadd.f32 %v6501, %v6525
      %v6541 = vadd.f32 %v6502, %v6525
      %v6542 = vadd.f32 %v6503, %v6525
      %v6543 = vadd.f32 %v6504, %v6525
      %v6544 = vadd.f32 %v6505, %v6525
      %v6545 = vadd.f32 %v6506, %v6525
      %v6546 = vadd.f32 %v6507, %v6525
      %v6547 = vadd.f32 %v6508, %v6525
      %v6548 = vadd.f32 %v6509, %v6525
      %v6549 = vadd.f32 %v6510, %v6525
      %v6550 = vadd.f32 %v6511, %v6525
      %v6551 = vadd.f32 %v6512, %v6525
      %v6552 = vadd.f32 %v6513, %v6525
      %v6553 = vadd.f32 %v6514, %v6525
      %v6554 = vadd.f32 %v6515, %v6525
      %v6555 = vadd.f32 %v6516, %v6525
      %v6556 = vadd.f32 %v6517, %v6525
      %v6557 = vadd.f32 %v6518, %v6525
      %v6558 = vadd.f32 %v6519, %v6525
      %v6559 = vld [vmem:[%s7] sm:$0x1]
      %v6560 = vld [vmem:[%s8] sm:$0x1]
      %6561 = vadd.xlane.f32.xlu0 %v6527
      %v6562 = vpop.xlane.xlu0 %6561
      %6563 = vadd.xlane.f32.xlu0 %v6528
      %v6564 = vpop.xlane.xlu0 %6563
      %6565 = vadd.xlane.f32.xlu0 %v6529
      %v6566 = vpop.xlane.xlu0 %6565
      %6567 = vadd.xlane.f32.xlu0 %v6530
      %v6568 = vpop.xlane.xlu0 %6567
      %6569 = vadd.xlane.f32.xlu0 %v6531
      %v6570 = vpop.xlane.xlu0 %6569
      %6571 = vadd.xlane.f32.xlu0 %v6532
      %v6572 = vpop.xlane.xlu0 %6571
      %6573 = vadd.xlane.f32.xlu0 %v6533
      %v6574 = vpop.xlane.xlu0 %6573
      %6575 = vadd.xlane.f32.xlu0 %v6534
      %v6576 = vpop.xlane.xlu0 %6575
      %6577 = vadd.xlane.f32.xlu0 %v6535
      %v6578 = vpop.xlane.xlu0 %6577
      %6579 = vadd.xlane.f32.xlu0 %v6536
      %v6580 = vpop.xlane.xlu0 %6579
      %6581 = vadd.xlane.f32.xlu0 %v6537
      %v6582 = vpop.xlane.xlu0 %6581
      %6583 = vadd.xlane.f32.xlu0 %v6538
      %v6584 = vpop.xlane.xlu0 %6583
      %6585 = vadd.xlane.f32.xlu0 %v6539
      %v6586 = vpop.xlane.xlu0 %6585
      %6587 = vadd.xlane.f32.xlu0 %v6540
      %v6588 = vpop.xlane.xlu0 %6587
      %6589 = vadd.xlane.f32.xlu0 %v6541
      %v6590 = vpop.xlane.xlu0 %6589
      %6591 = vadd.xlane.f32.xlu0 %v6542
      %v6592 = vpop.xlane.xlu0 %6591
      %6593 = vadd.xlane.f32.xlu0 %v6543
      %v6594 = vpop.xlane.xlu0 %6593
      %6595 = vadd.xlane.f32.xlu0 %v6544
      %v6596 = vpop.xlane.xlu0 %6595
      %6597 = vadd.xlane.f32.xlu0 %v6545
      %v6598 = vpop.xlane.xlu0 %6597
      %6599 = vadd.xlane.f32.xlu0 %v6546
      %v6600 = vpop.xlane.xlu0 %6599
      %6601 = vadd.xlane.f32.xlu0 %v6547
      %v6602 = vpop.xlane.xlu0 %6601
      %6603 = vadd.xlane.f32.xlu0 %v6548
      %v6604 = vpop.xlane.xlu0 %6603
      %6605 = vadd.xlane.f32.xlu0 %v6549
      %v6606 = vpop.xlane.xlu0 %6605
      %6607 = vadd.xlane.f32.xlu0 %v6550
      %v6608 = vpop.xlane.xlu0 %6607
      %6609 = vadd.xlane.f32.xlu0 %v6551
      %v6610 = vpop.xlane.xlu0 %6609
      %6611 = vadd.xlane.f32.xlu0 %v6552
      %v6612 = vpop.xlane.xlu0 %6611
      %6613 = vadd.xlane.f32.xlu0 %v6553
      %v6614 = vpop.xlane.xlu0 %6613
      %6615 = vadd.xlane.f32.xlu0 %v6554
      %v6616 = vpop.xlane.xlu0 %6615
      %6617 = vadd.xlane.f32.xlu0 %v6555
      %v6618 = vpop.xlane.xlu0 %6617
      %6619 = vadd.xlane.f32.xlu0 %v6556
      %v6620 = vpop.xlane.xlu0 %6619
      %6621 = vadd.xlane.f32.xlu0 %v6557
      %v6622 = vpop.xlane.xlu0 %6621
      %6623 = vadd.xlane.f32.xlu0 %v6558
      %v6624 = vpop.xlane.xlu0 %6623
      %v6625 = vmul.f32 %v6562, %v540
      %v6626 = vmul.f32 %v6564, %v540
      %v6627 = vmul.f32 %v6566, %v540
      %v6628 = vmul.f32 %v6568, %v540
      %v6629 = vmul.f32 %v6570, %v540
      %v6630 = vmul.f32 %v6572, %v540
      %v6631 = vmul.f32 %v6574, %v540
      %v6632 = vmul.f32 %v6576, %v540
      %v6633 = vmul.f32 %v6578, %v540
      %v6634 = vmul.f32 %v6580, %v540
      %v6635 = vmul.f32 %v6582, %v540
      %v6636 = vmul.f32 %v6584, %v540
      %v6637 = vmul.f32 %v6586, %v540
      %v6638 = vmul.f32 %v6588, %v540
      %v6639 = vmul.f32 %v6590, %v540
      %v6640 = vmul.f32 %v6592, %v540
      %v6641 = vmul.f32 %v6594, %v540
      %v6642 = vmul.f32 %v6596, %v540
      %v6643 = vmul.f32 %v6598, %v540
      %v6644 = vmul.f32 %v6600, %v540
      %v6645 = vmul.f32 %v6602, %v540
      %v6646 = vmul.f32 %v6604, %v540
      %v6647 = vmul.f32 %v6606, %v540
      %v6648 = vmul.f32 %v6608, %v540
      %v6649 = vmul.f32 %v6610, %v540
      %v6650 = vmul.f32 %v6612, %v540
      %v6651 = vmul.f32 %v6614, %v540
      %v6652 = vmul.f32 %v6616, %v540
      %v6653 = vmul.f32 %v6618, %v540
      %v6654 = vmul.f32 %v6620, %v540
      %v6655 = vmul.f32 %v6622, %v540
      %v6656 = vmul.f32 %v6624, %v540
      %v6657 = vsub.f32 %v6527, %v6625
      %v6658 = vsub.f32 %v6528, %v6626
      %v6659 = vsub.f32 %v6529, %v6627
      %v6660 = vsub.f32 %v6530, %v6628
      %v6661 = vsub.f32 %v6531, %v6629
      %v6662 = vsub.f32 %v6532, %v6630
      %v6663 = vsub.f32 %v6533, %v6631
      %v6664 = vsub.f32 %v6534, %v6632
      %v6665 = vsub.f32 %v6535, %v6633
      %v6666 = vsub.f32 %v6536, %v6634
      %v6667 = vsub.f32 %v6537, %v6635
      %v6668 = vsub.f32 %v6538, %v6636
      %v6669 = vsub.f32 %v6539, %v6637
      %v6670 = vsub.f32 %v6540, %v6638
      %v6671 = vsub.f32 %v6541, %v6639
      %v6672 = vsub.f32 %v6542, %v6640
      %v6673 = vsub.f32 %v6543, %v6641
      %v6674 = vsub.f32 %v6544, %v6642
      %v6675 = vsub.f32 %v6545, %v6643
      %v6676 = vsub.f32 %v6546, %v6644
      %v6677 = vsub.f32 %v6547, %v6645
      %v6678 = vsub.f32 %v6548, %v6646
      %v6679 = vsub.f32 %v6549, %v6647
      %v6680 = vsub.f32 %v6550, %v6648
      %v6681 = vsub.f32 %v6551, %v6649
      %v6682 = vsub.f32 %v6552, %v6650
      %v6683 = vsub.f32 %v6553, %v6651
      %v6684 = vsub.f32 %v6554, %v6652
      %v6685 = vsub.f32 %v6555, %v6653
      %v6686 = vsub.f32 %v6556, %v6654
      %v6687 = vsub.f32 %v6557, %v6655
      %v6688 = vsub.f32 %v6558, %v6656
      %v6689 = vmul.f32 %v6657, %v6657
      %v6690 = vmul.f32 %v6658, %v6658
      %v6691 = vmul.f32 %v6659, %v6659
      %v6692 = vmul.f32 %v6660, %v6660
      %v6693 = vmul.f32 %v6661, %v6661
      %v6694 = vmul.f32 %v6662, %v6662
      %v6695 = vmul.f32 %v6663, %v6663
      %v6696 = vmul.f32 %v6664, %v6664
      %v6697 = vmul.f32 %v6665, %v6665
      %v6698 = vmul.f32 %v6666, %v6666
      %v6699 = vmul.f32 %v6667, %v6667
      %v6700 = vmul.f32 %v6668, %v6668
      %v6701 = vmul.f32 %v6669, %v6669
      %v6702 = vmul.f32 %v6670, %v6670
      %v6703 = vmul.f32 %v6671, %v6671
      %v6704 = vmul.f32 %v6672, %v6672
      %v6705 = vmul.f32 %v6673, %v6673
      %v6706 = vmul.f32 %v6674, %v6674
      %v6707 = vmul.f32 %v6675, %v6675
      %v6708 = vmul.f32 %v6676, %v6676
      %v6709 = vmul.f32 %v6677, %v6677
      %v6710 = vmul.f32 %v6678, %v6678
      %v6711 = vmul.f32 %v6679, %v6679
      %v6712 = vmul.f32 %v6680, %v6680
      %v6713 = vmul.f32 %v6681, %v6681
      %v6714 = vmul.f32 %v6682, %v6682
      %v6715 = vmul.f32 %v6683, %v6683
      %v6716 = vmul.f32 %v6684, %v6684
      %v6717 = vmul.f32 %v6685, %v6685
      %v6718 = vmul.f32 %v6686, %v6686
      %v6719 = vmul.f32 %v6687, %v6687
      %v6720 = vmul.f32 %v6688, %v6688
      %6721 = vadd.xlane.f32.xlu0 %v6689
      %v6722 = vpop.xlane.xlu0 %6721
      %6723 = vadd.xlane.f32.xlu0 %v6690
      %v6724 = vpop.xlane.xlu0 %6723
      %6725 = vadd.xlane.f32.xlu0 %v6691
      %v6726 = vpop.xlane.xlu0 %6725
      %6727 = vadd.xlane.f32.xlu0 %v6692
      %v6728 = vpop.xlane.xlu0 %6727
      %6729 = vadd.xlane.f32.xlu0 %v6693
      %v6730 = vpop.xlane.xlu0 %6729
      %6731 = vadd.xlane.f32.xlu0 %v6694
      %v6732 = vpop.xlane.xlu0 %6731
      %6733 = vadd.xlane.f32.xlu0 %v6695
      %v6734 = vpop.xlane.xlu0 %6733
      %6735 = vadd.xlane.f32.xlu0 %v6696
      %v6736 = vpop.xlane.xlu0 %6735
      %6737 = vadd.xlane.f32.xlu0 %v6697
      %v6738 = vpop.xlane.xlu0 %6737
      %6739 = vadd.xlane.f32.xlu0 %v6698
      %v6740 = vpop.xlane.xlu0 %6739
      %6741 = vadd.xlane.f32.xlu0 %v6699
      %v6742 = vpop.xlane.xlu0 %6741
      %6743 = vadd.xlane.f32.xlu0 %v6700
      %v6744 = vpop.xlane.xlu0 %6743
      %6745 = vadd.xlane.f32.xlu0 %v6701
      %v6746 = vpop.xlane.xlu0 %6745
      %6747 = vadd.xlane.f32.xlu0 %v6702
      %v6748 = vpop.xlane.xlu0 %6747
      %6749 = vadd.xlane.f32.xlu0 %v6703
      %v6750 = vpop.xlane.xlu0 %6749
      %6751 = vadd.xlane.f32.xlu0 %v6704
      %v6752 = vpop.xlane.xlu0 %6751
      %6753 = vadd.xlane.f32.xlu0 %v6705
      %v6754 = vpop.xlane.xlu0 %6753
      %6755 = vadd.xlane.f32.xlu0 %v6706
      %v6756 = vpop.xlane.xlu0 %6755
      %6757 = vadd.xlane.f32.xlu0 %v6707
      %v6758 = vpop.xlane.xlu0 %6757
      %6759 = vadd.xlane.f32.xlu0 %v6708
      %v6760 = vpop.xlane.xlu0 %6759
      %6761 = vadd.xlane.f32.xlu0 %v6709
      %v6762 = vpop.xlane.xlu0 %6761
      %6763 = vadd.xlane.f32.xlu0 %v6710
      %v6764 = vpop.xlane.xlu0 %6763
      %6765 = vadd.xlane.f32.xlu0 %v6711
      %v6766 = vpop.xlane.xlu0 %6765
      %6767 = vadd.xlane.f32.xlu0 %v6712
      %v6768 = vpop.xlane.xlu0 %6767
      %6769 = vadd.xlane.f32.xlu0 %v6713
      %v6770 = vpop.xlane.xlu0 %6769
      %6771 = vadd.xlane.f32.xlu0 %v6714
      %v6772 = vpop.xlane.xlu0 %6771
      %6773 = vadd.xlane.f32.xlu0 %v6715
      %v6774 = vpop.xlane.xlu0 %6773
      %6775 = vadd.xlane.f32.xlu0 %v6716
      %v6776 = vpop.xlane.xlu0 %6775
      %6777 = vadd.xlane.f32.xlu0 %v6717
      %v6778 = vpop.xlane.xlu0 %6777
      %6779 = vadd.xlane.f32.xlu0 %v6718
      %v6780 = vpop.xlane.xlu0 %6779
      %6781 = vadd.xlane.f32.xlu0 %v6719
      %v6782 = vpop.xlane.xlu0 %6781
      %6783 = vadd.xlane.f32.xlu0 %v6720
      %v6784 = vpop.xlane.xlu0 %6783
      %v6785 = vmul.f32 %v6722, %v540
      %v6786 = vmul.f32 %v6724, %v540
      %v6787 = vmul.f32 %v6726, %v540
      %v6788 = vmul.f32 %v6728, %v540
      %v6789 = vmul.f32 %v6730, %v540
      %v6790 = vmul.f32 %v6732, %v540
      %v6791 = vmul.f32 %v6734, %v540
      %v6792 = vmul.f32 %v6736, %v540
      %v6793 = vmul.f32 %v6738, %v540
      %v6794 = vmul.f32 %v6740, %v540
      %v6795 = vmul.f32 %v6742, %v540
      %v6796 = vmul.f32 %v6744, %v540
      %v6797 = vmul.f32 %v6746, %v540
      %v6798 = vmul.f32 %v6748, %v540
      %v6799 = vmul.f32 %v6750, %v540
      %v6800 = vmul.f32 %v6752, %v540
      %v6801 = vmul.f32 %v6754, %v540
      %v6802 = vmul.f32 %v6756, %v540
      %v6803 = vmul.f32 %v6758, %v540
      %v6804 = vmul.f32 %v6760, %v540
      %v6805 = vmul.f32 %v6762, %v540
      %v6806 = vmul.f32 %v6764, %v540
      %v6807 = vmul.f32 %v6766, %v540
      %v6808 = vmul.f32 %v6768, %v540
      %v6809 = vmul.f32 %v6770, %v540
      %v6810 = vmul.f32 %v6772, %v540
      %v6811 = vmul.f32 %v6774, %v540
      %v6812 = vmul.f32 %v6776, %v540
      %v6813 = vmul.f32 %v6778, %v540
      %v6814 = vmul.f32 %v6780, %v540
      %v6815 = vmul.f32 %v6782, %v540
      %v6816 = vmul.f32 %v6784, %v540
      %v6817 = vadd.f32 %v6785, 1e-06
      %v6818 = vadd.f32 %v6786, 1e-06
      %v6819 = vadd.f32 %v6787, 1e-06
      %v6820 = vadd.f32 %v6788, 1e-06
      %v6821 = vadd.f32 %v6789, 1e-06
      %v6822 = vadd.f32 %v6790, 1e-06
      %v6823 = vadd.f32 %v6791, 1e-06
      %v6824 = vadd.f32 %v6792, 1e-06
      %v6825 = vadd.f32 %v6793, 1e-06
      %v6826 = vadd.f32 %v6794, 1e-06
      %v6827 = vadd.f32 %v6795, 1e-06
      %v6828 = vadd.f32 %v6796, 1e-06
      %v6829 = vadd.f32 %v6797, 1e-06
      %v6830 = vadd.f32 %v6798, 1e-06
      %v6831 = vadd.f32 %v6799, 1e-06
      %v6832 = vadd.f32 %v6800, 1e-06
      %v6833 = vadd.f32 %v6801, 1e-06
      %v6834 = vadd.f32 %v6802, 1e-06
      %v6835 = vadd.f32 %v6803, 1e-06
      %v6836 = vadd.f32 %v6804, 1e-06
      %v6837 = vadd.f32 %v6805, 1e-06
      %v6838 = vadd.f32 %v6806, 1e-06
      %v6839 = vadd.f32 %v6807, 1e-06
      %v6840 = vadd.f32 %v6808, 1e-06
      %v6841 = vadd.f32 %v6809, 1e-06
      %v6842 = vadd.f32 %v6810, 1e-06
      %v6843 = vadd.f32 %v6811, 1e-06
      %v6844 = vadd.f32 %v6812, 1e-06
      %v6845 = vadd.f32 %v6813, 1e-06
      %v6846 = vadd.f32 %v6814, 1e-06
      %v6847 = vadd.f32 %v6815, 1e-06
      %v6848 = vadd.f32 %v6816, 1e-06
      %v6849 = vrsqrt.pop %v6817
      %v6850 = vrsqrt.pop %v6818
      %v6851 = vrsqrt.pop %v6819
      %v6852 = vrsqrt.pop %v6820
      %v6853 = vrsqrt.pop %v6821
      %v6854 = vrsqrt.pop %v6822
      %v6855 = vrsqrt.pop %v6823
      %v6856 = vrsqrt.pop %v6824
      %v6857 = vrsqrt.pop %v6825
      %v6858 = vrsqrt.pop %v6826
      %v6859 = vrsqrt.pop %v6827
      %v6860 = vrsqrt.pop %v6828
      %v6861 = vrsqrt.pop %v6829
      %v6862 = vrsqrt.pop %v6830
      %v6863 = vrsqrt.pop %v6831
      %v6864 = vrsqrt.pop %v6832
      %v6865 = vrsqrt.pop %v6833
      %v6866 = vrsqrt.pop %v6834
      %v6867 = vrsqrt.pop %v6835
      %v6868 = vrsqrt.pop %v6836
      %v6869 = vrsqrt.pop %v6837
      %v6870 = vrsqrt.pop %v6838
      %v6871 = vrsqrt.pop %v6839
      %v6872 = vrsqrt.pop %v6840
      %v6873 = vrsqrt.pop %v6841
      %v6874 = vrsqrt.pop %v6842
      %v6875 = vrsqrt.pop %v6843
      %v6876 = vrsqrt.pop %v6844
      %v6877 = vrsqrt.pop %v6845
      %v6878 = vrsqrt.pop %v6846
      %v6879 = vrsqrt.pop %v6847
      %v6880 = vrsqrt.pop %v6848
      %v6881 = vmul.f32 %v6657, %v6849
      %v6882 = vmul.f32 %v6658, %v6850
      %v6883 = vmul.f32 %v6659, %v6851
      %v6884 = vmul.f32 %v6660, %v6852
      %v6885 = vmul.f32 %v6661, %v6853
      %v6886 = vmul.f32 %v6662, %v6854
      %v6887 = vmul.f32 %v6663, %v6855
      %v6888 = vmul.f32 %v6664, %v6856
      %v6889 = vmul.f32 %v6665, %v6857
      %v6890 = vmul.f32 %v6666, %v6858
      %v6891 = vmul.f32 %v6667, %v6859
      %v6892 = vmul.f32 %v6668, %v6860
      %v6893 = vmul.f32 %v6669, %v6861
      %v6894 = vmul.f32 %v6670, %v6862
      %v6895 = vmul.f32 %v6671, %v6863
      %v6896 = vmul.f32 %v6672, %v6864
      %v6897 = vmul.f32 %v6673, %v6865
      %v6898 = vmul.f32 %v6674, %v6866
      %v6899 = vmul.f32 %v6675, %v6867
      %v6900 = vmul.f32 %v6676, %v6868
      %v6901 = vmul.f32 %v6677, %v6869
      %v6902 = vmul.f32 %v6678, %v6870
      %v6903 = vmul.f32 %v6679, %v6871
      %v6904 = vmul.f32 %v6680, %v6872
      %v6905 = vmul.f32 %v6681, %v6873
      %v6906 = vmul.f32 %v6682, %v6874
      %v6907 = vmul.f32 %v6683, %v6875
      %v6908 = vmul.f32 %v6684, %v6876
      %v6909 = vmul.f32 %v6685, %v6877
      %v6910 = vmul.f32 %v6686, %v6878
      %v6911 = vmul.f32 %v6687, %v6879
      %v6912 = vmul.f32 %v6688, %v6880
      %v6914 = vlaneseq
      %v6915 = vshrl.u32 %v6914, 7
      %v6916 = vsub.s32 0, %v6915
      %v6917 = vrot.slane %v6559, %v6916
      %v6919 = vmul.f32 %v6881, %v6917
      %v6920 = vmul.f32 %v6882, %v6917
      %v6921 = vmul.f32 %v6883, %v6917
      %v6922 = vmul.f32 %v6884, %v6917
      %v6923 = vmul.f32 %v6885, %v6917
      %v6924 = vmul.f32 %v6886, %v6917
      %v6925 = vmul.f32 %v6887, %v6917
      %v6926 = vmul.f32 %v6888, %v6917
      %v6927 = vmul.f32 %v6889, %v6917
      %v6928 = vmul.f32 %v6890, %v6917
      %v6929 = vmul.f32 %v6891, %v6917
      %v6930 = vmul.f32 %v6892, %v6917
      %v6931 = vmul.f32 %v6893, %v6917
      %v6932 = vmul.f32 %v6894, %v6917
      %v6933 = vmul.f32 %v6895, %v6917
      %v6934 = vmul.f32 %v6896, %v6917
      %v6935 = vmul.f32 %v6897, %v6917
      %v6936 = vmul.f32 %v6898, %v6917
      %v6937 = vmul.f32 %v6899, %v6917
      %v6938 = vmul.f32 %v6900, %v6917
      %v6939 = vmul.f32 %v6901, %v6917
      %v6940 = vmul.f32 %v6902, %v6917
      %v6941 = vmul.f32 %v6903, %v6917
      %v6942 = vmul.f32 %v6904, %v6917
      %v6943 = vmul.f32 %v6905, %v6917
      %v6944 = vmul.f32 %v6906, %v6917
      %v6945 = vmul.f32 %v6907, %v6917
      %v6946 = vmul.f32 %v6908, %v6917
      %v6947 = vmul.f32 %v6909, %v6917
      %v6948 = vmul.f32 %v6910, %v6917
      %v6949 = vmul.f32 %v6911, %v6917
      %v6950 = vmul.f32 %v6912, %v6917
      %v6952 = vlaneseq
      %v6953 = vshrl.u32 %v6952, 7
      %v6954 = vsub.s32 0, %v6953
      %v6955 = vrot.slane %v6560, %v6954
      %v6957 = vadd.f32 %v6919, %v6955
      %v6958 = vadd.f32 %v6920, %v6955
      %v6959 = vadd.f32 %v6921, %v6955
      %v6960 = vadd.f32 %v6922, %v6955
      %v6961 = vadd.f32 %v6923, %v6955
      %v6962 = vadd.f32 %v6924, %v6955
      %v6963 = vadd.f32 %v6925, %v6955
      %v6964 = vadd.f32 %v6926, %v6955
      %v6965 = vadd.f32 %v6927, %v6955
      %v6966 = vadd.f32 %v6928, %v6955
      %v6967 = vadd.f32 %v6929, %v6955
      %v6968 = vadd.f32 %v6930, %v6955
      %v6969 = vadd.f32 %v6931, %v6955
      %v6970 = vadd.f32 %v6932, %v6955
      %v6971 = vadd.f32 %v6933, %v6955
      %v6972 = vadd.f32 %v6934, %v6955
      %v6973 = vadd.f32 %v6935, %v6955
      %v6974 = vadd.f32 %v6936, %v6955
      %v6975 = vadd.f32 %v6937, %v6955
      %v6976 = vadd.f32 %v6938, %v6955
      %v6977 = vadd.f32 %v6939, %v6955
      %v6978 = vadd.f32 %v6940, %v6955
      %v6979 = vadd.f32 %v6941, %v6955
      %v6980 = vadd.f32 %v6942, %v6955
      %v6981 = vadd.f32 %v6943, %v6955
      %v6982 = vadd.f32 %v6944, %v6955
      %v6983 = vadd.f32 %v6945, %v6955
      %v6984 = vadd.f32 %v6946, %v6955
      %v6985 = vadd.f32 %v6947, %v6955
      %v6986 = vadd.f32 %v6948, %v6955
      %v6987 = vadd.f32 %v6949, %v6955
      %v6988 = vadd.f32 %v6950, %v6955
      %v6989 = vpack.c.bf16 %v6958, %v6957
      %v6990 = vpack.c.bf16 %v6960, %v6959
      %v6991 = vpack.c.bf16 %v6962, %v6961
      %v6992 = vpack.c.bf16 %v6964, %v6963
      %v6993 = vpack.c.bf16 %v6966, %v6965
      %v6994 = vpack.c.bf16 %v6968, %v6967
      %v6995 = vpack.c.bf16 %v6970, %v6969
      %v6996 = vpack.c.bf16 %v6972, %v6971
      %v6997 = vpack.c.bf16 %v6974, %v6973
      %v6998 = vpack.c.bf16 %v6976, %v6975
      %v6999 = vpack.c.bf16 %v6978, %v6977
      %v7000 = vpack.c.bf16 %v6980, %v6979
      %v7001 = vpack.c.bf16 %v6982, %v6981
      %v7002 = vpack.c.bf16 %v6984, %v6983
      %v7003 = vpack.c.bf16 %v6986, %v6985
      %v7004 = vpack.c.bf16 %v6988, %v6987
      %v7005 = vld [vmem:[%s9] sm:$0xff]
      %v7006 = vld [vmem:[%s9 + $0x8] sm:$0xff]
      %v7007 = vld [vmem:[%s9 + $0x10] sm:$0xff]
      %v7008 = vld [vmem:[%s9 + $0x18] sm:$0xff]
      %v7009 = vld [vmem:[%s9 + $0x20] sm:$0xff]
      %v7010 = vld [vmem:[%s9 + $0x28] sm:$0xff]
      %v7011 = vld [vmem:[%s9 + $0x30] sm:$0xff]
      %v7012 = vld [vmem:[%s9 + $0x38] sm:$0xff]
      %v7013 = vld [vmem:[%s9 + $0x40] sm:$0xff]
      %v7014 = vld [vmem:[%s9 + $0x48] sm:$0xff]
      %v7015 = vld [vmem:[%s9 + $0x50] sm:$0xff]
      %v7016 = vld [vmem:[%s9 + $0x58] sm:$0xff]
      %v7017 = vld [vmem:[%s9 + $0x60] sm:$0xff]
      %v7018 = vld [vmem:[%s9 + $0x68] sm:$0xff]
      %v7019 = vld [vmem:[%s9 + $0x70] sm:$0xff]
      %v7020 = vld [vmem:[%s9 + $0x78] sm:$0xff]
      %v7021 = vld [vmem:[%s9 + $0x80] sm:$0xff]
      %v7022 = vld [vmem:[%s9 + $0x88] sm:$0xff]
      %v7023 = vld [vmem:[%s9 + $0x90] sm:$0xff]
      %v7024 = vld [vmem:[%s9 + $0x98] sm:$0xff]
      %v7025 = vld [vmem:[%s9 + $0xa0] sm:$0xff]
      %v7026 = vld [vmem:[%s9 + $0xa8] sm:$0xff]
      %v7027 = vld [vmem:[%s9 + $0xb0] sm:$0xff]
      %v7028 = vld [vmem:[%s9 + $0xb8] sm:$0xff]
      %v7029 = vld [vmem:[%s9 + $0xc0] sm:$0xff]
      %v7030 = vld [vmem:[%s9 + $0xc8] sm:$0xff]
      %v7031 = vld [vmem:[%s9 + $0xd0] sm:$0xff]
      %v7032 = vld [vmem:[%s9 + $0xd8] sm:$0xff]
      %v7033 = vld [vmem:[%s9 + $0xe0] sm:$0xff]
      %v7034 = vld [vmem:[%s9 + $0xe8] sm:$0xff]
      %v7035 = vld [vmem:[%s9 + $0xf0] sm:$0xff]
      %v7036 = vld [vmem:[%s9 + $0xf8] sm:$0xff]
      %v7037 = vld [vmem:[%s10] sm:$0xf]
      %v7039 = vlaneseq
      %v7040 = vshrl.u32 %v7039, 7
      %v7041 = vsub.s32 0, %v7040
      %v7042 = vrot.slane %v7037, %v7041
      %v7043 = vlaneseq
      %v7044 = vshrl.u32 %v7043, 7
      %v7045 = vsub.s32 1, %v7044
      %v7046 = vrot.slane %v7037, %v7045
      %v7047 = vlaneseq
      %v7048 = vshrl.u32 %v7047, 7
      %v7049 = vsub.s32 2, %v7048
      %v7050 = vrot.slane %v7037, %v7049
      %v7051 = vlaneseq
      %v7052 = vshrl.u32 %v7051, 7
      %v7053 = vsub.s32 3, %v7052
      %v7054 = vrot.slane %v7037, %v7053
      %v7091 = vunpack.c.l.b16 %v7005
      %v7092 = vunpack.c.h.b16 %v7005
      %v7093 = vunpack.c.l.b16 %v7006
      %v7094 = vunpack.c.h.b16 %v7006
      %v7095 = vunpack.c.l.b16 %v7007
      %v7096 = vunpack.c.h.b16 %v7007
      %v7097 = vunpack.c.l.b16 %v7008
      %v7098 = vunpack.c.h.b16 %v7008
      %v7099 = vunpack.c.l.b16 %v7009
      %v7100 = vunpack.c.h.b16 %v7009
      %v7101 = vunpack.c.l.b16 %v7010
      %v7102 = vunpack.c.h.b16 %v7010
      %v7103 = vunpack.c.l.b16 %v7011
      %v7104 = vunpack.c.h.b16 %v7011
      %v7105 = vunpack.c.l.b16 %v7012
      %v7106 = vunpack.c.h.b16 %v7012
      %v7107 = vunpack.c.l.b16 %v7013
      %v7108 = vunpack.c.h.b16 %v7013
      %v7109 = vunpack.c.l.b16 %v7014
      %v7110 = vunpack.c.h.b16 %v7014
      %v7111 = vunpack.c.l.b16 %v7015
      %v7112 = vunpack.c.h.b16 %v7015
      %v7113 = vunpack.c.l.b16 %v7016
      %v7114 = vunpack.c.h.b16 %v7016
      %v7115 = vunpack.c.l.b16 %v7017
      %v7116 = vunpack.c.h.b16 %v7017
      %v7117 = vunpack.c.l.b16 %v7018
      %v7118 = vunpack.c.h.b16 %v7018
      %v7119 = vunpack.c.l.b16 %v7019
      %v7120 = vunpack.c.h.b16 %v7019
      %v7121 = vunpack.c.l.b16 %v7020
      %v7122 = vunpack.c.h.b16 %v7020
      %v7123 = vunpack.c.l.b16 %v7021
      %v7124 = vunpack.c.h.b16 %v7021
      %v7125 = vunpack.c.l.b16 %v7022
      %v7126 = vunpack.c.h.b16 %v7022
      %v7127 = vunpack.c.l.b16 %v7023
      %v7128 = vunpack.c.h.b16 %v7023
      %v7129 = vunpack.c.l.b16 %v7024
      %v7130 = vunpack.c.h.b16 %v7024
      %v7131 = vunpack.c.l.b16 %v7025
      %v7132 = vunpack.c.h.b16 %v7025
      %v7133 = vunpack.c.l.b16 %v7026
      %v7134 = vunpack.c.h.b16 %v7026
      %v7135 = vunpack.c.l.b16 %v7027
      %v7136 = vunpack.c.h.b16 %v7027
      %v7137 = vunpack.c.l.b16 %v7028
      %v7138 = vunpack.c.h.b16 %v7028
      %v7139 = vunpack.c.l.b16 %v7029
      %v7140 = vunpack.c.h.b16 %v7029
      %v7141 = vunpack.c.l.b16 %v7030
      %v7142 = vunpack.c.h.b16 %v7030
      %v7143 = vunpack.c.l.b16 %v7031
      %v7144 = vunpack.c.h.b16 %v7031
      %v7145 = vunpack.c.l.b16 %v7032
      %v7146 = vunpack.c.h.b16 %v7032
      %v7147 = vunpack.c.l.b16 %v7033
      %v7148 = vunpack.c.h.b16 %v7033
      %v7149 = vunpack.c.l.b16 %v7034
      %v7150 = vunpack.c.h.b16 %v7034
      %v7151 = vunpack.c.l.b16 %v7035
      %v7152 = vunpack.c.h.b16 %v7035
      %v7153 = vunpack.c.l.b16 %v7036
      %v7154 = vunpack.c.h.b16 %v7036
      %v7155 = vpack.c.b16 %v7095, %v7091
      %v7156 = vpack.c.b16 %v7096, %v7092
      %v7157 = vpack.c.b16 %v7097, %v7093
      %v7158 = vpack.c.b16 %v7098, %v7094
      %v7159 = vpack.c.b16 %v7103, %v7099
      %v7160 = vpack.c.b16 %v7104, %v7100
      %v7161 = vpack.c.b16 %v7105, %v7101
      %v7162 = vpack.c.b16 %v7106, %v7102
      %v7163 = vpack.c.b16 %v7111, %v7107
      %v7164 = vpack.c.b16 %v7112, %v7108
      %v7165 = vpack.c.b16 %v7113, %v7109
      %v7166 = vpack.c.b16 %v7114, %v7110
      %v7167 = vpack.c.b16 %v7119, %v7115
      %v7168 = vpack.c.b16 %v7120, %v7116
      %v7169 = vpack.c.b16 %v7121, %v7117
      %v7170 = vpack.c.b16 %v7122, %v7118
      %v7171 = vpack.c.b16 %v7127, %v7123
      %v7172 = vpack.c.b16 %v7128, %v7124
      %v7173 = vpack.c.b16 %v7129, %v7125
      %v7174 = vpack.c.b16 %v7130, %v7126
      %v7175 = vpack.c.b16 %v7135, %v7131
      %v7176 = vpack.c.b16 %v7136, %v7132
      %v7177 = vpack.c.b16 %v7137, %v7133
      %v7178 = vpack.c.b16 %v7138, %v7134
      %v7179 = vpack.c.b16 %v7143, %v7139
      %v7180 = vpack.c.b16 %v7144, %v7140
      %v7181 = vpack.c.b16 %v7145, %v7141
      %v7182 = vpack.c.b16 %v7146, %v7142
      %v7183 = vpack.c.b16 %v7151, %v7147
      %v7184 = vpack.c.b16 %v7152, %v7148
      %v7185 = vpack.c.b16 %v7153, %v7149
      %v7186 = vpack.c.b16 %v7154, %v7150
      %7219 = vmatprep.subr.bf16.mxu0 %v7156
      %7220 = vmatpush1.bf16.msra.mxu0 %v7155
      %7221 = vmatprep.subr.bf16.mxu0 %v7160
      %7222 = vmatpush1.bf16.msra.mxu0 %v7159
      %7223 = vmatprep.subr.bf16.mxu0 %v7164
      %7224 = vmatpush1.bf16.msra.mxu0 %v7163
      %7225 = vmatprep.subr.bf16.mxu0 %v7168
      %7226 = vmatpush1.bf16.msra.mxu0 %v7167
      %7227 = vmatprep.subr.bf16.mxu0 %v7172
      %7228 = vmatpush1.bf16.msra.mxu0 %v7171
      %7229 = vmatprep.subr.bf16.mxu0 %v7176
      %7230 = vmatpush1.bf16.msra.mxu0 %v7175
      %7231 = vmatprep.subr.bf16.mxu0 %v7180
      %7232 = vmatpush1.bf16.msra.mxu0 %v7179
      %7233 = vmatprep.subr.bf16.mxu0 %v7184
      %7234 = vmatpush1.bf16.msra.mxu0 %v7183
      %7235 = vmatprep.subr.bf16.mxu0 0
      %7236 = vmatpush1.bf16.msra.mxu0 0
      %7237 = vmatprep.subr.bf16.mxu0 0
      %7238 = vmatpush1.bf16.msra.mxu0 0
      %7239 = vmatprep.subr.bf16.mxu0 0
      %7240 = vmatpush1.bf16.msra.mxu0 0
      %7241 = vmatprep.subr.bf16.mxu0 0
      %7242 = vmatpush1.bf16.msra.mxu0 0
      %7243 = vmatprep.subr.bf16.mxu0 0
      %7244 = vmatpush1.bf16.msra.mxu0 0
      %7245 = vmatprep.subr.bf16.mxu0 0
      %7246 = vmatpush1.bf16.msra.mxu0 0
      %7247 = vmatprep.subr.bf16.mxu0 0
      %7248 = vmatpush1.bf16.msra.mxu0 0
      %7249 = vmatprep.subr.bf16.mxu0 0
      %7250 = vmatpush1.bf16.msra.mxu0 0
      %7251 = vmatprep.mubr.bf16.mxu0 0
      %7252 = vmatmul.mubr.bf16.gmra.mrb[0].mxu0 %v6989
      %v7253 = vpop.f32.mrb[0].mxu0
      %v7254 = vadd.f32 %v7042, %v7253
      %v7255 = vpop.f32.mrb[0].mxu0
      %v7256 = vadd.f32 %v7046, %v7255
      %v7257 = vpop.f32.mrb[0].mxu0
      %v7258 = vadd.f32 %v7042, %v7257
      %v7259 = vpop.f32.mrb[0].mxu0
      %v7260 = vadd.f32 %v7046, %v7259
      %7261 = vmatprep.mubr.bf16.mxu0 0
      %7262 = vmatmul.mubr.bf16.gmra.mrb[0].mxu0 %v6990
      %v7263 = vpop.f32.mrb[0].mxu0
      %v7264 = vadd.f32 %v7042, %v7263
      %v7265 = vpop.f32.mrb[0].mxu0
      %v7266 = vadd.f32 %v7046, %v7265
      %v7267 = vpop.f32.mrb[0].mxu0
      %v7268 = vadd.f32 %v7042, %v7267
      %v7269 = vpop.f32.mrb[0].mxu0
      %v7270 = vadd.f32 %v7046, %v7269
      %7271 = vmatprep.mubr.bf16.mxu0 0
      %7272 = vmatmul.mubr.bf16.gmra.mrb[0].mxu0 %v6991
      %v7273 = vpop.f32.mrb[0].mxu0
      %v7274 = vadd.f32 %v7042, %v7273
      %v7275 = vpop.f32.mrb[0].mxu0
      %v7276 = vadd.f32 %v7046, %v7275
      %v7277 = vpop.f32.mrb[0].mxu0
      %v7278 = vadd.f32 %v7042, %v7277
      %v7279 = vpop.f32.mrb[0].mxu0
      %v7280 = vadd.f32 %v7046, %v7279
      %7281 = vmatprep.mubr.bf16.mxu0 0
      %7282 = vmatmul.mubr.bf16.gmra.mrb[0].mxu0 %v6992
      %v7283 = vpop.f32.mrb[0].mxu0
      %v7284 = vadd.f32 %v7042, %v7283
      %v7285 = vpop.f32.mrb[0].mxu0
      %v7286 = vadd.f32 %v7046, %v7285
      %v7287 = vpop.f32.mrb[0].mxu0
      %v7288 = vadd.f32 %v7042, %v7287
      %v7289 = vpop.f32.mrb[0].mxu0
      %v7290 = vadd.f32 %v7046, %v7289
      %7291 = vmatprep.mubr.bf16.mxu0 0
      %7292 = vmatmul.mubr.bf16.gmra.mrb[0].mxu0 %v6993
      %v7293 = vpop.f32.mrb[0].mxu0
      %v7294 = vadd.f32 %v7042, %v7293
      %v7295 = vpop.f32.mrb[0].mxu0
      %v7296 = vadd.f32 %v7046, %v7295
      %v7297 = vpop.f32.mrb[0].mxu0
      %v7298 = vadd.f32 %v7042, %v7297
      %v7299 = vpop.f32.mrb[0].mxu0
      %v7300 = vadd.f32 %v7046, %v7299
      %7301 = vmatprep.mubr.bf16.mxu0 0
      %7302 = vmatmul.mubr.bf16.gmra.mrb[0].mxu0 %v6994
      %v7303 = vpop.f32.mrb[0].mxu0
      %v7304 = vadd.f32 %v7042, %v7303
      %v7305 = vpop.f32.mrb[0].mxu0
      %v7306 = vadd.f32 %v7046, %v7305
      %v7307 = vpop.f32.mrb[0].mxu0
      %v7308 = vadd.f32 %v7042, %v7307
      %v7309 = vpop.f32.mrb[0].mxu0
      %v7310 = vadd.f32 %v7046, %v7309
      %7311 = vmatprep.mubr.bf16.mxu0 0
      %7312 = vmatmul.mubr.bf16.gmra.mrb[0].mxu0 %v6995
      %v7313 = vpop.f32.mrb[0].mxu0
      %v7314 = vadd.f32 %v7042, %v7313
      %v7315 = vpop.f32.mrb[0].mxu0
      %v7316 = vadd.f32 %v7046, %v7315
      %v7317 = vpop.f32.mrb[0].mxu0
      %v7318 = vadd.f32 %v7042, %v7317
      %v7319 = vpop.f32.mrb[0].mxu0
      %v7320 = vadd.f32 %v7046, %v7319
      %7321 = vmatprep.mubr.bf16.mxu0 0
      %7322 = vmatmul.mubr.bf16.gmra.mrb[0].mxu0 %v6996
      %v7323 = vpop.f32.mrb[0].mxu0
      %v7324 = vadd.f32 %v7042, %v7323
      %v7325 = vpop.f32.mrb[0].mxu0
      %v7326 = vadd.f32 %v7046, %v7325
      %v7327 = vpop.f32.mrb[0].mxu0
      %v7328 = vadd.f32 %v7042, %v7327
      %v7329 = vpop.f32.mrb[0].mxu0
      %v7330 = vadd.f32 %v7046, %v7329
      %7331 = vmatprep.mubr.bf16.mxu0 0
      %7332 = vmatmul.mubr.bf16.gmra.mrb[0].mxu0 %v6997
      %v7333 = vpop.f32.mrb[0].mxu0
      %v7334 = vadd.f32 %v7042, %v7333
      %v7335 = vpop.f32.mrb[0].mxu0
      %v7336 = vadd.f32 %v7046, %v7335
      %v7337 = vpop.f32.mrb[0].mxu0
      %v7338 = vadd.f32 %v7042, %v7337
      %v7339 = vpop.f32.mrb[0].mxu0
      %v7340 = vadd.f32 %v7046, %v7339
      %7341 = vmatprep.mubr.bf16.mxu0 0
      %7342 = vmatmul.mubr.bf16.gmra.mrb[0].mxu0 %v6998
      %v7343 = vpop.f32.mrb[0].mxu0
      %v7344 = vadd.f32 %v7042, %v7343
      %v7345 = vpop.f32.mrb[0].mxu0
      %v7346 = vadd.f32 %v7046, %v7345
      %v7347 = vpop.f32.mrb[0].mxu0
      %v7348 = vadd.f32 %v7042, %v7347
      %v7349 = vpop.f32.mrb[0].mxu0
      %v7350 = vadd.f32 %v7046, %v7349
      %7351 = vmatprep.mubr.bf16.mxu0 0
      %7352 = vmatmul.mubr.bf16.gmra.mrb[0].mxu0 %v6999
      %v7353 = vpop.f32.mrb[0].mxu0
      %v7354 = vadd.f32 %v7042, %v7353
      %v7355 = vpop.f32.mrb[0].mxu0
      %v7356 = vadd.f32 %v7046, %v7355
      %v7357 = vpop.f32.mrb[0].mxu0
      %v7358 = vadd.f32 %v7042, %v7357
      %v7359 = vpop.f32.mrb[0].mxu0
      %v7360 = vadd.f32 %v7046, %v7359
      %7361 = vmatprep.mubr.bf16.mxu0 0
      %7362 = vmatmul.mubr.bf16.gmra.mrb[0].mxu0 %v7000
      %v7363 = vpop.f32.mrb[0].mxu0
      %v7364 = vadd.f32 %v7042, %v7363
      %v7365 = vpop.f32.mrb[0].mxu0
      %v7366 = vadd.f32 %v7046, %v7365
      %v7367 = vpop.f32.mrb[0].mxu0
      %v7368 = vadd.f32 %v7042, %v7367
      %v7369 = vpop.f32.mrb[0].mxu0
      %v7370 = vadd.f32 %v7046, %v7369
      %7371 = vmatprep.mubr.bf16.mxu0 0
      %7372 = vmatmul.mubr.bf16.gmra.mrb[0].mxu0 %v7001
      %v7373 = vpop.f32.mrb[0].mxu0
      %v7374 = vadd.f32 %v7042, %v7373
      %v7375 = vpop.f32.mrb[0].mxu0
      %v7376 = vadd.f32 %v7046, %v7375
      %v7377 = vpop.f32.mrb[0].mxu0
      %v7378 = vadd.f32 %v7042, %v7377
      %v7379 = vpop.f32.mrb[0].mxu0
      %v7380 = vadd.f32 %v7046, %v7379
      %7381 = vmatprep.mubr.bf16.mxu0 0
      %7382 = vmatmul.mubr.bf16.gmra.mrb[0].mxu0 %v7002
      %v7383 = vpop.f32.mrb[0].mxu0
      %v7384 = vadd.f32 %v7042, %v7383
      %v7385 = vpop.f32.mrb[0].mxu0
      %v7386 = vadd.f32 %v7046, %v7385
      %v7387 = vpop.f32.mrb[0].mxu0
      %v7388 = vadd.f32 %v7042, %v7387
      %v7389 = vpop.f32.mrb[0].mxu0
      %v7390 = vadd.f32 %v7046, %v7389
      %7391 = vmatprep.mubr.bf16.mxu0 0
      %7392 = vmatmul.mubr.bf16.gmra.mrb[0].mxu0 %v7003
      %v7393 = vpop.f32.mrb[0].mxu0
      %v7394 = vadd.f32 %v7042, %v7393
      %v7395 = vpop.f32.mrb[0].mxu0
      %v7396 = vadd.f32 %v7046, %v7395
      %v7397 = vpop.f32.mrb[0].mxu0
      %v7398 = vadd.f32 %v7042, %v7397
      %v7399 = vpop.f32.mrb[0].mxu0
      %v7400 = vadd.f32 %v7046, %v7399
      %7401 = vmatprep.mubr.bf16.mxu0 0
      %7402 = vmatmul.mubr.bf16.gmra.mrb[0].mxu0 %v7004
      %v7403 = vpop.f32.mrb[0].mxu0
      %v7404 = vadd.f32 %v7042, %v7403
      %v7405 = vpop.f32.mrb[0].mxu0
      %v7406 = vadd.f32 %v7046, %v7405
      %v7407 = vpop.f32.mrb[0].mxu0
      %v7408 = vadd.f32 %v7042, %v7407
      %v7409 = vpop.f32.mrb[0].mxu0
      %v7410 = vadd.f32 %v7046, %v7409
      %7411 = vdwg.mxu0
      %7412 = vmatprep.subr.bf16.mxu0 %v7158
      %7413 = vmatpush1.bf16.msra.mxu0 %v7157
      %7414 = vmatprep.subr.bf16.mxu0 %v7162
      %7415 = vmatpush1.bf16.msra.mxu0 %v7161
      %7416 = vmatprep.subr.bf16.mxu0 %v7166
      %7417 = vmatpush1.bf16.msra.mxu0 %v7165
      %7418 = vmatprep.subr.bf16.mxu0 %v7170
      %7419 = vmatpush1.bf16.msra.mxu0 %v7169
      %7420 = vmatprep.subr.bf16.mxu0 %v7174
      %7421 = vmatpush1.bf16.msra.mxu0 %v7173
      %7422 = vmatprep.subr.bf16.mxu0 %v7178
      %7423 = vmatpush1.bf16.msra.mxu0 %v7177
      %7424 = vmatprep.subr.bf16.mxu0 %v7182
      %7425 = vmatpush1.bf16.msra.mxu0 %v7181
      %7426 = vmatprep.subr.bf16.mxu0 %v7186
      %7427 = vmatpush1.bf16.msra.mxu0 %v7185
      %7428 = vmatprep.subr.bf16.mxu0 0
      %7429 = vmatpush1.bf16.msra.mxu0 0
      %7430 = vmatprep.subr.bf16.mxu0 0
      %7431 = vmatpush1.bf16.msra.mxu0 0
      %7432 = vmatprep.subr.bf16.mxu0 0
      %7433 = vmatpush1.bf16.msra.mxu0 0
      %7434 = vmatprep.subr.bf16.mxu0 0
      %7435 = vmatpush1.bf16.msra.mxu0 0
      %7436 = vmatprep.subr.bf16.mxu0 0
      %7437 = vmatpush1.bf16.msra.mxu0 0
      %7438 = vmatprep.subr.bf16.mxu0 0
      %7439 = vmatpush1.bf16.msra.mxu0 0
      %7440 = vmatprep.subr.bf16.mxu0 0
      %7441 = vmatpush1.bf16.msra.mxu0 0
      %7442 = vmatprep.subr.bf16.mxu0 0
      %7443 = vmatpush1.bf16.msra.mxu0 0
      %7444 = vmatprep.mubr.bf16.mxu0 0
      %7445 = vmatmul.mubr.bf16.gmra.mrb[0].mxu0 %v6989
      %v7446 = vpop.f32.mrb[0].mxu0
      %v7447 = vadd.f32 %v7050, %v7446
      %v7448 = vpop.f32.mrb[0].mxu0
      %v7449 = vadd.f32 %v7054, %v7448
      %v7450 = vpop.f32.mrb[0].mxu0
      %v7451 = vadd.f32 %v7050, %v7450
      %v7452 = vpop.f32.mrb[0].mxu0
      %v7453 = vadd.f32 %v7054, %v7452
      %7454 = vmatprep.mubr.bf16.mxu0 0
      %7455 = vmatmul.mubr.bf16.gmra.mrb[0].mxu0 %v6990
      %v7456 = vpop.f32.mrb[0].mxu0
      %v7457 = vadd.f32 %v7050, %v7456
      %v7458 = vpop.f32.mrb[0].mxu0
      %v7459 = vadd.f32 %v7054, %v7458
      %v7460 = vpop.f32.mrb[0].mxu0
      %v7461 = vadd.f32 %v7050, %v7460
      %v7462 = vpop.f32.mrb[0].mxu0
      %v7463 = vadd.f32 %v7054, %v7462
      %7464 = vmatprep.mubr.bf16.mxu0 0
      %7465 = vmatmul.mubr.bf16.gmra.mrb[0].mxu0 %v6991
      %v7466 = vpop.f32.mrb[0].mxu0
      %v7467 = vadd.f32 %v7050, %v7466
      %v7468 = vpop.f32.mrb[0].mxu0
      %v7469 = vadd.f32 %v7054, %v7468
      %v7470 = vpop.f32.mrb[0].mxu0
      %v7471 = vadd.f32 %v7050, %v7470
      %v7472 = vpop.f32.mrb[0].mxu0
      %v7473 = vadd.f32 %v7054, %v7472
      %7474 = vmatprep.mubr.bf16.mxu0 0
      %7475 = vmatmul.mubr.bf16.gmra.mrb[0].mxu0 %v6992
      %v7476 = vpop.f32.mrb[0].mxu0
      %v7477 = vadd.f32 %v7050, %v7476
      %v7478 = vpop.f32.mrb[0].mxu0
      %v7479 = vadd.f32 %v7054, %v7478
      %v7480 = vpop.f32.mrb[0].mxu0
      %v7481 = vadd.f32 %v7050, %v7480
      %v7482 = vpop.f32.mrb[0].mxu0
      %v7483 = vadd.f32 %v7054, %v7482
      %7484 = vmatprep.mubr.bf16.mxu0 0
      %7485 = vmatmul.mubr.bf16.gmra.mrb[0].mxu0 %v6993
      %v7486 = vpop.f32.mrb[0].mxu0
      %v7487 = vadd.f32 %v7050, %v7486
      %v7488 = vpop.f32.mrb[0].mxu0
      %v7489 = vadd.f32 %v7054, %v7488
      %v7490 = vpop.f32.mrb[0].mxu0
      %v7491 = vadd.f32 %v7050, %v7490
      %v7492 = vpop.f32.mrb[0].mxu0
      %v7493 = vadd.f32 %v7054, %v7492
      %7494 = vmatprep.mubr.bf16.mxu0 0
      %7495 = vmatmul.mubr.bf16.gmra.mrb[0].mxu0 %v6994
      %v7496 = vpop.f32.mrb[0].mxu0
      %v7497 = vadd.f32 %v7050, %v7496
      %v7498 = vpop.f32.mrb[0].mxu0
      %v7499 = vadd.f32 %v7054, %v7498
      %v7500 = vpop.f32.mrb[0].mxu0
      %v7501 = vadd.f32 %v7050, %v7500
      %v7502 = vpop.f32.mrb[0].mxu0
      %v7503 = vadd.f32 %v7054, %v7502
      %7504 = vmatprep.mubr.bf16.mxu0 0
      %7505 = vmatmul.mubr.bf16.gmra.mrb[0].mxu0 %v6995
      %v7506 = vpop.f32.mrb[0].mxu0
      %v7507 = vadd.f32 %v7050, %v7506
      %v7508 = vpop.f32.mrb[0].mxu0
      %v7509 = vadd.f32 %v7054, %v7508
      %v7510 = vpop.f32.mrb[0].mxu0
      %v7511 = vadd.f32 %v7050, %v7510
      %v7512 = vpop.f32.mrb[0].mxu0
      %v7513 = vadd.f32 %v7054, %v7512
      %7514 = vmatprep.mubr.bf16.mxu0 0
      %7515 = vmatmul.mubr.bf16.gmra.mrb[0].mxu0 %v6996
      %v7516 = vpop.f32.mrb[0].mxu0
      %v7517 = vadd.f32 %v7050, %v7516
      %v7518 = vpop.f32.mrb[0].mxu0
      %v7519 = vadd.f32 %v7054, %v7518
      %v7520 = vpop.f32.mrb[0].mxu0
      %v7521 = vadd.f32 %v7050, %v7520
      %v7522 = vpop.f32.mrb[0].mxu0
      %v7523 = vadd.f32 %v7054, %v7522
      %7524 = vmatprep.mubr.bf16.mxu0 0
      %7525 = vmatmul.mubr.bf16.gmra.mrb[0].mxu0 %v6997
      %v7526 = vpop.f32.mrb[0].mxu0
      %v7527 = vadd.f32 %v7050, %v7526
      %v7528 = vpop.f32.mrb[0].mxu0
      %v7529 = vadd.f32 %v7054, %v7528
      %v7530 = vpop.f32.mrb[0].mxu0
      %v7531 = vadd.f32 %v7050, %v7530
      %v7532 = vpop.f32.mrb[0].mxu0
      %v7533 = vadd.f32 %v7054, %v7532
      %7534 = vmatprep.mubr.bf16.mxu0 0
      %7535 = vmatmul.mubr.bf16.gmra.mrb[0].mxu0 %v6998
      %v7536 = vpop.f32.mrb[0].mxu0
      %v7537 = vadd.f32 %v7050, %v7536
      %v7538 = vpop.f32.mrb[0].mxu0
      %v7539 = vadd.f32 %v7054, %v7538
      %v7540 = vpop.f32.mrb[0].mxu0
      %v7541 = vadd.f32 %v7050, %v7540
      %v7542 = vpop.f32.mrb[0].mxu0
      %v7543 = vadd.f32 %v7054, %v7542
      %7544 = vmatprep.mubr.bf16.mxu0 0
      %7545 = vmatmul.mubr.bf16.gmra.mrb[0].mxu0 %v6999
      %v7546 = vpop.f32.mrb[0].mxu0
      %v7547 = vadd.f32 %v7050, %v7546
      %v7548 = vpop.f32.mrb[0].mxu0
      %v7549 = vadd.f32 %v7054, %v7548
      %v7550 = vpop.f32.mrb[0].mxu0
      %v7551 = vadd.f32 %v7050, %v7550
      %v7552 = vpop.f32.mrb[0].mxu0
      %v7553 = vadd.f32 %v7054, %v7552
      %7554 = vmatprep.mubr.bf16.mxu0 0
      %7555 = vmatmul.mubr.bf16.gmra.mrb[0].mxu0 %v7000
      %v7556 = vpop.f32.mrb[0].mxu0
      %v7557 = vadd.f32 %v7050, %v7556
      %v7558 = vpop.f32.mrb[0].mxu0
      %v7559 = vadd.f32 %v7054, %v7558
      %v7560 = vpop.f32.mrb[0].mxu0
      %v7561 = vadd.f32 %v7050, %v7560
      %v7562 = vpop.f32.mrb[0].mxu0
      %v7563 = vadd.f32 %v7054, %v7562
      %7564 = vmatprep.mubr.bf16.mxu0 0
      %7565 = vmatmul.mubr.bf16.gmra.mrb[0].mxu0 %v7001
      %v7566 = vpop.f32.mrb[0].mxu0
      %v7567 = vadd.f32 %v7050, %v7566
      %v7568 = vpop.f32.mrb[0].mxu0
      %v7569 = vadd.f32 %v7054, %v7568
      %v7570 = vpop.f32.mrb[0].mxu0
      %v7571 = vadd.f32 %v7050, %v7570
      %v7572 = vpop.f32.mrb[0].mxu0
      %v7573 = vadd.f32 %v7054, %v7572
      %7574 = vmatprep.mubr.bf16.mxu0 0
      %7575 = vmatmul.mubr.bf16.gmra.mrb[0].mxu0 %v7002
      %v7576 = vpop.f32.mrb[0].mxu0
      %v7577 = vadd.f32 %v7050, %v7576
      %v7578 = vpop.f32.mrb[0].mxu0
      %v7579 = vadd.f32 %v7054, %v7578
      %v7580 = vpop.f32.mrb[0].mxu0
      %v7581 = vadd.f32 %v7050, %v7580
      %v7582 = vpop.f32.mrb[0].mxu0
      %v7583 = vadd.f32 %v7054, %v7582
      %7584 = vmatprep.mubr.bf16.mxu0 0
      %7585 = vmatmul.mubr.bf16.gmra.mrb[0].mxu0 %v7003
      %v7586 = vpop.f32.mrb[0].mxu0
      %v7587 = vadd.f32 %v7050, %v7586
      %v7588 = vpop.f32.mrb[0].mxu0
      %v7589 = vadd.f32 %v7054, %v7588
      %v7590 = vpop.f32.mrb[0].mxu0
      %v7591 = vadd.f32 %v7050, %v7590
      %v7592 = vpop.f32.mrb[0].mxu0
      %v7593 = vadd.f32 %v7054, %v7592
      %7594 = vmatprep.mubr.bf16.mxu0 0
      %7595 = vmatmul.mubr.bf16.gmra.mrb[0].mxu0 %v7004
      %v7596 = vpop.f32.mrb[0].mxu0
      %v7597 = vadd.f32 %v7050, %v7596
      %v7598 = vpop.f32.mrb[0].mxu0
      %v7599 = vadd.f32 %v7054, %v7598
      %v7600 = vpop.f32.mrb[0].mxu0
      %v7601 = vadd.f32 %v7050, %v7600
      %v7602 = vpop.f32.mrb[0].mxu0
      %v7603 = vadd.f32 %v7054, %v7602
      %7604 = vdwg.mxu0
      %v7605 = vmul.f32 %v7254, 0.5
      %v7606 = vmul.f32 %v7256, 0.5
      %v7607 = vmul.f32 %v7447, 0.5
      %v7608 = vmul.f32 %v7449, 0.5
      %v7609 = vmul.f32 %v7258, 0.5
      %v7610 = vmul.f32 %v7260, 0.5
      %v7611 = vmul.f32 %v7451, 0.5
      %v7612 = vmul.f32 %v7453, 0.5
      %v7613 = vmul.f32 %v7264, 0.5
      %v7614 = vmul.f32 %v7266, 0.5
      %v7615 = vmul.f32 %v7457, 0.5
      %v7616 = vmul.f32 %v7459, 0.5
      %v7617 = vmul.f32 %v7268, 0.5
      %v7618 = vmul.f32 %v7270, 0.5
      %v7619 = vmul.f32 %v7461, 0.5
      %v7620 = vmul.f32 %v7463, 0.5
      %v7621 = vmul.f32 %v7274, 0.5
      %v7622 = vmul.f32 %v7276, 0.5
      %v7623 = vmul.f32 %v7467, 0.5
      %v7624 = vmul.f32 %v7469, 0.5
      %v7625 = vmul.f32 %v7278, 0.5
      %v7626 = vmul.f32 %v7280, 0.5
      %v7627 = vmul.f32 %v7471, 0.5
      %v7628 = vmul.f32 %v7473, 0.5
      %v7629 = vmul.f32 %v7284, 0.5
      %v7630 = vmul.f32 %v7286, 0.5
      %v7631 = vmul.f32 %v7477, 0.5
      %v7632 = vmul.f32 %v7479, 0.5
      %v7633 = vmul.f32 %v7288, 0.5
      %v7634 = vmul.f32 %v7290, 0.5
      %v7635 = vmul.f32 %v7481, 0.5
      %v7636 = vmul.f32 %v7483, 0.5
      %v7637 = vmul.f32 %v7294, 0.5
      %v7638 = vmul.f32 %v7296, 0.5
      %v7639 = vmul.f32 %v7487, 0.5
      %v7640 = vmul.f32 %v7489, 0.5
      %v7641 = vmul.f32 %v7298, 0.5
      %v7642 = vmul.f32 %v7300, 0.5
      %v7643 = vmul.f32 %v7491, 0.5
      %v7644 = vmul.f32 %v7493, 0.5
      %v7645 = vmul.f32 %v7304, 0.5
      %v7646 = vmul.f32 %v7306, 0.5
      %v7647 = vmul.f32 %v7497, 0.5
      %v7648 = vmul.f32 %v7499, 0.5
      %v7649 = vmul.f32 %v7308, 0.5
      %v7650 = vmul.f32 %v7310, 0.5
      %v7651 = vmul.f32 %v7501, 0.5
      %v7652 = vmul.f32 %v7503, 0.5
      %v7653 = vmul.f32 %v7314, 0.5
      %v7654 = vmul.f32 %v7316, 0.5
      %v7655 = vmul.f32 %v7507, 0.5
      %v7656 = vmul.f32 %v7509, 0.5
      %v7657 = vmul.f32 %v7318, 0.5
      %v7658 = vmul.f32 %v7320, 0.5
      %v7659 = vmul.f32 %v7511, 0.5
      %v7660 = vmul.f32 %v7513, 0.5
      %v7661 = vmul.f32 %v7324, 0.5
      %v7662 = vmul.f32 %v7326, 0.5
      %v7663 = vmul.f32 %v7517, 0.5
      %v7664 = vmul.f32 %v7519, 0.5
      %v7665 = vmul.f32 %v7328, 0.5
      %v7666 = vmul.f32 %v7330, 0.5
      %v7667 = vmul.f32 %v7521, 0.5
      %v7668 = vmul.f32 %v7523, 0.5
      %v7669 = vmul.f32 %v7334, 0.5
      %v7670 = vmul.f32 %v7336, 0.5
      %v7671 = vmul.f32 %v7527, 0.5
      %v7672 = vmul.f32 %v7529, 0.5
      %v7673 = vmul.f32 %v7338, 0.5
      %v7674 = vmul.f32 %v7340, 0.5
      %v7675 = vmul.f32 %v7531, 0.5
      %v7676 = vmul.f32 %v7533, 0.5
      %v7677 = vmul.f32 %v7344, 0.5
      %v7678 = vmul.f32 %v7346, 0.5
      %v7679 = vmul.f32 %v7537, 0.5
      %v7680 = vmul.f32 %v7539, 0.5
      %v7681 = vmul.f32 %v7348, 0.5
      %v7682 = vmul.f32 %v7350, 0.5
      %v7683 = vmul.f32 %v7541, 0.5
      %v7684 = vmul.f32 %v7543, 0.5
      %v7685 = vmul.f32 %v7354, 0.5
      %v7686 = vmul.f32 %v7356, 0.5
      %v7687 = vmul.f32 %v7547, 0.5
      %v7688 = vmul.f32 %v7549, 0.5
      %v7689 = vmul.f32 %v7358, 0.5
      %v7690 = vmul.f32 %v7360, 0.5
      %v7691 = vmul.f32 %v7551, 0.5
      %v7692 = vmul.f32 %v7553, 0.5
      %v7693 = vmul.f32 %v7364, 0.5
      %v7694 = vmul.f32 %v7366, 0.5
      %v7695 = vmul.f32 %v7557, 0.5
      %v7696 = vmul.f32 %v7559, 0.5
      %v7697 = vmul.f32 %v7368, 0.5
      %v7698 = vmul.f32 %v7370, 0.5
      %v7699 = vmul.f32 %v7561, 0.5
      %v7700 = vmul.f32 %v7563, 0.5
      %v7701 = vmul.f32 %v7374, 0.5
      %v7702 = vmul.f32 %v7376, 0.5
      %v7703 = vmul.f32 %v7567, 0.5
      %v7704 = vmul.f32 %v7569, 0.5
      %v7705 = vmul.f32 %v7378, 0.5
      %v7706 = vmul.f32 %v7380, 0.5
      %v7707 = vmul.f32 %v7571, 0.5
      %v7708 = vmul.f32 %v7573, 0.5
      %v7709 = vmul.f32 %v7384, 0.5
      %v7710 = vmul.f32 %v7386, 0.5
      %v7711 = vmul.f32 %v7577, 0.5
      %v7712 = vmul.f32 %v7579, 0.5
      %v7713 = vmul.f32 %v7388, 0.5
      %v7714 = vmul.f32 %v7390, 0.5
      %v7715 = vmul.f32 %v7581, 0.5
      %v7716 = vmul.f32 %v7583, 0.5
      %v7717 = vmul.f32 %v7394, 0.5
      %v7718 = vmul.f32 %v7396, 0.5
      %v7719 = vmul.f32 %v7587, 0.5
      %v7720 = vmul.f32 %v7589, 0.5
      %v7721 = vmul.f32 %v7398, 0.5
      %v7722 = vmul.f32 %v7400, 0.5
      %v7723 = vmul.f32 %v7591, 0.5
      %v7724 = vmul.f32 %v7593, 0.5
      %v7725 = vmul.f32 %v7404, 0.5
      %v7726 = vmul.f32 %v7406, 0.5
      %v7727 = vmul.f32 %v7597, 0.5
      %v7728 = vmul.f32 %v7599, 0.5
      %v7729 = vmul.f32 %v7408, 0.5
      %v7730 = vmul.f32 %v7410, 0.5
      %v7731 = vmul.f32 %v7601, 0.5
      %v7732 = vmul.f32 %v7603, 0.5
      %v7733 = vmul.f32 %v7254, 0.044715
      %v7734 = vmul.f32 %v7256, 0.044715
      %v7735 = vmul.f32 %v7447, 0.044715
      %v7736 = vmul.f32 %v7449, 0.044715
      %v7737 = vmul.f32 %v7258, 0.044715
      %v7738 = vmul.f32 %v7260, 0.044715
      %v7739 = vmul.f32 %v7451, 0.044715
      %v7740 = vmul.f32 %v7453, 0.044715
      %v7741 = vmul.f32 %v7264, 0.044715
      %v7742 = vmul.f32 %v7266, 0.044715
      %v7743 = vmul.f32 %v7457, 0.044715
      %v7744 = vmul.f32 %v7459, 0.044715
      %v7745 = vmul.f32 %v7268, 0.044715
      %v7746 = vmul.f32 %v7270, 0.044715
      %v7747 = vmul.f32 %v7461, 0.044715
      %v7748 = vmul.f32 %v7463, 0.044715
      %v7749 = vmul.f32 %v7274, 0.044715
      %v7750 = vmul.f32 %v7276, 0.044715
      %v7751 = vmul.f32 %v7467, 0.044715
      %v7752 = vmul.f32 %v7469, 0.044715
      %v7753 = vmul.f32 %v7278, 0.044715
      %v7754 = vmul.f32 %v7280, 0.044715
      %v7755 = vmul.f32 %v7471, 0.044715
      %v7756 = vmul.f32 %v7473, 0.044715
      %v7757 = vmul.f32 %v7284, 0.044715
      %v7758 = vmul.f32 %v7286, 0.044715
      %v7759 = vmul.f32 %v7477, 0.044715
      %v7760 = vmul.f32 %v7479, 0.044715
      %v7761 = vmul.f32 %v7288, 0.044715
      %v7762 = vmul.f32 %v7290, 0.044715
      %v7763 = vmul.f32 %v7481, 0.044715
      %v7764 = vmul.f32 %v7483, 0.044715
      %v7765 = vmul.f32 %v7294, 0.044715
      %v7766 = vmul.f32 %v7296, 0.044715
      %v7767 = vmul.f32 %v7487, 0.044715
      %v7768 = vmul.f32 %v7489, 0.044715
      %v7769 = vmul.f32 %v7298, 0.044715
      %v7770 = vmul.f32 %v7300, 0.044715
      %v7771 = vmul.f32 %v7491, 0.044715
      %v7772 = vmul.f32 %v7493, 0.044715
      %v7773 = vmul.f32 %v7304, 0.044715
      %v7774 = vmul.f32 %v7306, 0.044715
      %v7775 = vmul.f32 %v7497, 0.044715
      %v7776 = vmul.f32 %v7499, 0.044715
      %v7777 = vmul.f32 %v7308, 0.044715
      %v7778 = vmul.f32 %v7310, 0.044715
      %v7779 = vmul.f32 %v7501, 0.044715
      %v7780 = vmul.f32 %v7503, 0.044715
      %v7781 = vmul.f32 %v7314, 0.044715
      %v7782 = vmul.f32 %v7316, 0.044715
      %v7783 = vmul.f32 %v7507, 0.044715
      %v7784 = vmul.f32 %v7509, 0.044715
      %v7785 = vmul.f32 %v7318, 0.044715
      %v7786 = vmul.f32 %v7320, 0.044715
      %v7787 = vmul.f32 %v7511, 0.044715
      %v7788 = vmul.f32 %v7513, 0.044715
      %v7789 = vmul.f32 %v7324, 0.044715
      %v7790 = vmul.f32 %v7326, 0.044715
      %v7791 = vmul.f32 %v7517, 0.044715
      %v7792 = vmul.f32 %v7519, 0.044715
      %v7793 = vmul.f32 %v7328, 0.044715
      %v7794 = vmul.f32 %v7330, 0.044715
      %v7795 = vmul.f32 %v7521, 0.044715
      %v7796 = vmul.f32 %v7523, 0.044715
      %v7797 = vmul.f32 %v7334, 0.044715
      %v7798 = vmul.f32 %v7336, 0.044715
      %v7799 = vmul.f32 %v7527, 0.044715
      %v7800 = vmul.f32 %v7529, 0.044715
      %v7801 = vmul.f32 %v7338, 0.044715
      %v7802 = vmul.f32 %v7340, 0.044715
      %v7803 = vmul.f32 %v7531, 0.044715
      %v7804 = vmul.f32 %v7533, 0.044715
      %v7805 = vmul.f32 %v7344, 0.044715
      %v7806 = vmul.f32 %v7346, 0.044715
      %v7807 = vmul.f32 %v7537, 0.044715
      %v7808 = vmul.f32 %v7539, 0.044715
      %v7809 = vmul.f32 %v7348, 0.044715
      %v7810 = vmul.f32 %v7350, 0.044715
      %v7811 = vmul.f32 %v7541, 0.044715
      %v7812 = vmul.f32 %v7543, 0.044715
      %v7813 = vmul.f32 %v7354, 0.044715
      %v7814 = vmul.f32 %v7356, 0.044715
      %v7815 = vmul.f32 %v7547, 0.044715
      %v7816 = vmul.f32 %v7549, 0.044715
      %v7817 = vmul.f32 %v7358, 0.044715
      %v7818 = vmul.f32 %v7360, 0.044715
      %v7819 = vmul.f32 %v7551, 0.044715
      %v7820 = vmul.f32 %v7553, 0.044715
      %v7821 = vmul.f32 %v7364, 0.044715
      %v7822 = vmul.f32 %v7366, 0.044715
      %v7823 = vmul.f32 %v7557, 0.044715
      %v7824 = vmul.f32 %v7559, 0.044715
      %v7825 = vmul.f32 %v7368, 0.044715
      %v7826 = vmul.f32 %v7370, 0.044715
      %v7827 = vmul.f32 %v7561, 0.044715
      %v7828 = vmul.f32 %v7563, 0.044715
      %v7829 = vmul.f32 %v7374, 0.044715
      %v7830 = vmul.f32 %v7376, 0.044715
      %v7831 = vmul.f32 %v7567, 0.044715
      %v7832 = vmul.f32 %v7569, 0.044715
      %v7833 = vmul.f32 %v7378, 0.044715
      %v7834 = vmul.f32 %v7380, 0.044715
      %v7835 = vmul.f32 %v7571, 0.044715
      %v7836 = vmul.f32 %v7573, 0.044715
      %v7837 = vmul.f32 %v7384, 0.044715
      %v7838 = vmul.f32 %v7386, 0.044715
      %v7839 = vmul.f32 %v7577, 0.044715
      %v7840 = vmul.f32 %v7579, 0.044715
      %v7841 = vmul.f32 %v7388, 0.044715
      %v7842 = vmul.f32 %v7390, 0.044715
      %v7843 = vmul.f32 %v7581, 0.044715
      %v7844 = vmul.f32 %v7583, 0.044715
      %v7845 = vmul.f32 %v7394, 0.044715
      %v7846 = vmul.f32 %v7396, 0.044715
      %v7847 = vmul.f32 %v7587, 0.044715
      %v7848 = vmul.f32 %v7589, 0.044715
      %v7849 = vmul.f32 %v7398, 0.044715
      %v7850 = vmul.f32 %v7400, 0.044715
      %v7851 = vmul.f32 %v7591, 0.044715
      %v7852 = vmul.f32 %v7593, 0.044715
      %v7853 = vmul.f32 %v7404, 0.044715
      %v7854 = vmul.f32 %v7406, 0.044715
      %v7855 = vmul.f32 %v7597, 0.044715
      %v7856 = vmul.f32 %v7599, 0.044715
      %v7857 = vmul.f32 %v7408, 0.044715
      %v7858 = vmul.f32 %v7410, 0.044715
      %v7859 = vmul.f32 %v7601, 0.044715
      %v7860 = vmul.f32 %v7603, 0.044715
      %v7861 = vmul.f32 %v7733, %v7254
      %v7862 = vmul.f32 %v7734, %v7256
      %v7863 = vmul.f32 %v7735, %v7447
      %v7864 = vmul.f32 %v7736, %v7449
      %v7865 = vmul.f32 %v7737, %v7258
      %v7866 = vmul.f32 %v7738, %v7260
      %v7867 = vmul.f32 %v7739, %v7451
      %v7868 = vmul.f32 %v7740, %v7453
      %v7869 = vmul.f32 %v7741, %v7264
      %v7870 = vmul.f32 %v7742, %v7266
      %v7871 = vmul.f32 %v7743, %v7457
      %v7872 = vmul.f32 %v7744, %v7459
      %v7873 = vmul.f32 %v7745, %v7268
      %v7874 = vmul.f32 %v7746, %v7270
      %v7875 = vmul.f32 %v7747, %v7461
      %v7876 = vmul.f32 %v7748, %v7463
      %v7877 = vmul.f32 %v7749, %v7274
      %v7878 = vmul.f32 %v7750, %v7276
      %v7879 = vmul.f32 %v7751, %v7467
      %v7880 = vmul.f32 %v7752, %v7469
      %v7881 = vmul.f32 %v7753, %v7278
      %v7882 = vmul.f32 %v7754, %v7280
      %v7883 = vmul.f32 %v7755, %v7471
      %v7884 = vmul.f32 %v7756, %v7473
      %v7885 = vmul.f32 %v7757, %v7284
      %v7886 = vmul.f32 %v7758, %v7286
      %v7887 = vmul.f32 %v7759, %v7477
      %v7888 = vmul.f32 %v7760, %v7479
      %v7889 = vmul.f32 %v7761, %v7288
      %v7890 = vmul.f32 %v7762, %v7290
      %v7891 = vmul.f32 %v7763, %v7481
      %v7892 = vmul.f32 %v7764, %v7483
      %v7893 = vmul.f32 %v7765, %v7294
      %v7894 = vmul.f32 %v7766, %v7296
      %v7895 = vmul.f32 %v7767, %v7487
      %v7896 = vmul.f32 %v7768, %v7489
      %v7897 = vmul.f32 %v7769, %v7298
      %v7898 = vmul.f32 %v7770, %v7300
      %v7899 = vmul.f32 %v7771, %v7491
      %v7900 = vmul.f32 %v7772, %v7493
      %v7901 = vmul.f32 %v7773, %v7304
      %v7902 = vmul.f32 %v7774, %v7306
      %v7903 = vmul.f32 %v7775, %v7497
      %v7904 = vmul.f32 %v7776, %v7499
      %v7905 = vmul.f32 %v7777, %v7308
      %v7906 = vmul.f32 %v7778, %v7310
      %v7907 = vmul.f32 %v7779, %v7501
      %v7908 = vmul.f32 %v7780, %v7503
      %v7909 = vmul.f32 %v7781, %v7314
      %v7910 = vmul.f32 %v7782, %v7316
      %v7911 = vmul.f32 %v7783, %v7507
      %v7912 = vmul.f32 %v7784, %v7509
      %v7913 = vmul.f32 %v7785, %v7318
      %v7914 = vmul.f32 %v7786, %v7320
      %v7915 = vmul.f32 %v7787, %v7511
      %v7916 = vmul.f32 %v7788, %v7513
      %v7917 = vmul.f32 %v7789, %v7324
      %v7918 = vmul.f32 %v7790, %v7326
      %v7919 = vmul.f32 %v7791, %v7517
      %v7920 = vmul.f32 %v7792, %v7519
      %v7921 = vmul.f32 %v7793, %v7328
      %v7922 = vmul.f32 %v7794, %v7330
      %v7923 = vmul.f32 %v7795, %v7521
      %v7924 = vmul.f32 %v7796, %v7523
      %v7925 = vmul.f32 %v7797, %v7334
      %v7926 = vmul.f32 %v7798, %v7336
      %v7927 = vmul.f32 %v7799, %v7527
      %v7928 = vmul.f32 %v7800, %v7529
      %v7929 = vmul.f32 %v7801, %v7338
      %v7930 = vmul.f32 %v7802, %v7340
      %v7931 = vmul.f32 %v7803, %v7531
      %v7932 = vmul.f32 %v7804, %v7533
      %v7933 = vmul.f32 %v7805, %v7344
      %v7934 = vmul.f32 %v7806, %v7346
      %v7935 = vmul.f32 %v7807, %v7537
      %v7936 = vmul.f32 %v7808, %v7539
      %v7937 = vmul.f32 %v7809, %v7348
      %v7938 = vmul.f32 %v7810, %v7350
      %v7939 = vmul.f32 %v7811, %v7541
      %v7940 = vmul.f32 %v7812, %v7543
      %v7941 = vmul.f32 %v7813, %v7354
      %v7942 = vmul.f32 %v7814, %v7356
      %v7943 = vmul.f32 %v7815, %v7547
      %v7944 = vmul.f32 %v7816, %v7549
      %v7945 = vmul.f32 %v7817, %v7358
      %v7946 = vmul.f32 %v7818, %v7360
      %v7947 = vmul.f32 %v7819, %v7551
      %v7948 = vmul.f32 %v7820, %v7553
      %v7949 = vmul.f32 %v7821, %v7364
      %v7950 = vmul.f32 %v7822, %v7366
      %v7951 = vmul.f32 %v7823, %v7557
      %v7952 = vmul.f32 %v7824, %v7559
      %v7953 = vmul.f32 %v7825, %v7368
      %v7954 = vmul.f32 %v7826, %v7370
      %v7955 = vmul.f32 %v7827, %v7561
      %v7956 = vmul.f32 %v7828, %v7563
      %v7957 = vmul.f32 %v7829, %v7374
      %v7958 = vmul.f32 %v7830, %v7376
      %v7959 = vmul.f32 %v7831, %v7567
      %v7960 = vmul.f32 %v7832, %v7569
      %v7961 = vmul.f32 %v7833, %v7378
      %v7962 = vmul.f32 %v7834, %v7380
      %v7963 = vmul.f32 %v7835, %v7571
      %v7964 = vmul.f32 %v7836, %v7573
      %v7965 = vmul.f32 %v7837, %v7384
      %v7966 = vmul.f32 %v7838, %v7386
      %v7967 = vmul.f32 %v7839, %v7577
      %v7968 = vmul.f32 %v7840, %v7579
      %v7969 = vmul.f32 %v7841, %v7388
      %v7970 = vmul.f32 %v7842, %v7390
      %v7971 = vmul.f32 %v7843, %v7581
      %v7972 = vmul.f32 %v7844, %v7583
      %v7973 = vmul.f32 %v7845, %v7394
      %v7974 = vmul.f32 %v7846, %v7396
      %v7975 = vmul.f32 %v7847, %v7587
      %v7976 = vmul.f32 %v7848, %v7589
      %v7977 = vmul.f32 %v7849, %v7398
      %v7978 = vmul.f32 %v7850, %v7400
      %v7979 = vmul.f32 %v7851, %v7591
      %v7980 = vmul.f32 %v7852, %v7593
      %v7981 = vmul.f32 %v7853, %v7404
      %v7982 = vmul.f32 %v7854, %v7406
      %v7983 = vmul.f32 %v7855, %v7597
      %v7984 = vmul.f32 %v7856, %v7599
      %v7985 = vmul.f32 %v7857, %v7408
      %v7986 = vmul.f32 %v7858, %v7410
      %v7987 = vmul.f32 %v7859, %v7601
      %v7988 = vmul.f32 %v7860, %v7603
      %v7989 = vmul.f32 %v7861, %v7254
      %v7990 = vmul.f32 %v7862, %v7256
      %v7991 = vmul.f32 %v7863, %v7447
      %v7992 = vmul.f32 %v7864, %v7449
      %v7993 = vmul.f32 %v7865, %v7258
      %v7994 = vmul.f32 %v7866, %v7260
      %v7995 = vmul.f32 %v7867, %v7451
      %v7996 = vmul.f32 %v7868, %v7453
      %v7997 = vmul.f32 %v7869, %v7264
      %v7998 = vmul.f32 %v7870, %v7266
      %v7999 = vmul.f32 %v7871, %v7457
      %v8000 = vmul.f32 %v7872, %v7459
      %v8001 = vmul.f32 %v7873, %v7268
      %v8002 = vmul.f32 %v7874, %v7270
      %v8003 = vmul.f32 %v7875, %v7461
      %v8004 = vmul.f32 %v7876, %v7463
      %v8005 = vmul.f32 %v7877, %v7274
      %v8006 = vmul.f32 %v7878, %v7276
      %v8007 = vmul.f32 %v7879, %v7467
      %v8008 = vmul.f32 %v7880, %v7469
      %v8009 = vmul.f32 %v7881, %v7278
      %v8010 = vmul.f32 %v7882, %v7280
      %v8011 = vmul.f32 %v7883, %v7471
      %v8012 = vmul.f32 %v7884, %v7473
      %v8013 = vmul.f32 %v7885, %v7284
      %v8014 = vmul.f32 %v7886, %v7286
      %v8015 = vmul.f32 %v7887, %v7477
      %v8016 = vmul.f32 %v7888, %v7479
      %v8017 = vmul.f32 %v7889, %v7288
      %v8018 = vmul.f32 %v7890, %v7290
      %v8019 = vmul.f32 %v7891, %v7481
      %v8020 = vmul.f32 %v7892, %v7483
      %v8021 = vmul.f32 %v7893, %v7294
      %v8022 = vmul.f32 %v7894, %v7296
      %v8023 = vmul.f32 %v7895, %v7487
      %v8024 = vmul.f32 %v7896, %v7489
      %v8025 = vmul.f32 %v7897, %v7298
      %v8026 = vmul.f32 %v7898, %v7300
      %v8027 = vmul.f32 %v7899, %v7491
      %v8028 = vmul.f32 %v7900, %v7493
      %v8029 = vmul.f32 %v7901, %v7304
      %v8030 = vmul.f32 %v7902, %v7306
      %v8031 = vmul.f32 %v7903, %v7497
      %v8032 = vmul.f32 %v7904, %v7499
      %v8033 = vmul.f32 %v7905, %v7308
      %v8034 = vmul.f32 %v7906, %v7310
      %v8035 = vmul.f32 %v7907, %v7501
      %v8036 = vmul.f32 %v7908, %v7503
      %v8037 = vmul.f32 %v7909, %v7314
      %v8038 = vmul.f32 %v7910, %v7316
      %v8039 = vmul.f32 %v7911, %v7507
      %v8040 = vmul.f32 %v7912, %v7509
      %v8041 = vmul.f32 %v7913, %v7318
      %v8042 = vmul.f32 %v7914, %v7320
      %v8043 = vmul.f32 %v7915, %v7511
      %v8044 = vmul.f32 %v7916, %v7513
      %v8045 = vmul.f32 %v7917, %v7324
      %v8046 = vmul.f32 %v7918, %v7326
      %v8047 = vmul.f32 %v7919, %v7517
      %v8048 = vmul.f32 %v7920, %v7519
      %v8049 = vmul.f32 %v7921, %v7328
      %v8050 = vmul.f32 %v7922, %v7330
      %v8051 = vmul.f32 %v7923, %v7521
      %v8052 = vmul.f32 %v7924, %v7523
      %v8053 = vmul.f32 %v7925, %v7334
      %v8054 = vmul.f32 %v7926, %v7336
      %v8055 = vmul.f32 %v7927, %v7527
      %v8056 = vmul.f32 %v7928, %v7529
      %v8057 = vmul.f32 %v7929, %v7338
      %v8058 = vmul.f32 %v7930, %v7340
      %v8059 = vmul.f32 %v7931, %v7531
      %v8060 = vmul.f32 %v7932, %v7533
      %v8061 = vmul.f32 %v7933, %v7344
      %v8062 = vmul.f32 %v7934, %v7346
      %v8063 = vmul.f32 %v7935, %v7537
      %v8064 = vmul.f32 %v7936, %v7539
      %v8065 = vmul.f32 %v7937, %v7348
      %v8066 = vmul.f32 %v7938, %v7350
      %v8067 = vmul.f32 %v7939, %v7541
      %v8068 = vmul.f32 %v7940, %v7543
      %v8069 = vmul.f32 %v7941, %v7354
      %v8070 = vmul.f32 %v7942, %v7356
      %v8071 = vmul.f32 %v7943, %v7547
      %v8072 = vmul.f32 %v7944, %v7549
      %v8073 = vmul.f32 %v7945, %v7358
      %v8074 = vmul.f32 %v7946, %v7360
      %v8075 = vmul.f32 %v7947, %v7551
      %v8076 = vmul.f32 %v7948, %v7553
      %v8077 = vmul.f32 %v7949, %v7364
      %v8078 = vmul.f32 %v7950, %v7366
      %v8079 = vmul.f32 %v7951, %v7557
      %v8080 = vmul.f32 %v7952, %v7559
      %v8081 = vmul.f32 %v7953, %v7368
      %v8082 = vmul.f32 %v7954, %v7370
      %v8083 = vmul.f32 %v7955, %v7561
      %v8084 = vmul.f32 %v7956, %v7563
      %v8085 = vmul.f32 %v7957, %v7374
      %v8086 = vmul.f32 %v7958, %v7376
      %v8087 = vmul.f32 %v7959, %v7567
      %v8088 = vmul.f32 %v7960, %v7569
      %v8089 = vmul.f32 %v7961, %v7378
      %v8090 = vmul.f32 %v7962, %v7380
      %v8091 = vmul.f32 %v7963, %v7571
      %v8092 = vmul.f32 %v7964, %v7573
      %v8093 = vmul.f32 %v7965, %v7384
      %v8094 = vmul.f32 %v7966, %v7386
      %v8095 = vmul.f32 %v7967, %v7577
      %v8096 = vmul.f32 %v7968, %v7579
      %v8097 = vmul.f32 %v7969, %v7388
      %v8098 = vmul.f32 %v7970, %v7390
      %v8099 = vmul.f32 %v7971, %v7581
      %v8100 = vmul.f32 %v7972, %v7583
      %v8101 = vmul.f32 %v7973, %v7394
      %v8102 = vmul.f32 %v7974, %v7396
      %v8103 = vmul.f32 %v7975, %v7587
      %v8104 = vmul.f32 %v7976, %v7589
      %v8105 = vmul.f32 %v7977, %v7398
      %v8106 = vmul.f32 %v7978, %v7400
      %v8107 = vmul.f32 %v7979, %v7591
      %v8108 = vmul.f32 %v7980, %v7593
      %v8109 = vmul.f32 %v7981, %v7404
      %v8110 = vmul.f32 %v7982, %v7406
      %v8111 = vmul.f32 %v7983, %v7597
      %v8112 = vmul.f32 %v7984, %v7599
      %v8113 = vmul.f32 %v7985, %v7408
      %v8114 = vmul.f32 %v7986, %v7410
      %v8115 = vmul.f32 %v7987, %v7601
      %v8116 = vmul.f32 %v7988, %v7603
      %v8117 = vadd.f32 %v7254, %v7989
      %v8118 = vadd.f32 %v7256, %v7990
      %v8119 = vadd.f32 %v7447, %v7991
      %v8120 = vadd.f32 %v7449, %v7992
      %v8121 = vadd.f32 %v7258, %v7993
      %v8122 = vadd.f32 %v7260, %v7994
      %v8123 = vadd.f32 %v7451, %v7995
      %v8124 = vadd.f32 %v7453, %v7996
      %v8125 = vadd.f32 %v7264, %v7997
      %v8126 = vadd.f32 %v7266, %v7998
      %v8127 = vadd.f32 %v7457, %v7999
      %v8128 = vadd.f32 %v7459, %v8000
      %v8129 = vadd.f32 %v7268, %v8001
      %v8130 = vadd.f32 %v7270, %v8002
      %v8131 = vadd.f32 %v7461, %v8003
      %v8132 = vadd.f32 %v7463, %v8004
      %v8133 = vadd.f32 %v7274, %v8005
      %v8134 = vadd.f32 %v7276, %v8006
      %v8135 = vadd.f32 %v7467, %v8007
      %v8136 = vadd.f32 %v7469, %v8008
      %v8137 = vadd.f32 %v7278, %v8009
      %v8138 = vadd.f32 %v7280, %v8010
      %v8139 = vadd.f32 %v7471, %v8011
      %v8140 = vadd.f32 %v7473, %v8012
      %v8141 = vadd.f32 %v7284, %v8013
      %v8142 = vadd.f32 %v7286, %v8014
      %v8143 = vadd.f32 %v7477, %v8015
      %v8144 = vadd.f32 %v7479, %v8016
      %v8145 = vadd.f32 %v7288, %v8017
      %v8146 = vadd.f32 %v7290, %v8018
      %v8147 = vadd.f32 %v7481, %v8019
      %v8148 = vadd.f32 %v7483, %v8020
      %v8149 = vadd.f32 %v7294, %v8021
      %v8150 = vadd.f32 %v7296, %v8022
      %v8151 = vadd.f32 %v7487, %v8023
      %v8152 = vadd.f32 %v7489, %v8024
      %v8153 = vadd.f32 %v7298, %v8025
      %v8154 = vadd.f32 %v7300, %v8026
      %v8155 = vadd.f32 %v7491, %v8027
      %v8156 = vadd.f32 %v7493, %v8028
      %v8157 = vadd.f32 %v7304, %v8029
      %v8158 = vadd.f32 %v7306, %v8030
      %v8159 = vadd.f32 %v7497, %v8031
      %v8160 = vadd.f32 %v7499, %v8032
      %v8161 = vadd.f32 %v7308, %v8033
      %v8162 = vadd.f32 %v7310, %v8034
      %v8163 = vadd.f32 %v7501, %v8035
      %v8164 = vadd.f32 %v7503, %v8036
      %v8165 = vadd.f32 %v7314, %v8037
      %v8166 = vadd.f32 %v7316, %v8038
      %v8167 = vadd.f32 %v7507, %v8039
      %v8168 = vadd.f32 %v7509, %v8040
      %v8169 = vadd.f32 %v7318, %v8041
      %v8170 = vadd.f32 %v7320, %v8042
      %v8171 = vadd.f32 %v7511, %v8043
      %v8172 = vadd.f32 %v7513, %v8044
      %v8173 = vadd.f32 %v7324, %v8045
      %v8174 = vadd.f32 %v7326, %v8046
      %v8175 = vadd.f32 %v7517, %v8047
      %v8176 = vadd.f32 %v7519, %v8048
      %v8177 = vadd.f32 %v7328, %v8049
      %v8178 = vadd.f32 %v7330, %v8050
      %v8179 = vadd.f32 %v7521, %v8051
      %v8180 = vadd.f32 %v7523, %v8052
      %v8181 = vadd.f32 %v7334, %v8053
      %v8182 = vadd.f32 %v7336, %v8054
      %v8183 = vadd.f32 %v7527, %v8055
      %v8184 = vadd.f32 %v7529, %v8056
      %v8185 = vadd.f32 %v7338, %v8057
      %v8186 = vadd.f32 %v7340, %v8058
      %v8187 = vadd.f32 %v7531, %v8059
      %v8188 = vadd.f32 %v7533, %v8060
      %v8189 = vadd.f32 %v7344, %v8061
      %v8190 = vadd.f32 %v7346, %v8062
      %v8191 = vadd.f32 %v7537, %v8063
      %v8192 = vadd.f32 %v7539, %v8064
      %v8193 = vadd.f32 %v7348, %v8065
      %v8194 = vadd.f32 %v7350, %v8066
      %v8195 = vadd.f32 %v7541, %v8067
      %v8196 = vadd.f32 %v7543, %v8068
      %v8197 = vadd.f32 %v7354, %v8069
      %v8198 = vadd.f32 %v7356, %v8070
      %v8199 = vadd.f32 %v7547, %v8071
      %v8200 = vadd.f32 %v7549, %v8072
      %v8201 = vadd.f32 %v7358, %v8073
      %v8202 = vadd.f32 %v7360, %v8074
      %v8203 = vadd.f32 %v7551, %v8075
      %v8204 = vadd.f32 %v7553, %v8076
      %v8205 = vadd.f32 %v7364, %v8077
      %v8206 = vadd.f32 %v7366, %v8078
      %v8207 = vadd.f32 %v7557, %v8079
      %v8208 = vadd.f32 %v7559, %v8080
      %v8209 = vadd.f32 %v7368, %v8081
      %v8210 = vadd.f32 %v7370, %v8082
      %v8211 = vadd.f32 %v7561, %v8083
      %v8212 = vadd.f32 %v7563, %v8084
      %v8213 = vadd.f32 %v7374, %v8085
      %v8214 = vadd.f32 %v7376, %v8086
      %v8215 = vadd.f32 %v7567, %v8087
      %v8216 = vadd.f32 %v7569, %v8088
      %v8217 = vadd.f32 %v7378, %v8089
      %v8218 = vadd.f32 %v7380, %v8090
      %v8219 = vadd.f32 %v7571, %v8091
      %v8220 = vadd.f32 %v7573, %v8092
      %v8221 = vadd.f32 %v7384, %v8093
      %v8222 = vadd.f32 %v7386, %v8094
      %v8223 = vadd.f32 %v7577, %v8095
      %v8224 = vadd.f32 %v7579, %v8096
      %v8225 = vadd.f32 %v7388, %v8097
      %v8226 = vadd.f32 %v7390, %v8098
      %v8227 = vadd.f32 %v7581, %v8099
      %v8228 = vadd.f32 %v7583, %v8100
      %v8229 = vadd.f32 %v7394, %v8101
      %v8230 = vadd.f32 %v7396, %v8102
      %v8231 = vadd.f32 %v7587, %v8103
      %v8232 = vadd.f32 %v7589, %v8104
      %v8233 = vadd.f32 %v7398, %v8105
      %v8234 = vadd.f32 %v7400, %v8106
      %v8235 = vadd.f32 %v7591, %v8107
      %v8236 = vadd.f32 %v7593, %v8108
      %v8237 = vadd.f32 %v7404, %v8109
      %v8238 = vadd.f32 %v7406, %v8110
      %v8239 = vadd.f32 %v7597, %v8111
      %v8240 = vadd.f32 %v7599, %v8112
      %v8241 = vadd.f32 %v7408, %v8113
      %v8242 = vadd.f32 %v7410, %v8114
      %v8243 = vadd.f32 %v7601, %v8115
      %v8244 = vadd.f32 %v7603, %v8116
      %v8245 = vmul.f32 %v8117, 0.7978846
      %v8246 = vmul.f32 %v8118, 0.7978846
      %v8247 = vmul.f32 %v8119, 0.7978846
      %v8248 = vmul.f32 %v8120, 0.7978846
      %v8249 = vmul.f32 %v8121, 0.7978846
      %v8250 = vmul.f32 %v8122, 0.7978846
      %v8251 = vmul.f32 %v8123, 0.7978846
      %v8252 = vmul.f32 %v8124, 0.7978846
      %v8253 = vmul.f32 %v8125, 0.7978846
      %v8254 = vmul.f32 %v8126, 0.7978846
      %v8255 = vmul.f32 %v8127, 0.7978846
      %v8256 = vmul.f32 %v8128, 0.7978846
      %v8257 = vmul.f32 %v8129, 0.7978846
      %v8258 = vmul.f32 %v8130, 0.7978846
      %v8259 = vmul.f32 %v8131, 0.7978846
      %v8260 = vmul.f32 %v8132, 0.7978846
      %v8261 = vmul.f32 %v8133, 0.7978846
      %v8262 = vmul.f32 %v8134, 0.7978846
      %v8263 = vmul.f32 %v8135, 0.7978846
      %v8264 = vmul.f32 %v8136, 0.7978846
      %v8265 = vmul.f32 %v8137, 0.7978846
      %v8266 = vmul.f32 %v8138, 0.7978846
      %v8267 = vmul.f32 %v8139, 0.7978846
      %v8268 = vmul.f32 %v8140, 0.7978846
      %v8269 = vmul.f32 %v8141, 0.7978846
      %v8270 = vmul.f32 %v8142, 0.7978846
      %v8271 = vmul.f32 %v8143, 0.7978846
      %v8272 = vmul.f32 %v8144, 0.7978846
      %v8273 = vmul.f32 %v8145, 0.7978846
      %v8274 = vmul.f32 %v8146, 0.7978846
      %v8275 = vmul.f32 %v8147, 0.7978846
      %v8276 = vmul.f32 %v8148, 0.7978846
      %v8277 = vmul.f32 %v8149, 0.7978846
      %v8278 = vmul.f32 %v8150, 0.7978846
      %v8279 = vmul.f32 %v8151, 0.7978846
      %v8280 = vmul.f32 %v8152, 0.7978846
      %v8281 = vmul.f32 %v8153, 0.7978846
      %v8282 = vmul.f32 %v8154, 0.7978846
      %v8283 = vmul.f32 %v8155, 0.7978846
      %v8284 = vmul.f32 %v8156, 0.7978846
      %v8285 = vmul.f32 %v8157, 0.7978846
      %v8286 = vmul.f32 %v8158, 0.7978846
      %v8287 = vmul.f32 %v8159, 0.7978846
      %v8288 = vmul.f32 %v8160, 0.7978846
      %v8289 = vmul.f32 %v8161, 0.7978846
      %v8290 = vmul.f32 %v8162, 0.7978846
      %v8291 = vmul.f32 %v8163, 0.7978846
      %v8292 = vmul.f32 %v8164, 0.7978846
      %v8293 = vmul.f32 %v8165, 0.7978846
      %v8294 = vmul.f32 %v8166, 0.7978846
      %v8295 = vmul.f32 %v8167, 0.7978846
      %v8296 = vmul.f32 %v8168, 0.7978846
      %v8297 = vmul.f32 %v8169, 0.7978846
      %v8298 = vmul.f32 %v8170, 0.7978846
      %v8299 = vmul.f32 %v8171, 0.7978846
      %v8300 = vmul.f32 %v8172, 0.7978846
      %v8301 = vmul.f32 %v8173, 0.7978846
      %v8302 = vmul.f32 %v8174, 0.7978846
      %v8303 = vmul.f32 %v8175, 0.7978846
      %v8304 = vmul.f32 %v8176, 0.7978846
      %v8305 = vmul.f32 %v8177, 0.7978846
      %v8306 = vmul.f32 %v8178, 0.7978846
      %v8307 = vmul.f32 %v8179, 0.7978846
      %v8308 = vmul.f32 %v8180, 0.7978846
      %v8309 = vmul.f32 %v8181, 0.7978846
      %v8310 = vmul.f32 %v8182, 0.7978846
      %v8311 = vmul.f32 %v8183, 0.7978846
      %v8312 = vmul.f32 %v8184, 0.7978846
      %v8313 = vmul.f32 %v8185, 0.7978846
      %v8314 = vmul.f32 %v8186, 0.7978846
      %v8315 = vmul.f32 %v8187, 0.7978846
      %v8316 = vmul.f32 %v8188, 0.7978846
      %v8317 = vmul.f32 %v8189, 0.7978846
      %v8318 = vmul.f32 %v8190, 0.7978846
      %v8319 = vmul.f32 %v8191, 0.7978846
      %v8320 = vmul.f32 %v8192, 0.7978846
      %v8321 = vmul.f32 %v8193, 0.7978846
      %v8322 = vmul.f32 %v8194, 0.7978846
      %v8323 = vmul.f32 %v8195, 0.7978846
      %v8324 = vmul.f32 %v8196, 0.7978846
      %v8325 = vmul.f32 %v8197, 0.7978846
      %v8326 = vmul.f32 %v8198, 0.7978846
      %v8327 = vmul.f32 %v8199, 0.7978846
      %v8328 = vmul.f32 %v8200, 0.7978846
      %v8329 = vmul.f32 %v8201, 0.7978846
      %v8330 = vmul.f32 %v8202, 0.7978846
      %v8331 = vmul.f32 %v8203, 0.7978846
      %v8332 = vmul.f32 %v8204, 0.7978846
      %v8333 = vmul.f32 %v8205, 0.7978846
      %v8334 = vmul.f32 %v8206, 0.7978846
      %v8335 = vmul.f32 %v8207, 0.7978846
      %v8336 = vmul.f32 %v8208, 0.7978846
      %v8337 = vmul.f32 %v8209, 0.7978846
      %v8338 = vmul.f32 %v8210, 0.7978846
      %v8339 = vmul.f32 %v8211, 0.7978846
      %v8340 = vmul.f32 %v8212, 0.7978846
      %v8341 = vmul.f32 %v8213, 0.7978846
      %v8342 = vmul.f32 %v8214, 0.7978846
      %v8343 = vmul.f32 %v8215, 0.7978846
      %v8344 = vmul.f32 %v8216, 0.7978846
      %v8345 = vmul.f32 %v8217, 0.7978846
      %v8346 = vmul.f32 %v8218, 0.7978846
      %v8347 = vmul.f32 %v8219, 0.7978846
      %v8348 = vmul.f32 %v8220, 0.7978846
      %v8349 = vmul.f32 %v8221, 0.7978846
      %v8350 = vmul.f32 %v8222, 0.7978846
      %v8351 = vmul.f32 %v8223, 0.7978846
      %v8352 = vmul.f32 %v8224, 0.7978846
      %v8353 = vmul.f32 %v8225, 0.7978846
      %v8354 = vmul.f32 %v8226, 0.7978846
      %v8355 = vmul.f32 %v8227, 0.7978846
      %v8356 = vmul.f32 %v8228, 0.7978846
      %v8357 = vmul.f32 %v8229, 0.7978846
      %v8358 = vmul.f32 %v8230, 0.7978846
      %v8359 = vmul.f32 %v8231, 0.7978846
      %v8360 = vmul.f32 %v8232, 0.7978846
      %v8361 = vmul.f32 %v8233, 0.7978846
      %v8362 = vmul.f32 %v8234, 0.7978846
      %v8363 = vmul.f32 %v8235, 0.7978846
      %v8364 = vmul.f32 %v8236, 0.7978846
      %v8365 = vmul.f32 %v8237, 0.7978846
      %v8366 = vmul.f32 %v8238, 0.7978846
      %v8367 = vmul.f32 %v8239, 0.7978846
      %v8368 = vmul.f32 %v8240, 0.7978846
      %v8369 = vmul.f32 %v8241, 0.7978846
      %v8370 = vmul.f32 %v8242, 0.7978846
      %v8371 = vmul.f32 %v8243, 0.7978846
      %v8372 = vmul.f32 %v8244, 0.7978846
      %v8373 = vtanh.pop %v8245
      %v8374 = vtanh.pop %v8246
      %v8375 = vtanh.pop %v8247
      %v8376 = vtanh.pop %v8248
      %v8377 = vtanh.pop %v8249
      %v8378 = vtanh.pop %v8250
      %v8379 = vtanh.pop %v8251
      %v8380 = vtanh.pop %v8252
      %v8381 = vtanh.pop %v8253
      %v8382 = vtanh.pop %v8254
      %v8383 = vtanh.pop %v8255
      %v8384 = vtanh.pop %v8256
      %v8385 = vtanh.pop %v8257
      %v8386 = vtanh.pop %v8258
      %v8387 = vtanh.pop %v8259
      %v8388 = vtanh.pop %v8260
      %v8389 = vtanh.pop %v8261
      %v8390 = vtanh.pop %v8262
      %v8391 = vtanh.pop %v8263
      %v8392 = vtanh.pop %v8264
      %v8393 = vtanh.pop %v8265
      %v8394 = vtanh.pop %v8266
      %v8395 = vtanh.pop %v8267
      %v8396 = vtanh.pop %v8268
      %v8397 = vtanh.pop %v8269
      %v8398 = vtanh.pop %v8270
      %v8399 = vtanh.pop %v8271
      %v8400 = vtanh.pop %v8272
      %v8401 = vtanh.pop %v8273
      %v8402 = vtanh.pop %v8274
      %v8403 = vtanh.pop %v8275
      %v8404 = vtanh.pop %v8276
      %v8405 = vtanh.pop %v8277
      %v8406 = vtanh.pop %v8278
      %v8407 = vtanh.pop %v8279
      %v8408 = vtanh.pop %v8280
      %v8409 = vtanh.pop %v8281
      %v8410 = vtanh.pop %v8282
      %v8411 = vtanh.pop %v8283
      %v8412 = vtanh.pop %v8284
      %v8413 = vtanh.pop %v8285
      %v8414 = vtanh.pop %v8286
      %v8415 = vtanh.pop %v8287
      %v8416 = vtanh.pop %v8288
      %v8417 = vtanh.pop %v8289
      %v8418 = vtanh.pop %v8290
      %v8419 = vtanh.pop %v8291
      %v8420 = vtanh.pop %v8292
      %v8421 = vtanh.pop %v8293
      %v8422 = vtanh.pop %v8294
      %v8423 = vtanh.pop %v8295
      %v8424 = vtanh.pop %v8296
      %v8425 = vtanh.pop %v8297
      %v8426 = vtanh.pop %v8298
      %v8427 = vtanh.pop %v8299
      %v8428 = vtanh.pop %v8300
      %v8429 = vtanh.pop %v8301
      %v8430 = vtanh.pop %v8302
      %v8431 = vtanh.pop %v8303
      %v8432 = vtanh.pop %v8304
      %v8433 = vtanh.pop %v8305
      %v8434 = vtanh.pop %v8306
      %v8435 = vtanh.pop %v8307
      %v8436 = vtanh.pop %v8308
      %v8437 = vtanh.pop %v8309
      %v8438 = vtanh.pop %v8310
      %v8439 = vtanh.pop %v8311
      %v8440 = vtanh.pop %v8312
      %v8441 = vtanh.pop %v8313
      %v8442 = vtanh.pop %v8314
      %v8443 = vtanh.pop %v8315
      %v8444 = vtanh.pop %v8316
      %v8445 = vtanh.pop %v8317
      %v8446 = vtanh.pop %v8318
      %v8447 = vtanh.pop %v8319
      %v8448 = vtanh.pop %v8320
      %v8449 = vtanh.pop %v8321
      %v8450 = vtanh.pop %v8322
      %v8451 = vtanh.pop %v8323
      %v8452 = vtanh.pop %v8324
      %v8453 = vtanh.pop %v8325
      %v8454 = vtanh.pop %v8326
      %v8455 = vtanh.pop %v8327
      %v8456 = vtanh.pop %v8328
      %v8457 = vtanh.pop %v8329
      %v8458 = vtanh.pop %v8330
      %v8459 = vtanh.pop %v8331
      %v8460 = vtanh.pop %v8332
      %v8461 = vtanh.pop %v8333
      %v8462 = vtanh.pop %v8334
      %v8463 = vtanh.pop %v8335
      %v8464 = vtanh.pop %v8336
      %v8465 = vtanh.pop %v8337
      %v8466 = vtanh.pop %v8338
      %v8467 = vtanh.pop %v8339
      %v8468 = vtanh.pop %v8340
      %v8469 = vtanh.pop %v8341
      %v8470 = vtanh.pop %v8342
      %v8471 = vtanh.pop %v8343
      %v8472 = vtanh.pop %v8344
      %v8473 = vtanh.pop %v8345
      %v8474 = vtanh.pop %v8346
      %v8475 = vtanh.pop %v8347
      %v8476 = vtanh.pop %v8348
      %v8477 = vtanh.pop %v8349
      %v8478 = vtanh.pop %v8350
      %v8479 = vtanh.pop %v8351
      %v8480 = vtanh.pop %v8352
      %v8481 = vtanh.pop %v8353
      %v8482 = vtanh.pop %v8354
      %v8483 = vtanh.pop %v8355
      %v8484 = vtanh.pop %v8356
      %v8485 = vtanh.pop %v8357
      %v8486 = vtanh.pop %v8358
      %v8487 = vtanh.pop %v8359
      %v8488 = vtanh.pop %v8360
      %v8489 = vtanh.pop %v8361
      %v8490 = vtanh.pop %v8362
      %v8491 = vtanh.pop %v8363
      %v8492 = vtanh.pop %v8364
      %v8493 = vtanh.pop %v8365
      %v8494 = vtanh.pop %v8366
      %v8495 = vtanh.pop %v8367
      %v8496 = vtanh.pop %v8368
      %v8497 = vtanh.pop %v8369
      %v8498 = vtanh.pop %v8370
      %v8499 = vtanh.pop %v8371
      %v8500 = vtanh.pop %v8372
      %v8501 = vadd.f32 %v8373, 1.0
      %v8502 = vadd.f32 %v8374, 1.0
      %v8503 = vadd.f32 %v8375, 1.0
      %v8504 = vadd.f32 %v8376, 1.0
      %v8505 = vadd.f32 %v8377, 1.0
      %v8506 = vadd.f32 %v8378, 1.0
      %v8507 = vadd.f32 %v8379, 1.0
      %v8508 = vadd.f32 %v8380, 1.0
      %v8509 = vadd.f32 %v8381, 1.0
      %v8510 = vadd.f32 %v8382, 1.0
      %v8511 = vadd.f32 %v8383, 1.0
      %v8512 = vadd.f32 %v8384, 1.0
      %v8513 = vadd.f32 %v8385, 1.0
      %v8514 = vadd.f32 %v8386, 1.0
      %v8515 = vadd.f32 %v8387, 1.0
      %v8516 = vadd.f32 %v8388, 1.0
      %v8517 = vadd.f32 %v8389, 1.0
      %v8518 = vadd.f32 %v8390, 1.0
      %v8519 = vadd.f32 %v8391, 1.0
      %v8520 = vadd.f32 %v8392, 1.0
      %v8521 = vadd.f32 %v8393, 1.0
      %v8522 = vadd.f32 %v8394, 1.0
      %v8523 = vadd.f32 %v8395, 1.0
      %v8524 = vadd.f32 %v8396, 1.0
      %v8525 = vadd.f32 %v8397, 1.0
      %v8526 = vadd.f32 %v8398, 1.0
      %v8527 = vadd.f32 %v8399, 1.0
      %v8528 = vadd.f32 %v8400, 1.0
      %v8529 = vadd.f32 %v8401, 1.0
      %v8530 = vadd.f32 %v8402, 1.0
      %v8531 = vadd.f32 %v8403, 1.0
      %v8532 = vadd.f32 %v8404, 1.0
      %v8533 = vadd.f32 %v8405, 1.0
      %v8534 = vadd.f32 %v8406, 1.0
      %v8535 = vadd.f32 %v8407, 1.0
      %v8536 = vadd.f32 %v8408, 1.0
      %v8537 = vadd.f32 %v8409, 1.0
      %v8538 = vadd.f32 %v8410, 1.0
      %v8539 = vadd.f32 %v8411, 1.0
      %v8540 = vadd.f32 %v8412, 1.0
      %v8541 = vadd.f32 %v8413, 1.0
      %v8542 = vadd.f32 %v8414, 1.0
      %v8543 = vadd.f32 %v8415, 1.0
      %v8544 = vadd.f32 %v8416, 1.0
      %v8545 = vadd.f32 %v8417, 1.0
      %v8546 = vadd.f32 %v8418, 1.0
      %v8547 = vadd.f32 %v8419, 1.0
      %v8548 = vadd.f32 %v8420, 1.0
      %v8549 = vadd.f32 %v8421, 1.0
      %v8550 = vadd.f32 %v8422, 1.0
      %v8551 = vadd.f32 %v8423, 1.0
      %v8552 = vadd.f32 %v8424, 1.0
      %v8553 = vadd.f32 %v8425, 1.0
      %v8554 = vadd.f32 %v8426, 1.0
      %v8555 = vadd.f32 %v8427, 1.0
      %v8556 = vadd.f32 %v8428, 1.0
      %v8557 = vadd.f32 %v8429, 1.0
      %v8558 = vadd.f32 %v8430, 1.0
      %v8559 = vadd.f32 %v8431, 1.0
      %v8560 = vadd.f32 %v8432, 1.0
      %v8561 = vadd.f32 %v8433, 1.0
      %v8562 = vadd.f32 %v8434, 1.0
      %v8563 = vadd.f32 %v8435, 1.0
      %v8564 = vadd.f32 %v8436, 1.0
      %v8565 = vadd.f32 %v8437, 1.0
      %v8566 = vadd.f32 %v8438, 1.0
      %v8567 = vadd.f32 %v8439, 1.0
      %v8568 = vadd.f32 %v8440, 1.0
      %v8569 = vadd.f32 %v8441, 1.0
      %v8570 = vadd.f32 %v8442, 1.0
      %v8571 = vadd.f32 %v8443, 1.0
      %v8572 = vadd.f32 %v8444, 1.0
      %v8573 = vadd.f32 %v8445, 1.0
      %v8574 = vadd.f32 %v8446, 1.0
      %v8575 = vadd.f32 %v8447, 1.0
      %v8576 = vadd.f32 %v8448, 1.0
      %v8577 = vadd.f32 %v8449, 1.0
      %v8578 = vadd.f32 %v8450, 1.0
      %v8579 = vadd.f32 %v8451, 1.0
      %v8580 = vadd.f32 %v8452, 1.0
      %v8581 = vadd.f32 %v8453, 1.0
      %v8582 = vadd.f32 %v8454, 1.0
      %v8583 = vadd.f32 %v8455, 1.0
      %v8584 = vadd.f32 %v8456, 1.0
      %v8585 = vadd.f32 %v8457, 1.0
      %v8586 = vadd.f32 %v8458, 1.0
      %v8587 = vadd.f32 %v8459, 1.0
      %v8588 = vadd.f32 %v8460, 1.0
      %v8589 = vadd.f32 %v8461, 1.0
      %v8590 = vadd.f32 %v8462, 1.0
      %v8591 = vadd.f32 %v8463, 1.0
      %v8592 = vadd.f32 %v8464, 1.0
      %v8593 = vadd.f32 %v8465, 1.0
      %v8594 = vadd.f32 %v8466, 1.0
      %v8595 = vadd.f32 %v8467, 1.0
      %v8596 = vadd.f32 %v8468, 1.0
      %v8597 = vadd.f32 %v8469, 1.0
      %v8598 = vadd.f32 %v8470, 1.0
      %v8599 = vadd.f32 %v8471, 1.0
      %v8600 = vadd.f32 %v8472, 1.0
      %v8601 = vadd.f32 %v8473, 1.0
      %v8602 = vadd.f32 %v8474, 1.0
      %v8603 = vadd.f32 %v8475, 1.0
      %v8604 = vadd.f32 %v8476, 1.0
      %v8605 = vadd.f32 %v8477, 1.0
      %v8606 = vadd.f32 %v8478, 1.0
      %v8607 = vadd.f32 %v8479, 1.0
      %v8608 = vadd.f32 %v8480, 1.0
      %v8609 = vadd.f32 %v8481, 1.0
      %v8610 = vadd.f32 %v8482, 1.0
      %v8611 = vadd.f32 %v8483, 1.0
      %v8612 = vadd.f32 %v8484, 1.0
      %v8613 = vadd.f32 %v8485, 1.0
      %v8614 = vadd.f32 %v8486, 1.0
      %v8615 = vadd.f32 %v8487, 1.0
      %v8616 = vadd.f32 %v8488, 1.0
      %v8617 = vadd.f32 %v8489, 1.0
      %v8618 = vadd.f32 %v8490, 1.0
      %v8619 = vadd.f32 %v8491, 1.0
      %v8620 = vadd.f32 %v8492, 1.0
      %v8621 = vadd.f32 %v8493, 1.0
      %v8622 = vadd.f32 %v8494, 1.0
      %v8623 = vadd.f32 %v8495, 1.0
      %v8624 = vadd.f32 %v8496, 1.0
      %v8625 = vadd.f32 %v8497, 1.0
      %v8626 = vadd.f32 %v8498, 1.0
      %v8627 = vadd.f32 %v8499, 1.0
      %v8628 = vadd.f32 %v8500, 1.0
      %v8629 = vmul.f32 %v7605, %v8501
      %v8630 = vmul.f32 %v7606, %v8502
      %v8631 = vmul.f32 %v7607, %v8503
      %v8632 = vmul.f32 %v7608, %v8504
      %v8633 = vmul.f32 %v7609, %v8505
      %v8634 = vmul.f32 %v7610, %v8506
      %v8635 = vmul.f32 %v7611, %v8507
      %v8636 = vmul.f32 %v7612, %v8508
      %v8637 = vmul.f32 %v7613, %v8509
      %v8638 = vmul.f32 %v7614, %v8510
      %v8639 = vmul.f32 %v7615, %v8511
      %v8640 = vmul.f32 %v7616, %v8512
      %v8641 = vmul.f32 %v7617, %v8513
      %v8642 = vmul.f32 %v7618, %v8514
      %v8643 = vmul.f32 %v7619, %v8515
      %v8644 = vmul.f32 %v7620, %v8516
      %v8645 = vmul.f32 %v7621, %v8517
      %v8646 = vmul.f32 %v7622, %v8518
      %v8647 = vmul.f32 %v7623, %v8519
      %v8648 = vmul.f32 %v7624, %v8520
      %v8649 = vmul.f32 %v7625, %v8521
      %v8650 = vmul.f32 %v7626, %v8522
      %v8651 = vmul.f32 %v7627, %v8523
      %v8652 = vmul.f32 %v7628, %v8524
      %v8653 = vmul.f32 %v7629, %v8525
      %v8654 = vmul.f32 %v7630, %v8526
      %v8655 = vmul.f32 %v7631, %v8527
      %v8656 = vmul.f32 %v7632, %v8528
      %v8657 = vmul.f32 %v7633, %v8529
      %v8658 = vmul.f32 %v7634, %v8530
      %v8659 = vmul.f32 %v7635, %v8531
      %v8660 = vmul.f32 %v7636, %v8532
      %v8661 = vmul.f32 %v7637, %v8533
      %v8662 = vmul.f32 %v7638, %v8534
      %v8663 = vmul.f32 %v7639, %v8535
      %v8664 = vmul.f32 %v7640, %v8536
      %v8665 = vmul.f32 %v7641, %v8537
      %v8666 = vmul.f32 %v7642, %v8538
      %v8667 = vmul.f32 %v7643, %v8539
      %v8668 = vmul.f32 %v7644, %v8540
      %v8669 = vmul.f32 %v7645, %v8541
      %v8670 = vmul.f32 %v7646, %v8542
      %v8671 = vmul.f32 %v7647, %v8543
      %v8672 = vmul.f32 %v7648, %v8544
      %v8673 = vmul.f32 %v7649, %v8545
      %v8674 = vmul.f32 %v7650, %v8546
      %v8675 = vmul.f32 %v7651, %v8547
      %v8676 = vmul.f32 %v7652, %v8548
      %v8677 = vmul.f32 %v7653, %v8549
      %v8678 = vmul.f32 %v7654, %v8550
      %v8679 = vmul.f32 %v7655, %v8551
      %v8680 = vmul.f32 %v7656, %v8552
      %v8681 = vmul.f32 %v7657, %v8553
      %v8682 = vmul.f32 %v7658, %v8554
      %v8683 = vmul.f32 %v7659, %v8555
      %v8684 = vmul.f32 %v7660, %v8556
      %v8685 = vmul.f32 %v7661, %v8557
      %v8686 = vmul.f32 %v7662, %v8558
      %v8687 = vmul.f32 %v7663, %v8559
      %v8688 = vmul.f32 %v7664, %v8560
      %v8689 = vmul.f32 %v7665, %v8561
      %v8690 = vmul.f32 %v7666, %v8562
      %v8691 = vmul.f32 %v7667, %v8563
      %v8692 = vmul.f32 %v7668, %v8564
      %v8693 = vmul.f32 %v7669, %v8565
      %v8694 = vmul.f32 %v7670, %v8566
      %v8695 = vmul.f32 %v7671, %v8567
      %v8696 = vmul.f32 %v7672, %v8568
      %v8697 = vmul.f32 %v7673, %v8569
      %v8698 = vmul.f32 %v7674, %v8570
      %v8699 = vmul.f32 %v7675, %v8571
      %v8700 = vmul.f32 %v7676, %v8572
      %v8701 = vmul.f32 %v7677, %v8573
      %v8702 = vmul.f32 %v7678, %v8574
      %v8703 = vmul.f32 %v7679, %v8575
      %v8704 = vmul.f32 %v7680, %v8576
      %v8705 = vmul.f32 %v7681, %v8577
      %v8706 = vmul.f32 %v7682, %v8578
      %v8707 = vmul.f32 %v7683, %v8579
      %v8708 = vmul.f32 %v7684, %v8580
      %v8709 = vmul.f32 %v7685, %v8581
      %v8710 = vmul.f32 %v7686, %v8582
      %v8711 = vmul.f32 %v7687, %v8583
      %v8712 = vmul.f32 %v7688, %v8584
      %v8713 = vmul.f32 %v7689, %v8585
      %v8714 = vmul.f32 %v7690, %v8586
      %v8715 = vmul.f32 %v7691, %v8587
      %v8716 = vmul.f32 %v7692, %v8588
      %v8717 = vmul.f32 %v7693, %v8589
      %v8718 = vmul.f32 %v7694, %v8590
      %v8719 = vmul.f32 %v7695, %v8591
      %v8720 = vmul.f32 %v7696, %v8592
      %v8721 = vmul.f32 %v7697, %v8593
      %v8722 = vmul.f32 %v7698, %v8594
      %v8723 = vmul.f32 %v7699, %v8595
      %v8724 = vmul.f32 %v7700, %v8596
      %v8725 = vmul.f32 %v7701, %v8597
      %v8726 = vmul.f32 %v7702, %v8598
      %v8727 = vmul.f32 %v7703, %v8599
      %v8728 = vmul.f32 %v7704, %v8600
      %v8729 = vmul.f32 %v7705, %v8601
      %v8730 = vmul.f32 %v7706, %v8602
      %v8731 = vmul.f32 %v7707, %v8603
      %v8732 = vmul.f32 %v7708, %v8604
      %v8733 = vmul.f32 %v7709, %v8605
      %v8734 = vmul.f32 %v7710, %v8606
      %v8735 = vmul.f32 %v7711, %v8607
      %v8736 = vmul.f32 %v7712, %v8608
      %v8737 = vmul.f32 %v7713, %v8609
      %v8738 = vmul.f32 %v7714, %v8610
      %v8739 = vmul.f32 %v7715, %v8611
      %v8740 = vmul.f32 %v7716, %v8612
      %v8741 = vmul.f32 %v7717, %v8613
      %v8742 = vmul.f32 %v7718, %v8614
      %v8743 = vmul.f32 %v7719, %v8615
      %v8744 = vmul.f32 %v7720, %v8616
      %v8745 = vmul.f32 %v7721, %v8617
      %v8746 = vmul.f32 %v7722, %v8618
      %v8747 = vmul.f32 %v7723, %v8619
      %v8748 = vmul.f32 %v7724, %v8620
      %v8749 = vmul.f32 %v7725, %v8621
      %v8750 = vmul.f32 %v7726, %v8622
      %v8751 = vmul.f32 %v7727, %v8623
      %v8752 = vmul.f32 %v7728, %v8624
      %v8753 = vmul.f32 %v7729, %v8625
      %v8754 = vmul.f32 %v7730, %v8626
      %v8755 = vmul.f32 %v7731, %v8627
      %v8756 = vmul.f32 %v7732, %v8628
      %v8757 = vpack.c.bf16 %v8633, %v8629
      %v8758 = vpack.c.bf16 %v8634, %v8630
      %v8759 = vpack.c.bf16 %v8635, %v8631
      %v8760 = vpack.c.bf16 %v8636, %v8632
      %v8761 = vpack.c.bf16 %v8641, %v8637
      %v8762 = vpack.c.bf16 %v8642, %v8638
      %v8763 = vpack.c.bf16 %v8643, %v8639
      %v8764 = vpack.c.bf16 %v8644, %v8640
      %v8765 = vpack.c.bf16 %v8649, %v8645
      %v8766 = vpack.c.bf16 %v8650, %v8646
      %v8767 = vpack.c.bf16 %v8651, %v8647
      %v8768 = vpack.c.bf16 %v8652, %v8648
      %v8769 = vpack.c.bf16 %v8657, %v8653
      %v8770 = vpack.c.bf16 %v8658, %v8654
      %v8771 = vpack.c.bf16 %v8659, %v8655
      %v8772 = vpack.c.bf16 %v8660, %v8656
      %v8773 = vpack.c.bf16 %v8665, %v8661
      %v8774 = vpack.c.bf16 %v8666, %v8662
      %v8775 = vpack.c.bf16 %v8667, %v8663
      %v8776 = vpack.c.bf16 %v8668, %v8664
      %v8777 = vpack.c.bf16 %v8673, %v8669
      %v8778 = vpack.c.bf16 %v8674, %v8670
      %v8779 = vpack.c.bf16 %v8675, %v8671
      %v8780 = vpack.c.bf16 %v8676, %v8672
      %v8781 = vpack.c.bf16 %v8681, %v8677
      %v8782 = vpack.c.bf16 %v8682, %v8678
      %v8783 = vpack.c.bf16 %v8683, %v8679
      %v8784 = vpack.c.bf16 %v8684, %v8680
      %v8785 = vpack.c.bf16 %v8689, %v8685
      %v8786 = vpack.c.bf16 %v8690, %v8686
      %v8787 = vpack.c.bf16 %v8691, %v8687
      %v8788 = vpack.c.bf16 %v8692, %v8688
      %v8789 = vpack.c.bf16 %v8697, %v8693
      %v8790 = vpack.c.bf16 %v8698, %v8694
      %v8791 = vpack.c.bf16 %v8699, %v8695
      %v8792 = vpack.c.bf16 %v8700, %v8696
      %v8793 = vpack.c.bf16 %v8705, %v8701
      %v8794 = vpack.c.bf16 %v8706, %v8702
      %v8795 = vpack.c.bf16 %v8707, %v8703
      %v8796 = vpack.c.bf16 %v8708, %v8704
      %v8797 = vpack.c.bf16 %v8713, %v8709
      %v8798 = vpack.c.bf16 %v8714, %v8710
      %v8799 = vpack.c.bf16 %v8715, %v8711
      %v8800 = vpack.c.bf16 %v8716, %v8712
      %v8801 = vpack.c.bf16 %v8721, %v8717
      %v8802 = vpack.c.bf16 %v8722, %v8718
      %v8803 = vpack.c.bf16 %v8723, %v8719
      %v8804 = vpack.c.bf16 %v8724, %v8720
      %v8805 = vpack.c.bf16 %v8729, %v8725
      %v8806 = vpack.c.bf16 %v8730, %v8726
      %v8807 = vpack.c.bf16 %v8731, %v8727
      %v8808 = vpack.c.bf16 %v8732, %v8728
      %v8809 = vpack.c.bf16 %v8737, %v8733
      %v8810 = vpack.c.bf16 %v8738, %v8734
      %v8811 = vpack.c.bf16 %v8739, %v8735
      %v8812 = vpack.c.bf16 %v8740, %v8736
      %v8813 = vpack.c.bf16 %v8745, %v8741
      %v8814 = vpack.c.bf16 %v8746, %v8742
      %v8815 = vpack.c.bf16 %v8747, %v8743
      %v8816 = vpack.c.bf16 %v8748, %v8744
      %v8817 = vpack.c.bf16 %v8753, %v8749
      %v8818 = vpack.c.bf16 %v8754, %v8750
      %v8819 = vpack.c.bf16 %v8755, %v8751
      %v8820 = vpack.c.bf16 %v8756, %v8752
      %v8821 = vld [vmem:[%s11] sm:$0xf]
      %v8822 = vld [vmem:[%s11 + $0x4] sm:$0xf]
      %v8823 = vld [vmem:[%s11 + $0x8] sm:$0xf]
      %v8824 = vld [vmem:[%s11 + $0xc] sm:$0xf]
      %v8825 = vld [vmem:[%s11 + $0x10] sm:$0xf]
      %v8826 = vld [vmem:[%s11 + $0x14] sm:$0xf]
      %v8827 = vld [vmem:[%s11 + $0x18] sm:$0xf]
      %v8828 = vld [vmem:[%s11 + $0x1c] sm:$0xf]
      %v8829 = vld [vmem:[%s11 + $0x20] sm:$0xf]
      %v8830 = vld [vmem:[%s11 + $0x24] sm:$0xf]
      %v8831 = vld [vmem:[%s11 + $0x28] sm:$0xf]
      %v8832 = vld [vmem:[%s11 + $0x2c] sm:$0xf]
      %v8833 = vld [vmem:[%s11 + $0x30] sm:$0xf]
      %v8834 = vld [vmem:[%s11 + $0x34] sm:$0xf]
      %v8835 = vld [vmem:[%s11 + $0x38] sm:$0xf]
      %v8836 = vld [vmem:[%s11 + $0x3c] sm:$0xf]
      %v8837 = vld [vmem:[%s11 + $0x40] sm:$0xf]
      %v8838 = vld [vmem:[%s11 + $0x44] sm:$0xf]
      %v8839 = vld [vmem:[%s11 + $0x48] sm:$0xf]
      %v8840 = vld [vmem:[%s11 + $0x4c] sm:$0xf]
      %v8841 = vld [vmem:[%s11 + $0x50] sm:$0xf]
      %v8842 = vld [vmem:[%s11 + $0x54] sm:$0xf]
      %v8843 = vld [vmem:[%s11 + $0x58] sm:$0xf]
      %v8844 = vld [vmem:[%s11 + $0x5c] sm:$0xf]
      %v8845 = vld [vmem:[%s11 + $0x60] sm:$0xf]
      %v8846 = vld [vmem:[%s11 + $0x64] sm:$0xf]
      %v8847 = vld [vmem:[%s11 + $0x68] sm:$0xf]
      %v8848 = vld [vmem:[%s11 + $0x6c] sm:$0xf]
      %v8849 = vld [vmem:[%s11 + $0x70] sm:$0xf]
      %v8850 = vld [vmem:[%s11 + $0x74] sm:$0xf]
      %v8851 = vld [vmem:[%s11 + $0x78] sm:$0xf]
      %v8852 = vld [vmem:[%s11 + $0x7c] sm:$0xf]
      %v8853 = vld [vmem:[%s11 + $0x80] sm:$0xf]
      %v8854 = vld [vmem:[%s11 + $0x84] sm:$0xf]
      %v8855 = vld [vmem:[%s11 + $0x88] sm:$0xf]
      %v8856 = vld [vmem:[%s11 + $0x8c] sm:$0xf]
      %v8857 = vld [vmem:[%s11 + $0x90] sm:$0xf]
      %v8858 = vld [vmem:[%s11 + $0x94] sm:$0xf]
      %v8859 = vld [vmem:[%s11 + $0x98] sm:$0xf]
      %v8860 = vld [vmem:[%s11 + $0x9c] sm:$0xf]
      %v8861 = vld [vmem:[%s11 + $0xa0] sm:$0xf]
      %v8862 = vld [vmem:[%s11 + $0xa4] sm:$0xf]
      %v8863 = vld [vmem:[%s11 + $0xa8] sm:$0xf]
      %v8864 = vld [vmem:[%s11 + $0xac] sm:$0xf]
      %v8865 = vld [vmem:[%s11 + $0xb0] sm:$0xf]
      %v8866 = vld [vmem:[%s11 + $0xb4] sm:$0xf]
      %v8867 = vld [vmem:[%s11 + $0xb8] sm:$0xf]
      %v8868 = vld [vmem:[%s11 + $0xbc] sm:$0xf]
      %v8869 = vld [vmem:[%s11 + $0xc0] sm:$0xf]
      %v8870 = vld [vmem:[%s11 + $0xc4] sm:$0xf]
      %v8871 = vld [vmem:[%s11 + $0xc8] sm:$0xf]
      %v8872 = vld [vmem:[%s11 + $0xcc] sm:$0xf]
      %v8873 = vld [vmem:[%s11 + $0xd0] sm:$0xf]
      %v8874 = vld [vmem:[%s11 + $0xd4] sm:$0xf]
      %v8875 = vld [vmem:[%s11 + $0xd8] sm:$0xf]
      %v8876 = vld [vmem:[%s11 + $0xdc] sm:$0xf]
      %v8877 = vld [vmem:[%s11 + $0xe0] sm:$0xf]
      %v8878 = vld [vmem:[%s11 + $0xe4] sm:$0xf]
      %v8879 = vld [vmem:[%s11 + $0xe8] sm:$0xf]
      %v8880 = vld [vmem:[%s11 + $0xec] sm:$0xf]
      %v8881 = vld [vmem:[%s11 + $0xf0] sm:$0xf]
      %v8882 = vld [vmem:[%s11 + $0xf4] sm:$0xf]
      %v8883 = vld [vmem:[%s11 + $0xf8] sm:$0xf]
      %v8884 = vld [vmem:[%s11 + $0xfc] sm:$0xf]
      %v8949 = vunpack.c.l.b16 %v8821
      %v8950 = vunpack.c.l.b16 %v8822
      %v8951 = vunpack.c.l.b16 %v8823
      %v8952 = vunpack.c.l.b16 %v8824
      %v8953 = vunpack.c.l.b16 %v8825
      %v8954 = vunpack.c.l.b16 %v8826
      %v8955 = vunpack.c.l.b16 %v8827
      %v8956 = vunpack.c.l.b16 %v8828
      %v8957 = vunpack.c.l.b16 %v8829
      %v8958 = vunpack.c.l.b16 %v8830
      %v8959 = vunpack.c.l.b16 %v8831
      %v8960 = vunpack.c.l.b16 %v8832
      %v8961 = vunpack.c.l.b16 %v8833
      %v8962 = vunpack.c.l.b16 %v8834
      %v8963 = vunpack.c.l.b16 %v8835
      %v8964 = vunpack.c.l.b16 %v8836
      %v8965 = vunpack.c.l.b16 %v8837
      %v8966 = vunpack.c.l.b16 %v8838
      %v8967 = vunpack.c.l.b16 %v8839
      %v8968 = vunpack.c.l.b16 %v8840
      %v8969 = vunpack.c.l.b16 %v8841
      %v8970 = vunpack.c.l.b16 %v8842
      %v8971 = vunpack.c.l.b16 %v8843
      %v8972 = vunpack.c.l.b16 %v8844
      %v8973 = vunpack.c.l.b16 %v8845
      %v8974 = vunpack.c.l.b16 %v8846
      %v8975 = vunpack.c.l.b16 %v8847
      %v8976 = vunpack.c.l.b16 %v8848
      %v8977 = vunpack.c.l.b16 %v8849
      %v8978 = vunpack.c.l.b16 %v8850
      %v8979 = vunpack.c.l.b16 %v8851
      %v8980 = vunpack.c.l.b16 %v8852
      %v8981 = vunpack.c.l.b16 %v8853
      %v8982 = vunpack.c.l.b16 %v8854
      %v8983 = vunpack.c.l.b16 %v8855
      %v8984 = vunpack.c.l.b16 %v8856
      %v8985 = vunpack.c.l.b16 %v8857
      %v8986 = vunpack.c.l.b16 %v8858
      %v8987 = vunpack.c.l.b16 %v8859
      %v8988 = vunpack.c.l.b16 %v8860
      %v8989 = vunpack.c.l.b16 %v8861
      %v8990 = vunpack.c.l.b16 %v8862
      %v8991 = vunpack.c.l.b16 %v8863
      %v8992 = vunpack.c.l.b16 %v8864
      %v8993 = vunpack.c.l.b16 %v8865
      %v8994 = vunpack.c.l.b16 %v8866
      %v8995 = vunpack.c.l.b16 %v8867
      %v8996 = vunpack.c.l.b16 %v8868
      %v8997 = vunpack.c.l.b16 %v8869
      %v8998 = vunpack.c.l.b16 %v8870
      %v8999 = vunpack.c.l.b16 %v8871
      %v9000 = vunpack.c.l.b16 %v8872
      %v9001 = vunpack.c.l.b16 %v8873
      %v9002 = vunpack.c.l.b16 %v8874
      %v9003 = vunpack.c.l.b16 %v8875
      %v9004 = vunpack.c.l.b16 %v8876
      %v9005 = vunpack.c.l.b16 %v8877
      %v9006 = vunpack.c.l.b16 %v8878
      %v9007 = vunpack.c.l.b16 %v8879
      %v9008 = vunpack.c.l.b16 %v8880
      %v9009 = vunpack.c.l.b16 %v8881
      %v9010 = vunpack.c.l.b16 %v8882
      %v9011 = vunpack.c.l.b16 %v8883
      %v9012 = vunpack.c.l.b16 %v8884
      %v9013 = vpack.c.b16 %v8950, %v8949
      %v9014 = vpack.c.b16 %v8952, %v8951
      %v9015 = vpack.c.b16 %v8954, %v8953
      %v9016 = vpack.c.b16 %v8956, %v8955
      %v9017 = vpack.c.b16 %v8958, %v8957
      %v9018 = vpack.c.b16 %v8960, %v8959
      %v9019 = vpack.c.b16 %v8962, %v8961
      %v9020 = vpack.c.b16 %v8964, %v8963
      %v9021 = vpack.c.b16 %v8966, %v8965
      %v9022 = vpack.c.b16 %v8968, %v8967
      %v9023 = vpack.c.b16 %v8970, %v8969
      %v9024 = vpack.c.b16 %v8972, %v8971
      %v9025 = vpack.c.b16 %v8974, %v8973
      %v9026 = vpack.c.b16 %v8976, %v8975
      %v9027 = vpack.c.b16 %v8978, %v8977
      %v9028 = vpack.c.b16 %v8980, %v8979
      %v9029 = vpack.c.b16 %v8982, %v8981
      %v9030 = vpack.c.b16 %v8984, %v8983
      %v9031 = vpack.c.b16 %v8986, %v8985
      %v9032 = vpack.c.b16 %v8988, %v8987
      %v9033 = vpack.c.b16 %v8990, %v8989
      %v9034 = vpack.c.b16 %v8992, %v8991
      %v9035 = vpack.c.b16 %v8994, %v8993
      %v9036 = vpack.c.b16 %v8996, %v8995
      %v9037 = vpack.c.b16 %v8998, %v8997
      %v9038 = vpack.c.b16 %v9000, %v8999
      %v9039 = vpack.c.b16 %v9002, %v9001
      %v9040 = vpack.c.b16 %v9004, %v9003
      %v9041 = vpack.c.b16 %v9006, %v9005
      %v9042 = vpack.c.b16 %v9008, %v9007
      %v9043 = vpack.c.b16 %v9010, %v9009
      %v9044 = vpack.c.b16 %v9012, %v9011
      %9077 = vmatprep.subr.bf16.mxu0 0
      %9078 = vmatpush1.bf16.msra.mxu0 %v9013
      %9079 = vmatprep.subr.bf16.mxu0 0
      %9080 = vmatpush1.bf16.msra.mxu0 %v9014
      %9081 = vmatprep.subr.bf16.mxu0 0
      %9082 = vmatpush1.bf16.msra.mxu0 %v9015
      %9083 = vmatprep.subr.bf16.mxu0 0
      %9084 = vmatpush1.bf16.msra.mxu0 %v9016
      %9085 = vmatprep.subr.bf16.mxu0 0
      %9086 = vmatpush1.bf16.msra.mxu0 %v9017
      %9087 = vmatprep.subr.bf16.mxu0 0
      %9088 = vmatpush1.bf16.msra.mxu0 %v9018
      %9089 = vmatprep.subr.bf16.mxu0 0
      %9090 = vmatpush1.bf16.msra.mxu0 %v9019
      %9091 = vmatprep.subr.bf16.mxu0 0
      %9092 = vmatpush1.bf16.msra.mxu0 %v9020
      %9093 = vmatprep.subr.bf16.mxu0 0
      %9094 = vmatpush1.bf16.msra.mxu0 %v9021
      %9095 = vmatprep.subr.bf16.mxu0 0
      %9096 = vmatpush1.bf16.msra.mxu0 %v9022
      %9097 = vmatprep.subr.bf16.mxu0 0
      %9098 = vmatpush1.bf16.msra.mxu0 %v9023
      %9099 = vmatprep.subr.bf16.mxu0 0
      %9100 = vmatpush1.bf16.msra.mxu0 %v9024
      %9101 = vmatprep.subr.bf16.mxu0 0
      %9102 = vmatpush1.bf16.msra.mxu0 %v9025
      %9103 = vmatprep.subr.bf16.mxu0 0
      %9104 = vmatpush1.bf16.msra.mxu0 %v9026
      %9105 = vmatprep.subr.bf16.mxu0 0
      %9106 = vmatpush1.bf16.msra.mxu0 %v9027
      %9107 = vmatprep.subr.bf16.mxu0 0
      %9108 = vmatpush1.bf16.msra.mxu0 %v9028
      %9109 = vmatprep.mubr.bf16.mxu0 %v8758
      %9110 = vmatmul.mubr.bf16.gmra.mrb[0].mxu0 %v8757
      %v9111 = vpop.f32.mrb[0].mxu0
      %v9112 = vadd.f32 0.0, %v9111
      %v9113 = vpop.f32.mrb[0].mxu0
      %v9114 = vpop.f32.mrb[0].mxu0
      %v9115 = vadd.f32 0.0, %v9114
      %v9116 = vpop.f32.mrb[0].mxu0
      %9117 = vmatprep.mubr.bf16.mxu0 %v8762
      %9118 = vmatmul.mubr.bf16.gmra.mrb[0].mxu0 %v8761
      %v9119 = vpop.f32.mrb[0].mxu0
      %v9120 = vadd.f32 0.0, %v9119
      %v9121 = vpop.f32.mrb[0].mxu0
      %v9122 = vpop.f32.mrb[0].mxu0
      %v9123 = vadd.f32 0.0, %v9122
      %v9124 = vpop.f32.mrb[0].mxu0
      %9125 = vmatprep.mubr.bf16.mxu0 %v8766
      %9126 = vmatmul.mubr.bf16.gmra.mrb[0].mxu0 %v8765
      %v9127 = vpop.f32.mrb[0].mxu0
      %v9128 = vadd.f32 0.0, %v9127
      %v9129 = vpop.f32.mrb[0].mxu0
      %v9130 = vpop.f32.mrb[0].mxu0
      %v9131 = vadd.f32 0.0, %v9130
      %v9132 = vpop.f32.mrb[0].mxu0
      %9133 = vmatprep.mubr.bf16.mxu0 %v8770
      %9134 = vmatmul.mubr.bf16.gmra.mrb[0].mxu0 %v8769
      %v9135 = vpop.f32.mrb[0].mxu0
      %v9136 = vadd.f32 0.0, %v9135
      %v9137 = vpop.f32.mrb[0].mxu0
      %v9138 = vpop.f32.mrb[0].mxu0
      %v9139 = vadd.f32 0.0, %v9138
      %v9140 = vpop.f32.mrb[0].mxu0
      %9141 = vmatprep.mubr.bf16.mxu0 %v8774
      %9142 = vmatmul.mubr.bf16.gmra.mrb[0].mxu0 %v8773
      %v9143 = vpop.f32.mrb[0].mxu0
      %v9144 = vadd.f32 0.0, %v9143
      %v9145 = vpop.f32.mrb[0].mxu0
      %v9146 = vpop.f32.mrb[0].mxu0
      %v9147 = vadd.f32 0.0, %v9146
      %v9148 = vpop.f32.mrb[0].mxu0
      %9149 = vmatprep.mubr.bf16.mxu0 %v8778
      %9150 = vmatmul.mubr.bf16.gmra.mrb[0].mxu0 %v8777
      %v9151 = vpop.f32.mrb[0].mxu0
      %v9152 = vadd.f32 0.0, %v9151
      %v9153 = vpop.f32.mrb[0].mxu0
      %v9154 = vpop.f32.mrb[0].mxu0
      %v9155 = vadd.f32 0.0, %v9154
      %v9156 = vpop.f32.mrb[0].mxu0
      %9157 = vmatprep.mubr.bf16.mxu0 %v8782
      %9158 = vmatmul.mubr.bf16.gmra.mrb[0].mxu0 %v8781
      %v9159 = vpop.f32.mrb[0].mxu0
      %v9160 = vadd.f32 0.0, %v9159
      %v9161 = vpop.f32.mrb[0].mxu0
      %v9162 = vpop.f32.mrb[0].mxu0
      %v9163 = vadd.f32 0.0, %v9162
      %v9164 = vpop.f32.mrb[0].mxu0
      %9165 = vmatprep.mubr.bf16.mxu0 %v8786
      %9166 = vmatmul.mubr.bf16.gmra.mrb[0].mxu0 %v8785
      %v9167 = vpop.f32.mrb[0].mxu0
      %v9168 = vadd.f32 0.0, %v9167
      %v9169 = vpop.f32.mrb[0].mxu0
      %v9170 = vpop.f32.mrb[0].mxu0
      %v9171 = vadd.f32 0.0, %v9170
      %v9172 = vpop.f32.mrb[0].mxu0
      %9173 = vmatprep.mubr.bf16.mxu0 %v8790
      %9174 = vmatmul.mubr.bf16.gmra.mrb[0].mxu0 %v8789
      %v9175 = vpop.f32.mrb[0].mxu0
      %v9176 = vadd.f32 0.0, %v9175
      %v9177 = vpop.f32.mrb[0].mxu0
      %v9178 = vpop.f32.mrb[0].mxu0
      %v9179 = vadd.f32 0.0, %v9178
      %v9180 = vpop.f32.mrb[0].mxu0
      %9181 = vmatprep.mubr.bf16.mxu0 %v8794
      %9182 = vmatmul.mubr.bf16.gmra.mrb[0].mxu0 %v8793
      %v9183 = vpop.f32.mrb[0].mxu0
      %v9184 = vadd.f32 0.0, %v9183
      %v9185 = vpop.f32.mrb[0].mxu0
      %v9186 = vpop.f32.mrb[0].mxu0
      %v9187 = vadd.f32 0.0, %v9186
      %v9188 = vpop.f32.mrb[0].mxu0
      %9189 = vmatprep.mubr.bf16.mxu0 %v8798
      %9190 = vmatmul.mubr.bf16.gmra.mrb[0].mxu0 %v8797
      %v9191 = vpop.f32.mrb[0].mxu0
      %v9192 = vadd.f32 0.0, %v9191
      %v9193 = vpop.f32.mrb[0].mxu0
      %v9194 = vpop.f32.mrb[0].mxu0
      %v9195 = vadd.f32 0.0, %v9194
      %v9196 = vpop.f32.mrb[0].mxu0
      %9197 = vmatprep.mubr.bf16.mxu0 %v8802
      %9198 = vmatmul.mubr.bf16.gmra.mrb[0].mxu0 %v8801
      %v9199 = vpop.f32.mrb[0].mxu0
      %v9200 = vadd.f32 0.0, %v9199
      %v9201 = vpop.f32.mrb[0].mxu0
      %v9202 = vpop.f32.mrb[0].mxu0
      %v9203 = vadd.f32 0.0, %v9202
      %v9204 = vpop.f32.mrb[0].mxu0
      %9205 = vmatprep.mubr.bf16.mxu0 %v8806
      %9206 = vmatmul.mubr.bf16.gmra.mrb[0].mxu0 %v8805
      %v9207 = vpop.f32.mrb[0].mxu0
      %v9208 = vadd.f32 0.0, %v9207
      %v9209 = vpop.f32.mrb[0].mxu0
      %v9210 = vpop.f32.mrb[0].mxu0
      %v9211 = vadd.f32 0.0, %v9210
      %v9212 = vpop.f32.mrb[0].mxu0
      %9213 = vmatprep.mubr.bf16.mxu0 %v8810
      %9214 = vmatmul.mubr.bf16.gmra.mrb[0].mxu0 %v8809
      %v9215 = vpop.f32.mrb[0].mxu0
      %v9216 = vadd.f32 0.0, %v9215
      %v9217 = vpop.f32.mrb[0].mxu0
      %v9218 = vpop.f32.mrb[0].mxu0
      %v9219 = vadd.f32 0.0, %v9218
      %v9220 = vpop.f32.mrb[0].mxu0
      %9221 = vmatprep.mubr.bf16.mxu0 %v8814
      %9222 = vmatmul.mubr.bf16.gmra.mrb[0].mxu0 %v8813
      %v9223 = vpop.f32.mrb[0].mxu0
      %v9224 = vadd.f32 0.0, %v9223
      %v9225 = vpop.f32.mrb[0].mxu0
      %v9226 = vpop.f32.mrb[0].mxu0
      %v9227 = vadd.f32 0.0, %v9226
      %v9228 = vpop.f32.mrb[0].mxu0
      %9229 = vmatprep.mubr.bf16.mxu0 %v8818
      %9230 = vmatmul.mubr.bf16.gmra.mrb[0].mxu0 %v8817
      %v9231 = vpop.f32.mrb[0].mxu0
      %v9232 = vadd.f32 0.0, %v9231
      %v9233 = vpop.f32.mrb[0].mxu0
      %v9234 = vpop.f32.mrb[0].mxu0
      %v9235 = vadd.f32 0.0, %v9234
      %v9236 = vpop.f32.mrb[0].mxu0
      %9237 = vdwg.mxu0
      %9238 = vmatprep.subr.bf16.mxu0 0
      %9239 = vmatpush1.bf16.msra.mxu0 %v9029
      %9240 = vmatprep.subr.bf16.mxu0 0
      %9241 = vmatpush1.bf16.msra.mxu0 %v9030
      %9242 = vmatprep.subr.bf16.mxu0 0
      %9243 = vmatpush1.bf16.msra.mxu0 %v9031
      %9244 = vmatprep.subr.bf16.mxu0 0
      %9245 = vmatpush1.bf16.msra.mxu0 %v9032
      %9246 = vmatprep.subr.bf16.mxu0 0
      %9247 = vmatpush1.bf16.msra.mxu0 %v9033
      %9248 = vmatprep.subr.bf16.mxu0 0
      %9249 = vmatpush1.bf16.msra.mxu0 %v9034
      %9250 = vmatprep.subr.bf16.mxu0 0
      %9251 = vmatpush1.bf16.msra.mxu0 %v9035
      %9252 = vmatprep.subr.bf16.mxu0 0
      %9253 = vmatpush1.bf16.msra.mxu0 %v9036
      %9254 = vmatprep.subr.bf16.mxu0 0
      %9255 = vmatpush1.bf16.msra.mxu0 %v9037
      %9256 = vmatprep.subr.bf16.mxu0 0
      %9257 = vmatpush1.bf16.msra.mxu0 %v9038
      %9258 = vmatprep.subr.bf16.mxu0 0
      %9259 = vmatpush1.bf16.msra.mxu0 %v9039
      %9260 = vmatprep.subr.bf16.mxu0 0
      %9261 = vmatpush1.bf16.msra.mxu0 %v9040
      %9262 = vmatprep.subr.bf16.mxu0 0
      %9263 = vmatpush1.bf16.msra.mxu0 %v9041
      %9264 = vmatprep.subr.bf16.mxu0 0
      %9265 = vmatpush1.bf16.msra.mxu0 %v9042
      %9266 = vmatprep.subr.bf16.mxu0 0
      %9267 = vmatpush1.bf16.msra.mxu0 %v9043
      %9268 = vmatprep.subr.bf16.mxu0 0
      %9269 = vmatpush1.bf16.msra.mxu0 %v9044
      %9270 = vmatprep.mubr.bf16.mxu0 %v8760
      %9271 = vmatmul.mubr.bf16.gmra.mrb[0].mxu0 %v8759
      %v9272 = vpop.f32.mrb[0].mxu0
      %v9273 = vadd.f32 %v9112, %v9272
      %v9274 = vpop.f32.mrb[0].mxu0
      %v9275 = vpop.f32.mrb[0].mxu0
      %v9276 = vadd.f32 %v9115, %v9275
      %v9277 = vpop.f32.mrb[0].mxu0
      %9278 = vmatprep.mubr.bf16.mxu0 %v8764
      %9279 = vmatmul.mubr.bf16.gmra.mrb[0].mxu0 %v8763
      %v9280 = vpop.f32.mrb[0].mxu0
      %v9281 = vadd.f32 %v9120, %v9280
      %v9282 = vpop.f32.mrb[0].mxu0
      %v9283 = vpop.f32.mrb[0].mxu0
      %v9284 = vadd.f32 %v9123, %v9283
      %v9285 = vpop.f32.mrb[0].mxu0
      %9286 = vmatprep.mubr.bf16.mxu0 %v8768
      %9287 = vmatmul.mubr.bf16.gmra.mrb[0].mxu0 %v8767
      %v9288 = vpop.f32.mrb[0].mxu0
      %v9289 = vadd.f32 %v9128, %v9288
      %v9290 = vpop.f32.mrb[0].mxu0
      %v9291 = vpop.f32.mrb[0].mxu0
      %v9292 = vadd.f32 %v9131, %v9291
      %v9293 = vpop.f32.mrb[0].mxu0
      %9294 = vmatprep.mubr.bf16.mxu0 %v8772
      %9295 = vmatmul.mubr.bf16.gmra.mrb[0].mxu0 %v8771
      %v9296 = vpop.f32.mrb[0].mxu0
      %v9297 = vadd.f32 %v9136, %v9296
      %v9298 = vpop.f32.mrb[0].mxu0
      %v9299 = vpop.f32.mrb[0].mxu0
      %v9300 = vadd.f32 %v9139, %v9299
      %v9301 = vpop.f32.mrb[0].mxu0
      %9302 = vmatprep.mubr.bf16.mxu0 %v8776
      %9303 = vmatmul.mubr.bf16.gmra.mrb[0].mxu0 %v8775
      %v9304 = vpop.f32.mrb[0].mxu0
      %v9305 = vadd.f32 %v9144, %v9304
      %v9306 = vpop.f32.mrb[0].mxu0
      %v9307 = vpop.f32.mrb[0].mxu0
      %v9308 = vadd.f32 %v9147, %v9307
      %v9309 = vpop.f32.mrb[0].mxu0
      %9310 = vmatprep.mubr.bf16.mxu0 %v8780
      %9311 = vmatmul.mubr.bf16.gmra.mrb[0].mxu0 %v8779
      %v9312 = vpop.f32.mrb[0].mxu0
      %v9313 = vadd.f32 %v9152, %v9312
      %v9314 = vpop.f32.mrb[0].mxu0
      %v9315 = vpop.f32.mrb[0].mxu0
      %v9316 = vadd.f32 %v9155, %v9315
      %v9317 = vpop.f32.mrb[0].mxu0
      %9318 = vmatprep.mubr.bf16.mxu0 %v8784
      %9319 = vmatmul.mubr.bf16.gmra.mrb[0].mxu0 %v8783
      %v9320 = vpop.f32.mrb[0].mxu0
      %v9321 = vadd.f32 %v9160, %v9320
      %v9322 = vpop.f32.mrb[0].mxu0
      %v9323 = vpop.f32.mrb[0].mxu0
      %v9324 = vadd.f32 %v9163, %v9323
      %v9325 = vpop.f32.mrb[0].mxu0
      %9326 = vmatprep.mubr.bf16.mxu0 %v8788
      %9327 = vmatmul.mubr.bf16.gmra.mrb[0].mxu0 %v8787
      %v9328 = vpop.f32.mrb[0].mxu0
      %v9329 = vadd.f32 %v9168, %v9328
      %v9330 = vpop.f32.mrb[0].mxu0
      %v9331 = vpop.f32.mrb[0].mxu0
      %v9332 = vadd.f32 %v9171, %v9331
      %v9333 = vpop.f32.mrb[0].mxu0
      %9334 = vmatprep.mubr.bf16.mxu0 %v8792
      %9335 = vmatmul.mubr.bf16.gmra.mrb[0].mxu0 %v8791
      %v9336 = vpop.f32.mrb[0].mxu0
      %v9337 = vadd.f32 %v9176, %v9336
      %v9338 = vpop.f32.mrb[0].mxu0
      %v9339 = vpop.f32.mrb[0].mxu0
      %v9340 = vadd.f32 %v9179, %v9339
      %v9341 = vpop.f32.mrb[0].mxu0
      %9342 = vmatprep.mubr.bf16.mxu0 %v8796
      %9343 = vmatmul.mubr.bf16.gmra.mrb[0].mxu0 %v8795
      %v9344 = vpop.f32.mrb[0].mxu0
      %v9345 = vadd.f32 %v9184, %v9344
      %v9346 = vpop.f32.mrb[0].mxu0
      %v9347 = vpop.f32.mrb[0].mxu0
      %v9348 = vadd.f32 %v9187, %v9347
      %v9349 = vpop.f32.mrb[0].mxu0
      %9350 = vmatprep.mubr.bf16.mxu0 %v8800
      %9351 = vmatmul.mubr.bf16.gmra.mrb[0].mxu0 %v8799
      %v9352 = vpop.f32.mrb[0].mxu0
      %v9353 = vadd.f32 %v9192, %v9352
      %v9354 = vpop.f32.mrb[0].mxu0
      %v9355 = vpop.f32.mrb[0].mxu0
      %v9356 = vadd.f32 %v9195, %v9355
      %v9357 = vpop.f32.mrb[0].mxu0
      %9358 = vmatprep.mubr.bf16.mxu0 %v8804
      %9359 = vmatmul.mubr.bf16.gmra.mrb[0].mxu0 %v8803
      %v9360 = vpop.f32.mrb[0].mxu0
      %v9361 = vadd.f32 %v9200, %v9360
      %v9362 = vpop.f32.mrb[0].mxu0
      %v9363 = vpop.f32.mrb[0].mxu0
      %v9364 = vadd.f32 %v9203, %v9363
      %v9365 = vpop.f32.mrb[0].mxu0
      %9366 = vmatprep.mubr.bf16.mxu0 %v8808
      %9367 = vmatmul.mubr.bf16.gmra.mrb[0].mxu0 %v8807
      %v9368 = vpop.f32.mrb[0].mxu0
      %v9369 = vadd.f32 %v9208, %v9368
      %v9370 = vpop.f32.mrb[0].mxu0
      %v9371 = vpop.f32.mrb[0].mxu0
      %v9372 = vadd.f32 %v9211, %v9371
      %v9373 = vpop.f32.mrb[0].mxu0
      %9374 = vmatprep.mubr.bf16.mxu0 %v8812
      %9375 = vmatmul.mubr.bf16.gmra.mrb[0].mxu0 %v8811
      %v9376 = vpop.f32.mrb[0].mxu0
      %v9377 = vadd.f32 %v9216, %v9376
      %v9378 = vpop.f32.mrb[0].mxu0
      %v9379 = vpop.f32.mrb[0].mxu0
      %v9380 = vadd.f32 %v9219, %v9379
      %v9381 = vpop.f32.mrb[0].mxu0
      %9382 = vmatprep.mubr.bf16.mxu0 %v8816
      %9383 = vmatmul.mubr.bf16.gmra.mrb[0].mxu0 %v8815
      %v9384 = vpop.f32.mrb[0].mxu0
      %v9385 = vadd.f32 %v9224, %v9384
      %v9386 = vpop.f32.mrb[0].mxu0
      %v9387 = vpop.f32.mrb[0].mxu0
      %v9388 = vadd.f32 %v9227, %v9387
      %v9389 = vpop.f32.mrb[0].mxu0
      %9390 = vmatprep.mubr.bf16.mxu0 %v8820
      %9391 = vmatmul.mubr.bf16.gmra.mrb[0].mxu0 %v8819
      %v9392 = vpop.f32.mrb[0].mxu0
      %v9393 = vadd.f32 %v9232, %v9392
      %v9394 = vpop.f32.mrb[0].mxu0
      %v9395 = vpop.f32.mrb[0].mxu0
      %v9396 = vadd.f32 %v9235, %v9395
      %v9397 = vpop.f32.mrb[0].mxu0
      %9398 = vdwg.mxu0
      %v9399 = vadd.f32 %v6527, %v9273
      %v9400 = vadd.f32 %v6528, %v9276
      %v9401 = vadd.f32 %v6529, %v9281
      %v9402 = vadd.f32 %v6530, %v9284
      %v9403 = vadd.f32 %v6531, %v9289
      %v9404 = vadd.f32 %v6532, %v9292
      %v9405 = vadd.f32 %v6533, %v9297
      %v9406 = vadd.f32 %v6534, %v9300
      %v9407 = vadd.f32 %v6535, %v9305
      %v9408 = vadd.f32 %v6536, %v9308
      %v9409 = vadd.f32 %v6537, %v9313
      %v9410 = vadd.f32 %v6538, %v9316
      %v9411 = vadd.f32 %v6539, %v9321
      %v9412 = vadd.f32 %v6540, %v9324
      %v9413 = vadd.f32 %v6541, %v9329
      %v9414 = vadd.f32 %v6542, %v9332
      %v9415 = vadd.f32 %v6543, %v9337
      %v9416 = vadd.f32 %v6544, %v9340
      %v9417 = vadd.f32 %v6545, %v9345
      %v9418 = vadd.f32 %v6546, %v9348
      %v9419 = vadd.f32 %v6547, %v9353
      %v9420 = vadd.f32 %v6548, %v9356
      %v9421 = vadd.f32 %v6549, %v9361
      %v9422 = vadd.f32 %v6550, %v9364
      %v9423 = vadd.f32 %v6551, %v9369
      %v9424 = vadd.f32 %v6552, %v9372
      %v9425 = vadd.f32 %v6553, %v9377
      %v9426 = vadd.f32 %v6554, %v9380
      %v9427 = vadd.f32 %v6555, %v9385
      %v9428 = vadd.f32 %v6556, %v9388
      %v9429 = vadd.f32 %v6557, %v9393
      %v9430 = vadd.f32 %v6558, %v9396
      %v9431 = vld [vmem:[%s12] sm:$0x1]
      %v9433 = vlaneseq
      %v9434 = vshrl.u32 %v9433, 7
      %v9435 = vsub.s32 0, %v9434
      %v9436 = vrot.slane %v9431, %v9435
      %v9438 = vadd.f32 %v9399, %v9436
      %v9439 = vadd.f32 %v9400, %v9436
      %v9440 = vadd.f32 %v9401, %v9436
      %v9441 = vadd.f32 %v9402, %v9436
      %v9442 = vadd.f32 %v9403, %v9436
      %v9443 = vadd.f32 %v9404, %v9436
      %v9444 = vadd.f32 %v9405, %v9436
      %v9445 = vadd.f32 %v9406, %v9436
      %v9446 = vadd.f32 %v9407, %v9436
      %v9447 = vadd.f32 %v9408, %v9436
      %v9448 = vadd.f32 %v9409, %v9436
      %v9449 = vadd.f32 %v9410, %v9436
      %v9450 = vadd.f32 %v9411, %v9436
      %v9451 = vadd.f32 %v9412, %v9436
      %v9452 = vadd.f32 %v9413, %v9436
      %v9453 = vadd.f32 %v9414, %v9436
      %v9454 = vadd.f32 %v9415, %v9436
      %v9455 = vadd.f32 %v9416, %v9436
      %v9456 = vadd.f32 %v9417, %v9436
      %v9457 = vadd.f32 %v9418, %v9436
      %v9458 = vadd.f32 %v9419, %v9436
      %v9459 = vadd.f32 %v9420, %v9436
      %v9460 = vadd.f32 %v9421, %v9436
      %v9461 = vadd.f32 %v9422, %v9436
      %v9462 = vadd.f32 %v9423, %v9436
      %v9463 = vadd.f32 %v9424, %v9436
      %v9464 = vadd.f32 %v9425, %v9436
      %v9465 = vadd.f32 %v9426, %v9436
      %v9466 = vadd.f32 %v9427, %v9436
      %v9467 = vadd.f32 %v9428, %v9436
      %v9468 = vadd.f32 %v9429, %v9436
      %v9469 = vadd.f32 %v9430, %v9436
      %9470 = vst [vmem:[%s440] sm:$0xff] %v9438
      %9471 = vst [vmem:[%s440 + $0x8] sm:$0xff] %v9439
      %9472 = vst [vmem:[%s440 + $0x10] sm:$0xff] %v9440
      %9473 = vst [vmem:[%s440 + $0x18] sm:$0xff] %v9441
      %9474 = vst [vmem:[%s440 + $0x20] sm:$0xff] %v9442
      %9475 = vst [vmem:[%s440 + $0x28] sm:$0xff] %v9443
      %9476 = vst [vmem:[%s440 + $0x30] sm:$0xff] %v9444
      %9477 = vst [vmem:[%s440 + $0x38] sm:$0xff] %v9445
      %9478 = vst [vmem:[%s440 + $0x40] sm:$0xff] %v9446
      %9479 = vst [vmem:[%s440 + $0x48] sm:$0xff] %v9447
      %9480 = vst [vmem:[%s440 + $0x50] sm:$0xff] %v9448
      %9481 = vst [vmem:[%s440 + $0x58] sm:$0xff] %v9449
      %9482 = vst [vmem:[%s440 + $0x60] sm:$0xff] %v9450
      %9483 = vst [vmem:[%s440 + $0x68] sm:$0xff] %v9451
      %9484 = vst [vmem:[%s440 + $0x70] sm:$0xff] %v9452
      %9485 = vst [vmem:[%s440 + $0x78] sm:$0xff] %v9453
      %9486 = vst [vmem:[%s440 + $0x80] sm:$0xff] %v9454
      %9487 = vst [vmem:[%s440 + $0x88] sm:$0xff] %v9455
      %9488 = vst [vmem:[%s440 + $0x90] sm:$0xff] %v9456
      %9489 = vst [vmem:[%s440 + $0x98] sm:$0xff] %v9457
      %9490 = vst [vmem:[%s440 + $0xa0] sm:$0xff] %v9458
      %9491 = vst [vmem:[%s440 + $0xa8] sm:$0xff] %v9459
      %9492 = vst [vmem:[%s440 + $0xb0] sm:$0xff] %v9460
      %9493 = vst [vmem:[%s440 + $0xb8] sm:$0xff] %v9461
      %9494 = vst [vmem:[%s440 + $0xc0] sm:$0xff] %v9462
      %9495 = vst [vmem:[%s440 + $0xc8] sm:$0xff] %v9463
      %9496 = vst [vmem:[%s440 + $0xd0] sm:$0xff] %v9464
      %9497 = vst [vmem:[%s440 + $0xd8] sm:$0xff] %v9465
      %9498 = vst [vmem:[%s440 + $0xe0] sm:$0xff] %v9466
      %9499 = vst [vmem:[%s440 + $0xe8] sm:$0xff] %v9467
      %9500 = vst [vmem:[%s440 + $0xf0] sm:$0xff] %v9468
      %9501 = vst [vmem:[%s440 + $0xf8] sm:$0xff] %v9469
      %p9502 = scmp.lt.s32.totalorder %s24, 1
      %s9503 = scalar_select %p9502, %s24, 1
      %s9504 = smul.addr %s9503, 32
      %s9505 = smul.addr %s9504, 8
      %s9506 = scalar_lea.vmem %s13, %s9505
      // Predicated region
      $region73: #{tnet8_forward.5} parent=71 // pred_check
        %p9507 = pneg %p320
      $region74: #{tnet8_forward.5} parent=71 // pred_check_branch
        %9509 = sbr.rel (%p9507) target = $region76
      $region75: #{tnet8_forward.5} parent=71 // pred_region
        _
      $region76: #{tnet8_forward.5} parent=71 // pred_fallthru
        _
    $region72: #{tnet8_forward.5} parent=5 // pred_fallthru
      _
    %p9510 = scmp.le.s32.totalorder 2, %s19
    // Predicated region
    $region77: #{tnet8_forward.5} parent=5 // pred_check
      %p9511 = pneg %p9510
    $region78: #{tnet8_forward.5} parent=5 // pred_check_branch
      %9513 = sbr.rel (%p9511) target = $region80
    $region79: #{tnet8_forward.5} parent=5 // pred_region
      %s9514 = ssub.s32 %s19, 2
      // Predicated region
      $region81: #{tnet8_forward.5} parent=79 // pred_check
        %p9515 = pneg %p326
      $region82: #{tnet8_forward.5} parent=79 // pred_check_branch
        %9517 = sbr.rel (%p9515) target = $region84
      $region83: #{tnet8_forward.5} parent=79 // pred_region
        %p9518 = scmp.lt.s32.totalorder %s25, 1
        %s9519 = scalar_select %p9518, %s25, 1
        %s9520 = smul.addr %s9519, 32
        %s9521 = smul.addr %s9520, 8
        %s9522 = scalar_lea.vmem %s13, %s9521
      $region84: #{tnet8_forward.5} parent=79 // pred_fallthru
        _
    $region80: #{tnet8_forward.5} parent=5 // pred_fallthru
      _
  $region6: #{tnet8_forward.5} parent=0 // loop_footer
    %s23 = sadd.s32 1, %s19
  $region7: #{tnet8_forward.5} parent=0 // loop_footer_branch
    %18 = sbr.rel target = $region3
  $region8: #{tnet8_forward.5} parent=0 // loop_exit
    _

</llo_original>
